<compile_context>
chip_gen: v7x
topology: tpu7x:2x2x1
jax: 0.10.0
libtpu: 0.0.40
codegen_flags: <defaults>
</compile_context>

<pallas_src>
import numpy as np
import jax
import jax.numpy as jnp
from jax.experimental import pallas as pl
from jax.experimental.pallas import tpu as pltpu  # noqa: F401  (not needed for this fused kernel)

# ---------------- configuration (small, consistent with the module) ----------
B, T, C, H, W = 2, 2, 3, 16, 16          # video: batch=2, 2 frames, 3ch, 16x16
P = 4                                    # patch size (swin patch4)
D1, HEADS1 = 32, 2                       # stage-1 embed dim / heads
D2, HEADS2 = 64, 4                       # stage-2 embed dim / heads (after merge)
WS = 2                                   # window size (analog of window7)
NUM_CLASSES = 2
MLP_RATIO = 4
EPS = 1e-5

BLOCK_KEYS = ("ln1_g", "ln1_b", "wq", "wk", "wv", "bq", "bk", "bv",
              "attn_bias", "wo", "bo", "ln2_g", "ln2_b", "w1", "b1", "w2", "b2")

# ---------------------------- in-kernel helpers -------------------------------

def _gelu_tanh(x):
    # TODO(synk): nn.GELU defaults to exact erf; tanh approximation keeps it on EUP.
    return 0.5 * x * (1.0 + jnp.tanh(0.7978845608028654 * (x + 0.044715 * x * x * x)))


def _ln(x, g, b):
    mu = jnp.mean(x, axis=-1, keepdims=True)
    var = jnp.mean((x - mu) ** 2, axis=-1, keepdims=True)
    return (x - mu) * jax.lax.rsqrt(var + EPS) * g + b


def _swin_block(x, nxt):
    """LN1 + (shifted-)window MHSA + out-proj + residual + LN2 + MLP + residual.

    x: (M, D) slab with M = BF * tokens_per_frame.  All window / shift / frame
    structure is encoded in the precomputed additive bias (heads, M, M).
    Per-head weights are selected with free leading-axis ref slices and the
    output projection is accumulated in registers (no scratch round-trip).
    """
    ln1g = nxt()[...]; ln1b = nxt()[...]
    wq = nxt(); wk = nxt(); wv = nxt()          # refs: (heads, d, hd)
    bq = nxt(); bk = nxt(); bv = nxt()          # refs: (heads, 1, hd)
    bias = nxt()                                # ref : (heads, M, M)
    wo = nxt(); bo = nxt()[...]                 # wo ref: (heads, hd, d)
    ln2g = nxt()[...]; ln2b = nxt()[...]
    w1 = nxt()[...]; b1 = nxt()[...]
    w2 = nxt()[...]; b2 = nxt()[...]

    heads = wq.shape[0]
    xn = _ln(x, ln1g, ln1b)

    attn = bo                                   # (1, d), broadcasts up
    for h in range(heads):                      # small static unroll
        q = jnp.dot(xn, wq[h], preferred_element_type=jnp.float32) + bq[h]
        k = jnp.dot(xn, wk[h], preferred_element_type=jnp.float32) + bk[h]
        v = jnp.dot(xn, wv[h], preferred_element_type=jnp.float32) + bv[h]
        s = jax.lax.dot_general(q, k, (((1,), (1,)), ((), ())),
                                preferred_element_type=jnp.float32)   # (M, M)
        s = s + bias[h]        # rel-pos bias + window mask + shift mask + frame mask
        s = s - jnp.max(s, axis=-1, keepdims=True)
        p = jnp.exp(s)
        p = p * pl.reciprocal(jnp.sum(p, axis=-1, keepdims=True), approx=True)
        pv = jnp.dot(p, v, preferred_element_type=jnp.float32)        # (M, hd)
        attn = attn + jnp.dot(pv, wo[h], preferred_element_type=jnp.float32)
    x = x + attn

    y = _ln(x, ln2g, ln2b)
    y = _gelu_tanh(jnp.dot(y, w1, preferred_element_type=jnp.float32) + b1)
    y = jnp.dot(y, w2, preferred_element_type=jnp.float32) + b2
    return x + y


def _fused_forward_kernel(*refs):
    """Whole forward in one kernel invocation; all operands VMEM-resident."""
    o_ref = refs[-1]
    it = iter(refs[:-1])
    nxt = lambda: next(it)

    # ---- 1) patch embedding: linear + layernorm (all frames/tokens batched) ----
    patches = nxt()[...]                                    # (BF*N1, C*P*P)
    pe_w = nxt()[...]; pe_b = nxt()[...]
    pe_g = nxt()[...]; pe_bb = nxt()[...]
    x = jnp.dot(patches, pe_w, preferred_element_type=jnp.float32) + pe_b
    x = _ln(x, pe_g, pe_bb)                                 # (BF*N1, D1)

    # ---- 2) stage 1: W-MSA block + SW-MSA block (shift folded into bias) ----
    x = _swin_block(x, nxt)
    x = _swin_block(x, nxt)

    # ---- 3) patch merging: static selection matmuls + joint LN + linear ----
    gsel = nxt()                                            # ref: (4, M2, M1)
    pm_g = nxt(); pm_bln = nxt()                            # refs: (4, 1, D1)
    pm_w = nxt()                                            # ref: (4, D1, D2)
    pm_b = nxt()[...]                                       # (1, D2)
    z = [jnp.dot(gsel[j], x, preferred_element_type=jnp.float32) for j in range(4)]
    d4 = 4.0 * x.shape[-1]
    mu = sum(jnp.sum(zj, axis=-1, keepdims=True) for zj in z) / d4
    var = sum(jnp.sum((zj - mu) ** 2, axis=-1, keepdims=True) for zj in z) / d4
    rstd = jax.lax.rsqrt(var + EPS)
    y = pm_b
    for j in range(4):
        nj = (z[j] - mu) * rstd * pm_g[j] + pm_bln[j]
        y = y + jnp.dot(nj, pm_w[j], preferred_element_type=jnp.float32)
    x = y                                                   # (BF*N2, D2)

    # ---- 4) stage 2: single window per frame (frame mask in bias) ----
    x = _swin_block(x, nxt)

    # ---- 5) final layernorm + per-frame mean pool (matmul) + classifier ----
    fin_g = nxt()[...]; fin_b = nxt()[...]
    pool_mat = nxt()[...]                                   # (BF, BF*N2), rows sum to 1
    head_w = nxt()[...]; head_b = nxt()[...]
    xn = _ln(x, fin_g, fin_b)
    pooled = jnp.dot(pool_mat, xn, preferred_element_type=jnp.float32)   # (BF, D2)
    # NOTE: logits last dim = NUM_CLASSES (=2) -> tiny masked store; unavoidable.
    o_ref[...] = jnp.dot(pooled, head_w,
                         preferred_element_type=jnp.float32) + head_b

# ---------------------------- plain-JAX glue / precompute -----------------------

def extract_patches(x, p):
    b, t, c, h, w = x.shape
    x = x.reshape(b * t, c, h // p, p, w // p, p)
    x = x.transpose(0, 2, 4, 1, 3, 5)            # (BF, Hp, Wp, C, p, p)
    return x.reshape(b * t, (h // p) * (w // p), c * p * p)


def rel_pos_index(ws):
    coords = np.stack(np.meshgrid(np.arange(ws), np.arange(ws), indexing="ij"))
    flat = coords.reshape(2, -1)
    rel = (flat[:, :, None] - flat[:, None, :]).transpose(1, 2, 0)
    rel[:, :, 0] += ws - 1
    rel[:, :, 1] += ws - 1
    rel[:, :, 0] *= 2 * ws - 1
    return rel.sum(-1)                            # (ws2, ws2) ints


def build_attn_bias(rpb, hg, wg, ws, shift):
    """Fold roll + window partition + rel-pos bias + shift mask into one
    (heads, N, N) additive bias over a frame's N = hg*wg tokens."""
    rr, cc = np.meshgrid(np.arange(hg), np.arange(wg), indexing="ij")
    r_roll = (rr - shift) % hg                    # position after jnp.roll(-shift)
    c_roll = (cc - shift) % wg
    wid = (r_roll // ws) * (wg // ws) + (c_roll // ws)        # window id
    wi = (r_roll % ws) * ws + (c_roll % ws)                   # index within window
    img = np.zeros((hg, wg), np.int32)                        # Swin shift regions
    if shift > 0:
        cnt = 0
        for hs in (slice(0, -ws), slice(-ws, -shift), slice(-shift, None)):
            for vs in (slice(0, -ws), slice(-ws, -shift), slice(-shift, None)):
                img[hs, vs] = cnt
                cnt += 1
    reg = img[r_roll, c_roll]
    wid_f, wi_f, reg_f = wid.reshape(-1), wi.reshape(-1), reg.reshape(-1)
    same_win = wid_f[:, None] == wid_f[None, :]                          # (N, N)
    shift_mask = np.where(reg_f[:, None] == reg_f[None, :],
                          0.0, -100.0).astype(np.float32)                # (N, N)
    rpb_full = rpb[:, wi_f[:, None], wi_f[None, :]]                      # (h, N, N)
    bias = jnp.where(same_win[None], rpb_full + shift_mask[None], -1e9)
    return bias.astype(jnp.float32)


def expand_bias_to_slab(frame_bias, bf):
    """(heads, N, N) per-frame bias -> (heads, BF*N, BF*N) slab bias with
    cross-frame pairs masked (-1e9 -> exactly 0 after softmax).
    TODO(synk): at real Swin sizes this O(M^2) bias does not fit v7x VMEM;
    switch back to per-window (mask_type, heads, ws^2, ws^2) tiles there."""
    heads, n, _ = frame_bias.shape
    m = bf * n
    slab = jnp.full((heads, m, m), -1e9, jnp.float32)
    for f in range(bf):
        slab = slab.at[:, f * n:(f + 1) * n, f * n:(f + 1) * n].set(frame_bias)
    return slab


def build_merge_selectors(bf, hp, wp):
    """Static 0/1 selection matrices implementing the patch-merging regroup as
    4 MXU matmuls on the (BF*N1, D1) token slab."""
    n1, h2, w2 = hp * wp, hp // 2, wp // 2
    n2 = h2 * w2
    order = [(0, 0), (1, 0), (0, 1), (1, 1)]       # [x00, x10, x01, x11] concat order
    g = np.zeros((4, bf * n2, bf * n1), np.float32)
    for j, (dr, dc) in enumerate(order):
        for f in range(bf):
            for r in range(h2):
                for c in range(w2):
                    dst = f * n2 + r * w2 + c
                    src = f * n1 + (2 * r + dr) * wp + (2 * c + dc)
                    g[j, dst, src] = 1.0
    return jnp.asarray(g)


def build_pool_matrix(bf, n):
    """Per-frame mean pooling as one static matmul: (BF, BF*N) @ (BF*N, D)."""
    m = np.zeros((bf, bf * n), np.float32)
    for f in range(bf):
        m[f, f * n:(f + 1) * n] = 1.0 / n
    return jnp.asarray(m)

# ---------------------------- parameters --------------------------------------

def _dense(key, fan_in, fan_out, std=0.02):
    return std * jax.random.normal(key, (fan_in, fan_out), jnp.float32)


def init_block(key, d, heads, ws, hg, wg, shift, bf):
    hd = d // heads
    ks = jax.random.split(key, 7)
    table = 0.02 * jax.random.normal(ks[0], ((2 * ws - 1) ** 2, heads), jnp.float32)
    idx = rel_pos_index(ws)
    rpb = table[idx.reshape(-1)].reshape(ws * ws, ws * ws, heads).transpose(2, 0, 1)
    frame_bias = build_attn_bias(rpb, hg, wg, ws, shift)       # (heads, N, N)
    slab_bias = expand_bias_to_slab(frame_bias, bf)            # (heads, M, M)
    scale = float(hd) ** -0.5
    wq = _dense(ks[1], d, d) * scale          # fold 1/sqrt(hd) into Wq (and bq below)
    wk = _dense(ks[2], d, d)
    wv = _dense(ks[3], d, d)
    to_heads = lambda w: w.reshape(d, heads, hd).transpose(1, 0, 2)   # (heads, d, hd)
    wo = _dense(ks[4], d, d).reshape(heads, hd, d)                    # (heads, hd, d)
    return dict(
        ln1_g=jnp.ones((1, d)), ln1_b=jnp.zeros((1, d)),
        wq=to_heads(wq), wk=to_heads(wk), wv=to_heads(wv),
        bq=jnp.zeros((heads, 1, hd)) * scale,                 # scaled like Wq
        bk=jnp.zeros((heads, 1, hd)), bv=jnp.zeros((heads, 1, hd)),
        attn_bias=slab_bias,
        wo=wo, bo=jnp.zeros((1, d)),
        ln2_g=jnp.ones((1, d)), ln2_b=jnp.zeros((1, d)),
        w1=_dense(ks[5], d, MLP_RATIO * d), b1=jnp.zeros((1, MLP_RATIO * d)),
        w2=_dense(ks[6], MLP_RATIO * d, d), b2=jnp.zeros((1, d)),
    )


def init_params(key):
    k = jax.random.split(key, 8)
    hp, wp = H // P, W // P
    bf = B * T
    return dict(
        pe_w=_dense(k[0], C * P * P, D1), pe_b=jnp.zeros((1, D1)),
        pe_ln_g=jnp.ones((1, D1)), pe_ln_b=jnp.zeros((1, D1)),
        s1b1=init_block(k[1], D1, HEADS1, WS, hp, wp, 0, bf),
        s1b2=init_block(k[2], D1, HEADS1, WS, hp, wp, WS // 2, bf),
        pm_gsel=build_merge_selectors(bf, hp, wp),                       # (4, M2, M1)
        pm_ln_g=jnp.ones((4, 1, D1)), pm_ln_b=jnp.zeros((4, 1, D1)),
        pm_w=_dense(k[3], 4 * D1, D2).reshape(4, D1, D2), pm_b=jnp.zeros((1, D2)),
        s2b1=init_block(k[4], D2, HEADS2, WS, hp // 2, wp // 2, 0, bf),
        fin_ln_g=jnp.ones((1, D2)), fin_ln_b=jnp.zeros((1, D2)),
        pool_mat=build_pool_matrix(bf, (hp // 2) * (wp // 2)),           # (BF, M2)
        head_w=_dense(k[5], D2, NUM_CLASSES), head_b=jnp.zeros((1, NUM_CLASSES)),
    )

# ---------------------------- model forward ------------------------------------

def swin_video_classifier(x, params):
    b, t, c, h, w = x.shape
    bf = b * t
    hp, wp = h // P, w // P
    # (B, T, C, H, W) -> (B*T, C, H, W) -> patch-token slab (only non-kernel glue)
    patches = extract_patches(x, P).reshape(bf * hp * wp, c * P * P)     # (64, 48)

    flat = [patches, params["pe_w"], params["pe_b"],
            params["pe_ln_g"], params["pe_ln_b"]]
    for blk in ("s1b1", "s1b2"):
        flat += [params[blk][key] for key in BLOCK_KEYS]
    flat += [params["pm_gsel"], params["pm_ln_g"], params["pm_ln_b"],
             params["pm_w"], params["pm_b"]]
    flat += [params["s2b1"][key] for key in BLOCK_KEYS]
    flat += [params["fin_ln_g"], params["fin_ln_b"], params["pool_mat"],
             params["head_w"], params["head_b"]]

    logits = pl.pallas_call(
        _fused_forward_kernel,
        out_shape=jax.ShapeDtypeStruct((bf, NUM_CLASSES), jnp.float32),
    )(*flat)
    return logits.reshape(b, t, NUM_CLASSES)

# ---------------------------------- main ---------------------------------------

if __name__ == "__main__":
    key = jax.random.PRNGKey(0)
    kx, kp = jax.random.split(key)
    x = jax.random.normal(kx, (B, T, C, H, W), jnp.float32)
    # TODO(synk): pretrained HF Swin weights are not loadable here; parameters are
    # deterministic synthetic initialisations with Swin-shaped tensors.
    params = init_params(kp)
    logits = swin_video_classifier(x, params)
    logits = jax.block_until_ready(logits)
    assert logits.shape == (B, T, NUM_CLASSES), logits.shape
    assert bool(jnp.all(jnp.isfinite(logits)))
    print("KERNEL_OK")
</pallas_src>

<mosaic_0001>
module attributes {stable_mosaic.version = 11 : i64} {
  func.func @_fused_forward_kernel(%arg0: memref<64x48xf32, #tpu.memory_space<vmem>>, %arg1: memref<48x32xf32, #tpu.memory_space<vmem>>, %arg2: memref<1x32xf32, #tpu.memory_space<vmem>>, %arg3: memref<1x32xf32, #tpu.memory_space<vmem>>, %arg4: memref<1x32xf32, #tpu.memory_space<vmem>>, %arg5: memref<1x32xf32, #tpu.memory_space<vmem>>, %arg6: memref<1x32xf32, #tpu.memory_space<vmem>>, %arg7: memref<2x32x16xf32, #tpu.memory_space<vmem>>, %arg8: memref<2x32x16xf32, #tpu.memory_space<vmem>>, %arg9: memref<2x32x16xf32, #tpu.memory_space<vmem>>, %arg10: memref<2x1x16xf32, #tpu.memory_space<vmem>>, %arg11: memref<2x1x16xf32, #tpu.memory_space<vmem>>, %arg12: memref<2x1x16xf32, #tpu.memory_space<vmem>>, %arg13: memref<2x64x64xf32, #tpu.memory_space<vmem>>, %arg14: memref<2x16x32xf32, #tpu.memory_space<vmem>>, %arg15: memref<1x32xf32, #tpu.memory_space<vmem>>, %arg16: memref<1x32xf32, #tpu.memory_space<vmem>>, %arg17: memref<1x32xf32, #tpu.memory_space<vmem>>, %arg18: memref<32x128xf32, #tpu.memory_space<vmem>>, %arg19: memref<1x128xf32, #tpu.memory_space<vmem>>, %arg20: memref<128x32xf32, #tpu.memory_space<vmem>>, %arg21: memref<1x32xf32, #tpu.memory_space<vmem>>, %arg22: memref<1x32xf32, #tpu.memory_space<vmem>>, %arg23: memref<1x32xf32, #tpu.memory_space<vmem>>, %arg24: memref<2x32x16xf32, #tpu.memory_space<vmem>>, %arg25: memref<2x32x16xf32, #tpu.memory_space<vmem>>, %arg26: memref<2x32x16xf32, #tpu.memory_space<vmem>>, %arg27: memref<2x1x16xf32, #tpu.memory_space<vmem>>, %arg28: memref<2x1x16xf32, #tpu.memory_space<vmem>>, %arg29: memref<2x1x16xf32, #tpu.memory_space<vmem>>, %arg30: memref<2x64x64xf32, #tpu.memory_space<vmem>>, %arg31: memref<2x16x32xf32, #tpu.memory_space<vmem>>, %arg32: memref<1x32xf32, #tpu.memory_space<vmem>>, %arg33: memref<1x32xf32, #tpu.memory_space<vmem>>, %arg34: memref<1x32xf32, #tpu.memory_space<vmem>>, %arg35: memref<32x128xf32, #tpu.memory_space<vmem>>, %arg36: memref<1x128xf32, #tpu.memory_space<vmem>>, %arg37: memref<128x32xf32, #tpu.memory_space<vmem>>, %arg38: memref<1x32xf32, #tpu.memory_space<vmem>>, %arg39: memref<4x16x64xf32, #tpu.memory_space<vmem>>, %arg40: memref<4x1x32xf32, #tpu.memory_space<vmem>>, %arg41: memref<4x1x32xf32, #tpu.memory_space<vmem>>, %arg42: memref<4x32x64xf32, #tpu.memory_space<vmem>>, %arg43: memref<1x64xf32, #tpu.memory_space<vmem>>, %arg44: memref<1x64xf32, #tpu.memory_space<vmem>>, %arg45: memref<1x64xf32, #tpu.memory_space<vmem>>, %arg46: memref<4x64x16xf32, #tpu.memory_space<vmem>>, %arg47: memref<4x64x16xf32, #tpu.memory_space<vmem>>, %arg48: memref<4x64x16xf32, #tpu.memory_space<vmem>>, %arg49: memref<4x1x16xf32, #tpu.memory_space<vmem>>, %arg50: memref<4x1x16xf32, #tpu.memory_space<vmem>>, %arg51: memref<4x1x16xf32, #tpu.memory_space<vmem>>, %arg52: memref<4x16x16xf32, #tpu.memory_space<vmem>>, %arg53: memref<4x16x64xf32, #tpu.memory_space<vmem>>, %arg54: memref<1x64xf32, #tpu.memory_space<vmem>>, %arg55: memref<1x64xf32, #tpu.memory_space<vmem>>, %arg56: memref<1x64xf32, #tpu.memory_space<vmem>>, %arg57: memref<64x256xf32, #tpu.memory_space<vmem>>, %arg58: memref<1x256xf32, #tpu.memory_space<vmem>>, %arg59: memref<256x64xf32, #tpu.memory_space<vmem>>, %arg60: memref<1x64xf32, #tpu.memory_space<vmem>>, %arg61: memref<1x64xf32, #tpu.memory_space<vmem>>, %arg62: memref<1x64xf32, #tpu.memory_space<vmem>>, %arg63: memref<4x16xf32, #tpu.memory_space<vmem>>, %arg64: memref<64x2xf32, #tpu.memory_space<vmem>>, %arg65: memref<1x2xf32, #tpu.memory_space<vmem>>, %arg66: memref<4x2xf32, #tpu.memory_space<vmem>>) attributes {dimension_semantics = [], scalar_prefetch = 0 : i64, scratch_operands = 0 : i64, tpu.core_type = #tpu.core_type<tc>} {
    %c0 = arith.constant 0 : index
    %c0_0 = arith.constant 0 : index
    %0 = vector.load %arg0[%c0, %c0_0] : memref<64x48xf32, #tpu.memory_space<vmem>>, vector<64x48xf32>
    %c0_1 = arith.constant 0 : index
    %c0_2 = arith.constant 0 : index
    %1 = vector.load %arg1[%c0_1, %c0_2] : memref<48x32xf32, #tpu.memory_space<vmem>>, vector<48x32xf32>
    %c0_3 = arith.constant 0 : index
    %c0_4 = arith.constant 0 : index
    %2 = vector.load %arg2[%c0_3, %c0_4] : memref<1x32xf32, #tpu.memory_space<vmem>>, vector<1x32xf32>
    %c0_5 = arith.constant 0 : index
    %c0_6 = arith.constant 0 : index
    %3 = vector.load %arg3[%c0_5, %c0_6] : memref<1x32xf32, #tpu.memory_space<vmem>>, vector<1x32xf32>
    %c0_7 = arith.constant 0 : index
    %c0_8 = arith.constant 0 : index
    %4 = vector.load %arg4[%c0_7, %c0_8] : memref<1x32xf32, #tpu.memory_space<vmem>>, vector<1x32xf32>
    %cst = arith.constant dense<0.000000e+00> : vector<64x32xf32>
    %5 = tpu.matmul %0, %1, %cst {dimension_numbers = #tpu.dot_dimension_numbers<[1], [0], [0], [1], [0, 0, 1, 1], [], []>} : vector<64x48xf32>, vector<48x32xf32>, vector<64x32xf32> -> vector<64x32xf32>
    %6 = vector.broadcast %2 : vector<1x32xf32> to vector<64x32xf32>
    %7 = arith.addf %5, %6 : vector<64x32xf32>
    %cst_9 = arith.constant dense<0.000000e+00> : vector<64xf32>
    %8 = vector.multi_reduction <add>, %7, %cst_9 [1] : vector<64x32xf32> to vector<64xf32>
    %9 = vector.shape_cast %8 : vector<64xf32> to vector<64x1xf32>
    %cst_10 = arith.constant 3.200000e+01 : f32
    %10 = vector.broadcast %cst_10 : f32 to vector<64x1xf32>
    %11 = arith.divf %9, %10 : vector<64x1xf32>
    %12 = vector.broadcast %11 : vector<64x1xf32> to vector<64x32xf32>
    %13 = arith.subf %7, %12 : vector<64x32xf32>
    %14 = arith.mulf %13, %13 : vector<64x32xf32>
    %cst_11 = arith.constant dense<0.000000e+00> : vector<64xf32>
    %15 = vector.multi_reduction <add>, %14, %cst_11 [1] : vector<64x32xf32> to vector<64xf32>
    %16 = vector.shape_cast %15 : vector<64xf32> to vector<64x1xf32>
    %cst_12 = arith.constant 3.200000e+01 : f32
    %17 = vector.broadcast %cst_12 : f32 to vector<64x1xf32>
    %18 = arith.divf %16, %17 : vector<64x1xf32>
    %19 = vector.broadcast %11 : vector<64x1xf32> to vector<64x32xf32>
    %20 = arith.subf %7, %19 : vector<64x32xf32>
    %cst_13 = arith.constant 9.99999974E-6 : f32
    %21 = vector.broadcast %cst_13 : f32 to vector<64x1xf32>
    %22 = arith.addf %18, %21 : vector<64x1xf32>
    %23 = math.rsqrt %22 : vector<64x1xf32>
    %24 = vector.broadcast %23 : vector<64x1xf32> to vector<64x32xf32>
    %25 = arith.mulf %20, %24 : vector<64x32xf32>
    %26 = vector.broadcast %3 : vector<1x32xf32> to vector<64x32xf32>
    %27 = arith.mulf %25, %26 : vector<64x32xf32>
    %28 = vector.broadcast %4 : vector<1x32xf32> to vector<64x32xf32>
    %29 = arith.addf %27, %28 : vector<64x32xf32>
    %c0_14 = arith.constant 0 : index
    %c0_15 = arith.constant 0 : index
    %30 = vector.load %arg5[%c0_14, %c0_15] : memref<1x32xf32, #tpu.memory_space<vmem>>, vector<1x32xf32>
    %c0_16 = arith.constant 0 : index
    %c0_17 = arith.constant 0 : index
    %31 = vector.load %arg6[%c0_16, %c0_17] : memref<1x32xf32, #tpu.memory_space<vmem>>, vector<1x32xf32>
    %c0_18 = arith.constant 0 : index
    %c0_19 = arith.constant 0 : index
    %32 = vector.load %arg15[%c0_18, %c0_19] : memref<1x32xf32, #tpu.memory_space<vmem>>, vector<1x32xf32>
    %c0_20 = arith.constant 0 : index
    %c0_21 = arith.constant 0 : index
    %33 = vector.load %arg16[%c0_20, %c0_21] : memref<1x32xf32, #tpu.memory_space<vmem>>, vector<1x32xf32>
    %c0_22 = arith.constant 0 : index
    %c0_23 = arith.constant 0 : index
    %34 = vector.load %arg17[%c0_22, %c0_23] : memref<1x32xf32, #tpu.memory_space<vmem>>, vector<1x32xf32>
    %c0_24 = arith.constant 0 : index
    %c0_25 = arith.constant 0 : index
    %35 = vector.load %arg18[%c0_24, %c0_25] : memref<32x128xf32, #tpu.memory_space<vmem>>, vector<32x128xf32>
    %c0_26 = arith.constant 0 : index
    %c0_27 = arith.constant 0 : index
    %36 = vector.load %arg19[%c0_26, %c0_27] : memref<1x128xf32, #tpu.memory_space<vmem>>, vector<1x128xf32>
    %c0_28 = arith.constant 0 : index
    %c0_29 = arith.constant 0 : index
    %37 = vector.load %arg20[%c0_28, %c0_29] : memref<128x32xf32, #tpu.memory_space<vmem>>, vector<128x32xf32>
    %c0_30 = arith.constant 0 : index
    %c0_31 = arith.constant 0 : index
    %38 = vector.load %arg21[%c0_30, %c0_31] : memref<1x32xf32, #tpu.memory_space<vmem>>, vector<1x32xf32>
    %cst_32 = arith.constant dense<0.000000e+00> : vector<64xf32>
    %39 = vector.multi_reduction <add>, %29, %cst_32 [1] : vector<64x32xf32> to vector<64xf32>
    %40 = vector.shape_cast %39 : vector<64xf32> to vector<64x1xf32>
    %cst_33 = arith.constant 3.200000e+01 : f32
    %41 = vector.broadcast %cst_33 : f32 to vector<64x1xf32>
    %42 = arith.divf %40, %41 : vector<64x1xf32>
    %43 = vector.broadcast %42 : vector<64x1xf32> to vector<64x32xf32>
    %44 = arith.subf %29, %43 : vector<64x32xf32>
    %45 = arith.mulf %44, %44 : vector<64x32xf32>
    %cst_34 = arith.constant dense<0.000000e+00> : vector<64xf32>
    %46 = vector.multi_reduction <add>, %45, %cst_34 [1] : vector<64x32xf32> to vector<64xf32>
    %47 = vector.shape_cast %46 : vector<64xf32> to vector<64x1xf32>
    %cst_35 = arith.constant 3.200000e+01 : f32
    %48 = vector.broadcast %cst_35 : f32 to vector<64x1xf32>
    %49 = arith.divf %47, %48 : vector<64x1xf32>
    %50 = vector.broadcast %42 : vector<64x1xf32> to vector<64x32xf32>
    %51 = arith.subf %29, %50 : vector<64x32xf32>
    %cst_36 = arith.constant 9.99999974E-6 : f32
    %52 = vector.broadcast %cst_36 : f32 to vector<64x1xf32>
    %53 = arith.addf %49, %52 : vector<64x1xf32>
    %54 = math.rsqrt %53 : vector<64x1xf32>
    %55 = vector.broadcast %54 : vector<64x1xf32> to vector<64x32xf32>
    %56 = arith.mulf %51, %55 : vector<64x32xf32>
    %57 = vector.broadcast %30 : vector<1x32xf32> to vector<64x32xf32>
    %58 = arith.mulf %56, %57 : vector<64x32xf32>
    %59 = vector.broadcast %31 : vector<1x32xf32> to vector<64x32xf32>
    %60 = arith.addf %58, %59 : vector<64x32xf32>
    %c0_37 = arith.constant 0 : index
    %c0_38 = arith.constant 0 : index
    %c0_39 = arith.constant 0 : index
    %61 = vector.load %arg7[%c0_37, %c0_38, %c0_39] : memref<2x32x16xf32, #tpu.memory_space<vmem>>, vector<1x32x16xf32>
    %62 = vector.shape_cast %61 : vector<1x32x16xf32> to vector<32x16xf32>
    %cst_40 = arith.constant dense<0.000000e+00> : vector<64x16xf32>
    %63 = tpu.matmul %60, %62, %cst_40 {dimension_numbers = #tpu.dot_dimension_numbers<[1], [0], [0], [1], [0, 0, 1, 1], [], []>} : vector<64x32xf32>, vector<32x16xf32>, vector<64x16xf32> -> vector<64x16xf32>
    %c0_41 = arith.constant 0 : index
    %c0_42 = arith.constant 0 : index
    %c0_43 = arith.constant 0 : index
    %64 = vector.load %arg10[%c0_41, %c0_42, %c0_43] : memref<2x1x16xf32, #tpu.memory_space<vmem>>, vector<1x1x16xf32>
    %65 = vector.shape_cast %64 : vector<1x1x16xf32> to vector<1x16xf32>
    %66 = vector.broadcast %65 : vector<1x16xf32> to vector<64x16xf32>
    %67 = arith.addf %63, %66 : vector<64x16xf32>
    %c0_44 = arith.constant 0 : index
    %c0_45 = arith.constant 0 : index
    %c0_46 = arith.constant 0 : index
    %68 = vector.load %arg8[%c0_44, %c0_45, %c0_46] : memref<2x32x16xf32, #tpu.memory_space<vmem>>, vector<1x32x16xf32>
    %69 = vector.shape_cast %68 : vector<1x32x16xf32> to vector<32x16xf32>
    %cst_47 = arith.constant dense<0.000000e+00> : vector<64x16xf32>
    %70 = tpu.matmul %60, %69, %cst_47 {dimension_numbers = #tpu.dot_dimension_numbers<[1], [0], [0], [1], [0, 0, 1, 1], [], []>} : vector<64x32xf32>, vector<32x16xf32>, vector<64x16xf32> -> vector<64x16xf32>
    %c0_48 = arith.constant 0 : index
    %c0_49 = arith.constant 0 : index
    %c0_50 = arith.constant 0 : index
    %71 = vector.load %arg11[%c0_48, %c0_49, %c0_50] : memref<2x1x16xf32, #tpu.memory_space<vmem>>, vector<1x1x16xf32>
    %72 = vector.shape_cast %71 : vector<1x1x16xf32> to vector<1x16xf32>
    %73 = vector.broadcast %72 : vector<1x16xf32> to vector<64x16xf32>
    %74 = arith.addf %70, %73 : vector<64x16xf32>
    %c0_51 = arith.constant 0 : index
    %c0_52 = arith.constant 0 : index
    %c0_53 = arith.constant 0 : index
    %75 = vector.load %arg9[%c0_51, %c0_52, %c0_53] : memref<2x32x16xf32, #tpu.memory_space<vmem>>, vector<1x32x16xf32>
    %76 = vector.shape_cast %75 : vector<1x32x16xf32> to vector<32x16xf32>
    %cst_54 = arith.constant dense<0.000000e+00> : vector<64x16xf32>
    %77 = tpu.matmul %60, %76, %cst_54 {dimension_numbers = #tpu.dot_dimension_numbers<[1], [0], [0], [1], [0, 0, 1, 1], [], []>} : vector<64x32xf32>, vector<32x16xf32>, vector<64x16xf32> -> vector<64x16xf32>
    %c0_55 = arith.constant 0 : index
    %c0_56 = arith.constant 0 : index
    %c0_57 = arith.constant 0 : index
    %78 = vector.load %arg12[%c0_55, %c0_56, %c0_57] : memref<2x1x16xf32, #tpu.memory_space<vmem>>, vector<1x1x16xf32>
    %79 = vector.shape_cast %78 : vector<1x1x16xf32> to vector<1x16xf32>
    %80 = vector.broadcast %79 : vector<1x16xf32> to vector<64x16xf32>
    %81 = arith.addf %77, %80 : vector<64x16xf32>
    %cst_58 = arith.constant dense<0.000000e+00> : vector<64x64xf32>
    %82 = tpu.matmul %67, %74, %cst_58 {dimension_numbers = #tpu.dot_dimension_numbers<[1], [1], [0], [0], [0, 0, 1, 0], [], []>} : vector<64x16xf32>, vector<64x16xf32>, vector<64x64xf32> -> vector<64x64xf32>
    %c0_59 = arith.constant 0 : index
    %c0_60 = arith.constant 0 : index
    %c0_61 = arith.constant 0 : index
    %83 = vector.load %arg13[%c0_59, %c0_60, %c0_61] : memref<2x64x64xf32, #tpu.memory_space<vmem>>, vector<1x64x64xf32>
    %84 = vector.shape_cast %83 : vector<1x64x64xf32> to vector<64x64xf32>
    %85 = arith.addf %82, %84 : vector<64x64xf32>
    %cst_62 = arith.constant dense<0xFF800000> : vector<64xf32>
    %86 = vector.multi_reduction <maximumf>, %85, %cst_62 [1] : vector<64x64xf32> to vector<64xf32>
    %87 = vector.shape_cast %86 : vector<64xf32> to vector<64x1xf32>
    %88 = vector.broadcast %87 : vector<64x1xf32> to vector<64x64xf32>
    %89 = arith.subf %85, %88 : vector<64x64xf32>
    %90 = math.exp %89 : vector<64x64xf32>
    %cst_63 = arith.constant dense<0.000000e+00> : vector<64xf32>
    %91 = vector.multi_reduction <add>, %90, %cst_63 [1] : vector<64x64xf32> to vector<64xf32>
    %92 = vector.shape_cast %91 : vector<64xf32> to vector<64x1xf32>
    %93 = tpu.reciprocal %92 {approx = true} : vector<64x1xf32> -> vector<64x1xf32>
    %94 = vector.broadcast %93 : vector<64x1xf32> to vector<64x64xf32>
    %95 = arith.mulf %90, %94 : vector<64x64xf32>
    %cst_64 = arith.constant dense<0.000000e+00> : vector<64x16xf32>
    %96 = tpu.matmul %95, %81, %cst_64 {dimension_numbers = #tpu.dot_dimension_numbers<[1], [0], [0], [1], [0, 0, 1, 1], [], []>} : vector<64x64xf32>, vector<64x16xf32>, vector<64x16xf32> -> vector<64x16xf32>
    %c0_65 = arith.constant 0 : index
    %c0_66 = arith.constant 0 : index
    %c0_67 = arith.constant 0 : index
    %97 = vector.load %arg14[%c0_65, %c0_66, %c0_67] : memref<2x16x32xf32, #tpu.memory_space<vmem>>, vector<1x16x32xf32>
    %98 = vector.shape_cast %97 : vector<1x16x32xf32> to vector<16x32xf32>
    %cst_68 = arith.constant dense<0.000000e+00> : vector<64x32xf32>
    %99 = tpu.matmul %96, %98, %cst_68 {dimension_numbers = #tpu.dot_dimension_numbers<[1], [0], [0], [1], [0, 0, 1, 1], [], []>} : vector<64x16xf32>, vector<16x32xf32>, vector<64x32xf32> -> vector<64x32xf32>
    %100 = vector.broadcast %32 : vector<1x32xf32> to vector<64x32xf32>
    %101 = arith.addf %100, %99 : vector<64x32xf32>
    %c1 = arith.constant 1 : index
    %c0_69 = arith.constant 0 : index
    %c0_70 = arith.constant 0 : index
    %102 = vector.load %arg7[%c1, %c0_69, %c0_70] : memref<2x32x16xf32, #tpu.memory_space<vmem>>, vector<1x32x16xf32>
    %103 = vector.shape_cast %102 : vector<1x32x16xf32> to vector<32x16xf32>
    %cst_71 = arith.constant dense<0.000000e+00> : vector<64x16xf32>
    %104 = tpu.matmul %60, %103, %cst_71 {dimension_numbers = #tpu.dot_dimension_numbers<[1], [0], [0], [1], [0, 0, 1, 1], [], []>} : vector<64x32xf32>, vector<32x16xf32>, vector<64x16xf32> -> vector<64x16xf32>
    %c1_72 = arith.constant 1 : index
    %c0_73 = arith.constant 0 : index
    %c0_74 = arith.constant 0 : index
    %105 = vector.load %arg10[%c1_72, %c0_73, %c0_74] : memref<2x1x16xf32, #tpu.memory_space<vmem>>, vector<1x1x16xf32>
    %106 = vector.shape_cast %105 : vector<1x1x16xf32> to vector<1x16xf32>
    %107 = vector.broadcast %106 : vector<1x16xf32> to vector<64x16xf32>
    %108 = arith.addf %104, %107 : vector<64x16xf32>
    %c1_75 = arith.constant 1 : index
    %c0_76 = arith.constant 0 : index
    %c0_77 = arith.constant 0 : index
    %109 = vector.load %arg8[%c1_75, %c0_76, %c0_77] : memref<2x32x16xf32, #tpu.memory_space<vmem>>, vector<1x32x16xf32>
    %110 = vector.shape_cast %109 : vector<1x32x16xf32> to vector<32x16xf32>
    %cst_78 = arith.constant dense<0.000000e+00> : vector<64x16xf32>
    %111 = tpu.matmul %60, %110, %cst_78 {dimension_numbers = #tpu.dot_dimension_numbers<[1], [0], [0], [1], [0, 0, 1, 1], [], []>} : vector<64x32xf32>, vector<32x16xf32>, vector<64x16xf32> -> vector<64x16xf32>
    %c1_79 = arith.constant 1 : index
    %c0_80 = arith.constant 0 : index
    %c0_81 = arith.constant 0 : index
    %112 = vector.load %arg11[%c1_79, %c0_80, %c0_81] : memref<2x1x16xf32, #tpu.memory_space<vmem>>, vector<1x1x16xf32>
    %113 = vector.shape_cast %112 : vector<1x1x16xf32> to vector<1x16xf32>
    %114 = vector.broadcast %113 : vector<1x16xf32> to vector<64x16xf32>
    %115 = arith.addf %111, %114 : vector<64x16xf32>
    %c1_82 = arith.constant 1 : index
    %c0_83 = arith.constant 0 : index
    %c0_84 = arith.constant 0 : index
    %116 = vector.load %arg9[%c1_82, %c0_83, %c0_84] : memref<2x32x16xf32, #tpu.memory_space<vmem>>, vector<1x32x16xf32>
    %117 = vector.shape_cast %116 : vector<1x32x16xf32> to vector<32x16xf32>
    %cst_85 = arith.constant dense<0.000000e+00> : vector<64x16xf32>
    %118 = tpu.matmul %60, %117, %cst_85 {dimension_numbers = #tpu.dot_dimension_numbers<[1], [0], [0], [1], [0, 0, 1, 1], [], []>} : vector<64x32xf32>, vector<32x16xf32>, vector<64x16xf32> -> vector<64x16xf32>
    %c1_86 = arith.constant 1 : index
    %c0_87 = arith.constant 0 : index
    %c0_88 = arith.constant 0 : index
    %119 = vector.load %arg12[%c1_86, %c0_87, %c0_88] : memref<2x1x16xf32, #tpu.memory_space<vmem>>, vector<1x1x16xf32>
    %120 = vector.shape_cast %119 : vector<1x1x16xf32> to vector<1x16xf32>
    %121 = vector.broadcast %120 : vector<1x16xf32> to vector<64x16xf32>
    %122 = arith.addf %118, %121 : vector<64x16xf32>
    %cst_89 = arith.constant dense<0.000000e+00> : vector<64x64xf32>
    %123 = tpu.matmul %108, %115, %cst_89 {dimension_numbers = #tpu.dot_dimension_numbers<[1], [1], [0], [0], [0, 0, 1, 0], [], []>} : vector<64x16xf32>, vector<64x16xf32>, vector<64x64xf32> -> vector<64x64xf32>
    %c1_90 = arith.constant 1 : index
    %c0_91 = arith.constant 0 : index
    %c0_92 = arith.constant 0 : index
    %124 = vector.load %arg13[%c1_90, %c0_91, %c0_92] : memref<2x64x64xf32, #tpu.memory_space<vmem>>, vector<1x64x64xf32>
    %125 = vector.shape_cast %124 : vector<1x64x64xf32> to vector<64x64xf32>
    %126 = arith.addf %123, %125 : vector<64x64xf32>
    %cst_93 = arith.constant dense<0xFF800000> : vector<64xf32>
    %127 = vector.multi_reduction <maximumf>, %126, %cst_93 [1] : vector<64x64xf32> to vector<64xf32>
    %128 = vector.shape_cast %127 : vector<64xf32> to vector<64x1xf32>
    %129 = vector.broadcast %128 : vector<64x1xf32> to vector<64x64xf32>
    %130 = arith.subf %126, %129 : vector<64x64xf32>
    %131 = math.exp %130 : vector<64x64xf32>
    %cst_94 = arith.constant dense<0.000000e+00> : vector<64xf32>
    %132 = vector.multi_reduction <add>, %131, %cst_94 [1] : vector<64x64xf32> to vector<64xf32>
    %133 = vector.shape_cast %132 : vector<64xf32> to vector<64x1xf32>
    %134 = tpu.reciprocal %133 {approx = true} : vector<64x1xf32> -> vector<64x1xf32>
    %135 = vector.broadcast %134 : vector<64x1xf32> to vector<64x64xf32>
    %136 = arith.mulf %131, %135 : vector<64x64xf32>
    %cst_95 = arith.constant dense<0.000000e+00> : vector<64x16xf32>
    %137 = tpu.matmul %136, %122, %cst_95 {dimension_numbers = #tpu.dot_dimension_numbers<[1], [0], [0], [1], [0, 0, 1, 1], [], []>} : vector<64x64xf32>, vector<64x16xf32>, vector<64x16xf32> -> vector<64x16xf32>
    %c1_96 = arith.constant 1 : index
    %c0_97 = arith.constant 0 : index
    %c0_98 = arith.constant 0 : index
    %138 = vector.load %arg14[%c1_96, %c0_97, %c0_98] : memref<2x16x32xf32, #tpu.memory_space<vmem>>, vector<1x16x32xf32>
    %139 = vector.shape_cast %138 : vector<1x16x32xf32> to vector<16x32xf32>
    %cst_99 = arith.constant dense<0.000000e+00> : vector<64x32xf32>
    %140 = tpu.matmul %137, %139, %cst_99 {dimension_numbers = #tpu.dot_dimension_numbers<[1], [0], [0], [1], [0, 0, 1, 1], [], []>} : vector<64x16xf32>, vector<16x32xf32>, vector<64x32xf32> -> vector<64x32xf32>
    %141 = arith.addf %101, %140 : vector<64x32xf32>
    %142 = arith.addf %29, %141 : vector<64x32xf32>
    %cst_100 = arith.constant dense<0.000000e+00> : vector<64xf32>
    %143 = vector.multi_reduction <add>, %142, %cst_100 [1] : vector<64x32xf32> to vector<64xf32>
    %144 = vector.shape_cast %143 : vector<64xf32> to vector<64x1xf32>
    %cst_101 = arith.constant 3.200000e+01 : f32
    %145 = vector.broadcast %cst_101 : f32 to vector<64x1xf32>
    %146 = arith.divf %144, %145 : vector<64x1xf32>
    %147 = vector.broadcast %146 : vector<64x1xf32> to vector<64x32xf32>
    %148 = arith.subf %142, %147 : vector<64x32xf32>
    %149 = arith.mulf %148, %148 : vector<64x32xf32>
    %cst_102 = arith.constant dense<0.000000e+00> : vector<64xf32>
    %150 = vector.multi_reduction <add>, %149, %cst_102 [1] : vector<64x32xf32> to vector<64xf32>
    %151 = vector.shape_cast %150 : vector<64xf32> to vector<64x1xf32>
    %cst_103 = arith.constant 3.200000e+01 : f32
    %152 = vector.broadcast %cst_103 : f32 to vector<64x1xf32>
    %153 = arith.divf %151, %152 : vector<64x1xf32>
    %154 = vector.broadcast %146 : vector<64x1xf32> to vector<64x32xf32>
    %155 = arith.subf %142, %154 : vector<64x32xf32>
    %cst_104 = arith.constant 9.99999974E-6 : f32
    %156 = vector.broadcast %cst_104 : f32 to vector<64x1xf32>
    %157 = arith.addf %153, %156 : vector<64x1xf32>
    %158 = math.rsqrt %157 : vector<64x1xf32>
    %159 = vector.broadcast %158 : vector<64x1xf32> to vector<64x32xf32>
    %160 = arith.mulf %155, %159 : vector<64x32xf32>
    %161 = vector.broadcast %33 : vector<1x32xf32> to vector<64x32xf32>
    %162 = arith.mulf %160, %161 : vector<64x32xf32>
    %163 = vector.broadcast %34 : vector<1x32xf32> to vector<64x32xf32>
    %164 = arith.addf %162, %163 : vector<64x32xf32>
    %cst_105 = arith.constant dense<0.000000e+00> : vector<64x128xf32>
    %165 = tpu.matmul %164, %35, %cst_105 {dimension_numbers = #tpu.dot_dimension_numbers<[1], [0], [0], [1], [0, 0, 1, 1], [], []>} : vector<64x32xf32>, vector<32x128xf32>, vector<64x128xf32> -> vector<64x128xf32>
    %166 = vector.broadcast %36 : vector<1x128xf32> to vector<64x128xf32>
    %167 = arith.addf %165, %166 : vector<64x128xf32>
    %cst_106 = arith.constant 5.000000e-01 : f32
    %168 = vector.broadcast %cst_106 : f32 to vector<64x128xf32>
    %169 = arith.mulf %168, %167 : vector<64x128xf32>
    %cst_107 = arith.constant 4.471500e-02 : f32
    %170 = vector.broadcast %cst_107 : f32 to vector<64x128xf32>
    %171 = arith.mulf %170, %167 : vector<64x128xf32>
    %172 = arith.mulf %171, %167 : vector<64x128xf32>
    %173 = arith.mulf %172, %167 : vector<64x128xf32>
    %174 = arith.addf %167, %173 : vector<64x128xf32>
    %cst_108 = arith.constant 0.797884583 : f32
    %175 = vector.broadcast %cst_108 : f32 to vector<64x128xf32>
    %176 = arith.mulf %175, %174 : vector<64x128xf32>
    %177 = math.tanh %176 : vector<64x128xf32>
    %cst_109 = arith.constant 1.000000e+00 : f32
    %178 = vector.broadcast %cst_109 : f32 to vector<64x128xf32>
    %179 = arith.addf %178, %177 : vector<64x128xf32>
    %180 = arith.mulf %169, %179 : vector<64x128xf32>
    %cst_110 = arith.constant dense<0.000000e+00> : vector<64x32xf32>
    %181 = tpu.matmul %180, %37, %cst_110 {dimension_numbers = #tpu.dot_dimension_numbers<[1], [0], [0], [1], [0, 0, 1, 1], [], []>} : vector<64x128xf32>, vector<128x32xf32>, vector<64x32xf32> -> vector<64x32xf32>
    %182 = vector.broadcast %38 : vector<1x32xf32> to vector<64x32xf32>
    %183 = arith.addf %181, %182 : vector<64x32xf32>
    %184 = arith.addf %142, %183 : vector<64x32xf32>
    %c0_111 = arith.constant 0 : index
    %c0_112 = arith.constant 0 : index
    %185 = vector.load %arg22[%c0_111, %c0_112] : memref<1x32xf32, #tpu.memory_space<vmem>>, vector<1x32xf32>
    %c0_113 = arith.constant 0 : index
    %c0_114 = arith.constant 0 : index
    %186 = vector.load %arg23[%c0_113, %c0_114] : memref<1x32xf32, #tpu.memory_space<vmem>>, vector<1x32xf32>
    %c0_115 = arith.constant 0 : index
    %c0_116 = arith.constant 0 : index
    %187 = vector.load %arg32[%c0_115, %c0_116] : memref<1x32xf32, #tpu.memory_space<vmem>>, vector<1x32xf32>
    %c0_117 = arith.constant 0 : index
    %c0_118 = arith.constant 0 : index
    %188 = vector.load %arg33[%c0_117, %c0_118] : memref<1x32xf32, #tpu.memory_space<vmem>>, vector<1x32xf32>
    %c0_119 = arith.constant 0 : index
    %c0_120 = arith.constant 0 : index
    %189 = vector.load %arg34[%c0_119, %c0_120] : memref<1x32xf32, #tpu.memory_space<vmem>>, vector<1x32xf32>
    %c0_121 = arith.constant 0 : index
    %c0_122 = arith.constant 0 : index
    %190 = vector.load %arg35[%c0_121, %c0_122] : memref<32x128xf32, #tpu.memory_space<vmem>>, vector<32x128xf32>
    %c0_123 = arith.constant 0 : index
    %c0_124 = arith.constant 0 : index
    %191 = vector.load %arg36[%c0_123, %c0_124] : memref<1x128xf32, #tpu.memory_space<vmem>>, vector<1x128xf32>
    %c0_125 = arith.constant 0 : index
    %c0_126 = arith.constant 0 : index
    %192 = vector.load %arg37[%c0_125, %c0_126] : memref<128x32xf32, #tpu.memory_space<vmem>>, vector<128x32xf32>
    %c0_127 = arith.constant 0 : index
    %c0_128 = arith.constant 0 : index
    %193 = vector.load %arg38[%c0_127, %c0_128] : memref<1x32xf32, #tpu.memory_space<vmem>>, vector<1x32xf32>
    %cst_129 = arith.constant dense<0.000000e+00> : vector<64xf32>
    %194 = vector.multi_reduction <add>, %184, %cst_129 [1] : vector<64x32xf32> to vector<64xf32>
    %195 = vector.shape_cast %194 : vector<64xf32> to vector<64x1xf32>
    %cst_130 = arith.constant 3.200000e+01 : f32
    %196 = vector.broadcast %cst_130 : f32 to vector<64x1xf32>
    %197 = arith.divf %195, %196 : vector<64x1xf32>
    %198 = vector.broadcast %197 : vector<64x1xf32> to vector<64x32xf32>
    %199 = arith.subf %184, %198 : vector<64x32xf32>
    %200 = arith.mulf %199, %199 : vector<64x32xf32>
    %cst_131 = arith.constant dense<0.000000e+00> : vector<64xf32>
    %201 = vector.multi_reduction <add>, %200, %cst_131 [1] : vector<64x32xf32> to vector<64xf32>
    %202 = vector.shape_cast %201 : vector<64xf32> to vector<64x1xf32>
    %cst_132 = arith.constant 3.200000e+01 : f32
    %203 = vector.broadcast %cst_132 : f32 to vector<64x1xf32>
    %204 = arith.divf %202, %203 : vector<64x1xf32>
    %205 = vector.broadcast %197 : vector<64x1xf32> to vector<64x32xf32>
    %206 = arith.subf %184, %205 : vector<64x32xf32>
    %cst_133 = arith.constant 9.99999974E-6 : f32
    %207 = vector.broadcast %cst_133 : f32 to vector<64x1xf32>
    %208 = arith.addf %204, %207 : vector<64x1xf32>
    %209 = math.rsqrt %208 : vector<64x1xf32>
    %210 = vector.broadcast %209 : vector<64x1xf32> to vector<64x32xf32>
    %211 = arith.mulf %206, %210 : vector<64x32xf32>
    %212 = vector.broadcast %185 : vector<1x32xf32> to vector<64x32xf32>
    %213 = arith.mulf %211, %212 : vector<64x32xf32>
    %214 = vector.broadcast %186 : vector<1x32xf32> to vector<64x32xf32>
    %215 = arith.addf %213, %214 : vector<64x32xf32>
    %c0_134 = arith.constant 0 : index
    %c0_135 = arith.constant 0 : index
    %c0_136 = arith.constant 0 : index
    %216 = vector.load %arg24[%c0_134, %c0_135, %c0_136] : memref<2x32x16xf32, #tpu.memory_space<vmem>>, vector<1x32x16xf32>
    %217 = vector.shape_cast %216 : vector<1x32x16xf32> to vector<32x16xf32>
    %cst_137 = arith.constant dense<0.000000e+00> : vector<64x16xf32>
    %218 = tpu.matmul %215, %217, %cst_137 {dimension_numbers = #tpu.dot_dimension_numbers<[1], [0], [0], [1], [0, 0, 1, 1], [], []>} : vector<64x32xf32>, vector<32x16xf32>, vector<64x16xf32> -> vector<64x16xf32>
    %c0_138 = arith.constant 0 : index
    %c0_139 = arith.constant 0 : index
    %c0_140 = arith.constant 0 : index
    %219 = vector.load %arg27[%c0_138, %c0_139, %c0_140] : memref<2x1x16xf32, #tpu.memory_space<vmem>>, vector<1x1x16xf32>
    %220 = vector.shape_cast %219 : vector<1x1x16xf32> to vector<1x16xf32>
    %221 = vector.broadcast %220 : vector<1x16xf32> to vector<64x16xf32>
    %222 = arith.addf %218, %221 : vector<64x16xf32>
    %c0_141 = arith.constant 0 : index
    %c0_142 = arith.constant 0 : index
    %c0_143 = arith.constant 0 : index
    %223 = vector.load %arg25[%c0_141, %c0_142, %c0_143] : memref<2x32x16xf32, #tpu.memory_space<vmem>>, vector<1x32x16xf32>
    %224 = vector.shape_cast %223 : vector<1x32x16xf32> to vector<32x16xf32>
    %cst_144 = arith.constant dense<0.000000e+00> : vector<64x16xf32>
    %225 = tpu.matmul %215, %224, %cst_144 {dimension_numbers = #tpu.dot_dimension_numbers<[1], [0], [0], [1], [0, 0, 1, 1], [], []>} : vector<64x32xf32>, vector<32x16xf32>, vector<64x16xf32> -> vector<64x16xf32>
    %c0_145 = arith.constant 0 : index
    %c0_146 = arith.constant 0 : index
    %c0_147 = arith.constant 0 : index
    %226 = vector.load %arg28[%c0_145, %c0_146, %c0_147] : memref<2x1x16xf32, #tpu.memory_space<vmem>>, vector<1x1x16xf32>
    %227 = vector.shape_cast %226 : vector<1x1x16xf32> to vector<1x16xf32>
    %228 = vector.broadcast %227 : vector<1x16xf32> to vector<64x16xf32>
    %229 = arith.addf %225, %228 : vector<64x16xf32>
    %c0_148 = arith.constant 0 : index
    %c0_149 = arith.constant 0 : index
    %c0_150 = arith.constant 0 : index
    %230 = vector.load %arg26[%c0_148, %c0_149, %c0_150] : memref<2x32x16xf32, #tpu.memory_space<vmem>>, vector<1x32x16xf32>
    %231 = vector.shape_cast %230 : vector<1x32x16xf32> to vector<32x16xf32>
    %cst_151 = arith.constant dense<0.000000e+00> : vector<64x16xf32>
    %232 = tpu.matmul %215, %231, %cst_151 {dimension_numbers = #tpu.dot_dimension_numbers<[1], [0], [0], [1], [0, 0, 1, 1], [], []>} : vector<64x32xf32>, vector<32x16xf32>, vector<64x16xf32> -> vector<64x16xf32>
    %c0_152 = arith.constant 0 : index
    %c0_153 = arith.constant 0 : index
    %c0_154 = arith.constant 0 : index
    %233 = vector.load %arg29[%c0_152, %c0_153, %c0_154] : memref<2x1x16xf32, #tpu.memory_space<vmem>>, vector<1x1x16xf32>
    %234 = vector.shape_cast %233 : vector<1x1x16xf32> to vector<1x16xf32>
    %235 = vector.broadcast %234 : vector<1x16xf32> to vector<64x16xf32>
    %236 = arith.addf %232, %235 : vector<64x16xf32>
    %cst_155 = arith.constant dense<0.000000e+00> : vector<64x64xf32>
    %237 = tpu.matmul %222, %229, %cst_155 {dimension_numbers = #tpu.dot_dimension_numbers<[1], [1], [0], [0], [0, 0, 1, 0], [], []>} : vector<64x16xf32>, vector<64x16xf32>, vector<64x64xf32> -> vector<64x64xf32>
    %c0_156 = arith.constant 0 : index
    %c0_157 = arith.constant 0 : index
    %c0_158 = arith.constant 0 : index
    %238 = vector.load %arg30[%c0_156, %c0_157, %c0_158] : memref<2x64x64xf32, #tpu.memory_space<vmem>>, vector<1x64x64xf32>
    %239 = vector.shape_cast %238 : vector<1x64x64xf32> to vector<64x64xf32>
    %240 = arith.addf %237, %239 : vector<64x64xf32>
    %cst_159 = arith.constant dense<0xFF800000> : vector<64xf32>
    %241 = vector.multi_reduction <maximumf>, %240, %cst_159 [1] : vector<64x64xf32> to vector<64xf32>
    %242 = vector.shape_cast %241 : vector<64xf32> to vector<64x1xf32>
    %243 = vector.broadcast %242 : vector<64x1xf32> to vector<64x64xf32>
    %244 = arith.subf %240, %243 : vector<64x64xf32>
    %245 = math.exp %244 : vector<64x64xf32>
    %cst_160 = arith.constant dense<0.000000e+00> : vector<64xf32>
    %246 = vector.multi_reduction <add>, %245, %cst_160 [1] : vector<64x64xf32> to vector<64xf32>
    %247 = vector.shape_cast %246 : vector<64xf32> to vector<64x1xf32>
    %248 = tpu.reciprocal %247 {approx = true} : vector<64x1xf32> -> vector<64x1xf32>
    %249 = vector.broadcast %248 : vector<64x1xf32> to vector<64x64xf32>
    %250 = arith.mulf %245, %249 : vector<64x64xf32>
    %cst_161 = arith.constant dense<0.000000e+00> : vector<64x16xf32>
    %251 = tpu.matmul %250, %236, %cst_161 {dimension_numbers = #tpu.dot_dimension_numbers<[1], [0], [0], [1], [0, 0, 1, 1], [], []>} : vector<64x64xf32>, vector<64x16xf32>, vector<64x16xf32> -> vector<64x16xf32>
    %c0_162 = arith.constant 0 : index
    %c0_163 = arith.constant 0 : index
    %c0_164 = arith.constant 0 : index
    %252 = vector.load %arg31[%c0_162, %c0_163, %c0_164] : memref<2x16x32xf32, #tpu.memory_space<vmem>>, vector<1x16x32xf32>
    %253 = vector.shape_cast %252 : vector<1x16x32xf32> to vector<16x32xf32>
    %cst_165 = arith.constant dense<0.000000e+00> : vector<64x32xf32>
    %254 = tpu.matmul %251, %253, %cst_165 {dimension_numbers = #tpu.dot_dimension_numbers<[1], [0], [0], [1], [0, 0, 1, 1], [], []>} : vector<64x16xf32>, vector<16x32xf32>, vector<64x32xf32> -> vector<64x32xf32>
    %255 = vector.broadcast %187 : vector<1x32xf32> to vector<64x32xf32>
    %256 = arith.addf %255, %254 : vector<64x32xf32>
    %c1_166 = arith.constant 1 : index
    %c0_167 = arith.constant 0 : index
    %c0_168 = arith.constant 0 : index
    %257 = vector.load %arg24[%c1_166, %c0_167, %c0_168] : memref<2x32x16xf32, #tpu.memory_space<vmem>>, vector<1x32x16xf32>
    %258 = vector.shape_cast %257 : vector<1x32x16xf32> to vector<32x16xf32>
    %cst_169 = arith.constant dense<0.000000e+00> : vector<64x16xf32>
    %259 = tpu.matmul %215, %258, %cst_169 {dimension_numbers = #tpu.dot_dimension_numbers<[1], [0], [0], [1], [0, 0, 1, 1], [], []>} : vector<64x32xf32>, vector<32x16xf32>, vector<64x16xf32> -> vector<64x16xf32>
    %c1_170 = arith.constant 1 : index
    %c0_171 = arith.constant 0 : index
    %c0_172 = arith.constant 0 : index
    %260 = vector.load %arg27[%c1_170, %c0_171, %c0_172] : memref<2x1x16xf32, #tpu.memory_space<vmem>>, vector<1x1x16xf32>
    %261 = vector.shape_cast %260 : vector<1x1x16xf32> to vector<1x16xf32>
    %262 = vector.broadcast %261 : vector<1x16xf32> to vector<64x16xf32>
    %263 = arith.addf %259, %262 : vector<64x16xf32>
    %c1_173 = arith.constant 1 : index
    %c0_174 = arith.constant 0 : index
    %c0_175 = arith.constant 0 : index
    %264 = vector.load %arg25[%c1_173, %c0_174, %c0_175] : memref<2x32x16xf32, #tpu.memory_space<vmem>>, vector<1x32x16xf32>
    %265 = vector.shape_cast %264 : vector<1x32x16xf32> to vector<32x16xf32>
    %cst_176 = arith.constant dense<0.000000e+00> : vector<64x16xf32>
    %266 = tpu.matmul %215, %265, %cst_176 {dimension_numbers = #tpu.dot_dimension_numbers<[1], [0], [0], [1], [0, 0, 1, 1], [], []>} : vector<64x32xf32>, vector<32x16xf32>, vector<64x16xf32> -> vector<64x16xf32>
    %c1_177 = arith.constant 1 : index
    %c0_178 = arith.constant 0 : index
    %c0_179 = arith.constant 0 : index
    %267 = vector.load %arg28[%c1_177, %c0_178, %c0_179] : memref<2x1x16xf32, #tpu.memory_space<vmem>>, vector<1x1x16xf32>
    %268 = vector.shape_cast %267 : vector<1x1x16xf32> to vector<1x16xf32>
    %269 = vector.broadcast %268 : vector<1x16xf32> to vector<64x16xf32>
    %270 = arith.addf %266, %269 : vector<64x16xf32>
    %c1_180 = arith.constant 1 : index
    %c0_181 = arith.constant 0 : index
    %c0_182 = arith.constant 0 : index
    %271 = vector.load %arg26[%c1_180, %c0_181, %c0_182] : memref<2x32x16xf32, #tpu.memory_space<vmem>>, vector<1x32x16xf32>
    %272 = vector.shape_cast %271 : vector<1x32x16xf32> to vector<32x16xf32>
    %cst_183 = arith.constant dense<0.000000e+00> : vector<64x16xf32>
    %273 = tpu.matmul %215, %272, %cst_183 {dimension_numbers = #tpu.dot_dimension_numbers<[1], [0], [0], [1], [0, 0, 1, 1], [], []>} : vector<64x32xf32>, vector<32x16xf32>, vector<64x16xf32> -> vector<64x16xf32>
    %c1_184 = arith.constant 1 : index
    %c0_185 = arith.constant 0 : index
    %c0_186 = arith.constant 0 : index
    %274 = vector.load %arg29[%c1_184, %c0_185, %c0_186] : memref<2x1x16xf32, #tpu.memory_space<vmem>>, vector<1x1x16xf32>
    %275 = vector.shape_cast %274 : vector<1x1x16xf32> to vector<1x16xf32>
    %276 = vector.broadcast %275 : vector<1x16xf32> to vector<64x16xf32>
    %277 = arith.addf %273, %276 : vector<64x16xf32>
    %cst_187 = arith.constant dense<0.000000e+00> : vector<64x64xf32>
    %278 = tpu.matmul %263, %270, %cst_187 {dimension_numbers = #tpu.dot_dimension_numbers<[1], [1], [0], [0], [0, 0, 1, 0], [], []>} : vector<64x16xf32>, vector<64x16xf32>, vector<64x64xf32> -> vector<64x64xf32>
    %c1_188 = arith.constant 1 : index
    %c0_189 = arith.constant 0 : index
    %c0_190 = arith.constant 0 : index
    %279 = vector.load %arg30[%c1_188, %c0_189, %c0_190] : memref<2x64x64xf32, #tpu.memory_space<vmem>>, vector<1x64x64xf32>
    %280 = vector.shape_cast %279 : vector<1x64x64xf32> to vector<64x64xf32>
    %281 = arith.addf %278, %280 : vector<64x64xf32>
    %cst_191 = arith.constant dense<0xFF800000> : vector<64xf32>
    %282 = vector.multi_reduction <maximumf>, %281, %cst_191 [1] : vector<64x64xf32> to vector<64xf32>
    %283 = vector.shape_cast %282 : vector<64xf32> to vector<64x1xf32>
    %284 = vector.broadcast %283 : vector<64x1xf32> to vector<64x64xf32>
    %285 = arith.subf %281, %284 : vector<64x64xf32>
    %286 = math.exp %285 : vector<64x64xf32>
    %cst_192 = arith.constant dense<0.000000e+00> : vector<64xf32>
    %287 = vector.multi_reduction <add>, %286, %cst_192 [1] : vector<64x64xf32> to vector<64xf32>
    %288 = vector.shape_cast %287 : vector<64xf32> to vector<64x1xf32>
    %289 = tpu.reciprocal %288 {approx = true} : vector<64x1xf32> -> vector<64x1xf32>
    %290 = vector.broadcast %289 : vector<64x1xf32> to vector<64x64xf32>
    %291 = arith.mulf %286, %290 : vector<64x64xf32>
    %cst_193 = arith.constant dense<0.000000e+00> : vector<64x16xf32>
    %292 = tpu.matmul %291, %277, %cst_193 {dimension_numbers = #tpu.dot_dimension_numbers<[1], [0], [0], [1], [0, 0, 1, 1], [], []>} : vector<64x64xf32>, vector<64x16xf32>, vector<64x16xf32> -> vector<64x16xf32>
    %c1_194 = arith.constant 1 : index
    %c0_195 = arith.constant 0 : index
    %c0_196 = arith.constant 0 : index
    %293 = vector.load %arg31[%c1_194, %c0_195, %c0_196] : memref<2x16x32xf32, #tpu.memory_space<vmem>>, vector<1x16x32xf32>
    %294 = vector.shape_cast %293 : vector<1x16x32xf32> to vector<16x32xf32>
    %cst_197 = arith.constant dense<0.000000e+00> : vector<64x32xf32>
    %295 = tpu.matmul %292, %294, %cst_197 {dimension_numbers = #tpu.dot_dimension_numbers<[1], [0], [0], [1], [0, 0, 1, 1], [], []>} : vector<64x16xf32>, vector<16x32xf32>, vector<64x32xf32> -> vector<64x32xf32>
    %296 = arith.addf %256, %295 : vector<64x32xf32>
    %297 = arith.addf %184, %296 : vector<64x32xf32>
    %cst_198 = arith.constant dense<0.000000e+00> : vector<64xf32>
    %298 = vector.multi_reduction <add>, %297, %cst_198 [1] : vector<64x32xf32> to vector<64xf32>
    %299 = vector.shape_cast %298 : vector<64xf32> to vector<64x1xf32>
    %cst_199 = arith.constant 3.200000e+01 : f32
    %300 = vector.broadcast %cst_199 : f32 to vector<64x1xf32>
    %301 = arith.divf %299, %300 : vector<64x1xf32>
    %302 = vector.broadcast %301 : vector<64x1xf32> to vector<64x32xf32>
    %303 = arith.subf %297, %302 : vector<64x32xf32>
    %304 = arith.mulf %303, %303 : vector<64x32xf32>
    %cst_200 = arith.constant dense<0.000000e+00> : vector<64xf32>
    %305 = vector.multi_reduction <add>, %304, %cst_200 [1] : vector<64x32xf32> to vector<64xf32>
    %306 = vector.shape_cast %305 : vector<64xf32> to vector<64x1xf32>
    %cst_201 = arith.constant 3.200000e+01 : f32
    %307 = vector.broadcast %cst_201 : f32 to vector<64x1xf32>
    %308 = arith.divf %306, %307 : vector<64x1xf32>
    %309 = vector.broadcast %301 : vector<64x1xf32> to vector<64x32xf32>
    %310 = arith.subf %297, %309 : vector<64x32xf32>
    %cst_202 = arith.constant 9.99999974E-6 : f32
    %311 = vector.broadcast %cst_202 : f32 to vector<64x1xf32>
    %312 = arith.addf %308, %311 : vector<64x1xf32>
    %313 = math.rsqrt %312 : vector<64x1xf32>
    %314 = vector.broadcast %313 : vector<64x1xf32> to vector<64x32xf32>
    %315 = arith.mulf %310, %314 : vector<64x32xf32>
    %316 = vector.broadcast %188 : vector<1x32xf32> to vector<64x32xf32>
    %317 = arith.mulf %315, %316 : vector<64x32xf32>
    %318 = vector.broadcast %189 : vector<1x32xf32> to vector<64x32xf32>
    %319 = arith.addf %317, %318 : vector<64x32xf32>
    %cst_203 = arith.constant dense<0.000000e+00> : vector<64x128xf32>
    %320 = tpu.matmul %319, %190, %cst_203 {dimension_numbers = #tpu.dot_dimension_numbers<[1], [0], [0], [1], [0, 0, 1, 1], [], []>} : vector<64x32xf32>, vector<32x128xf32>, vector<64x128xf32> -> vector<64x128xf32>
    %321 = vector.broadcast %191 : vector<1x128xf32> to vector<64x128xf32>
    %322 = arith.addf %320, %321 : vector<64x128xf32>
    %cst_204 = arith.constant 5.000000e-01 : f32
    %323 = vector.broadcast %cst_204 : f32 to vector<64x128xf32>
    %324 = arith.mulf %323, %322 : vector<64x128xf32>
    %cst_205 = arith.constant 4.471500e-02 : f32
    %325 = vector.broadcast %cst_205 : f32 to vector<64x128xf32>
    %326 = arith.mulf %325, %322 : vector<64x128xf32>
    %327 = arith.mulf %326, %322 : vector<64x128xf32>
    %328 = arith.mulf %327, %322 : vector<64x128xf32>
    %329 = arith.addf %322, %328 : vector<64x128xf32>
    %cst_206 = arith.constant 0.797884583 : f32
    %330 = vector.broadcast %cst_206 : f32 to vector<64x128xf32>
    %331 = arith.mulf %330, %329 : vector<64x128xf32>
    %332 = math.tanh %331 : vector<64x128xf32>
    %cst_207 = arith.constant 1.000000e+00 : f32
    %333 = vector.broadcast %cst_207 : f32 to vector<64x128xf32>
    %334 = arith.addf %333, %332 : vector<64x128xf32>
    %335 = arith.mulf %324, %334 : vector<64x128xf32>
    %cst_208 = arith.constant dense<0.000000e+00> : vector<64x32xf32>
    %336 = tpu.matmul %335, %192, %cst_208 {dimension_numbers = #tpu.dot_dimension_numbers<[1], [0], [0], [1], [0, 0, 1, 1], [], []>} : vector<64x128xf32>, vector<128x32xf32>, vector<64x32xf32> -> vector<64x32xf32>
    %337 = vector.broadcast %193 : vector<1x32xf32> to vector<64x32xf32>
    %338 = arith.addf %336, %337 : vector<64x32xf32>
    %339 = arith.addf %297, %338 : vector<64x32xf32>
    %c0_209 = arith.constant 0 : index
    %c0_210 = arith.constant 0 : index
    %340 = vector.load %arg43[%c0_209, %c0_210] : memref<1x64xf32, #tpu.memory_space<vmem>>, vector<1x64xf32>
    %c0_211 = arith.constant 0 : index
    %c0_212 = arith.constant 0 : index
    %c0_213 = arith.constant 0 : index
    %341 = vector.load %arg39[%c0_211, %c0_212, %c0_213] : memref<4x16x64xf32, #tpu.memory_space<vmem>>, vector<1x16x64xf32>
    %342 = vector.shape_cast %341 : vector<1x16x64xf32> to vector<16x64xf32>
    %cst_214 = arith.constant dense<0.000000e+00> : vector<16x32xf32>
    %343 = tpu.matmul %342, %339, %cst_214 {dimension_numbers = #tpu.dot_dimension_numbers<[1], [0], [0], [1], [0, 0, 1, 1], [], []>} : vector<16x64xf32>, vector<64x32xf32>, vector<16x32xf32> -> vector<16x32xf32>
    %c1_215 = arith.constant 1 : index
    %c0_216 = arith.constant 0 : index
    %c0_217 = arith.constant 0 : index
    %344 = vector.load %arg39[%c1_215, %c0_216, %c0_217] : memref<4x16x64xf32, #tpu.memory_space<vmem>>, vector<1x16x64xf32>
    %345 = vector.shape_cast %344 : vector<1x16x64xf32> to vector<16x64xf32>
    %cst_218 = arith.constant dense<0.000000e+00> : vector<16x32xf32>
    %346 = tpu.matmul %345, %339, %cst_218 {dimension_numbers = #tpu.dot_dimension_numbers<[1], [0], [0], [1], [0, 0, 1, 1], [], []>} : vector<16x64xf32>, vector<64x32xf32>, vector<16x32xf32> -> vector<16x32xf32>
    %c2 = arith.constant 2 : index
    %c0_219 = arith.constant 0 : index
    %c0_220 = arith.constant 0 : index
    %347 = vector.load %arg39[%c2, %c0_219, %c0_220] : memref<4x16x64xf32, #tpu.memory_space<vmem>>, vector<1x16x64xf32>
    %348 = vector.shape_cast %347 : vector<1x16x64xf32> to vector<16x64xf32>
    %cst_221 = arith.constant dense<0.000000e+00> : vector<16x32xf32>
    %349 = tpu.matmul %348, %339, %cst_221 {dimension_numbers = #tpu.dot_dimension_numbers<[1], [0], [0], [1], [0, 0, 1, 1], [], []>} : vector<16x64xf32>, vector<64x32xf32>, vector<16x32xf32> -> vector<16x32xf32>
    %c3 = arith.constant 3 : index
    %c0_222 = arith.constant 0 : index
    %c0_223 = arith.constant 0 : index
    %350 = vector.load %arg39[%c3, %c0_222, %c0_223] : memref<4x16x64xf32, #tpu.memory_space<vmem>>, vector<1x16x64xf32>
    %351 = vector.shape_cast %350 : vector<1x16x64xf32> to vector<16x64xf32>
    %cst_224 = arith.constant dense<0.000000e+00> : vector<16x32xf32>
    %352 = tpu.matmul %351, %339, %cst_224 {dimension_numbers = #tpu.dot_dimension_numbers<[1], [0], [0], [1], [0, 0, 1, 1], [], []>} : vector<16x64xf32>, vector<64x32xf32>, vector<16x32xf32> -> vector<16x32xf32>
    %cst_225 = arith.constant dense<0.000000e+00> : vector<16xf32>
    %353 = vector.multi_reduction <add>, %343, %cst_225 [1] : vector<16x32xf32> to vector<16xf32>
    %354 = vector.shape_cast %353 : vector<16xf32> to vector<16x1xf32>
    %cst_226 = arith.constant 0.000000e+00 : f32
    %355 = vector.broadcast %cst_226 : f32 to vector<16x1xf32>
    %356 = arith.addf %355, %354 : vector<16x1xf32>
    %cst_227 = arith.constant dense<0.000000e+00> : vector<16xf32>
    %357 = vector.multi_reduction <add>, %346, %cst_227 [1] : vector<16x32xf32> to vector<16xf32>
    %358 = vector.shape_cast %357 : vector<16xf32> to vector<16x1xf32>
    %359 = arith.addf %356, %358 : vector<16x1xf32>
    %cst_228 = arith.constant dense<0.000000e+00> : vector<16xf32>
    %360 = vector.multi_reduction <add>, %349, %cst_228 [1] : vector<16x32xf32> to vector<16xf32>
    %361 = vector.shape_cast %360 : vector<16xf32> to vector<16x1xf32>
    %362 = arith.addf %359, %361 : vector<16x1xf32>
    %cst_229 = arith.constant dense<0.000000e+00> : vector<16xf32>
    %363 = vector.multi_reduction <add>, %352, %cst_229 [1] : vector<16x32xf32> to vector<16xf32>
    %364 = vector.shape_cast %363 : vector<16xf32> to vector<16x1xf32>
    %365 = arith.addf %362, %364 : vector<16x1xf32>
    %cst_230 = arith.constant 1.280000e+02 : f32
    %366 = vector.broadcast %cst_230 : f32 to vector<16x1xf32>
    %367 = arith.divf %365, %366 : vector<16x1xf32>
    %368 = vector.broadcast %367 : vector<16x1xf32> to vector<16x32xf32>
    %369 = arith.subf %343, %368 : vector<16x32xf32>
    %370 = arith.mulf %369, %369 : vector<16x32xf32>
    %cst_231 = arith.constant dense<0.000000e+00> : vector<16xf32>
    %371 = vector.multi_reduction <add>, %370, %cst_231 [1] : vector<16x32xf32> to vector<16xf32>
    %372 = vector.shape_cast %371 : vector<16xf32> to vector<16x1xf32>
    %cst_232 = arith.constant 0.000000e+00 : f32
    %373 = vector.broadcast %cst_232 : f32 to vector<16x1xf32>
    %374 = arith.addf %373, %372 : vector<16x1xf32>
    %375 = vector.broadcast %367 : vector<16x1xf32> to vector<16x32xf32>
    %376 = arith.subf %346, %375 : vector<16x32xf32>
    %377 = arith.mulf %376, %376 : vector<16x32xf32>
    %cst_233 = arith.constant dense<0.000000e+00> : vector<16xf32>
    %378 = vector.multi_reduction <add>, %377, %cst_233 [1] : vector<16x32xf32> to vector<16xf32>
    %379 = vector.shape_cast %378 : vector<16xf32> to vector<16x1xf32>
    %380 = arith.addf %374, %379 : vector<16x1xf32>
    %381 = vector.broadcast %367 : vector<16x1xf32> to vector<16x32xf32>
    %382 = arith.subf %349, %381 : vector<16x32xf32>
    %383 = arith.mulf %382, %382 : vector<16x32xf32>
    %cst_234 = arith.constant dense<0.000000e+00> : vector<16xf32>
    %384 = vector.multi_reduction <add>, %383, %cst_234 [1] : vector<16x32xf32> to vector<16xf32>
    %385 = vector.shape_cast %384 : vector<16xf32> to vector<16x1xf32>
    %386 = arith.addf %380, %385 : vector<16x1xf32>
    %387 = vector.broadcast %367 : vector<16x1xf32> to vector<16x32xf32>
    %388 = arith.subf %352, %387 : vector<16x32xf32>
    %389 = arith.mulf %388, %388 : vector<16x32xf32>
    %cst_235 = arith.constant dense<0.000000e+00> : vector<16xf32>
    %390 = vector.multi_reduction <add>, %389, %cst_235 [1] : vector<16x32xf32> to vector<16xf32>
    %391 = vector.shape_cast %390 : vector<16xf32> to vector<16x1xf32>
    %392 = arith.addf %386, %391 : vector<16x1xf32>
    %cst_236 = arith.constant 1.280000e+02 : f32
    %393 = vector.broadcast %cst_236 : f32 to vector<16x1xf32>
    %394 = arith.divf %392, %393 : vector<16x1xf32>
    %cst_237 = arith.constant 9.99999974E-6 : f32
    %395 = vector.broadcast %cst_237 : f32 to vector<16x1xf32>
    %396 = arith.addf %394, %395 : vector<16x1xf32>
    %397 = math.rsqrt %396 : vector<16x1xf32>
    %398 = vector.broadcast %367 : vector<16x1xf32> to vector<16x32xf32>
    %399 = arith.subf %343, %398 : vector<16x32xf32>
    %400 = vector.broadcast %397 : vector<16x1xf32> to vector<16x32xf32>
    %401 = arith.mulf %399, %400 : vector<16x32xf32>
    %c0_238 = arith.constant 0 : index
    %c0_239 = arith.constant 0 : index
    %c0_240 = arith.constant 0 : index
    %402 = vector.load %arg40[%c0_238, %c0_239, %c0_240] : memref<4x1x32xf32, #tpu.memory_space<vmem>>, vector<1x1x32xf32>
    %403 = vector.shape_cast %402 : vector<1x1x32xf32> to vector<1x32xf32>
    %404 = vector.broadcast %403 : vector<1x32xf32> to vector<16x32xf32>
    %405 = arith.mulf %401, %404 : vector<16x32xf32>
    %c0_241 = arith.constant 0 : index
    %c0_242 = arith.constant 0 : index
    %c0_243 = arith.constant 0 : index
    %406 = vector.load %arg41[%c0_241, %c0_242, %c0_243] : memref<4x1x32xf32, #tpu.memory_space<vmem>>, vector<1x1x32xf32>
    %407 = vector.shape_cast %406 : vector<1x1x32xf32> to vector<1x32xf32>
    %408 = vector.broadcast %407 : vector<1x32xf32> to vector<16x32xf32>
    %409 = arith.addf %405, %408 : vector<16x32xf32>
    %c0_244 = arith.constant 0 : index
    %c0_245 = arith.constant 0 : index
    %c0_246 = arith.constant 0 : index
    %410 = vector.load %arg42[%c0_244, %c0_245, %c0_246] : memref<4x32x64xf32, #tpu.memory_space<vmem>>, vector<1x32x64xf32>
    %411 = vector.shape_cast %410 : vector<1x32x64xf32> to vector<32x64xf32>
    %cst_247 = arith.constant dense<0.000000e+00> : vector<16x64xf32>
    %412 = tpu.matmul %409, %411, %cst_247 {dimension_numbers = #tpu.dot_dimension_numbers<[1], [0], [0], [1], [0, 0, 1, 1], [], []>} : vector<16x32xf32>, vector<32x64xf32>, vector<16x64xf32> -> vector<16x64xf32>
    %413 = vector.broadcast %340 : vector<1x64xf32> to vector<16x64xf32>
    %414 = arith.addf %413, %412 : vector<16x64xf32>
    %415 = vector.broadcast %367 : vector<16x1xf32> to vector<16x32xf32>
    %416 = arith.subf %346, %415 : vector<16x32xf32>
    %417 = vector.broadcast %397 : vector<16x1xf32> to vector<16x32xf32>
    %418 = arith.mulf %416, %417 : vector<16x32xf32>
    %c1_248 = arith.constant 1 : index
    %c0_249 = arith.constant 0 : index
    %c0_250 = arith.constant 0 : index
    %419 = vector.load %arg40[%c1_248, %c0_249, %c0_250] : memref<4x1x32xf32, #tpu.memory_space<vmem>>, vector<1x1x32xf32>
    %420 = vector.shape_cast %419 : vector<1x1x32xf32> to vector<1x32xf32>
    %421 = vector.broadcast %420 : vector<1x32xf32> to vector<16x32xf32>
    %422 = arith.mulf %418, %421 : vector<16x32xf32>
    %c1_251 = arith.constant 1 : index
    %c0_252 = arith.constant 0 : index
    %c0_253 = arith.constant 0 : index
    %423 = vector.load %arg41[%c1_251, %c0_252, %c0_253] : memref<4x1x32xf32, #tpu.memory_space<vmem>>, vector<1x1x32xf32>
    %424 = vector.shape_cast %423 : vector<1x1x32xf32> to vector<1x32xf32>
    %425 = vector.broadcast %424 : vector<1x32xf32> to vector<16x32xf32>
    %426 = arith.addf %422, %425 : vector<16x32xf32>
    %c1_254 = arith.constant 1 : index
    %c0_255 = arith.constant 0 : index
    %c0_256 = arith.constant 0 : index
    %427 = vector.load %arg42[%c1_254, %c0_255, %c0_256] : memref<4x32x64xf32, #tpu.memory_space<vmem>>, vector<1x32x64xf32>
    %428 = vector.shape_cast %427 : vector<1x32x64xf32> to vector<32x64xf32>
    %cst_257 = arith.constant dense<0.000000e+00> : vector<16x64xf32>
    %429 = tpu.matmul %426, %428, %cst_257 {dimension_numbers = #tpu.dot_dimension_numbers<[1], [0], [0], [1], [0, 0, 1, 1], [], []>} : vector<16x32xf32>, vector<32x64xf32>, vector<16x64xf32> -> vector<16x64xf32>
    %430 = arith.addf %414, %429 : vector<16x64xf32>
    %431 = vector.broadcast %367 : vector<16x1xf32> to vector<16x32xf32>
    %432 = arith.subf %349, %431 : vector<16x32xf32>
    %433 = vector.broadcast %397 : vector<16x1xf32> to vector<16x32xf32>
    %434 = arith.mulf %432, %433 : vector<16x32xf32>
    %c2_258 = arith.constant 2 : index
    %c0_259 = arith.constant 0 : index
    %c0_260 = arith.constant 0 : index
    %435 = vector.load %arg40[%c2_258, %c0_259, %c0_260] : memref<4x1x32xf32, #tpu.memory_space<vmem>>, vector<1x1x32xf32>
    %436 = vector.shape_cast %435 : vector<1x1x32xf32> to vector<1x32xf32>
    %437 = vector.broadcast %436 : vector<1x32xf32> to vector<16x32xf32>
    %438 = arith.mulf %434, %437 : vector<16x32xf32>
    %c2_261 = arith.constant 2 : index
    %c0_262 = arith.constant 0 : index
    %c0_263 = arith.constant 0 : index
    %439 = vector.load %arg41[%c2_261, %c0_262, %c0_263] : memref<4x1x32xf32, #tpu.memory_space<vmem>>, vector<1x1x32xf32>
    %440 = vector.shape_cast %439 : vector<1x1x32xf32> to vector<1x32xf32>
    %441 = vector.broadcast %440 : vector<1x32xf32> to vector<16x32xf32>
    %442 = arith.addf %438, %441 : vector<16x32xf32>
    %c2_264 = arith.constant 2 : index
    %c0_265 = arith.constant 0 : index
    %c0_266 = arith.constant 0 : index
    %443 = vector.load %arg42[%c2_264, %c0_265, %c0_266] : memref<4x32x64xf32, #tpu.memory_space<vmem>>, vector<1x32x64xf32>
    %444 = vector.shape_cast %443 : vector<1x32x64xf32> to vector<32x64xf32>
    %cst_267 = arith.constant dense<0.000000e+00> : vector<16x64xf32>
    %445 = tpu.matmul %442, %444, %cst_267 {dimension_numbers = #tpu.dot_dimension_numbers<[1], [0], [0], [1], [0, 0, 1, 1], [], []>} : vector<16x32xf32>, vector<32x64xf32>, vector<16x64xf32> -> vector<16x64xf32>
    %446 = arith.addf %430, %445 : vector<16x64xf32>
    %447 = vector.broadcast %367 : vector<16x1xf32> to vector<16x32xf32>
    %448 = arith.subf %352, %447 : vector<16x32xf32>
    %449 = vector.broadcast %397 : vector<16x1xf32> to vector<16x32xf32>
    %450 = arith.mulf %448, %449 : vector<16x32xf32>
    %c3_268 = arith.constant 3 : index
    %c0_269 = arith.constant 0 : index
    %c0_270 = arith.constant 0 : index
    %451 = vector.load %arg40[%c3_268, %c0_269, %c0_270] : memref<4x1x32xf32, #tpu.memory_space<vmem>>, vector<1x1x32xf32>
    %452 = vector.shape_cast %451 : vector<1x1x32xf32> to vector<1x32xf32>
    %453 = vector.broadcast %452 : vector<1x32xf32> to vector<16x32xf32>
    %454 = arith.mulf %450, %453 : vector<16x32xf32>
    %c3_271 = arith.constant 3 : index
    %c0_272 = arith.constant 0 : index
    %c0_273 = arith.constant 0 : index
    %455 = vector.load %arg41[%c3_271, %c0_272, %c0_273] : memref<4x1x32xf32, #tpu.memory_space<vmem>>, vector<1x1x32xf32>
    %456 = vector.shape_cast %455 : vector<1x1x32xf32> to vector<1x32xf32>
    %457 = vector.broadcast %456 : vector<1x32xf32> to vector<16x32xf32>
    %458 = arith.addf %454, %457 : vector<16x32xf32>
    %c3_274 = arith.constant 3 : index
    %c0_275 = arith.constant 0 : index
    %c0_276 = arith.constant 0 : index
    %459 = vector.load %arg42[%c3_274, %c0_275, %c0_276] : memref<4x32x64xf32, #tpu.memory_space<vmem>>, vector<1x32x64xf32>
    %460 = vector.shape_cast %459 : vector<1x32x64xf32> to vector<32x64xf32>
    %cst_277 = arith.constant dense<0.000000e+00> : vector<16x64xf32>
    %461 = tpu.matmul %458, %460, %cst_277 {dimension_numbers = #tpu.dot_dimension_numbers<[1], [0], [0], [1], [0, 0, 1, 1], [], []>} : vector<16x32xf32>, vector<32x64xf32>, vector<16x64xf32> -> vector<16x64xf32>
    %462 = arith.addf %446, %461 : vector<16x64xf32>
    %c0_278 = arith.constant 0 : index
    %c0_279 = arith.constant 0 : index
    %463 = vector.load %arg44[%c0_278, %c0_279] : memref<1x64xf32, #tpu.memory_space<vmem>>, vector<1x64xf32>
    %c0_280 = arith.constant 0 : index
    %c0_281 = arith.constant 0 : index
    %464 = vector.load %arg45[%c0_280, %c0_281] : memref<1x64xf32, #tpu.memory_space<vmem>>, vector<1x64xf32>
    %c0_282 = arith.constant 0 : index
    %c0_283 = arith.constant 0 : index
    %465 = vector.load %arg54[%c0_282, %c0_283] : memref<1x64xf32, #tpu.memory_space<vmem>>, vector<1x64xf32>
    %c0_284 = arith.constant 0 : index
    %c0_285 = arith.constant 0 : index
    %466 = vector.load %arg55[%c0_284, %c0_285] : memref<1x64xf32, #tpu.memory_space<vmem>>, vector<1x64xf32>
    %c0_286 = arith.constant 0 : index
    %c0_287 = arith.constant 0 : index
    %467 = vector.load %arg56[%c0_286, %c0_287] : memref<1x64xf32, #tpu.memory_space<vmem>>, vector<1x64xf32>
    %c0_288 = arith.constant 0 : index
    %c0_289 = arith.constant 0 : index
    %468 = vector.load %arg57[%c0_288, %c0_289] : memref<64x256xf32, #tpu.memory_space<vmem>>, vector<64x256xf32>
    %c0_290 = arith.constant 0 : index
    %c0_291 = arith.constant 0 : index
    %469 = vector.load %arg58[%c0_290, %c0_291] : memref<1x256xf32, #tpu.memory_space<vmem>>, vector<1x256xf32>
    %c0_292 = arith.constant 0 : index
    %c0_293 = arith.constant 0 : index
    %470 = vector.load %arg59[%c0_292, %c0_293] : memref<256x64xf32, #tpu.memory_space<vmem>>, vector<256x64xf32>
    %c0_294 = arith.constant 0 : index
    %c0_295 = arith.constant 0 : index
    %471 = vector.load %arg60[%c0_294, %c0_295] : memref<1x64xf32, #tpu.memory_space<vmem>>, vector<1x64xf32>
    %cst_296 = arith.constant dense<0.000000e+00> : vector<16xf32>
    %472 = vector.multi_reduction <add>, %462, %cst_296 [1] : vector<16x64xf32> to vector<16xf32>
    %473 = vector.shape_cast %472 : vector<16xf32> to vector<16x1xf32>
    %cst_297 = arith.constant 6.400000e+01 : f32
    %474 = vector.broadcast %cst_297 : f32 to vector<16x1xf32>
    %475 = arith.divf %473, %474 : vector<16x1xf32>
    %476 = vector.broadcast %475 : vector<16x1xf32> to vector<16x64xf32>
    %477 = arith.subf %462, %476 : vector<16x64xf32>
    %478 = arith.mulf %477, %477 : vector<16x64xf32>
    %cst_298 = arith.constant dense<0.000000e+00> : vector<16xf32>
    %479 = vector.multi_reduction <add>, %478, %cst_298 [1] : vector<16x64xf32> to vector<16xf32>
    %480 = vector.shape_cast %479 : vector<16xf32> to vector<16x1xf32>
    %cst_299 = arith.constant 6.400000e+01 : f32
    %481 = vector.broadcast %cst_299 : f32 to vector<16x1xf32>
    %482 = arith.divf %480, %481 : vector<16x1xf32>
    %483 = vector.broadcast %475 : vector<16x1xf32> to vector<16x64xf32>
    %484 = arith.subf %462, %483 : vector<16x64xf32>
    %cst_300 = arith.constant 9.99999974E-6 : f32
    %485 = vector.broadcast %cst_300 : f32 to vector<16x1xf32>
    %486 = arith.addf %482, %485 : vector<16x1xf32>
    %487 = math.rsqrt %486 : vector<16x1xf32>
    %488 = vector.broadcast %487 : vector<16x1xf32> to vector<16x64xf32>
    %489 = arith.mulf %484, %488 : vector<16x64xf32>
    %490 = vector.broadcast %463 : vector<1x64xf32> to vector<16x64xf32>
    %491 = arith.mulf %489, %490 : vector<16x64xf32>
    %492 = vector.broadcast %464 : vector<1x64xf32> to vector<16x64xf32>
    %493 = arith.addf %491, %492 : vector<16x64xf32>
    %c0_301 = arith.constant 0 : index
    %c0_302 = arith.constant 0 : index
    %c0_303 = arith.constant 0 : index
    %494 = vector.load %arg46[%c0_301, %c0_302, %c0_303] : memref<4x64x16xf32, #tpu.memory_space<vmem>>, vector<1x64x16xf32>
    %495 = vector.shape_cast %494 : vector<1x64x16xf32> to vector<64x16xf32>
    %cst_304 = arith.constant dense<0.000000e+00> : vector<16x16xf32>
    %496 = tpu.matmul %493, %495, %cst_304 {dimension_numbers = #tpu.dot_dimension_numbers<[1], [0], [0], [1], [0, 0, 1, 1], [], []>} : vector<16x64xf32>, vector<64x16xf32>, vector<16x16xf32> -> vector<16x16xf32>
    %c0_305 = arith.constant 0 : index
    %c0_306 = arith.constant 0 : index
    %c0_307 = arith.constant 0 : index
    %497 = vector.load %arg49[%c0_305, %c0_306, %c0_307] : memref<4x1x16xf32, #tpu.memory_space<vmem>>, vector<1x1x16xf32>
    %498 = vector.shape_cast %497 : vector<1x1x16xf32> to vector<1x16xf32>
    %499 = vector.broadcast %498 : vector<1x16xf32> to vector<16x16xf32>
    %500 = arith.addf %496, %499 : vector<16x16xf32>
    %c0_308 = arith.constant 0 : index
    %c0_309 = arith.constant 0 : index
    %c0_310 = arith.constant 0 : index
    %501 = vector.load %arg47[%c0_308, %c0_309, %c0_310] : memref<4x64x16xf32, #tpu.memory_space<vmem>>, vector<1x64x16xf32>
    %502 = vector.shape_cast %501 : vector<1x64x16xf32> to vector<64x16xf32>
    %cst_311 = arith.constant dense<0.000000e+00> : vector<16x16xf32>
    %503 = tpu.matmul %493, %502, %cst_311 {dimension_numbers = #tpu.dot_dimension_numbers<[1], [0], [0], [1], [0, 0, 1, 1], [], []>} : vector<16x64xf32>, vector<64x16xf32>, vector<16x16xf32> -> vector<16x16xf32>
    %c0_312 = arith.constant 0 : index
    %c0_313 = arith.constant 0 : index
    %c0_314 = arith.constant 0 : index
    %504 = vector.load %arg50[%c0_312, %c0_313, %c0_314] : memref<4x1x16xf32, #tpu.memory_space<vmem>>, vector<1x1x16xf32>
    %505 = vector.shape_cast %504 : vector<1x1x16xf32> to vector<1x16xf32>
    %506 = vector.broadcast %505 : vector<1x16xf32> to vector<16x16xf32>
    %507 = arith.addf %503, %506 : vector<16x16xf32>
    %c0_315 = arith.constant 0 : index
    %c0_316 = arith.constant 0 : index
    %c0_317 = arith.constant 0 : index
    %508 = vector.load %arg48[%c0_315, %c0_316, %c0_317] : memref<4x64x16xf32, #tpu.memory_space<vmem>>, vector<1x64x16xf32>
    %509 = vector.shape_cast %508 : vector<1x64x16xf32> to vector<64x16xf32>
    %cst_318 = arith.constant dense<0.000000e+00> : vector<16x16xf32>
    %510 = tpu.matmul %493, %509, %cst_318 {dimension_numbers = #tpu.dot_dimension_numbers<[1], [0], [0], [1], [0, 0, 1, 1], [], []>} : vector<16x64xf32>, vector<64x16xf32>, vector<16x16xf32> -> vector<16x16xf32>
    %c0_319 = arith.constant 0 : index
    %c0_320 = arith.constant 0 : index
    %c0_321 = arith.constant 0 : index
    %511 = vector.load %arg51[%c0_319, %c0_320, %c0_321] : memref<4x1x16xf32, #tpu.memory_space<vmem>>, vector<1x1x16xf32>
    %512 = vector.shape_cast %511 : vector<1x1x16xf32> to vector<1x16xf32>
    %513 = vector.broadcast %512 : vector<1x16xf32> to vector<16x16xf32>
    %514 = arith.addf %510, %513 : vector<16x16xf32>
    %cst_322 = arith.constant dense<0.000000e+00> : vector<16x16xf32>
    %515 = tpu.matmul %500, %507, %cst_322 {dimension_numbers = #tpu.dot_dimension_numbers<[1], [1], [0], [0], [0, 0, 1, 0], [], []>} : vector<16x16xf32>, vector<16x16xf32>, vector<16x16xf32> -> vector<16x16xf32>
    %c0_323 = arith.constant 0 : index
    %c0_324 = arith.constant 0 : index
    %c0_325 = arith.constant 0 : index
    %516 = vector.load %arg52[%c0_323, %c0_324, %c0_325] : memref<4x16x16xf32, #tpu.memory_space<vmem>>, vector<1x16x16xf32>
    %517 = vector.shape_cast %516 : vector<1x16x16xf32> to vector<16x16xf32>
    %518 = arith.addf %515, %517 : vector<16x16xf32>
    %cst_326 = arith.constant dense<0xFF800000> : vector<16xf32>
    %519 = vector.multi_reduction <maximumf>, %518, %cst_326 [1] : vector<16x16xf32> to vector<16xf32>
    %520 = vector.shape_cast %519 : vector<16xf32> to vector<16x1xf32>
    %521 = vector.broadcast %520 : vector<16x1xf32> to vector<16x16xf32>
    %522 = arith.subf %518, %521 : vector<16x16xf32>
    %523 = math.exp %522 : vector<16x16xf32>
    %cst_327 = arith.constant dense<0.000000e+00> : vector<16xf32>
    %524 = vector.multi_reduction <add>, %523, %cst_327 [1] : vector<16x16xf32> to vector<16xf32>
    %525 = vector.shape_cast %524 : vector<16xf32> to vector<16x1xf32>
    %526 = tpu.reciprocal %525 {approx = true} : vector<16x1xf32> -> vector<16x1xf32>
    %527 = vector.broadcast %526 : vector<16x1xf32> to vector<16x16xf32>
    %528 = arith.mulf %523, %527 : vector<16x16xf32>
    %cst_328 = arith.constant dense<0.000000e+00> : vector<16x16xf32>
    %529 = tpu.matmul %528, %514, %cst_328 {dimension_numbers = #tpu.dot_dimension_numbers<[1], [0], [0], [1], [0, 0, 1, 1], [], []>} : vector<16x16xf32>, vector<16x16xf32>, vector<16x16xf32> -> vector<16x16xf32>
    %c0_329 = arith.constant 0 : index
    %c0_330 = arith.constant 0 : index
    %c0_331 = arith.constant 0 : index
    %530 = vector.load %arg53[%c0_329, %c0_330, %c0_331] : memref<4x16x64xf32, #tpu.memory_space<vmem>>, vector<1x16x64xf32>
    %531 = vector.shape_cast %530 : vector<1x16x64xf32> to vector<16x64xf32>
    %cst_332 = arith.constant dense<0.000000e+00> : vector<16x64xf32>
    %532 = tpu.matmul %529, %531, %cst_332 {dimension_numbers = #tpu.dot_dimension_numbers<[1], [0], [0], [1], [0, 0, 1, 1], [], []>} : vector<16x16xf32>, vector<16x64xf32>, vector<16x64xf32> -> vector<16x64xf32>
    %533 = vector.broadcast %465 : vector<1x64xf32> to vector<16x64xf32>
    %534 = arith.addf %533, %532 : vector<16x64xf32>
    %c1_333 = arith.constant 1 : index
    %c0_334 = arith.constant 0 : index
    %c0_335 = arith.constant 0 : index
    %535 = vector.load %arg46[%c1_333, %c0_334, %c0_335] : memref<4x64x16xf32, #tpu.memory_space<vmem>>, vector<1x64x16xf32>
    %536 = vector.shape_cast %535 : vector<1x64x16xf32> to vector<64x16xf32>
    %cst_336 = arith.constant dense<0.000000e+00> : vector<16x16xf32>
    %537 = tpu.matmul %493, %536, %cst_336 {dimension_numbers = #tpu.dot_dimension_numbers<[1], [0], [0], [1], [0, 0, 1, 1], [], []>} : vector<16x64xf32>, vector<64x16xf32>, vector<16x16xf32> -> vector<16x16xf32>
    %c1_337 = arith.constant 1 : index
    %c0_338 = arith.constant 0 : index
    %c0_339 = arith.constant 0 : index
    %538 = vector.load %arg49[%c1_337, %c0_338, %c0_339] : memref<4x1x16xf32, #tpu.memory_space<vmem>>, vector<1x1x16xf32>
    %539 = vector.shape_cast %538 : vector<1x1x16xf32> to vector<1x16xf32>
    %540 = vector.broadcast %539 : vector<1x16xf32> to vector<16x16xf32>
    %541 = arith.addf %537, %540 : vector<16x16xf32>
    %c1_340 = arith.constant 1 : index
    %c0_341 = arith.constant 0 : index
    %c0_342 = arith.constant 0 : index
    %542 = vector.load %arg47[%c1_340, %c0_341, %c0_342] : memref<4x64x16xf32, #tpu.memory_space<vmem>>, vector<1x64x16xf32>
    %543 = vector.shape_cast %542 : vector<1x64x16xf32> to vector<64x16xf32>
    %cst_343 = arith.constant dense<0.000000e+00> : vector<16x16xf32>
    %544 = tpu.matmul %493, %543, %cst_343 {dimension_numbers = #tpu.dot_dimension_numbers<[1], [0], [0], [1], [0, 0, 1, 1], [], []>} : vector<16x64xf32>, vector<64x16xf32>, vector<16x16xf32> -> vector<16x16xf32>
    %c1_344 = arith.constant 1 : index
    %c0_345 = arith.constant 0 : index
    %c0_346 = arith.constant 0 : index
    %545 = vector.load %arg50[%c1_344, %c0_345, %c0_346] : memref<4x1x16xf32, #tpu.memory_space<vmem>>, vector<1x1x16xf32>
    %546 = vector.shape_cast %545 : vector<1x1x16xf32> to vector<1x16xf32>
    %547 = vector.broadcast %546 : vector<1x16xf32> to vector<16x16xf32>
    %548 = arith.addf %544, %547 : vector<16x16xf32>
    %c1_347 = arith.constant 1 : index
    %c0_348 = arith.constant 0 : index
    %c0_349 = arith.constant 0 : index
    %549 = vector.load %arg48[%c1_347, %c0_348, %c0_349] : memref<4x64x16xf32, #tpu.memory_space<vmem>>, vector<1x64x16xf32>
    %550 = vector.shape_cast %549 : vector<1x64x16xf32> to vector<64x16xf32>
    %cst_350 = arith.constant dense<0.000000e+00> : vector<16x16xf32>
    %551 = tpu.matmul %493, %550, %cst_350 {dimension_numbers = #tpu.dot_dimension_numbers<[1], [0], [0], [1], [0, 0, 1, 1], [], []>} : vector<16x64xf32>, vector<64x16xf32>, vector<16x16xf32> -> vector<16x16xf32>
    %c1_351 = arith.constant 1 : index
    %c0_352 = arith.constant 0 : index
    %c0_353 = arith.constant 0 : index
    %552 = vector.load %arg51[%c1_351, %c0_352, %c0_353] : memref<4x1x16xf32, #tpu.memory_space<vmem>>, vector<1x1x16xf32>
    %553 = vector.shape_cast %552 : vector<1x1x16xf32> to vector<1x16xf32>
    %554 = vector.broadcast %553 : vector<1x16xf32> to vector<16x16xf32>
    %555 = arith.addf %551, %554 : vector<16x16xf32>
    %cst_354 = arith.constant dense<0.000000e+00> : vector<16x16xf32>
    %556 = tpu.matmul %541, %548, %cst_354 {dimension_numbers = #tpu.dot_dimension_numbers<[1], [1], [0], [0], [0, 0, 1, 0], [], []>} : vector<16x16xf32>, vector<16x16xf32>, vector<16x16xf32> -> vector<16x16xf32>
    %c1_355 = arith.constant 1 : index
    %c0_356 = arith.constant 0 : index
    %c0_357 = arith.constant 0 : index
    %557 = vector.load %arg52[%c1_355, %c0_356, %c0_357] : memref<4x16x16xf32, #tpu.memory_space<vmem>>, vector<1x16x16xf32>
    %558 = vector.shape_cast %557 : vector<1x16x16xf32> to vector<16x16xf32>
    %559 = arith.addf %556, %558 : vector<16x16xf32>
    %cst_358 = arith.constant dense<0xFF800000> : vector<16xf32>
    %560 = vector.multi_reduction <maximumf>, %559, %cst_358 [1] : vector<16x16xf32> to vector<16xf32>
    %561 = vector.shape_cast %560 : vector<16xf32> to vector<16x1xf32>
    %562 = vector.broadcast %561 : vector<16x1xf32> to vector<16x16xf32>
    %563 = arith.subf %559, %562 : vector<16x16xf32>
    %564 = math.exp %563 : vector<16x16xf32>
    %cst_359 = arith.constant dense<0.000000e+00> : vector<16xf32>
    %565 = vector.multi_reduction <add>, %564, %cst_359 [1] : vector<16x16xf32> to vector<16xf32>
    %566 = vector.shape_cast %565 : vector<16xf32> to vector<16x1xf32>
    %567 = tpu.reciprocal %566 {approx = true} : vector<16x1xf32> -> vector<16x1xf32>
    %568 = vector.broadcast %567 : vector<16x1xf32> to vector<16x16xf32>
    %569 = arith.mulf %564, %568 : vector<16x16xf32>
    %cst_360 = arith.constant dense<0.000000e+00> : vector<16x16xf32>
    %570 = tpu.matmul %569, %555, %cst_360 {dimension_numbers = #tpu.dot_dimension_numbers<[1], [0], [0], [1], [0, 0, 1, 1], [], []>} : vector<16x16xf32>, vector<16x16xf32>, vector<16x16xf32> -> vector<16x16xf32>
    %c1_361 = arith.constant 1 : index
    %c0_362 = arith.constant 0 : index
    %c0_363 = arith.constant 0 : index
    %571 = vector.load %arg53[%c1_361, %c0_362, %c0_363] : memref<4x16x64xf32, #tpu.memory_space<vmem>>, vector<1x16x64xf32>
    %572 = vector.shape_cast %571 : vector<1x16x64xf32> to vector<16x64xf32>
    %cst_364 = arith.constant dense<0.000000e+00> : vector<16x64xf32>
    %573 = tpu.matmul %570, %572, %cst_364 {dimension_numbers = #tpu.dot_dimension_numbers<[1], [0], [0], [1], [0, 0, 1, 1], [], []>} : vector<16x16xf32>, vector<16x64xf32>, vector<16x64xf32> -> vector<16x64xf32>
    %574 = arith.addf %534, %573 : vector<16x64xf32>
    %c2_365 = arith.constant 2 : index
    %c0_366 = arith.constant 0 : index
    %c0_367 = arith.constant 0 : index
    %575 = vector.load %arg46[%c2_365, %c0_366, %c0_367] : memref<4x64x16xf32, #tpu.memory_space<vmem>>, vector<1x64x16xf32>
    %576 = vector.shape_cast %575 : vector<1x64x16xf32> to vector<64x16xf32>
    %cst_368 = arith.constant dense<0.000000e+00> : vector<16x16xf32>
    %577 = tpu.matmul %493, %576, %cst_368 {dimension_numbers = #tpu.dot_dimension_numbers<[1], [0], [0], [1], [0, 0, 1, 1], [], []>} : vector<16x64xf32>, vector<64x16xf32>, vector<16x16xf32> -> vector<16x16xf32>
    %c2_369 = arith.constant 2 : index
    %c0_370 = arith.constant 0 : index
    %c0_371 = arith.constant 0 : index
    %578 = vector.load %arg49[%c2_369, %c0_370, %c0_371] : memref<4x1x16xf32, #tpu.memory_space<vmem>>, vector<1x1x16xf32>
    %579 = vector.shape_cast %578 : vector<1x1x16xf32> to vector<1x16xf32>
    %580 = vector.broadcast %579 : vector<1x16xf32> to vector<16x16xf32>
    %581 = arith.addf %577, %580 : vector<16x16xf32>
    %c2_372 = arith.constant 2 : index
    %c0_373 = arith.constant 0 : index
    %c0_374 = arith.constant 0 : index
    %582 = vector.load %arg47[%c2_372, %c0_373, %c0_374] : memref<4x64x16xf32, #tpu.memory_space<vmem>>, vector<1x64x16xf32>
    %583 = vector.shape_cast %582 : vector<1x64x16xf32> to vector<64x16xf32>
    %cst_375 = arith.constant dense<0.000000e+00> : vector<16x16xf32>
    %584 = tpu.matmul %493, %583, %cst_375 {dimension_numbers = #tpu.dot_dimension_numbers<[1], [0], [0], [1], [0, 0, 1, 1], [], []>} : vector<16x64xf32>, vector<64x16xf32>, vector<16x16xf32> -> vector<16x16xf32>
    %c2_376 = arith.constant 2 : index
    %c0_377 = arith.constant 0 : index
    %c0_378 = arith.constant 0 : index
    %585 = vector.load %arg50[%c2_376, %c0_377, %c0_378] : memref<4x1x16xf32, #tpu.memory_space<vmem>>, vector<1x1x16xf32>
    %586 = vector.shape_cast %585 : vector<1x1x16xf32> to vector<1x16xf32>
    %587 = vector.broadcast %586 : vector<1x16xf32> to vector<16x16xf32>
    %588 = arith.addf %584, %587 : vector<16x16xf32>
    %c2_379 = arith.constant 2 : index
    %c0_380 = arith.constant 0 : index
    %c0_381 = arith.constant 0 : index
    %589 = vector.load %arg48[%c2_379, %c0_380, %c0_381] : memref<4x64x16xf32, #tpu.memory_space<vmem>>, vector<1x64x16xf32>
    %590 = vector.shape_cast %589 : vector<1x64x16xf32> to vector<64x16xf32>
    %cst_382 = arith.constant dense<0.000000e+00> : vector<16x16xf32>
    %591 = tpu.matmul %493, %590, %cst_382 {dimension_numbers = #tpu.dot_dimension_numbers<[1], [0], [0], [1], [0, 0, 1, 1], [], []>} : vector<16x64xf32>, vector<64x16xf32>, vector<16x16xf32> -> vector<16x16xf32>
    %c2_383 = arith.constant 2 : index
    %c0_384 = arith.constant 0 : index
    %c0_385 = arith.constant 0 : index
    %592 = vector.load %arg51[%c2_383, %c0_384, %c0_385] : memref<4x1x16xf32, #tpu.memory_space<vmem>>, vector<1x1x16xf32>
    %593 = vector.shape_cast %592 : vector<1x1x16xf32> to vector<1x16xf32>
    %594 = vector.broadcast %593 : vector<1x16xf32> to vector<16x16xf32>
    %595 = arith.addf %591, %594 : vector<16x16xf32>
    %cst_386 = arith.constant dense<0.000000e+00> : vector<16x16xf32>
    %596 = tpu.matmul %581, %588, %cst_386 {dimension_numbers = #tpu.dot_dimension_numbers<[1], [1], [0], [0], [0, 0, 1, 0], [], []>} : vector<16x16xf32>, vector<16x16xf32>, vector<16x16xf32> -> vector<16x16xf32>
    %c2_387 = arith.constant 2 : index
    %c0_388 = arith.constant 0 : index
    %c0_389 = arith.constant 0 : index
    %597 = vector.load %arg52[%c2_387, %c0_388, %c0_389] : memref<4x16x16xf32, #tpu.memory_space<vmem>>, vector<1x16x16xf32>
    %598 = vector.shape_cast %597 : vector<1x16x16xf32> to vector<16x16xf32>
    %599 = arith.addf %596, %598 : vector<16x16xf32>
    %cst_390 = arith.constant dense<0xFF800000> : vector<16xf32>
    %600 = vector.multi_reduction <maximumf>, %599, %cst_390 [1] : vector<16x16xf32> to vector<16xf32>
    %601 = vector.shape_cast %600 : vector<16xf32> to vector<16x1xf32>
    %602 = vector.broadcast %601 : vector<16x1xf32> to vector<16x16xf32>
    %603 = arith.subf %599, %602 : vector<16x16xf32>
    %604 = math.exp %603 : vector<16x16xf32>
    %cst_391 = arith.constant dense<0.000000e+00> : vector<16xf32>
    %605 = vector.multi_reduction <add>, %604, %cst_391 [1] : vector<16x16xf32> to vector<16xf32>
    %606 = vector.shape_cast %605 : vector<16xf32> to vector<16x1xf32>
    %607 = tpu.reciprocal %606 {approx = true} : vector<16x1xf32> -> vector<16x1xf32>
    %608 = vector.broadcast %607 : vector<16x1xf32> to vector<16x16xf32>
    %609 = arith.mulf %604, %608 : vector<16x16xf32>
    %cst_392 = arith.constant dense<0.000000e+00> : vector<16x16xf32>
    %610 = tpu.matmul %609, %595, %cst_392 {dimension_numbers = #tpu.dot_dimension_numbers<[1], [0], [0], [1], [0, 0, 1, 1], [], []>} : vector<16x16xf32>, vector<16x16xf32>, vector<16x16xf32> -> vector<16x16xf32>
    %c2_393 = arith.constant 2 : index
    %c0_394 = arith.constant 0 : index
    %c0_395 = arith.constant 0 : index
    %611 = vector.load %arg53[%c2_393, %c0_394, %c0_395] : memref<4x16x64xf32, #tpu.memory_space<vmem>>, vector<1x16x64xf32>
    %612 = vector.shape_cast %611 : vector<1x16x64xf32> to vector<16x64xf32>
    %cst_396 = arith.constant dense<0.000000e+00> : vector<16x64xf32>
    %613 = tpu.matmul %610, %612, %cst_396 {dimension_numbers = #tpu.dot_dimension_numbers<[1], [0], [0], [1], [0, 0, 1, 1], [], []>} : vector<16x16xf32>, vector<16x64xf32>, vector<16x64xf32> -> vector<16x64xf32>
    %614 = arith.addf %574, %613 : vector<16x64xf32>
    %c3_397 = arith.constant 3 : index
    %c0_398 = arith.constant 0 : index
    %c0_399 = arith.constant 0 : index
    %615 = vector.load %arg46[%c3_397, %c0_398, %c0_399] : memref<4x64x16xf32, #tpu.memory_space<vmem>>, vector<1x64x16xf32>
    %616 = vector.shape_cast %615 : vector<1x64x16xf32> to vector<64x16xf32>
    %cst_400 = arith.constant dense<0.000000e+00> : vector<16x16xf32>
    %617 = tpu.matmul %493, %616, %cst_400 {dimension_numbers = #tpu.dot_dimension_numbers<[1], [0], [0], [1], [0, 0, 1, 1], [], []>} : vector<16x64xf32>, vector<64x16xf32>, vector<16x16xf32> -> vector<16x16xf32>
    %c3_401 = arith.constant 3 : index
    %c0_402 = arith.constant 0 : index
    %c0_403 = arith.constant 0 : index
    %618 = vector.load %arg49[%c3_401, %c0_402, %c0_403] : memref<4x1x16xf32, #tpu.memory_space<vmem>>, vector<1x1x16xf32>
    %619 = vector.shape_cast %618 : vector<1x1x16xf32> to vector<1x16xf32>
    %620 = vector.broadcast %619 : vector<1x16xf32> to vector<16x16xf32>
    %621 = arith.addf %617, %620 : vector<16x16xf32>
    %c3_404 = arith.constant 3 : index
    %c0_405 = arith.constant 0 : index
    %c0_406 = arith.constant 0 : index
    %622 = vector.load %arg47[%c3_404, %c0_405, %c0_406] : memref<4x64x16xf32, #tpu.memory_space<vmem>>, vector<1x64x16xf32>
    %623 = vector.shape_cast %622 : vector<1x64x16xf32> to vector<64x16xf32>
    %cst_407 = arith.constant dense<0.000000e+00> : vector<16x16xf32>
    %624 = tpu.matmul %493, %623, %cst_407 {dimension_numbers = #tpu.dot_dimension_numbers<[1], [0], [0], [1], [0, 0, 1, 1], [], []>} : vector<16x64xf32>, vector<64x16xf32>, vector<16x16xf32> -> vector<16x16xf32>
    %c3_408 = arith.constant 3 : index
    %c0_409 = arith.constant 0 : index
    %c0_410 = arith.constant 0 : index
    %625 = vector.load %arg50[%c3_408, %c0_409, %c0_410] : memref<4x1x16xf32, #tpu.memory_space<vmem>>, vector<1x1x16xf32>
    %626 = vector.shape_cast %625 : vector<1x1x16xf32> to vector<1x16xf32>
    %627 = vector.broadcast %626 : vector<1x16xf32> to vector<16x16xf32>
    %628 = arith.addf %624, %627 : vector<16x16xf32>
    %c3_411 = arith.constant 3 : index
    %c0_412 = arith.constant 0 : index
    %c0_413 = arith.constant 0 : index
    %629 = vector.load %arg48[%c3_411, %c0_412, %c0_413] : memref<4x64x16xf32, #tpu.memory_space<vmem>>, vector<1x64x16xf32>
    %630 = vector.shape_cast %629 : vector<1x64x16xf32> to vector<64x16xf32>
    %cst_414 = arith.constant dense<0.000000e+00> : vector<16x16xf32>
    %631 = tpu.matmul %493, %630, %cst_414 {dimension_numbers = #tpu.dot_dimension_numbers<[1], [0], [0], [1], [0, 0, 1, 1], [], []>} : vector<16x64xf32>, vector<64x16xf32>, vector<16x16xf32> -> vector<16x16xf32>
    %c3_415 = arith.constant 3 : index
    %c0_416 = arith.constant 0 : index
    %c0_417 = arith.constant 0 : index
    %632 = vector.load %arg51[%c3_415, %c0_416, %c0_417] : memref<4x1x16xf32, #tpu.memory_space<vmem>>, vector<1x1x16xf32>
    %633 = vector.shape_cast %632 : vector<1x1x16xf32> to vector<1x16xf32>
    %634 = vector.broadcast %633 : vector<1x16xf32> to vector<16x16xf32>
    %635 = arith.addf %631, %634 : vector<16x16xf32>
    %cst_418 = arith.constant dense<0.000000e+00> : vector<16x16xf32>
    %636 = tpu.matmul %621, %628, %cst_418 {dimension_numbers = #tpu.dot_dimension_numbers<[1], [1], [0], [0], [0, 0, 1, 0], [], []>} : vector<16x16xf32>, vector<16x16xf32>, vector<16x16xf32> -> vector<16x16xf32>
    %c3_419 = arith.constant 3 : index
    %c0_420 = arith.constant 0 : index
    %c0_421 = arith.constant 0 : index
    %637 = vector.load %arg52[%c3_419, %c0_420, %c0_421] : memref<4x16x16xf32, #tpu.memory_space<vmem>>, vector<1x16x16xf32>
    %638 = vector.shape_cast %637 : vector<1x16x16xf32> to vector<16x16xf32>
    %639 = arith.addf %636, %638 : vector<16x16xf32>
    %cst_422 = arith.constant dense<0xFF800000> : vector<16xf32>
    %640 = vector.multi_reduction <maximumf>, %639, %cst_422 [1] : vector<16x16xf32> to vector<16xf32>
    %641 = vector.shape_cast %640 : vector<16xf32> to vector<16x1xf32>
    %642 = vector.broadcast %641 : vector<16x1xf32> to vector<16x16xf32>
    %643 = arith.subf %639, %642 : vector<16x16xf32>
    %644 = math.exp %643 : vector<16x16xf32>
    %cst_423 = arith.constant dense<0.000000e+00> : vector<16xf32>
    %645 = vector.multi_reduction <add>, %644, %cst_423 [1] : vector<16x16xf32> to vector<16xf32>
    %646 = vector.shape_cast %645 : vector<16xf32> to vector<16x1xf32>
    %647 = tpu.reciprocal %646 {approx = true} : vector<16x1xf32> -> vector<16x1xf32>
    %648 = vector.broadcast %647 : vector<16x1xf32> to vector<16x16xf32>
    %649 = arith.mulf %644, %648 : vector<16x16xf32>
    %cst_424 = arith.constant dense<0.000000e+00> : vector<16x16xf32>
    %650 = tpu.matmul %649, %635, %cst_424 {dimension_numbers = #tpu.dot_dimension_numbers<[1], [0], [0], [1], [0, 0, 1, 1], [], []>} : vector<16x16xf32>, vector<16x16xf32>, vector<16x16xf32> -> vector<16x16xf32>
    %c3_425 = arith.constant 3 : index
    %c0_426 = arith.constant 0 : index
    %c0_427 = arith.constant 0 : index
    %651 = vector.load %arg53[%c3_425, %c0_426, %c0_427] : memref<4x16x64xf32, #tpu.memory_space<vmem>>, vector<1x16x64xf32>
    %652 = vector.shape_cast %651 : vector<1x16x64xf32> to vector<16x64xf32>
    %cst_428 = arith.constant dense<0.000000e+00> : vector<16x64xf32>
    %653 = tpu.matmul %650, %652, %cst_428 {dimension_numbers = #tpu.dot_dimension_numbers<[1], [0], [0], [1], [0, 0, 1, 1], [], []>} : vector<16x16xf32>, vector<16x64xf32>, vector<16x64xf32> -> vector<16x64xf32>
    %654 = arith.addf %614, %653 : vector<16x64xf32>
    %655 = arith.addf %462, %654 : vector<16x64xf32>
    %cst_429 = arith.constant dense<0.000000e+00> : vector<16xf32>
    %656 = vector.multi_reduction <add>, %655, %cst_429 [1] : vector<16x64xf32> to vector<16xf32>
    %657 = vector.shape_cast %656 : vector<16xf32> to vector<16x1xf32>
    %cst_430 = arith.constant 6.400000e+01 : f32
    %658 = vector.broadcast %cst_430 : f32 to vector<16x1xf32>
    %659 = arith.divf %657, %658 : vector<16x1xf32>
    %660 = vector.broadcast %659 : vector<16x1xf32> to vector<16x64xf32>
    %661 = arith.subf %655, %660 : vector<16x64xf32>
    %662 = arith.mulf %661, %661 : vector<16x64xf32>
    %cst_431 = arith.constant dense<0.000000e+00> : vector<16xf32>
    %663 = vector.multi_reduction <add>, %662, %cst_431 [1] : vector<16x64xf32> to vector<16xf32>
    %664 = vector.shape_cast %663 : vector<16xf32> to vector<16x1xf32>
    %cst_432 = arith.constant 6.400000e+01 : f32
    %665 = vector.broadcast %cst_432 : f32 to vector<16x1xf32>
    %666 = arith.divf %664, %665 : vector<16x1xf32>
    %667 = vector.broadcast %659 : vector<16x1xf32> to vector<16x64xf32>
    %668 = arith.subf %655, %667 : vector<16x64xf32>
    %cst_433 = arith.constant 9.99999974E-6 : f32
    %669 = vector.broadcast %cst_433 : f32 to vector<16x1xf32>
    %670 = arith.addf %666, %669 : vector<16x1xf32>
    %671 = math.rsqrt %670 : vector<16x1xf32>
    %672 = vector.broadcast %671 : vector<16x1xf32> to vector<16x64xf32>
    %673 = arith.mulf %668, %672 : vector<16x64xf32>
    %674 = vector.broadcast %466 : vector<1x64xf32> to vector<16x64xf32>
    %675 = arith.mulf %673, %674 : vector<16x64xf32>
    %676 = vector.broadcast %467 : vector<1x64xf32> to vector<16x64xf32>
    %677 = arith.addf %675, %676 : vector<16x64xf32>
    %cst_434 = arith.constant dense<0.000000e+00> : vector<16x256xf32>
    %678 = tpu.matmul %677, %468, %cst_434 {dimension_numbers = #tpu.dot_dimension_numbers<[1], [0], [0], [1], [0, 0, 1, 1], [], []>} : vector<16x64xf32>, vector<64x256xf32>, vector<16x256xf32> -> vector<16x256xf32>
    %679 = vector.broadcast %469 : vector<1x256xf32> to vector<16x256xf32>
    %680 = arith.addf %678, %679 : vector<16x256xf32>
    %cst_435 = arith.constant 5.000000e-01 : f32
    %681 = vector.broadcast %cst_435 : f32 to vector<16x256xf32>
    %682 = arith.mulf %681, %680 : vector<16x256xf32>
    %cst_436 = arith.constant 4.471500e-02 : f32
    %683 = vector.broadcast %cst_436 : f32 to vector<16x256xf32>
    %684 = arith.mulf %683, %680 : vector<16x256xf32>
    %685 = arith.mulf %684, %680 : vector<16x256xf32>
    %686 = arith.mulf %685, %680 : vector<16x256xf32>
    %687 = arith.addf %680, %686 : vector<16x256xf32>
    %cst_437 = arith.constant 0.797884583 : f32
    %688 = vector.broadcast %cst_437 : f32 to vector<16x256xf32>
    %689 = arith.mulf %688, %687 : vector<16x256xf32>
    %690 = math.tanh %689 : vector<16x256xf32>
    %cst_438 = arith.constant 1.000000e+00 : f32
    %691 = vector.broadcast %cst_438 : f32 to vector<16x256xf32>
    %692 = arith.addf %691, %690 : vector<16x256xf32>
    %693 = arith.mulf %682, %692 : vector<16x256xf32>
    %cst_439 = arith.constant dense<0.000000e+00> : vector<16x64xf32>
    %694 = tpu.matmul %693, %470, %cst_439 {dimension_numbers = #tpu.dot_dimension_numbers<[1], [0], [0], [1], [0, 0, 1, 1], [], []>} : vector<16x256xf32>, vector<256x64xf32>, vector<16x64xf32> -> vector<16x64xf32>
    %695 = vector.broadcast %471 : vector<1x64xf32> to vector<16x64xf32>
    %696 = arith.addf %694, %695 : vector<16x64xf32>
    %697 = arith.addf %655, %696 : vector<16x64xf32>
    %c0_440 = arith.constant 0 : index
    %c0_441 = arith.constant 0 : index
    %698 = vector.load %arg61[%c0_440, %c0_441] : memref<1x64xf32, #tpu.memory_space<vmem>>, vector<1x64xf32>
    %c0_442 = arith.constant 0 : index
    %c0_443 = arith.constant 0 : index
    %699 = vector.load %arg62[%c0_442, %c0_443] : memref<1x64xf32, #tpu.memory_space<vmem>>, vector<1x64xf32>
    %c0_444 = arith.constant 0 : index
    %c0_445 = arith.constant 0 : index
    %700 = vector.load %arg63[%c0_444, %c0_445] : memref<4x16xf32, #tpu.memory_space<vmem>>, vector<4x16xf32>
    %c0_446 = arith.constant 0 : index
    %c0_447 = arith.constant 0 : index
    %701 = vector.load %arg64[%c0_446, %c0_447] : memref<64x2xf32, #tpu.memory_space<vmem>>, vector<64x2xf32>
    %c0_448 = arith.constant 0 : index
    %c0_449 = arith.constant 0 : index
    %702 = vector.load %arg65[%c0_448, %c0_449] : memref<1x2xf32, #tpu.memory_space<vmem>>, vector<1x2xf32>
    %cst_450 = arith.constant dense<0.000000e+00> : vector<16xf32>
    %703 = vector.multi_reduction <add>, %697, %cst_450 [1] : vector<16x64xf32> to vector<16xf32>
    %704 = vector.shape_cast %703 : vector<16xf32> to vector<16x1xf32>
    %cst_451 = arith.constant 6.400000e+01 : f32
    %705 = vector.broadcast %cst_451 : f32 to vector<16x1xf32>
    %706 = arith.divf %704, %705 : vector<16x1xf32>
    %707 = vector.broadcast %706 : vector<16x1xf32> to vector<16x64xf32>
    %708 = arith.subf %697, %707 : vector<16x64xf32>
    %709 = arith.mulf %708, %708 : vector<16x64xf32>
    %cst_452 = arith.constant dense<0.000000e+00> : vector<16xf32>
    %710 = vector.multi_reduction <add>, %709, %cst_452 [1] : vector<16x64xf32> to vector<16xf32>
    %711 = vector.shape_cast %710 : vector<16xf32> to vector<16x1xf32>
    %cst_453 = arith.constant 6.400000e+01 : f32
    %712 = vector.broadcast %cst_453 : f32 to vector<16x1xf32>
    %713 = arith.divf %711, %712 : vector<16x1xf32>
    %714 = vector.broadcast %706 : vector<16x1xf32> to vector<16x64xf32>
    %715 = arith.subf %697, %714 : vector<16x64xf32>
    %cst_454 = arith.constant 9.99999974E-6 : f32
    %716 = vector.broadcast %cst_454 : f32 to vector<16x1xf32>
    %717 = arith.addf %713, %716 : vector<16x1xf32>
    %718 = math.rsqrt %717 : vector<16x1xf32>
    %719 = vector.broadcast %718 : vector<16x1xf32> to vector<16x64xf32>
    %720 = arith.mulf %715, %719 : vector<16x64xf32>
    %721 = vector.broadcast %698 : vector<1x64xf32> to vector<16x64xf32>
    %722 = arith.mulf %720, %721 : vector<16x64xf32>
    %723 = vector.broadcast %699 : vector<1x64xf32> to vector<16x64xf32>
    %724 = arith.addf %722, %723 : vector<16x64xf32>
    %cst_455 = arith.constant dense<0.000000e+00> : vector<4x64xf32>
    %725 = tpu.matmul %700, %724, %cst_455 {dimension_numbers = #tpu.dot_dimension_numbers<[1], [0], [0], [1], [0, 0, 1, 1], [], []>} : vector<4x16xf32>, vector<16x64xf32>, vector<4x64xf32> -> vector<4x64xf32>
    %cst_456 = arith.constant dense<0.000000e+00> : vector<4x2xf32>
    %726 = tpu.matmul %725, %701, %cst_456 {dimension_numbers = #tpu.dot_dimension_numbers<[1], [0], [0], [1], [0, 0, 1, 1], [], []>} : vector<4x64xf32>, vector<64x2xf32>, vector<4x2xf32> -> vector<4x2xf32>
    %727 = vector.broadcast %702 : vector<1x2xf32> to vector<4x2xf32>
    %728 = arith.addf %726, %727 : vector<4x2xf32>
    %c0_457 = arith.constant 0 : index
    %c0_458 = arith.constant 0 : index
    %729 = vector.load %arg66[%c0_457, %c0_458] : memref<4x2xf32, #tpu.memory_space<vmem>>, vector<4x2xf32>
    tpu.vector_store %arg66[%c0_457, %c0_458], %728 {strides = array<i32>} : memref<4x2xf32, #tpu.memory_space<vmem>>, vector<4x2xf32>,
    return
  }
}

</mosaic_0001>

<llo_original>
// kernel: tpu_custom_call.1
$region0: #{tpu_custom_call.1}
  #allocation0 [shape = 'u32[]', space=smem, size = 0x4, offset = 0x4, fixed_abs, tag = 'smem constant byte address 0x4 - core index']
  #allocation1 [shape = 'u32[144,128]{1,0:T(1,128)}', space=vmem, size = 0x12000, scoped, tag = 'internal scratch']
  %s0 = inlined_call_operand.smem [shape: u32[67], index: -1, kind: input, shape index: {}]
  %s1 = sld [smem:[%s0]]
  %s2 = scalar_lea.smem %s0, 1
  %s3 = sld [smem:[%s2]]
  %s4 = scalar_lea.smem %s0, 2
  %s5 = sld [smem:[%s4]]
  %s6 = scalar_lea.smem %s0, 3
  %s7 = sld [smem:[%s6]]
  %s8 = scalar_lea.smem %s0, 4
  %s9 = sld [smem:[%s8]]
  %s10 = scalar_lea.smem %s0, 5
  %s11 = sld [smem:[%s10]]
  %s12 = scalar_lea.smem %s0, 6
  %s13 = sld [smem:[%s12]]
  %s14 = scalar_lea.smem %s0, 7
  %s15 = sld [smem:[%s14]]
  %s16 = scalar_lea.smem %s0, 8
  %s17 = sld [smem:[%s16]]
  %s18 = scalar_lea.smem %s0, 9
  %s19 = sld [smem:[%s18]]
  %s20 = scalar_lea.smem %s0, 10
  %s21 = sld [smem:[%s20]]
  %s22 = scalar_lea.smem %s0, 11
  %s23 = sld [smem:[%s22]]
  %s24 = scalar_lea.smem %s0, 12
  %s25 = sld [smem:[%s24]]
  %s26 = scalar_lea.smem %s0, 13
  %s27 = sld [smem:[%s26]]
  %s28 = scalar_lea.smem %s0, 14
  %s29 = sld [smem:[%s28]]
  %s30 = scalar_lea.smem %s0, 15
  %s31 = sld [smem:[%s30]]
  %s32 = scalar_lea.smem %s0, 16
  %s33 = sld [smem:[%s32]]
  %s34 = scalar_lea.smem %s0, 17
  %s35 = sld [smem:[%s34]]
  %s36 = scalar_lea.smem %s0, 18
  %s37 = sld [smem:[%s36]]
  %s38 = scalar_lea.smem %s0, 19
  %s39 = sld [smem:[%s38]]
  %s40 = scalar_lea.smem %s0, 20
  %s41 = sld [smem:[%s40]]
  %s42 = scalar_lea.smem %s0, 21
  %s43 = sld [smem:[%s42]]
  %s44 = scalar_lea.smem %s0, 22
  %s45 = sld [smem:[%s44]]
  %s46 = scalar_lea.smem %s0, 23
  %s47 = sld [smem:[%s46]]
  %s48 = scalar_lea.smem %s0, 24
  %s49 = sld [smem:[%s48]]
  %s50 = scalar_lea.smem %s0, 25
  %s51 = sld [smem:[%s50]]
  %s52 = scalar_lea.smem %s0, 26
  %s53 = sld [smem:[%s52]]
  %s54 = scalar_lea.smem %s0, 27
  %s55 = sld [smem:[%s54]]
  %s56 = scalar_lea.smem %s0, 28
  %s57 = sld [smem:[%s56]]
  %s58 = scalar_lea.smem %s0, 29
  %s59 = sld [smem:[%s58]]
  %s60 = scalar_lea.smem %s0, 30
  %s61 = sld [smem:[%s60]]
  %s62 = scalar_lea.smem %s0, 31
  %s63 = sld [smem:[%s62]]
  %s64 = scalar_lea.smem %s0, 32
  %s65 = sld [smem:[%s64]]
  %s66 = scalar_lea.smem %s0, 33
  %s67 = sld [smem:[%s66]]
  %s68 = scalar_lea.smem %s0, 34
  %s69 = sld [smem:[%s68]]
  %s70 = scalar_lea.smem %s0, 35
  %s71 = sld [smem:[%s70]]
  %s72 = scalar_lea.smem %s0, 36
  %s73 = sld [smem:[%s72]]
  %s74 = scalar_lea.smem %s0, 37
  %s75 = sld [smem:[%s74]]
  %s76 = scalar_lea.smem %s0, 38
  %s77 = sld [smem:[%s76]]
  %s78 = scalar_lea.smem %s0, 39
  %s79 = sld [smem:[%s78]]
  %s80 = scalar_lea.smem %s0, 40
  %s81 = sld [smem:[%s80]]
  %s82 = scalar_lea.smem %s0, 41
  %s83 = sld [smem:[%s82]]
  %s84 = scalar_lea.smem %s0, 42
  %s85 = sld [smem:[%s84]]
  %s86 = scalar_lea.smem %s0, 43
  %s87 = sld [smem:[%s86]]
  %s88 = scalar_lea.smem %s0, 44
  %s89 = sld [smem:[%s88]]
  %s90 = scalar_lea.smem %s0, 45
  %s91 = sld [smem:[%s90]]
  %s92 = scalar_lea.smem %s0, 46
  %s93 = sld [smem:[%s92]]
  %s94 = scalar_lea.smem %s0, 47
  %s95 = sld [smem:[%s94]]
  %s96 = scalar_lea.smem %s0, 48
  %s97 = sld [smem:[%s96]]
  %s98 = scalar_lea.smem %s0, 49
  %s99 = sld [smem:[%s98]]
  %s100 = scalar_lea.smem %s0, 50
  %s101 = sld [smem:[%s100]]
  %s102 = scalar_lea.smem %s0, 51
  %s103 = sld [smem:[%s102]]
  %s104 = scalar_lea.smem %s0, 52
  %s105 = sld [smem:[%s104]]
  %s106 = scalar_lea.smem %s0, 53
  %s107 = sld [smem:[%s106]]
  %s108 = scalar_lea.smem %s0, 54
  %s109 = sld [smem:[%s108]]
  %s110 = scalar_lea.smem %s0, 55
  %s111 = sld [smem:[%s110]]
  %s112 = scalar_lea.smem %s0, 56
  %s113 = sld [smem:[%s112]]
  %s114 = scalar_lea.smem %s0, 57
  %s115 = sld [smem:[%s114]]
  %s116 = scalar_lea.smem %s0, 58
  %s117 = sld [smem:[%s116]]
  %s118 = scalar_lea.smem %s0, 59
  %s119 = sld [smem:[%s118]]
  %s120 = scalar_lea.smem %s0, 60
  %s121 = sld [smem:[%s120]]
  %s122 = scalar_lea.smem %s0, 61
  %s123 = sld [smem:[%s122]]
  %s124 = scalar_lea.smem %s0, 62
  %s125 = sld [smem:[%s124]]
  %s126 = scalar_lea.smem %s0, 63
  %s127 = sld [smem:[%s126]]
  %s128 = scalar_lea.smem %s0, 64
  %s129 = sld [smem:[%s128]]
  %s130 = scalar_lea.smem %s0, 65
  %s131 = sld [smem:[%s130]]
  %s132 = scalar_lea.smem %s0, 66
  %s133 = sld [smem:[%s132]]
  %s134 = sld [smem:[#allocation0]]
  $region338: #{tpu_custom_call.1} parent=0
    _
  %s136 = ssub.s32 1, %s134
  %s137 = scalar_select 0, %s136, %s134
  $region1: #{tpu_custom_call.1} parent=0
    #allocation2 [shape = 'u8[512]{0}', space=vmem, size = 0x400, scoped, tag = 'input window, operand 23, single buffered']
    #allocation3 [shape = 's32[1]{0}', space=sflag, size = 0x4, scoped, tag = 'scoped memory for tpu_custom_call.1']
    #allocation4 [shape = 'u8[512]{0}', space=vmem, size = 0x400, scoped, tag = 'input window, operand 32, single buffered']
    #allocation5 [shape = 's32[1]{0}', space=sflag, size = 0x4, scoped, tag = 'scoped memory for tpu_custom_call.1']
    #allocation6 [shape = 'u8[512]{0}', space=vmem, size = 0x400, scoped, tag = 'input window, operand 33, single buffered']
    #allocation7 [shape = 'u8[512]{0}', space=vmem, size = 0x400, scoped, tag = 'input window, operand 34, single buffered']
    #allocation8 [shape = 's32[1]{0}', space=sflag, size = 0x4, scoped, tag = 'scoped memory for tpu_custom_call.1']
    #allocation9 [shape = 'u8[512]{0}', space=vmem, size = 0x400, scoped, tag = 'input window, operand 36, single buffered']
    #allocation10 [shape = 'u8[512]{0}', space=vmem, size = 0x400, scoped, tag = 'input window, operand 38, single buffered']
    #allocation11 [shape = 's32[1]{0}', space=sflag, size = 0x4, scoped, tag = 'scoped memory for tpu_custom_call.1']
    #allocation12 [shape = 'u8[512]{0}', space=vmem, size = 0x400, scoped, tag = 'input window, operand 43, single buffered']
    #allocation13 [shape = 'u8[512]{0}', space=vmem, size = 0x400, scoped, tag = 'input window, operand 44, single buffered']
    #allocation14 [shape = 's32[1]{0}', space=sflag, size = 0x4, scoped, tag = 'scoped memory for tpu_custom_call.1']
    #allocation15 [shape = 'u8[512]{0}', space=vmem, size = 0x400, scoped, tag = 'input window, operand 45, single buffered']
    #allocation16 [shape = 'u8[512]{0}', space=vmem, size = 0x400, scoped, tag = 'input window, operand 54, single buffered']
    #allocation17 [shape = 's32[1]{0}', space=sflag, size = 0x4, scoped, tag = 'scoped memory for tpu_custom_call.1']
    #allocation18 [shape = 'u8[512]{0}', space=vmem, size = 0x400, scoped, tag = 'input window, operand 55, single buffered']
    #allocation19 [shape = 'u8[512]{0}', space=vmem, size = 0x400, scoped, tag = 'input window, operand 56, single buffered']
    #allocation20 [shape = 's32[1]{0}', space=sflag, size = 0x4, scoped, tag = 'scoped memory for tpu_custom_call.1']
    #allocation21 [shape = 'u8[512]{0}', space=vmem, size = 0x400, scoped, tag = 'input window, operand 60, single buffered']
    #allocation22 [shape = 'u8[512]{0}', space=vmem, size = 0x400, scoped, tag = 'input window, operand 61, single buffered']
    #allocation23 [shape = 's32[1]{0}', space=sflag, size = 0x4, scoped, tag = 'scoped memory for tpu_custom_call.1']
    #allocation24 [shape = 'u8[512]{0}', space=vmem, size = 0x400, scoped, tag = 'input window, operand 62, single buffered']
    #allocation25 [shape = 'u8[512]{0}', space=vmem, size = 0x400, scoped, tag = 'input window, operand 65, single buffered']
    #allocation26 [shape = 's32[1]{0}', space=sflag, size = 0x4, scoped, tag = 'scoped memory for tpu_custom_call.1']
    %138 = vsyncpa [#allocation3], 0
    %139 = vsyncpa [#allocation5], 0
    %140 = vsyncpa [#allocation8], 0
    %141 = vsyncpa [#allocation11], 0
    %142 = vsyncpa [#allocation14], 0
    %143 = vsyncpa [#allocation17], 0
    %144 = vsyncpa [#allocation20], 0
    %145 = vsyncpa [#allocation23], 0
    %146 = vsyncpa [#allocation26], 0
    // Predicated region
    $region2: #{tpu_custom_call.1} parent=1 // pred_check
      _
    $region3: #{tpu_custom_call.1} parent=1 // pred_check_branch
      %148 = sbr.rel (0) target = $region5
    $region4: #{tpu_custom_call.1} parent=1 // pred_region
      _
    $region5: #{tpu_custom_call.1} parent=1 // pred_fallthru
      _
    // Predicated region
    $region6: #{tpu_custom_call.1} parent=1 // pred_check
      _
    $region7: #{tpu_custom_call.1} parent=1 // pred_check_branch
      %150 = sbr.rel (0) target = $region9
    $region8: #{tpu_custom_call.1} parent=1 // pred_region
      _
    $region9: #{tpu_custom_call.1} parent=1 // pred_fallthru
      _
    // Predicated region
    $region10: #{tpu_custom_call.1} parent=1 // pred_check
      _
    $region11: #{tpu_custom_call.1} parent=1 // pred_check_branch
      %152 = sbr.rel (0) target = $region13
    $region12: #{tpu_custom_call.1} parent=1 // pred_region
      _
    $region13: #{tpu_custom_call.1} parent=1 // pred_fallthru
      _
    // Predicated region
    $region14: #{tpu_custom_call.1} parent=1 // pred_check
      _
    $region15: #{tpu_custom_call.1} parent=1 // pred_check_branch
      %154 = sbr.rel (0) target = $region17
    $region16: #{tpu_custom_call.1} parent=1 // pred_region
      _
    $region17: #{tpu_custom_call.1} parent=1 // pred_fallthru
      _
    // Predicated region
    $region18: #{tpu_custom_call.1} parent=1 // pred_check
      _
    $region19: #{tpu_custom_call.1} parent=1 // pred_check_branch
      %156 = sbr.rel (0) target = $region21
    $region20: #{tpu_custom_call.1} parent=1 // pred_region
      _
    $region21: #{tpu_custom_call.1} parent=1 // pred_fallthru
      _
    // Predicated region
    $region22: #{tpu_custom_call.1} parent=1 // pred_check
      _
    $region23: #{tpu_custom_call.1} parent=1 // pred_check_branch
      %158 = sbr.rel (0) target = $region25
    $region24: #{tpu_custom_call.1} parent=1 // pred_region
      _
    $region25: #{tpu_custom_call.1} parent=1 // pred_fallthru
      _
    // Predicated region
    $region26: #{tpu_custom_call.1} parent=1 // pred_check
      _
    $region27: #{tpu_custom_call.1} parent=1 // pred_check_branch
      %160 = sbr.rel (0) target = $region29
    $region28: #{tpu_custom_call.1} parent=1 // pred_region
      _
    $region29: #{tpu_custom_call.1} parent=1 // pred_fallthru
      _
    // Predicated region
    $region30: #{tpu_custom_call.1} parent=1 // pred_check
      _
    $region31: #{tpu_custom_call.1} parent=1 // pred_check_branch
      %162 = sbr.rel (0) target = $region33
    $region32: #{tpu_custom_call.1} parent=1 // pred_region
      _
    $region33: #{tpu_custom_call.1} parent=1 // pred_fallthru
      _
    // Predicated region
    $region34: #{tpu_custom_call.1} parent=1 // pred_check
      _
    $region35: #{tpu_custom_call.1} parent=1 // pred_check_branch
      %164 = sbr.rel (0) target = $region37
    $region36: #{tpu_custom_call.1} parent=1 // pred_region
      _
    $region37: #{tpu_custom_call.1} parent=1 // pred_fallthru
      _
    // Predicated region
    $region38: #{tpu_custom_call.1} parent=1 // pred_check
      _
    $region39: #{tpu_custom_call.1} parent=1 // pred_check_branch
      %166 = sbr.rel (0) target = $region41
    $region40: #{tpu_custom_call.1} parent=1 // pred_region
      _
    $region41: #{tpu_custom_call.1} parent=1 // pred_fallthru
      _
    // Predicated region
    $region42: #{tpu_custom_call.1} parent=1 // pred_check
      _
    $region43: #{tpu_custom_call.1} parent=1 // pred_check_branch
      %168 = sbr.rel (0) target = $region45
    $region44: #{tpu_custom_call.1} parent=1 // pred_region
      _
    $region45: #{tpu_custom_call.1} parent=1 // pred_fallthru
      _
    // Predicated region
    $region46: #{tpu_custom_call.1} parent=1 // pred_check
      _
    $region47: #{tpu_custom_call.1} parent=1 // pred_check_branch
      %170 = sbr.rel (0) target = $region49
    $region48: #{tpu_custom_call.1} parent=1 // pred_region
      _
    $region49: #{tpu_custom_call.1} parent=1 // pred_fallthru
      _
    // Predicated region
    $region50: #{tpu_custom_call.1} parent=1 // pred_check
      _
    $region51: #{tpu_custom_call.1} parent=1 // pred_check_branch
      %172 = sbr.rel (0) target = $region53
    $region52: #{tpu_custom_call.1} parent=1 // pred_region
      _
    $region53: #{tpu_custom_call.1} parent=1 // pred_fallthru
      _
    // Predicated region
    $region54: #{tpu_custom_call.1} parent=1 // pred_check
      _
    $region55: #{tpu_custom_call.1} parent=1 // pred_check_branch
      %174 = sbr.rel (0) target = $region57
    $region56: #{tpu_custom_call.1} parent=1 // pred_region
      _
    $region57: #{tpu_custom_call.1} parent=1 // pred_fallthru
      _
    // Predicated region
    $region58: #{tpu_custom_call.1} parent=1 // pred_check
      _
    $region59: #{tpu_custom_call.1} parent=1 // pred_check_branch
      %176 = sbr.rel (0) target = $region61
    $region60: #{tpu_custom_call.1} parent=1 // pred_region
      _
    $region61: #{tpu_custom_call.1} parent=1 // pred_fallthru
      _
    // Predicated region
    $region62: #{tpu_custom_call.1} parent=1 // pred_check
      _
    $region63: #{tpu_custom_call.1} parent=1 // pred_check_branch
      %178 = sbr.rel (0) target = $region65
    $region64: #{tpu_custom_call.1} parent=1 // pred_region
      _
    $region65: #{tpu_custom_call.1} parent=1 // pred_fallthru
      _
    // Predicated region
    $region66: #{tpu_custom_call.1} parent=1 // pred_check
      _
    $region67: #{tpu_custom_call.1} parent=1 // pred_check_branch
      %180 = sbr.rel (0) target = $region69
    $region68: #{tpu_custom_call.1} parent=1 // pred_region
      _
    $region69: #{tpu_custom_call.1} parent=1 // pred_fallthru
      _
    // Predicated region
    $region70: #{tpu_custom_call.1} parent=1 // pred_check
      _
    $region71: #{tpu_custom_call.1} parent=1 // pred_check_branch
      %182 = sbr.rel (0) target = $region73
    $region72: #{tpu_custom_call.1} parent=1 // pred_region
      _
    $region73: #{tpu_custom_call.1} parent=1 // pred_fallthru
      _
    // Predicated region
    $region74: #{tpu_custom_call.1} parent=1 // pred_check
      _
    $region75: #{tpu_custom_call.1} parent=1 // pred_check_branch
      %184 = sbr.rel (0) target = $region77
    $region76: #{tpu_custom_call.1} parent=1 // pred_region
      _
    $region77: #{tpu_custom_call.1} parent=1 // pred_fallthru
      _
    // Predicated region
    $region78: #{tpu_custom_call.1} parent=1 // pred_check
      _
    $region79: #{tpu_custom_call.1} parent=1 // pred_check_branch
      %186 = sbr.rel (0) target = $region81
    $region80: #{tpu_custom_call.1} parent=1 // pred_region
      _
    $region81: #{tpu_custom_call.1} parent=1 // pred_fallthru
      _
    // Predicated region
    $region82: #{tpu_custom_call.1} parent=1 // pred_check
      _
    $region83: #{tpu_custom_call.1} parent=1 // pred_check_branch
      %188 = sbr.rel (0) target = $region85
    $region84: #{tpu_custom_call.1} parent=1 // pred_region
      _
    $region85: #{tpu_custom_call.1} parent=1 // pred_fallthru
      _
    // Predicated region
    $region86: #{tpu_custom_call.1} parent=1 // pred_check
      _
    $region87: #{tpu_custom_call.1} parent=1 // pred_check_branch
      %190 = sbr.rel (0) target = $region89
    $region88: #{tpu_custom_call.1} parent=1 // pred_region
      _
    $region89: #{tpu_custom_call.1} parent=1 // pred_fallthru
      _
    // Predicated region
    $region90: #{tpu_custom_call.1} parent=1 // pred_check
      _
    $region91: #{tpu_custom_call.1} parent=1 // pred_check_branch
      %192 = sbr.rel (0) target = $region93
    $region92: #{tpu_custom_call.1} parent=1 // pred_region
      _
    $region93: #{tpu_custom_call.1} parent=1 // pred_fallthru
      _
    // Predicated region
    $region94: #{tpu_custom_call.1} parent=1 // pred_check
      _
    $region95: #{tpu_custom_call.1} parent=1 // pred_check_branch
      %194 = sbr.rel (0) target = $region97
    $region96: #{tpu_custom_call.1} parent=1 // pred_region
      %s196 = ssub.s32 16, 16
      %197 = vsyncadd [#allocation3], %s196
      %s199 = sshll.u32 [#allocation2], 4
      %s200 = int_to_ptr.vmem [resolvable:$true] %s199
      %202 = dma.hbm_to_vmem [thread:$0]  %s47, 16, %s200, [#allocation3]
    $region97: #{tpu_custom_call.1} parent=1 // pred_fallthru
      _
    // Predicated region
    $region98: #{tpu_custom_call.1} parent=1 // pred_check
      _
    $region99: #{tpu_custom_call.1} parent=1 // pred_check_branch
      %204 = sbr.rel (0) target = $region101
    $region100: #{tpu_custom_call.1} parent=1 // pred_region
      _
    $region101: #{tpu_custom_call.1} parent=1 // pred_fallthru
      _
    // Predicated region
    $region102: #{tpu_custom_call.1} parent=1 // pred_check
      _
    $region103: #{tpu_custom_call.1} parent=1 // pred_check_branch
      %206 = sbr.rel (0) target = $region105
    $region104: #{tpu_custom_call.1} parent=1 // pred_region
      _
    $region105: #{tpu_custom_call.1} parent=1 // pred_fallthru
      _
    // Predicated region
    $region106: #{tpu_custom_call.1} parent=1 // pred_check
      _
    $region107: #{tpu_custom_call.1} parent=1 // pred_check_branch
      %208 = sbr.rel (0) target = $region109
    $region108: #{tpu_custom_call.1} parent=1 // pred_region
      _
    $region109: #{tpu_custom_call.1} parent=1 // pred_fallthru
      _
    // Predicated region
    $region110: #{tpu_custom_call.1} parent=1 // pred_check
      _
    $region111: #{tpu_custom_call.1} parent=1 // pred_check_branch
      %210 = sbr.rel (0) target = $region113
    $region112: #{tpu_custom_call.1} parent=1 // pred_region
      _
    $region113: #{tpu_custom_call.1} parent=1 // pred_fallthru
      _
    // Predicated region
    $region114: #{tpu_custom_call.1} parent=1 // pred_check
      _
    $region115: #{tpu_custom_call.1} parent=1 // pred_check_branch
      %212 = sbr.rel (0) target = $region117
    $region116: #{tpu_custom_call.1} parent=1 // pred_region
      _
    $region117: #{tpu_custom_call.1} parent=1 // pred_fallthru
      _
    // Predicated region
    $region118: #{tpu_custom_call.1} parent=1 // pred_check
      _
    $region119: #{tpu_custom_call.1} parent=1 // pred_check_branch
      %214 = sbr.rel (0) target = $region121
    $region120: #{tpu_custom_call.1} parent=1 // pred_region
      _
    $region121: #{tpu_custom_call.1} parent=1 // pred_fallthru
      _
    // Predicated region
    $region122: #{tpu_custom_call.1} parent=1 // pred_check
      _
    $region123: #{tpu_custom_call.1} parent=1 // pred_check_branch
      %216 = sbr.rel (0) target = $region125
    $region124: #{tpu_custom_call.1} parent=1 // pred_region
      _
    $region125: #{tpu_custom_call.1} parent=1 // pred_fallthru
      _
    // Predicated region
    $region126: #{tpu_custom_call.1} parent=1 // pred_check
      _
    $region127: #{tpu_custom_call.1} parent=1 // pred_check_branch
      %218 = sbr.rel (0) target = $region129
    $region128: #{tpu_custom_call.1} parent=1 // pred_region
      _
    $region129: #{tpu_custom_call.1} parent=1 // pred_fallthru
      _
    // Predicated region
    $region130: #{tpu_custom_call.1} parent=1 // pred_check
      _
    $region131: #{tpu_custom_call.1} parent=1 // pred_check_branch
      %220 = sbr.rel (0) target = $region133
    $region132: #{tpu_custom_call.1} parent=1 // pred_region
      %s222 = ssub.s32 16, 16
      %223 = vsyncadd [#allocation5], %s222
      %s225 = sshll.u32 [#allocation4], 4
      %s226 = int_to_ptr.vmem [resolvable:$true] %s225
      %228 = dma.hbm_to_vmem [thread:$0]  %s65, 16, %s226, [#allocation5]
    $region133: #{tpu_custom_call.1} parent=1 // pred_fallthru
      _
    // Predicated region
    $region134: #{tpu_custom_call.1} parent=1 // pred_check
      _
    $region135: #{tpu_custom_call.1} parent=1 // pred_check_branch
      %230 = sbr.rel (0) target = $region137
    $region136: #{tpu_custom_call.1} parent=1 // pred_region
      %s232 = ssub.s32 16, 16
      %233 = vsyncadd [#allocation5], %s232
      %s235 = sshll.u32 [#allocation6], 4
      %s236 = int_to_ptr.vmem [resolvable:$true] %s235
      %238 = dma.hbm_to_vmem [thread:$0]  %s67, 16, %s236, [#allocation5]
    $region137: #{tpu_custom_call.1} parent=1 // pred_fallthru
      _
    // Predicated region
    $region138: #{tpu_custom_call.1} parent=1 // pred_check
      _
    $region139: #{tpu_custom_call.1} parent=1 // pred_check_branch
      %240 = sbr.rel (0) target = $region141
    $region140: #{tpu_custom_call.1} parent=1 // pred_region
      %s242 = ssub.s32 16, 16
      %243 = vsyncadd [#allocation8], %s242
      %s245 = sshll.u32 [#allocation7], 4
      %s246 = int_to_ptr.vmem [resolvable:$true] %s245
      %248 = dma.hbm_to_vmem [thread:$0]  %s69, 16, %s246, [#allocation8]
    $region141: #{tpu_custom_call.1} parent=1 // pred_fallthru
      _
    // Predicated region
    $region142: #{tpu_custom_call.1} parent=1 // pred_check
      _
    $region143: #{tpu_custom_call.1} parent=1 // pred_check_branch
      %250 = sbr.rel (0) target = $region145
    $region144: #{tpu_custom_call.1} parent=1 // pred_region
      _
    $region145: #{tpu_custom_call.1} parent=1 // pred_fallthru
      _
    // Predicated region
    $region146: #{tpu_custom_call.1} parent=1 // pred_check
      _
    $region147: #{tpu_custom_call.1} parent=1 // pred_check_branch
      %252 = sbr.rel (0) target = $region149
    $region148: #{tpu_custom_call.1} parent=1 // pred_region
      %s254 = ssub.s32 16, 16
      %255 = vsyncadd [#allocation8], %s254
      %s257 = sshll.u32 [#allocation9], 4
      %s258 = int_to_ptr.vmem [resolvable:$true] %s257
      %260 = dma.hbm_to_vmem [thread:$0]  %s73, 16, %s258, [#allocation8]
    $region149: #{tpu_custom_call.1} parent=1 // pred_fallthru
      _
    // Predicated region
    $region150: #{tpu_custom_call.1} parent=1 // pred_check
      _
    $region151: #{tpu_custom_call.1} parent=1 // pred_check_branch
      %262 = sbr.rel (0) target = $region153
    $region152: #{tpu_custom_call.1} parent=1 // pred_region
      _
    $region153: #{tpu_custom_call.1} parent=1 // pred_fallthru
      _
    // Predicated region
    $region154: #{tpu_custom_call.1} parent=1 // pred_check
      _
    $region155: #{tpu_custom_call.1} parent=1 // pred_check_branch
      %264 = sbr.rel (0) target = $region157
    $region156: #{tpu_custom_call.1} parent=1 // pred_region
      %s266 = ssub.s32 16, 16
      %267 = vsyncadd [#allocation11], %s266
      %s269 = sshll.u32 [#allocation10], 4
      %s270 = int_to_ptr.vmem [resolvable:$true] %s269
      %272 = dma.hbm_to_vmem [thread:$0]  %s77, 16, %s270, [#allocation11]
    $region157: #{tpu_custom_call.1} parent=1 // pred_fallthru
      _
    // Predicated region
    $region158: #{tpu_custom_call.1} parent=1 // pred_check
      _
    $region159: #{tpu_custom_call.1} parent=1 // pred_check_branch
      %274 = sbr.rel (0) target = $region161
    $region160: #{tpu_custom_call.1} parent=1 // pred_region
      _
    $region161: #{tpu_custom_call.1} parent=1 // pred_fallthru
      _
    // Predicated region
    $region162: #{tpu_custom_call.1} parent=1 // pred_check
      _
    $region163: #{tpu_custom_call.1} parent=1 // pred_check_branch
      %276 = sbr.rel (0) target = $region165
    $region164: #{tpu_custom_call.1} parent=1 // pred_region
      _
    $region165: #{tpu_custom_call.1} parent=1 // pred_fallthru
      _
    // Predicated region
    $region166: #{tpu_custom_call.1} parent=1 // pred_check
      _
    $region167: #{tpu_custom_call.1} parent=1 // pred_check_branch
      %278 = sbr.rel (0) target = $region169
    $region168: #{tpu_custom_call.1} parent=1 // pred_region
      _
    $region169: #{tpu_custom_call.1} parent=1 // pred_fallthru
      _
    // Predicated region
    $region170: #{tpu_custom_call.1} parent=1 // pred_check
      _
    $region171: #{tpu_custom_call.1} parent=1 // pred_check_branch
      %280 = sbr.rel (0) target = $region173
    $region172: #{tpu_custom_call.1} parent=1 // pred_region
      _
    $region173: #{tpu_custom_call.1} parent=1 // pred_fallthru
      _
    // Predicated region
    $region174: #{tpu_custom_call.1} parent=1 // pred_check
      _
    $region175: #{tpu_custom_call.1} parent=1 // pred_check_branch
      %282 = sbr.rel (0) target = $region177
    $region176: #{tpu_custom_call.1} parent=1 // pred_region
      %s284 = ssub.s32 16, 16
      %285 = vsyncadd [#allocation11], %s284
      %s287 = sshll.u32 [#allocation12], 4
      %s288 = int_to_ptr.vmem [resolvable:$true] %s287
      %290 = dma.hbm_to_vmem [thread:$0]  %s87, 16, %s288, [#allocation11]
    $region177: #{tpu_custom_call.1} parent=1 // pred_fallthru
      _
    // Predicated region
    $region178: #{tpu_custom_call.1} parent=1 // pred_check
      _
    $region179: #{tpu_custom_call.1} parent=1 // pred_check_branch
      %292 = sbr.rel (0) target = $region181
    $region180: #{tpu_custom_call.1} parent=1 // pred_region
      %s294 = ssub.s32 16, 16
      %295 = vsyncadd [#allocation14], %s294
      %s297 = sshll.u32 [#allocation13], 4
      %s298 = int_to_ptr.vmem [resolvable:$true] %s297
      %300 = dma.hbm_to_vmem [thread:$0]  %s89, 16, %s298, [#allocation14]
    $region181: #{tpu_custom_call.1} parent=1 // pred_fallthru
      _
    // Predicated region
    $region182: #{tpu_custom_call.1} parent=1 // pred_check
      _
    $region183: #{tpu_custom_call.1} parent=1 // pred_check_branch
      %302 = sbr.rel (0) target = $region185
    $region184: #{tpu_custom_call.1} parent=1 // pred_region
      %s304 = ssub.s32 16, 16
      %305 = vsyncadd [#allocation14], %s304
      %s307 = sshll.u32 [#allocation15], 4
      %s308 = int_to_ptr.vmem [resolvable:$true] %s307
      %310 = dma.hbm_to_vmem [thread:$0]  %s91, 16, %s308, [#allocation14]
    $region185: #{tpu_custom_call.1} parent=1 // pred_fallthru
      _
    // Predicated region
    $region186: #{tpu_custom_call.1} parent=1 // pred_check
      _
    $region187: #{tpu_custom_call.1} parent=1 // pred_check_branch
      %312 = sbr.rel (0) target = $region189
    $region188: #{tpu_custom_call.1} parent=1 // pred_region
      _
    $region189: #{tpu_custom_call.1} parent=1 // pred_fallthru
      _
    // Predicated region
    $region190: #{tpu_custom_call.1} parent=1 // pred_check
      _
    $region191: #{tpu_custom_call.1} parent=1 // pred_check_branch
      %314 = sbr.rel (0) target = $region193
    $region192: #{tpu_custom_call.1} parent=1 // pred_region
      _
    $region193: #{tpu_custom_call.1} parent=1 // pred_fallthru
      _
    // Predicated region
    $region194: #{tpu_custom_call.1} parent=1 // pred_check
      _
    $region195: #{tpu_custom_call.1} parent=1 // pred_check_branch
      %316 = sbr.rel (0) target = $region197
    $region196: #{tpu_custom_call.1} parent=1 // pred_region
      _
    $region197: #{tpu_custom_call.1} parent=1 // pred_fallthru
      _
    // Predicated region
    $region198: #{tpu_custom_call.1} parent=1 // pred_check
      _
    $region199: #{tpu_custom_call.1} parent=1 // pred_check_branch
      %318 = sbr.rel (0) target = $region201
    $region200: #{tpu_custom_call.1} parent=1 // pred_region
      _
    $region201: #{tpu_custom_call.1} parent=1 // pred_fallthru
      _
    // Predicated region
    $region202: #{tpu_custom_call.1} parent=1 // pred_check
      _
    $region203: #{tpu_custom_call.1} parent=1 // pred_check_branch
      %320 = sbr.rel (0) target = $region205
    $region204: #{tpu_custom_call.1} parent=1 // pred_region
      _
    $region205: #{tpu_custom_call.1} parent=1 // pred_fallthru
      _
    // Predicated region
    $region206: #{tpu_custom_call.1} parent=1 // pred_check
      _
    $region207: #{tpu_custom_call.1} parent=1 // pred_check_branch
      %322 = sbr.rel (0) target = $region209
    $region208: #{tpu_custom_call.1} parent=1 // pred_region
      _
    $region209: #{tpu_custom_call.1} parent=1 // pred_fallthru
      _
    // Predicated region
    $region210: #{tpu_custom_call.1} parent=1 // pred_check
      _
    $region211: #{tpu_custom_call.1} parent=1 // pred_check_branch
      %324 = sbr.rel (0) target = $region213
    $region212: #{tpu_custom_call.1} parent=1 // pred_region
      _
    $region213: #{tpu_custom_call.1} parent=1 // pred_fallthru
      _
    // Predicated region
    $region214: #{tpu_custom_call.1} parent=1 // pred_check
      _
    $region215: #{tpu_custom_call.1} parent=1 // pred_check_branch
      %326 = sbr.rel (0) target = $region217
    $region216: #{tpu_custom_call.1} parent=1 // pred_region
      _
    $region217: #{tpu_custom_call.1} parent=1 // pred_fallthru
      _
    // Predicated region
    $region218: #{tpu_custom_call.1} parent=1 // pred_check
      _
    $region219: #{tpu_custom_call.1} parent=1 // pred_check_branch
      %328 = sbr.rel (0) target = $region221
    $region220: #{tpu_custom_call.1} parent=1 // pred_region
      %s330 = ssub.s32 16, 16
      %331 = vsyncadd [#allocation17], %s330
      %s333 = sshll.u32 [#allocation16], 4
      %s334 = int_to_ptr.vmem [resolvable:$true] %s333
      %336 = dma.hbm_to_vmem [thread:$0]  %s109, 16, %s334, [#allocation17]
    $region221: #{tpu_custom_call.1} parent=1 // pred_fallthru
      _
    // Predicated region
    $region222: #{tpu_custom_call.1} parent=1 // pred_check
      _
    $region223: #{tpu_custom_call.1} parent=1 // pred_check_branch
      %338 = sbr.rel (0) target = $region225
    $region224: #{tpu_custom_call.1} parent=1 // pred_region
      %s340 = ssub.s32 16, 16
      %341 = vsyncadd [#allocation17], %s340
      %s343 = sshll.u32 [#allocation18], 4
      %s344 = int_to_ptr.vmem [resolvable:$true] %s343
      %346 = dma.hbm_to_vmem [thread:$0]  %s111, 16, %s344, [#allocation17]
    $region225: #{tpu_custom_call.1} parent=1 // pred_fallthru
      _
    // Predicated region
    $region226: #{tpu_custom_call.1} parent=1 // pred_check
      _
    $region227: #{tpu_custom_call.1} parent=1 // pred_check_branch
      %348 = sbr.rel (0) target = $region229
    $region228: #{tpu_custom_call.1} parent=1 // pred_region
      %s350 = ssub.s32 16, 16
      %351 = vsyncadd [#allocation20], %s350
      %s353 = sshll.u32 [#allocation19], 4
      %s354 = int_to_ptr.vmem [resolvable:$true] %s353
      %356 = dma.hbm_to_vmem [thread:$0]  %s113, 16, %s354, [#allocation20]
    $region229: #{tpu_custom_call.1} parent=1 // pred_fallthru
      _
    // Predicated region
    $region230: #{tpu_custom_call.1} parent=1 // pred_check
      _
    $region231: #{tpu_custom_call.1} parent=1 // pred_check_branch
      %358 = sbr.rel (0) target = $region233
    $region232: #{tpu_custom_call.1} parent=1 // pred_region
      _
    $region233: #{tpu_custom_call.1} parent=1 // pred_fallthru
      _
    // Predicated region
    $region234: #{tpu_custom_call.1} parent=1 // pred_check
      _
    $region235: #{tpu_custom_call.1} parent=1 // pred_check_branch
      %360 = sbr.rel (0) target = $region237
    $region236: #{tpu_custom_call.1} parent=1 // pred_region
      _
    $region237: #{tpu_custom_call.1} parent=1 // pred_fallthru
      _
    // Predicated region
    $region238: #{tpu_custom_call.1} parent=1 // pred_check
      _
    $region239: #{tpu_custom_call.1} parent=1 // pred_check_branch
      %362 = sbr.rel (0) target = $region241
    $region240: #{tpu_custom_call.1} parent=1 // pred_region
      _
    $region241: #{tpu_custom_call.1} parent=1 // pred_fallthru
      _
    // Predicated region
    $region242: #{tpu_custom_call.1} parent=1 // pred_check
      _
    $region243: #{tpu_custom_call.1} parent=1 // pred_check_branch
      %364 = sbr.rel (0) target = $region245
    $region244: #{tpu_custom_call.1} parent=1 // pred_region
      %s366 = ssub.s32 16, 16
      %367 = vsyncadd [#allocation20], %s366
      %s369 = sshll.u32 [#allocation21], 4
      %s370 = int_to_ptr.vmem [resolvable:$true] %s369
      %372 = dma.hbm_to_vmem [thread:$0]  %s121, 16, %s370, [#allocation20]
    $region245: #{tpu_custom_call.1} parent=1 // pred_fallthru
      _
    // Predicated region
    $region246: #{tpu_custom_call.1} parent=1 // pred_check
      _
    $region247: #{tpu_custom_call.1} parent=1 // pred_check_branch
      %374 = sbr.rel (0) target = $region249
    $region248: #{tpu_custom_call.1} parent=1 // pred_region
      %s376 = ssub.s32 16, 16
      %377 = vsyncadd [#allocation23], %s376
      %s379 = sshll.u32 [#allocation22], 4
      %s380 = int_to_ptr.vmem [resolvable:$true] %s379
      %382 = dma.hbm_to_vmem [thread:$0]  %s123, 16, %s380, [#allocation23]
    $region249: #{tpu_custom_call.1} parent=1 // pred_fallthru
      _
    // Predicated region
    $region250: #{tpu_custom_call.1} parent=1 // pred_check
      _
    $region251: #{tpu_custom_call.1} parent=1 // pred_check_branch
      %384 = sbr.rel (0) target = $region253
    $region252: #{tpu_custom_call.1} parent=1 // pred_region
      %s386 = ssub.s32 16, 16
      %387 = vsyncadd [#allocation23], %s386
      %s389 = sshll.u32 [#allocation24], 4
      %s390 = int_to_ptr.vmem [resolvable:$true] %s389
      %392 = dma.hbm_to_vmem [thread:$0]  %s125, 16, %s390, [#allocation23]
    $region253: #{tpu_custom_call.1} parent=1 // pred_fallthru
      _
    // Predicated region
    $region254: #{tpu_custom_call.1} parent=1 // pred_check
      _
    $region255: #{tpu_custom_call.1} parent=1 // pred_check_branch
      %394 = sbr.rel (0) target = $region257
    $region256: #{tpu_custom_call.1} parent=1 // pred_region
      _
    $region257: #{tpu_custom_call.1} parent=1 // pred_fallthru
      _
    // Predicated region
    $region258: #{tpu_custom_call.1} parent=1 // pred_check
      _
    $region259: #{tpu_custom_call.1} parent=1 // pred_check_branch
      %396 = sbr.rel (0) target = $region261
    $region260: #{tpu_custom_call.1} parent=1 // pred_region
      _
    $region261: #{tpu_custom_call.1} parent=1 // pred_fallthru
      _
    // Predicated region
    $region262: #{tpu_custom_call.1} parent=1 // pred_check
      _
    $region263: #{tpu_custom_call.1} parent=1 // pred_check_branch
      %398 = sbr.rel (0) target = $region265
    $region264: #{tpu_custom_call.1} parent=1 // pred_region
      %s400 = ssub.s32 16, 16
      %401 = vsyncadd [#allocation26], %s400
      %s403 = sshll.u32 [#allocation25], 4
      %s404 = int_to_ptr.vmem [resolvable:$true] %s403
      %406 = dma.hbm_to_vmem [thread:$0]  %s131, 16, %s404, [#allocation26]
    $region265: #{tpu_custom_call.1} parent=1 // pred_fallthru
      _
    // Predicated region
    $region266: #{tpu_custom_call.1} parent=1 // pred_check
      _
    $region267: #{tpu_custom_call.1} parent=1 // pred_check_branch
      %408 = sbr.rel (0) target = $region269
    $region268: #{tpu_custom_call.1} parent=1 // pred_region
      %409 = dma.done [#allocation3], 16
    $region269: #{tpu_custom_call.1} parent=1 // pred_fallthru
      _
    // Predicated region
    $region270: #{tpu_custom_call.1} parent=1 // pred_check
      _
    $region271: #{tpu_custom_call.1} parent=1 // pred_check_branch
      %411 = sbr.rel (0) target = $region273
    $region272: #{tpu_custom_call.1} parent=1 // pred_region
      %412 = dma.done [#allocation5], 16
    $region273: #{tpu_custom_call.1} parent=1 // pred_fallthru
      _
    // Predicated region
    $region274: #{tpu_custom_call.1} parent=1 // pred_check
      _
    $region275: #{tpu_custom_call.1} parent=1 // pred_check_branch
      %414 = sbr.rel (0) target = $region277
    $region276: #{tpu_custom_call.1} parent=1 // pred_region
      %415 = dma.done [#allocation5], 16
    $region277: #{tpu_custom_call.1} parent=1 // pred_fallthru
      _
    // Predicated region
    $region278: #{tpu_custom_call.1} parent=1 // pred_check
      _
    $region279: #{tpu_custom_call.1} parent=1 // pred_check_branch
      %417 = sbr.rel (0) target = $region281
    $region280: #{tpu_custom_call.1} parent=1 // pred_region
      %418 = dma.done [#allocation8], 16
    $region281: #{tpu_custom_call.1} parent=1 // pred_fallthru
      _
    // Predicated region
    $region282: #{tpu_custom_call.1} parent=1 // pred_check
      _
    $region283: #{tpu_custom_call.1} parent=1 // pred_check_branch
      %420 = sbr.rel (0) target = $region285
    $region284: #{tpu_custom_call.1} parent=1 // pred_region
      %421 = dma.done [#allocation8], 16
    $region285: #{tpu_custom_call.1} parent=1 // pred_fallthru
      _
    // Predicated region
    $region286: #{tpu_custom_call.1} parent=1 // pred_check
      _
    $region287: #{tpu_custom_call.1} parent=1 // pred_check_branch
      %423 = sbr.rel (0) target = $region289
    $region288: #{tpu_custom_call.1} parent=1 // pred_region
      %424 = dma.done [#allocation11], 16
    $region289: #{tpu_custom_call.1} parent=1 // pred_fallthru
      _
    // Predicated region
    $region290: #{tpu_custom_call.1} parent=1 // pred_check
      _
    $region291: #{tpu_custom_call.1} parent=1 // pred_check_branch
      %426 = sbr.rel (0) target = $region293
    $region292: #{tpu_custom_call.1} parent=1 // pred_region
      %427 = dma.done [#allocation11], 16
    $region293: #{tpu_custom_call.1} parent=1 // pred_fallthru
      _
    // Predicated region
    $region294: #{tpu_custom_call.1} parent=1 // pred_check
      _
    $region295: #{tpu_custom_call.1} parent=1 // pred_check_branch
      %429 = sbr.rel (0) target = $region297
    $region296: #{tpu_custom_call.1} parent=1 // pred_region
      %430 = dma.done [#allocation14], 16
    $region297: #{tpu_custom_call.1} parent=1 // pred_fallthru
      _
    // Predicated region
    $region298: #{tpu_custom_call.1} parent=1 // pred_check
      _
    $region299: #{tpu_custom_call.1} parent=1 // pred_check_branch
      %432 = sbr.rel (0) target = $region301
    $region300: #{tpu_custom_call.1} parent=1 // pred_region
      %433 = dma.done [#allocation14], 16
    $region301: #{tpu_custom_call.1} parent=1 // pred_fallthru
      _
    // Predicated region
    $region302: #{tpu_custom_call.1} parent=1 // pred_check
      _
    $region303: #{tpu_custom_call.1} parent=1 // pred_check_branch
      %435 = sbr.rel (0) target = $region305
    $region304: #{tpu_custom_call.1} parent=1 // pred_region
      %436 = dma.done [#allocation17], 16
    $region305: #{tpu_custom_call.1} parent=1 // pred_fallthru
      _
    // Predicated region
    $region306: #{tpu_custom_call.1} parent=1 // pred_check
      _
    $region307: #{tpu_custom_call.1} parent=1 // pred_check_branch
      %438 = sbr.rel (0) target = $region309
    $region308: #{tpu_custom_call.1} parent=1 // pred_region
      %439 = dma.done [#allocation17], 16
    $region309: #{tpu_custom_call.1} parent=1 // pred_fallthru
      _
    // Predicated region
    $region310: #{tpu_custom_call.1} parent=1 // pred_check
      _
    $region311: #{tpu_custom_call.1} parent=1 // pred_check_branch
      %441 = sbr.rel (0) target = $region313
    $region312: #{tpu_custom_call.1} parent=1 // pred_region
      %442 = dma.done [#allocation20], 16
    $region313: #{tpu_custom_call.1} parent=1 // pred_fallthru
      _
    // Predicated region
    $region314: #{tpu_custom_call.1} parent=1 // pred_check
      _
    $region315: #{tpu_custom_call.1} parent=1 // pred_check_branch
      %444 = sbr.rel (0) target = $region317
    $region316: #{tpu_custom_call.1} parent=1 // pred_region
      %445 = dma.done [#allocation20], 16
    $region317: #{tpu_custom_call.1} parent=1 // pred_fallthru
      _
    // Predicated region
    $region318: #{tpu_custom_call.1} parent=1 // pred_check
      _
    $region319: #{tpu_custom_call.1} parent=1 // pred_check_branch
      %447 = sbr.rel (0) target = $region321
    $region320: #{tpu_custom_call.1} parent=1 // pred_region
      %448 = dma.done [#allocation23], 16
    $region321: #{tpu_custom_call.1} parent=1 // pred_fallthru
      _
    // Predicated region
    $region322: #{tpu_custom_call.1} parent=1 // pred_check
      _
    $region323: #{tpu_custom_call.1} parent=1 // pred_check_branch
      %450 = sbr.rel (0) target = $region325
    $region324: #{tpu_custom_call.1} parent=1 // pred_region
      %451 = dma.done [#allocation23], 16
    $region325: #{tpu_custom_call.1} parent=1 // pred_fallthru
      _
    // Predicated region
    $region326: #{tpu_custom_call.1} parent=1 // pred_check
      _
    $region327: #{tpu_custom_call.1} parent=1 // pred_check_branch
      %453 = sbr.rel (0) target = $region329
    $region328: #{tpu_custom_call.1} parent=1 // pred_region
      %454 = dma.done [#allocation26], 16
    $region329: #{tpu_custom_call.1} parent=1 // pred_fallthru
      _
    %v455 = vld [vmem:[%s1] sm:$0xff]
    %v456 = vld [vmem:[%s1 + $0x8] sm:$0xff]
    %v457 = vld [vmem:[%s1 + $0x10] sm:$0xff]
    %v458 = vld [vmem:[%s1 + $0x18] sm:$0xff]
    %v459 = vld [vmem:[%s1 + $0x20] sm:$0xff]
    %v460 = vld [vmem:[%s1 + $0x28] sm:$0xff]
    %v461 = vld [vmem:[%s1 + $0x30] sm:$0xff]
    %v462 = vld [vmem:[%s1 + $0x38] sm:$0xff]
    %v463 = vld [vmem:[%s3] sm:$0xff]
    %v464 = vld [vmem:[%s3 + $0x8] sm:$0xff]
    %v465 = vld [vmem:[%s3 + $0x10] sm:$0xff]
    %v466 = vld [vmem:[%s3 + $0x18] sm:$0xff]
    %v467 = vld [vmem:[%s3 + $0x20] sm:$0xff]
    %v468 = vld [vmem:[%s3 + $0x28] sm:$0xff]
    %v469 = vld [vmem:[%s5] sm:$0x1]
    %v470 = vld [vmem:[%s7] sm:$0x1]
    %v471 = vld [vmem:[%s9] sm:$0x1]
    %v473 = vlaneseq
    %v474 = vshrl.u32 %v473, 7
    %v475 = vsub.s32 0, %v474
    %v476 = vrot.slane %v469, %v475
    %vm478 = vcmask 392192
    %v480 = vsel %vm478, %v455, 0
    %v483 = vsel %vm478, %v456, 0
    %v486 = vsel %vm478, %v457, 0
    %v489 = vsel %vm478, %v458, 0
    %v492 = vsel %vm478, %v459, 0
    %v495 = vsel %vm478, %v460, 0
    %v498 = vsel %vm478, %v461, 0
    %v501 = vsel %vm478, %v462, 0
    %503 = vmatprep.subr.mxu0 0.0
    %504 = vmatpush1.msra.mxu0 %v463
    %505 = vmatprep.subr.mxu0 0.0
    %506 = vmatpush1.msra.mxu0 %v464
    %507 = vmatprep.subr.mxu0 0.0
    %508 = vmatpush1.msra.mxu0 %v465
    %509 = vmatprep.subr.mxu0 0.0
    %510 = vmatpush1.msra.mxu0 %v466
    %511 = vmatprep.subr.mxu0 0.0
    %512 = vmatpush1.msra.mxu0 %v467
    %513 = vmatprep.subr.mxu0 0.0
    %514 = vmatpush1.msra.mxu0 %v468
    %515 = vmatprep.subr.mxu0 0.0
    %516 = vmatpush1.msra.mxu0 0.0
    %517 = vmatprep.subr.mxu0 0.0
    %518 = vmatpush1.msra.mxu0 0.0
    %519 = vmatprep.subr.mxu0 0.0
    %520 = vmatpush1.msra.mxu0 0.0
    %521 = vmatprep.subr.mxu0 0.0
    %522 = vmatpush1.msra.mxu0 0.0
    %523 = vmatprep.subr.mxu0 0.0
    %524 = vmatpush1.msra.mxu0 0.0
    %525 = vmatprep.subr.mxu0 0.0
    %526 = vmatpush1.msra.mxu0 0.0
    %527 = vmatprep.subr.mxu0 0.0
    %528 = vmatpush1.msra.mxu0 0.0
    %529 = vmatprep.subr.mxu0 0.0
    %530 = vmatpush1.msra.mxu0 0.0
    %531 = vmatprep.subr.mxu0 0.0
    %532 = vmatpush1.msra.mxu0 0.0
    %533 = vmatprep.subr.mxu0 0.0
    %534 = vmatpush1.msra.mxu0 0.0
    %535 = vmatprep.subr.mxu0 0.0
    %536 = vmatpush1.msra.mxu0 0.0
    %537 = vmatprep.subr.mxu0 0.0
    %538 = vmatpush1.msra.mxu0 0.0
    %539 = vmatprep.subr.mxu0 0.0
    %540 = vmatpush1.msra.mxu0 0.0
    %541 = vmatprep.subr.mxu0 0.0
    %542 = vmatpush1.msra.mxu0 0.0
    %543 = vmatprep.subr.mxu0 0.0
    %544 = vmatpush1.msra.mxu0 0.0
    %545 = vmatprep.subr.mxu0 0.0
    %546 = vmatpush1.msra.mxu0 0.0
    %547 = vmatprep.subr.mxu0 0.0
    %548 = vmatpush1.msra.mxu0 0.0
    %549 = vmatprep.subr.mxu0 0.0
    %550 = vmatpush1.msra.mxu0 0.0
    %551 = vmatprep.subr.mxu0 0.0
    %552 = vmatpush1.msra.mxu0 0.0
    %553 = vmatprep.subr.mxu0 0.0
    %554 = vmatpush1.msra.mxu0 0.0
    %555 = vmatprep.subr.mxu0 0.0
    %556 = vmatpush1.msra.mxu0 0.0
    %557 = vmatprep.subr.mxu0 0.0
    %558 = vmatpush1.msra.mxu0 0.0
    %559 = vmatprep.subr.mxu0 0.0
    %560 = vmatpush1.msra.mxu0 0.0
    %561 = vmatprep.subr.mxu0 0.0
    %562 = vmatpush1.msra.mxu0 0.0
    %563 = vmatprep.subr.mxu0 0.0
    %564 = vmatpush1.msra.mxu0 0.0
    %565 = vmatprep.subr.mxu0 0.0
    %566 = vmatpush1.msra.mxu0 0.0
    %567 = vmatprep.mubr.f32.mxu0 0.0
    %568 = vmatmul.mubr.f32.gmra.mrb[0].mxu0 %v480
    %v569 = vpop.f32.mrb[0].mxu0
    %v570 = vadd.f32 %v476, %v569
    %v571 = vpop.f32.mrb[0].mxu0
    %572 = vmatprep.mubr.f32.mxu0 0.0
    %573 = vmatmul.mubr.f32.gmra.mrb[0].mxu0 %v483
    %v574 = vpop.f32.mrb[0].mxu0
    %v575 = vadd.f32 %v476, %v574
    %v576 = vpop.f32.mrb[0].mxu0
    %577 = vmatprep.mubr.f32.mxu0 0.0
    %578 = vmatmul.mubr.f32.gmra.mrb[0].mxu0 %v486
    %v579 = vpop.f32.mrb[0].mxu0
    %v580 = vadd.f32 %v476, %v579
    %v581 = vpop.f32.mrb[0].mxu0
    %582 = vmatprep.mubr.f32.mxu0 0.0
    %583 = vmatmul.mubr.f32.gmra.mrb[0].mxu0 %v489
    %v584 = vpop.f32.mrb[0].mxu0
    %v585 = vadd.f32 %v476, %v584
    %v586 = vpop.f32.mrb[0].mxu0
    %587 = vmatprep.mubr.f32.mxu0 0.0
    %588 = vmatmul.mubr.f32.gmra.mrb[0].mxu0 %v492
    %v589 = vpop.f32.mrb[0].mxu0
    %v590 = vadd.f32 %v476, %v589
    %v591 = vpop.f32.mrb[0].mxu0
    %592 = vmatprep.mubr.f32.mxu0 0.0
    %593 = vmatmul.mubr.f32.gmra.mrb[0].mxu0 %v495
    %v594 = vpop.f32.mrb[0].mxu0
    %v595 = vadd.f32 %v476, %v594
    %v596 = vpop.f32.mrb[0].mxu0
    %597 = vmatprep.mubr.f32.mxu0 0.0
    %598 = vmatmul.mubr.f32.gmra.mrb[0].mxu0 %v498
    %v599 = vpop.f32.mrb[0].mxu0
    %v600 = vadd.f32 %v476, %v599
    %v601 = vpop.f32.mrb[0].mxu0
    %602 = vmatprep.mubr.f32.mxu0 0.0
    %603 = vmatmul.mubr.f32.gmra.mrb[0].mxu0 %v501
    %v604 = vpop.f32.mrb[0].mxu0
    %v605 = vadd.f32 %v476, %v604
    %v606 = vpop.f32.mrb[0].mxu0
    %607 = vdwg.mxu0
    %vm608 = vcmask 261120
    %v609 = vsel %vm608, %v570, 0.0
    %610 = vadd.xlane.f32.xlu0 %v609
    %v611 = vpop.xlane.xlu0 %610
    %v612 = vsel %vm608, %v575, 0.0
    %613 = vadd.xlane.f32.xlu0 %v612
    %v614 = vpop.xlane.xlu0 %613
    %v615 = vsel %vm608, %v580, 0.0
    %616 = vadd.xlane.f32.xlu0 %v615
    %v617 = vpop.xlane.xlu0 %616
    %v618 = vsel %vm608, %v585, 0.0
    %619 = vadd.xlane.f32.xlu0 %v618
    %v620 = vpop.xlane.xlu0 %619
    %v621 = vsel %vm608, %v590, 0.0
    %622 = vadd.xlane.f32.xlu0 %v621
    %v623 = vpop.xlane.xlu0 %622
    %v624 = vsel %vm608, %v595, 0.0
    %625 = vadd.xlane.f32.xlu0 %v624
    %v626 = vpop.xlane.xlu0 %625
    %v627 = vsel %vm608, %v600, 0.0
    %628 = vadd.xlane.f32.xlu0 %v627
    %v629 = vpop.xlane.xlu0 %628
    %v630 = vsel %vm608, %v605, 0.0
    %631 = vadd.xlane.f32.xlu0 %v630
    %v632 = vpop.xlane.xlu0 %631
    %v633 = vrcp.pop 32.0
    %v634 = vmul.f32 %v611, %v633
    %v635 = vmul.f32 %v614, %v633
    %v636 = vmul.f32 %v617, %v633
    %v637 = vmul.f32 %v620, %v633
    %v638 = vmul.f32 %v623, %v633
    %v639 = vmul.f32 %v626, %v633
    %v640 = vmul.f32 %v629, %v633
    %v641 = vmul.f32 %v632, %v633
    %v642 = vsub.f32 %v570, %v634
    %v643 = vsub.f32 %v575, %v635
    %v644 = vsub.f32 %v580, %v636
    %v645 = vsub.f32 %v585, %v637
    %v646 = vsub.f32 %v590, %v638
    %v647 = vsub.f32 %v595, %v639
    %v648 = vsub.f32 %v600, %v640
    %v649 = vsub.f32 %v605, %v641
    %v650 = vmul.f32 %v642, %v642
    %v651 = vmul.f32 %v643, %v643
    %v652 = vmul.f32 %v644, %v644
    %v653 = vmul.f32 %v645, %v645
    %v654 = vmul.f32 %v646, %v646
    %v655 = vmul.f32 %v647, %v647
    %v656 = vmul.f32 %v648, %v648
    %v657 = vmul.f32 %v649, %v649
    %v658 = vsel %vm608, %v650, 0.0
    %659 = vadd.xlane.f32.xlu0 %v658
    %v660 = vpop.xlane.xlu0 %659
    %v661 = vsel %vm608, %v651, 0.0
    %662 = vadd.xlane.f32.xlu0 %v661
    %v663 = vpop.xlane.xlu0 %662
    %v664 = vsel %vm608, %v652, 0.0
    %665 = vadd.xlane.f32.xlu0 %v664
    %v666 = vpop.xlane.xlu0 %665
    %v667 = vsel %vm608, %v653, 0.0
    %668 = vadd.xlane.f32.xlu0 %v667
    %v669 = vpop.xlane.xlu0 %668
    %v670 = vsel %vm608, %v654, 0.0
    %671 = vadd.xlane.f32.xlu0 %v670
    %v672 = vpop.xlane.xlu0 %671
    %v673 = vsel %vm608, %v655, 0.0
    %674 = vadd.xlane.f32.xlu0 %v673
    %v675 = vpop.xlane.xlu0 %674
    %v676 = vsel %vm608, %v656, 0.0
    %677 = vadd.xlane.f32.xlu0 %v676
    %v678 = vpop.xlane.xlu0 %677
    %v679 = vsel %vm608, %v657, 0.0
    %680 = vadd.xlane.f32.xlu0 %v679
    %v681 = vpop.xlane.xlu0 %680
    %v682 = vmul.f32 %v660, %v633
    %v683 = vmul.f32 %v663, %v633
    %v684 = vmul.f32 %v666, %v633
    %v685 = vmul.f32 %v669, %v633
    %v686 = vmul.f32 %v672, %v633
    %v687 = vmul.f32 %v675, %v633
    %v688 = vmul.f32 %v678, %v633
    %v689 = vmul.f32 %v681, %v633
    %v690 = vadd.f32 %v682, 1e-05
    %v691 = vadd.f32 %v683, 1e-05
    %v692 = vadd.f32 %v684, 1e-05
    %v693 = vadd.f32 %v685, 1e-05
    %v694 = vadd.f32 %v686, 1e-05
    %v695 = vadd.f32 %v687, 1e-05
    %v696 = vadd.f32 %v688, 1e-05
    %v697 = vadd.f32 %v689, 1e-05
    %v698 = vrsqrt.pop %v690
    %v699 = vrsqrt.pop %v691
    %v700 = vrsqrt.pop %v692
    %v701 = vrsqrt.pop %v693
    %v702 = vrsqrt.pop %v694
    %v703 = vrsqrt.pop %v695
    %v704 = vrsqrt.pop %v696
    %v705 = vrsqrt.pop %v697
    %v706 = vmul.f32 %v642, %v698
    %v707 = vmul.f32 %v643, %v699
    %v708 = vmul.f32 %v644, %v700
    %v709 = vmul.f32 %v645, %v701
    %v710 = vmul.f32 %v646, %v702
    %v711 = vmul.f32 %v647, %v703
    %v712 = vmul.f32 %v648, %v704
    %v713 = vmul.f32 %v649, %v705
    %v715 = vlaneseq
    %v716 = vshrl.u32 %v715, 7
    %v717 = vsub.s32 0, %v716
    %v718 = vrot.slane %v470, %v717
    %v720 = vmul.f32 %v706, %v718
    %v721 = vmul.f32 %v707, %v718
    %v722 = vmul.f32 %v708, %v718
    %v723 = vmul.f32 %v709, %v718
    %v724 = vmul.f32 %v710, %v718
    %v725 = vmul.f32 %v711, %v718
    %v726 = vmul.f32 %v712, %v718
    %v727 = vmul.f32 %v713, %v718
    %v729 = vlaneseq
    %v730 = vshrl.u32 %v729, 7
    %v731 = vsub.s32 0, %v730
    %v732 = vrot.slane %v471, %v731
    %v734 = vadd.f32 %v720, %v732
    %v735 = vadd.f32 %v721, %v732
    %v736 = vadd.f32 %v722, %v732
    %v737 = vadd.f32 %v723, %v732
    %v738 = vadd.f32 %v724, %v732
    %v739 = vadd.f32 %v725, %v732
    %v740 = vadd.f32 %v726, %v732
    %v741 = vadd.f32 %v727, %v732
    %v742 = vld [vmem:[%s11] sm:$0x1]
    %v743 = vld [vmem:[%s13] sm:$0x1]
    %v744 = vld [vmem:[%s31] sm:$0x1]
    %v745 = vld [vmem:[%s33] sm:$0x1]
    %v746 = vld [vmem:[%s35] sm:$0x1]
    %v747 = vld [vmem:[%s37] sm:$0xff]
    %v748 = vld [vmem:[%s37 + $0x8] sm:$0xff]
    %v749 = vld [vmem:[%s37 + $0x10] sm:$0xff]
    %v750 = vld [vmem:[%s37 + $0x18] sm:$0xff]
    %v751 = vld [vmem:[%s39] sm:$0x1]
    %v752 = vld [vmem:[%s41] sm:$0xff]
    %v753 = vld [vmem:[%s41 + $0x8] sm:$0xff]
    %v754 = vld [vmem:[%s41 + $0x10] sm:$0xff]
    %v755 = vld [vmem:[%s41 + $0x18] sm:$0xff]
    %v756 = vld [vmem:[%s41 + $0x20] sm:$0xff]
    %v757 = vld [vmem:[%s41 + $0x28] sm:$0xff]
    %v758 = vld [vmem:[%s41 + $0x30] sm:$0xff]
    %v759 = vld [vmem:[%s41 + $0x38] sm:$0xff]
    %v760 = vld [vmem:[%s41 + $0x40] sm:$0xff]
    %v761 = vld [vmem:[%s41 + $0x48] sm:$0xff]
    %v762 = vld [vmem:[%s41 + $0x50] sm:$0xff]
    %v763 = vld [vmem:[%s41 + $0x58] sm:$0xff]
    %v764 = vld [vmem:[%s41 + $0x60] sm:$0xff]
    %v765 = vld [vmem:[%s41 + $0x68] sm:$0xff]
    %v766 = vld [vmem:[%s41 + $0x70] sm:$0xff]
    %v767 = vld [vmem:[%s41 + $0x78] sm:$0xff]
    %v768 = vld [vmem:[%s43] sm:$0x1]
    %v769 = vsel %vm608, %v734, 0.0
    %770 = vadd.xlane.f32.xlu0 %v769
    %v771 = vpop.xlane.xlu0 %770
    %v772 = vsel %vm608, %v735, 0.0
    %773 = vadd.xlane.f32.xlu0 %v772
    %v774 = vpop.xlane.xlu0 %773
    %v775 = vsel %vm608, %v736, 0.0
    %776 = vadd.xlane.f32.xlu0 %v775
    %v777 = vpop.xlane.xlu0 %776
    %v778 = vsel %vm608, %v737, 0.0
    %779 = vadd.xlane.f32.xlu0 %v778
    %v780 = vpop.xlane.xlu0 %779
    %v781 = vsel %vm608, %v738, 0.0
    %782 = vadd.xlane.f32.xlu0 %v781
    %v783 = vpop.xlane.xlu0 %782
    %v784 = vsel %vm608, %v739, 0.0
    %785 = vadd.xlane.f32.xlu0 %v784
    %v786 = vpop.xlane.xlu0 %785
    %v787 = vsel %vm608, %v740, 0.0
    %788 = vadd.xlane.f32.xlu0 %v787
    %v789 = vpop.xlane.xlu0 %788
    %v790 = vsel %vm608, %v741, 0.0
    %791 = vadd.xlane.f32.xlu0 %v790
    %v792 = vpop.xlane.xlu0 %791
    %v793 = vmul.f32 %v771, %v633
    %v794 = vmul.f32 %v774, %v633
    %v795 = vmul.f32 %v777, %v633
    %v796 = vmul.f32 %v780, %v633
    %v797 = vmul.f32 %v783, %v633
    %v798 = vmul.f32 %v786, %v633
    %v799 = vmul.f32 %v789, %v633
    %v800 = vmul.f32 %v792, %v633
    %v801 = vsub.f32 %v734, %v793
    %v802 = vsub.f32 %v735, %v794
    %v803 = vsub.f32 %v736, %v795
    %v804 = vsub.f32 %v737, %v796
    %v805 = vsub.f32 %v738, %v797
    %v806 = vsub.f32 %v739, %v798
    %v807 = vsub.f32 %v740, %v799
    %v808 = vsub.f32 %v741, %v800
    %v809 = vmul.f32 %v801, %v801
    %v810 = vmul.f32 %v802, %v802
    %v811 = vmul.f32 %v803, %v803
    %v812 = vmul.f32 %v804, %v804
    %v813 = vmul.f32 %v805, %v805
    %v814 = vmul.f32 %v806, %v806
    %v815 = vmul.f32 %v807, %v807
    %v816 = vmul.f32 %v808, %v808
    %v817 = vsel %vm608, %v809, 0.0
    %818 = vadd.xlane.f32.xlu0 %v817
    %v819 = vpop.xlane.xlu0 %818
    %v820 = vsel %vm608, %v810, 0.0
    %821 = vadd.xlane.f32.xlu0 %v820
    %v822 = vpop.xlane.xlu0 %821
    %v823 = vsel %vm608, %v811, 0.0
    %824 = vadd.xlane.f32.xlu0 %v823
    %v825 = vpop.xlane.xlu0 %824
    %v826 = vsel %vm608, %v812, 0.0
    %827 = vadd.xlane.f32.xlu0 %v826
    %v828 = vpop.xlane.xlu0 %827
    %v829 = vsel %vm608, %v813, 0.0
    %830 = vadd.xlane.f32.xlu0 %v829
    %v831 = vpop.xlane.xlu0 %830
    %v832 = vsel %vm608, %v814, 0.0
    %833 = vadd.xlane.f32.xlu0 %v832
    %v834 = vpop.xlane.xlu0 %833
    %v835 = vsel %vm608, %v815, 0.0
    %836 = vadd.xlane.f32.xlu0 %v835
    %v837 = vpop.xlane.xlu0 %836
    %v838 = vsel %vm608, %v816, 0.0
    %839 = vadd.xlane.f32.xlu0 %v838
    %v840 = vpop.xlane.xlu0 %839
    %v841 = vmul.f32 %v819, %v633
    %v842 = vmul.f32 %v822, %v633
    %v843 = vmul.f32 %v825, %v633
    %v844 = vmul.f32 %v828, %v633
    %v845 = vmul.f32 %v831, %v633
    %v846 = vmul.f32 %v834, %v633
    %v847 = vmul.f32 %v837, %v633
    %v848 = vmul.f32 %v840, %v633
    %v849 = vadd.f32 %v841, 1e-05
    %v850 = vadd.f32 %v842, 1e-05
    %v851 = vadd.f32 %v843, 1e-05
    %v852 = vadd.f32 %v844, 1e-05
    %v853 = vadd.f32 %v845, 1e-05
    %v854 = vadd.f32 %v846, 1e-05
    %v855 = vadd.f32 %v847, 1e-05
    %v856 = vadd.f32 %v848, 1e-05
    %v857 = vrsqrt.pop %v849
    %v858 = vrsqrt.pop %v850
    %v859 = vrsqrt.pop %v851
    %v860 = vrsqrt.pop %v852
    %v861 = vrsqrt.pop %v853
    %v862 = vrsqrt.pop %v854
    %v863 = vrsqrt.pop %v855
    %v864 = vrsqrt.pop %v856
    %v865 = vmul.f32 %v801, %v857
    %v866 = vmul.f32 %v802, %v858
    %v867 = vmul.f32 %v803, %v859
    %v868 = vmul.f32 %v804, %v860
    %v869 = vmul.f32 %v805, %v861
    %v870 = vmul.f32 %v806, %v862
    %v871 = vmul.f32 %v807, %v863
    %v872 = vmul.f32 %v808, %v864
    %v874 = vlaneseq
    %v875 = vshrl.u32 %v874, 7
    %v876 = vsub.s32 0, %v875
    %v877 = vrot.slane %v742, %v876
    %v879 = vmul.f32 %v865, %v877
    %v880 = vmul.f32 %v866, %v877
    %v881 = vmul.f32 %v867, %v877
    %v882 = vmul.f32 %v868, %v877
    %v883 = vmul.f32 %v869, %v877
    %v884 = vmul.f32 %v870, %v877
    %v885 = vmul.f32 %v871, %v877
    %v886 = vmul.f32 %v872, %v877
    %v888 = vlaneseq
    %v889 = vshrl.u32 %v888, 7
    %v890 = vsub.s32 0, %v889
    %v891 = vrot.slane %v743, %v890
    %v893 = vadd.f32 %v879, %v891
    %v894 = vadd.f32 %v880, %v891
    %v895 = vadd.f32 %v881, %v891
    %v896 = vadd.f32 %v882, %v891
    %v897 = vadd.f32 %v883, %v891
    %v898 = vadd.f32 %v884, %v891
    %v899 = vadd.f32 %v885, %v891
    %v900 = vadd.f32 %v886, %v891
    %v901 = vld [vmem:[%s15] sm:$0xff]
    %v902 = vld [vmem:[%s15 + $0x8] sm:$0xff]
    %v903 = vld [vmem:[%s15 + $0x10] sm:$0xff]
    %v904 = vld [vmem:[%s15 + $0x18] sm:$0xff]
    %v905 = vld [vmem:[%s21] sm:$0x1]
    %v907 = vlaneseq
    %v908 = vshrl.u32 %v907, 7
    %v909 = vsub.s32 0, %v908
    %v910 = vrot.slane %v905, %v909
    %v913 = vsel %vm608, %v893, 0
    %v916 = vsel %vm608, %v894, 0
    %v919 = vsel %vm608, %v895, 0
    %v922 = vsel %vm608, %v896, 0
    %v925 = vsel %vm608, %v897, 0
    %v928 = vsel %vm608, %v898, 0
    %v931 = vsel %vm608, %v899, 0
    %v934 = vsel %vm608, %v900, 0
    %936 = vmatprep.subr.mxu0 0.0
    %937 = vmatpush1.msra.mxu0 %v901
    %938 = vmatprep.subr.mxu0 0.0
    %939 = vmatpush1.msra.mxu0 %v902
    %940 = vmatprep.subr.mxu0 0.0
    %941 = vmatpush1.msra.mxu0 %v903
    %942 = vmatprep.subr.mxu0 0.0
    %943 = vmatpush1.msra.mxu0 %v904
    %944 = vmatprep.subr.mxu0 0.0
    %945 = vmatpush1.msra.mxu0 0.0
    %946 = vmatprep.subr.mxu0 0.0
    %947 = vmatpush1.msra.mxu0 0.0
    %948 = vmatprep.subr.mxu0 0.0
    %949 = vmatpush1.msra.mxu0 0.0
    %950 = vmatprep.subr.mxu0 0.0
    %951 = vmatpush1.msra.mxu0 0.0
    %952 = vmatprep.subr.mxu0 0.0
    %953 = vmatpush1.msra.mxu0 0.0
    %954 = vmatprep.subr.mxu0 0.0
    %955 = vmatpush1.msra.mxu0 0.0
    %956 = vmatprep.subr.mxu0 0.0
    %957 = vmatpush1.msra.mxu0 0.0
    %958 = vmatprep.subr.mxu0 0.0
    %959 = vmatpush1.msra.mxu0 0.0
    %960 = vmatprep.subr.mxu0 0.0
    %961 = vmatpush1.msra.mxu0 0.0
    %962 = vmatprep.subr.mxu0 0.0
    %963 = vmatpush1.msra.mxu0 0.0
    %964 = vmatprep.subr.mxu0 0.0
    %965 = vmatpush1.msra.mxu0 0.0
    %966 = vmatprep.subr.mxu0 0.0
    %967 = vmatpush1.msra.mxu0 0.0
    %968 = vmatprep.subr.mxu0 0.0
    %969 = vmatpush1.msra.mxu0 0.0
    %970 = vmatprep.subr.mxu0 0.0
    %971 = vmatpush1.msra.mxu0 0.0
    %972 = vmatprep.subr.mxu0 0.0
    %973 = vmatpush1.msra.mxu0 0.0
    %974 = vmatprep.subr.mxu0 0.0
    %975 = vmatpush1.msra.mxu0 0.0
    %976 = vmatprep.subr.mxu0 0.0
    %977 = vmatpush1.msra.mxu0 0.0
    %978 = vmatprep.subr.mxu0 0.0
    %979 = vmatpush1.msra.mxu0 0.0
    %980 = vmatprep.subr.mxu0 0.0
    %981 = vmatpush1.msra.mxu0 0.0
    %982 = vmatprep.subr.mxu0 0.0
    %983 = vmatpush1.msra.mxu0 0.0
    %984 = vmatprep.subr.mxu0 0.0
    %985 = vmatpush1.msra.mxu0 0.0
    %986 = vmatprep.subr.mxu0 0.0
    %987 = vmatpush1.msra.mxu0 0.0
    %988 = vmatprep.subr.mxu0 0.0
    %989 = vmatpush1.msra.mxu0 0.0
    %990 = vmatprep.subr.mxu0 0.0
    %991 = vmatpush1.msra.mxu0 0.0
    %992 = vmatprep.subr.mxu0 0.0
    %993 = vmatpush1.msra.mxu0 0.0
    %994 = vmatprep.subr.mxu0 0.0
    %995 = vmatpush1.msra.mxu0 0.0
    %996 = vmatprep.subr.mxu0 0.0
    %997 = vmatpush1.msra.mxu0 0.0
    %998 = vmatprep.subr.mxu0 0.0
    %999 = vmatpush1.msra.mxu0 0.0
    %1000 = vmatprep.mubr.f32.mxu0 0.0
    %1001 = vmatmul.mubr.f32.gmra.mrb[0].mxu0 %v913
    %v1002 = vpop.f32.mrb[0].mxu0
    %v1003 = vadd.f32 %v910, %v1002
    %v1004 = vpop.f32.mrb[0].mxu0
    %1005 = vmatprep.mubr.f32.mxu0 0.0
    %1006 = vmatmul.mubr.f32.gmra.mrb[0].mxu0 %v916
    %v1007 = vpop.f32.mrb[0].mxu0
    %v1008 = vadd.f32 %v910, %v1007
    %v1009 = vpop.f32.mrb[0].mxu0
    %1010 = vmatprep.mubr.f32.mxu0 0.0
    %1011 = vmatmul.mubr.f32.gmra.mrb[0].mxu0 %v919
    %v1012 = vpop.f32.mrb[0].mxu0
    %v1013 = vadd.f32 %v910, %v1012
    %v1014 = vpop.f32.mrb[0].mxu0
    %1015 = vmatprep.mubr.f32.mxu0 0.0
    %1016 = vmatmul.mubr.f32.gmra.mrb[0].mxu0 %v922
    %v1017 = vpop.f32.mrb[0].mxu0
    %v1018 = vadd.f32 %v910, %v1017
    %v1019 = vpop.f32.mrb[0].mxu0
    %1020 = vmatprep.mubr.f32.mxu0 0.0
    %1021 = vmatmul.mubr.f32.gmra.mrb[0].mxu0 %v925
    %v1022 = vpop.f32.mrb[0].mxu0
    %v1023 = vadd.f32 %v910, %v1022
    %v1024 = vpop.f32.mrb[0].mxu0
    %1025 = vmatprep.mubr.f32.mxu0 0.0
    %1026 = vmatmul.mubr.f32.gmra.mrb[0].mxu0 %v928
    %v1027 = vpop.f32.mrb[0].mxu0
    %v1028 = vadd.f32 %v910, %v1027
    %v1029 = vpop.f32.mrb[0].mxu0
    %1030 = vmatprep.mubr.f32.mxu0 0.0
    %1031 = vmatmul.mubr.f32.gmra.mrb[0].mxu0 %v931
    %v1032 = vpop.f32.mrb[0].mxu0
    %v1033 = vadd.f32 %v910, %v1032
    %v1034 = vpop.f32.mrb[0].mxu0
    %1035 = vmatprep.mubr.f32.mxu0 0.0
    %1036 = vmatmul.mubr.f32.gmra.mrb[0].mxu0 %v934
    %v1037 = vpop.f32.mrb[0].mxu0
    %v1038 = vadd.f32 %v910, %v1037
    %v1039 = vpop.f32.mrb[0].mxu0
    %1040 = vdwg.mxu0
    %v1041 = vld [vmem:[%s17] sm:$0xff]
    %v1042 = vld [vmem:[%s17 + $0x8] sm:$0xff]
    %v1043 = vld [vmem:[%s17 + $0x10] sm:$0xff]
    %v1044 = vld [vmem:[%s17 + $0x18] sm:$0xff]
    %v1045 = vld [vmem:[%s23] sm:$0x1]
    %v1047 = vlaneseq
    %v1048 = vshrl.u32 %v1047, 7
    %v1049 = vsub.s32 0, %v1048
    %v1050 = vrot.slane %v1045, %v1049
    %1052 = vmatprep.subr.mxu0 0.0
    %1053 = vmatpush1.msra.mxu0 %v1041
    %1054 = vmatprep.subr.mxu0 0.0
    %1055 = vmatpush1.msra.mxu0 %v1042
    %1056 = vmatprep.subr.mxu0 0.0
    %1057 = vmatpush1.msra.mxu0 %v1043
    %1058 = vmatprep.subr.mxu0 0.0
    %1059 = vmatpush1.msra.mxu0 %v1044
    %1060 = vmatprep.subr.mxu0 0.0
    %1061 = vmatpush1.msra.mxu0 0.0
    %1062 = vmatprep.subr.mxu0 0.0
    %1063 = vmatpush1.msra.mxu0 0.0
    %1064 = vmatprep.subr.mxu0 0.0
    %1065 = vmatpush1.msra.mxu0 0.0
    %1066 = vmatprep.subr.mxu0 0.0
    %1067 = vmatpush1.msra.mxu0 0.0
    %1068 = vmatprep.subr.mxu0 0.0
    %1069 = vmatpush1.msra.mxu0 0.0
    %1070 = vmatprep.subr.mxu0 0.0
    %1071 = vmatpush1.msra.mxu0 0.0
    %1072 = vmatprep.subr.mxu0 0.0
    %1073 = vmatpush1.msra.mxu0 0.0
    %1074 = vmatprep.subr.mxu0 0.0
    %1075 = vmatpush1.msra.mxu0 0.0
    %1076 = vmatprep.subr.mxu0 0.0
    %1077 = vmatpush1.msra.mxu0 0.0
    %1078 = vmatprep.subr.mxu0 0.0
    %1079 = vmatpush1.msra.mxu0 0.0
    %1080 = vmatprep.subr.mxu0 0.0
    %1081 = vmatpush1.msra.mxu0 0.0
    %1082 = vmatprep.subr.mxu0 0.0
    %1083 = vmatpush1.msra.mxu0 0.0
    %1084 = vmatprep.subr.mxu0 0.0
    %1085 = vmatpush1.msra.mxu0 0.0
    %1086 = vmatprep.subr.mxu0 0.0
    %1087 = vmatpush1.msra.mxu0 0.0
    %1088 = vmatprep.subr.mxu0 0.0
    %1089 = vmatpush1.msra.mxu0 0.0
    %1090 = vmatprep.subr.mxu0 0.0
    %1091 = vmatpush1.msra.mxu0 0.0
    %1092 = vmatprep.subr.mxu0 0.0
    %1093 = vmatpush1.msra.mxu0 0.0
    %1094 = vmatprep.subr.mxu0 0.0
    %1095 = vmatpush1.msra.mxu0 0.0
    %1096 = vmatprep.subr.mxu0 0.0
    %1097 = vmatpush1.msra.mxu0 0.0
    %1098 = vmatprep.subr.mxu0 0.0
    %1099 = vmatpush1.msra.mxu0 0.0
    %1100 = vmatprep.subr.mxu0 0.0
    %1101 = vmatpush1.msra.mxu0 0.0
    %1102 = vmatprep.subr.mxu0 0.0
    %1103 = vmatpush1.msra.mxu0 0.0
    %1104 = vmatprep.subr.mxu0 0.0
    %1105 = vmatpush1.msra.mxu0 0.0
    %1106 = vmatprep.subr.mxu0 0.0
    %1107 = vmatpush1.msra.mxu0 0.0
    %1108 = vmatprep.subr.mxu0 0.0
    %1109 = vmatpush1.msra.mxu0 0.0
    %1110 = vmatprep.subr.mxu0 0.0
    %1111 = vmatpush1.msra.mxu0 0.0
    %1112 = vmatprep.subr.mxu0 0.0
    %1113 = vmatpush1.msra.mxu0 0.0
    %1114 = vmatprep.subr.mxu0 0.0
    %1115 = vmatpush1.msra.mxu0 0.0
    %1116 = vmatprep.mubr.f32.mxu0 0.0
    %1117 = vmatmul.mubr.f32.gmra.mrb[0].mxu0 %v913
    %v1118 = vpop.f32.mrb[0].mxu0
    %v1119 = vadd.f32 %v1050, %v1118
    %v1120 = vpop.f32.mrb[0].mxu0
    %1121 = vmatprep.mubr.f32.mxu0 0.0
    %1122 = vmatmul.mubr.f32.gmra.mrb[0].mxu0 %v916
    %v1123 = vpop.f32.mrb[0].mxu0
    %v1124 = vadd.f32 %v1050, %v1123
    %v1125 = vpop.f32.mrb[0].mxu0
    %1126 = vmatprep.mubr.f32.mxu0 0.0
    %1127 = vmatmul.mubr.f32.gmra.mrb[0].mxu0 %v919
    %v1128 = vpop.f32.mrb[0].mxu0
    %v1129 = vadd.f32 %v1050, %v1128
    %v1130 = vpop.f32.mrb[0].mxu0
    %1131 = vmatprep.mubr.f32.mxu0 0.0
    %1132 = vmatmul.mubr.f32.gmra.mrb[0].mxu0 %v922
    %v1133 = vpop.f32.mrb[0].mxu0
    %v1134 = vadd.f32 %v1050, %v1133
    %v1135 = vpop.f32.mrb[0].mxu0
    %1136 = vmatprep.mubr.f32.mxu0 0.0
    %1137 = vmatmul.mubr.f32.gmra.mrb[0].mxu0 %v925
    %v1138 = vpop.f32.mrb[0].mxu0
    %v1139 = vadd.f32 %v1050, %v1138
    %v1140 = vpop.f32.mrb[0].mxu0
    %1141 = vmatprep.mubr.f32.mxu0 0.0
    %1142 = vmatmul.mubr.f32.gmra.mrb[0].mxu0 %v928
    %v1143 = vpop.f32.mrb[0].mxu0
    %v1144 = vadd.f32 %v1050, %v1143
    %v1145 = vpop.f32.mrb[0].mxu0
    %1146 = vmatprep.mubr.f32.mxu0 0.0
    %1147 = vmatmul.mubr.f32.gmra.mrb[0].mxu0 %v931
    %v1148 = vpop.f32.mrb[0].mxu0
    %v1149 = vadd.f32 %v1050, %v1148
    %v1150 = vpop.f32.mrb[0].mxu0
    %1151 = vmatprep.mubr.f32.mxu0 0.0
    %1152 = vmatmul.mubr.f32.gmra.mrb[0].mxu0 %v934
    %v1153 = vpop.f32.mrb[0].mxu0
    %v1154 = vadd.f32 %v1050, %v1153
    %v1155 = vpop.f32.mrb[0].mxu0
    %1156 = vdwg.mxu0
    %v1157 = vld [vmem:[%s19] sm:$0xff]
    %v1158 = vld [vmem:[%s19 + $0x8] sm:$0xff]
    %v1159 = vld [vmem:[%s19 + $0x10] sm:$0xff]
    %v1160 = vld [vmem:[%s19 + $0x18] sm:$0xff]
    %v1161 = vld [vmem:[%s25] sm:$0x1]
    %v1163 = vlaneseq
    %v1164 = vshrl.u32 %v1163, 7
    %v1165 = vsub.s32 0, %v1164
    %v1166 = vrot.slane %v1161, %v1165
    %1168 = vmatprep.subr.mxu0 0.0
    %1169 = vmatpush1.msra.mxu0 %v1157
    %1170 = vmatprep.subr.mxu0 0.0
    %1171 = vmatpush1.msra.mxu0 %v1158
    %1172 = vmatprep.subr.mxu0 0.0
    %1173 = vmatpush1.msra.mxu0 %v1159
    %1174 = vmatprep.subr.mxu0 0.0
    %1175 = vmatpush1.msra.mxu0 %v1160
    %1176 = vmatprep.subr.mxu0 0.0
    %1177 = vmatpush1.msra.mxu0 0.0
    %1178 = vmatprep.subr.mxu0 0.0
    %1179 = vmatpush1.msra.mxu0 0.0
    %1180 = vmatprep.subr.mxu0 0.0
    %1181 = vmatpush1.msra.mxu0 0.0
    %1182 = vmatprep.subr.mxu0 0.0
    %1183 = vmatpush1.msra.mxu0 0.0
    %1184 = vmatprep.subr.mxu0 0.0
    %1185 = vmatpush1.msra.mxu0 0.0
    %1186 = vmatprep.subr.mxu0 0.0
    %1187 = vmatpush1.msra.mxu0 0.0
    %1188 = vmatprep.subr.mxu0 0.0
    %1189 = vmatpush1.msra.mxu0 0.0
    %1190 = vmatprep.subr.mxu0 0.0
    %1191 = vmatpush1.msra.mxu0 0.0
    %1192 = vmatprep.subr.mxu0 0.0
    %1193 = vmatpush1.msra.mxu0 0.0
    %1194 = vmatprep.subr.mxu0 0.0
    %1195 = vmatpush1.msra.mxu0 0.0
    %1196 = vmatprep.subr.mxu0 0.0
    %1197 = vmatpush1.msra.mxu0 0.0
    %1198 = vmatprep.subr.mxu0 0.0
    %1199 = vmatpush1.msra.mxu0 0.0
    %1200 = vmatprep.subr.mxu0 0.0
    %1201 = vmatpush1.msra.mxu0 0.0
    %1202 = vmatprep.subr.mxu0 0.0
    %1203 = vmatpush1.msra.mxu0 0.0
    %1204 = vmatprep.subr.mxu0 0.0
    %1205 = vmatpush1.msra.mxu0 0.0
    %1206 = vmatprep.subr.mxu0 0.0
    %1207 = vmatpush1.msra.mxu0 0.0
    %1208 = vmatprep.subr.mxu0 0.0
    %1209 = vmatpush1.msra.mxu0 0.0
    %1210 = vmatprep.subr.mxu0 0.0
    %1211 = vmatpush1.msra.mxu0 0.0
    %1212 = vmatprep.subr.mxu0 0.0
    %1213 = vmatpush1.msra.mxu0 0.0
    %1214 = vmatprep.subr.mxu0 0.0
    %1215 = vmatpush1.msra.mxu0 0.0
    %1216 = vmatprep.subr.mxu0 0.0
    %1217 = vmatpush1.msra.mxu0 0.0
    %1218 = vmatprep.subr.mxu0 0.0
    %1219 = vmatpush1.msra.mxu0 0.0
    %1220 = vmatprep.subr.mxu0 0.0
    %1221 = vmatpush1.msra.mxu0 0.0
    %1222 = vmatprep.subr.mxu0 0.0
    %1223 = vmatpush1.msra.mxu0 0.0
    %1224 = vmatprep.subr.mxu0 0.0
    %1225 = vmatpush1.msra.mxu0 0.0
    %1226 = vmatprep.subr.mxu0 0.0
    %1227 = vmatpush1.msra.mxu0 0.0
    %1228 = vmatprep.subr.mxu0 0.0
    %1229 = vmatpush1.msra.mxu0 0.0
    %1230 = vmatprep.subr.mxu0 0.0
    %1231 = vmatpush1.msra.mxu0 0.0
    %1232 = vmatprep.mubr.f32.mxu0 0.0
    %1233 = vmatmul.mubr.f32.gmra.mrb[0].mxu0 %v913
    %v1234 = vpop.f32.mrb[0].mxu0
    %v1235 = vadd.f32 %v1166, %v1234
    %v1236 = vpop.f32.mrb[0].mxu0
    %1237 = vmatprep.mubr.f32.mxu0 0.0
    %1238 = vmatmul.mubr.f32.gmra.mrb[0].mxu0 %v916
    %v1239 = vpop.f32.mrb[0].mxu0
    %v1240 = vadd.f32 %v1166, %v1239
    %v1241 = vpop.f32.mrb[0].mxu0
    %1242 = vmatprep.mubr.f32.mxu0 0.0
    %1243 = vmatmul.mubr.f32.gmra.mrb[0].mxu0 %v919
    %v1244 = vpop.f32.mrb[0].mxu0
    %v1245 = vadd.f32 %v1166, %v1244
    %v1246 = vpop.f32.mrb[0].mxu0
    %1247 = vmatprep.mubr.f32.mxu0 0.0
    %1248 = vmatmul.mubr.f32.gmra.mrb[0].mxu0 %v922
    %v1249 = vpop.f32.mrb[0].mxu0
    %v1250 = vadd.f32 %v1166, %v1249
    %v1251 = vpop.f32.mrb[0].mxu0
    %1252 = vmatprep.mubr.f32.mxu0 0.0
    %1253 = vmatmul.mubr.f32.gmra.mrb[0].mxu0 %v925
    %v1254 = vpop.f32.mrb[0].mxu0
    %v1255 = vadd.f32 %v1166, %v1254
    %v1256 = vpop.f32.mrb[0].mxu0
    %1257 = vmatprep.mubr.f32.mxu0 0.0
    %1258 = vmatmul.mubr.f32.gmra.mrb[0].mxu0 %v928
    %v1259 = vpop.f32.mrb[0].mxu0
    %v1260 = vadd.f32 %v1166, %v1259
    %v1261 = vpop.f32.mrb[0].mxu0
    %1262 = vmatprep.mubr.f32.mxu0 0.0
    %1263 = vmatmul.mubr.f32.gmra.mrb[0].mxu0 %v931
    %v1264 = vpop.f32.mrb[0].mxu0
    %v1265 = vadd.f32 %v1166, %v1264
    %v1266 = vpop.f32.mrb[0].mxu0
    %1267 = vmatprep.mubr.f32.mxu0 0.0
    %1268 = vmatmul.mubr.f32.gmra.mrb[0].mxu0 %v934
    %v1269 = vpop.f32.mrb[0].mxu0
    %v1270 = vadd.f32 %v1166, %v1269
    %v1271 = vpop.f32.mrb[0].mxu0
    %1272 = vdwg.mxu0
    %v1273 = vld [vmem:[%s27] sm:$0xff]
    %v1274 = vld [vmem:[%s27 + $0x8] sm:$0xff]
    %v1275 = vld [vmem:[%s27 + $0x10] sm:$0xff]
    %v1276 = vld [vmem:[%s27 + $0x18] sm:$0xff]
    %v1277 = vld [vmem:[%s27 + $0x20] sm:$0xff]
    %v1278 = vld [vmem:[%s27 + $0x28] sm:$0xff]
    %v1279 = vld [vmem:[%s27 + $0x30] sm:$0xff]
    %v1280 = vld [vmem:[%s27 + $0x38] sm:$0xff]
    %vm1281 = vcmask 130048
    %v1283 = vsel %vm1281, %v1003, 0
    %v1286 = vsel %vm1281, %v1008, 0
    %v1289 = vsel %vm1281, %v1013, 0
    %v1292 = vsel %vm1281, %v1018, 0
    %v1295 = vsel %vm1281, %v1023, 0
    %v1298 = vsel %vm1281, %v1028, 0
    %v1301 = vsel %vm1281, %v1033, 0
    %v1304 = vsel %vm1281, %v1038, 0
    %v1307 = vsel %vm1281, %v1119, 0
    %v1310 = vsel %vm1281, %v1124, 0
    %v1313 = vsel %vm1281, %v1129, 0
    %v1316 = vsel %vm1281, %v1134, 0
    %v1319 = vsel %vm1281, %v1139, 0
    %v1322 = vsel %vm1281, %v1144, 0
    %v1325 = vsel %vm1281, %v1149, 0
    %v1328 = vsel %vm1281, %v1154, 0
    %1330 = vmatprep.subr.mxu0 0.0
    %1331 = vmatpush1.xpose.msra.mxu0 %v1307
    %1332 = vmatprep.subr.mxu0 0.0
    %1333 = vmatpush1.xpose.msra.mxu0 %v1310
    %1334 = vmatprep.subr.mxu0 0.0
    %1335 = vmatpush1.xpose.msra.mxu0 %v1313
    %1336 = vmatprep.subr.mxu0 0.0
    %1337 = vmatpush1.xpose.msra.mxu0 %v1316
    %1338 = vmatprep.subr.mxu0 0.0
    %1339 = vmatpush1.xpose.msra.mxu0 %v1319
    %1340 = vmatprep.subr.mxu0 0.0
    %1341 = vmatpush1.xpose.msra.mxu0 %v1322
    %1342 = vmatprep.subr.mxu0 0.0
    %1343 = vmatpush1.xpose.msra.mxu0 %v1325
    %1344 = vmatprep.subr.mxu0 0.0
    %1345 = vmatpush1.xpose.msra.mxu0 %v1328
    %1346 = vmatprep.subr.mxu0 0.0
    %1347 = vmatpush1.xpose.msra.mxu0 0.0
    %1348 = vmatprep.subr.mxu0 0.0
    %1349 = vmatpush1.xpose.msra.mxu0 0.0
    %1350 = vmatprep.subr.mxu0 0.0
    %1351 = vmatpush1.xpose.msra.mxu0 0.0
    %1352 = vmatprep.subr.mxu0 0.0
    %1353 = vmatpush1.xpose.msra.mxu0 0.0
    %1354 = vmatprep.subr.mxu0 0.0
    %1355 = vmatpush1.xpose.msra.mxu0 0.0
    %1356 = vmatprep.subr.mxu0 0.0
    %1357 = vmatpush1.xpose.msra.mxu0 0.0
    %1358 = vmatprep.subr.mxu0 0.0
    %1359 = vmatpush1.xpose.msra.mxu0 0.0
    %1360 = vmatprep.subr.mxu0 0.0
    %1361 = vmatpush1.xpose.msra.mxu0 0.0
    %1362 = vmatprep.subr.mxu0 0.0
    %1363 = vmatpush1.xpose.msra.mxu0 0.0
    %1364 = vmatprep.subr.mxu0 0.0
    %1365 = vmatpush1.xpose.msra.mxu0 0.0
    %1366 = vmatprep.subr.mxu0 0.0
    %1367 = vmatpush1.xpose.msra.mxu0 0.0
    %1368 = vmatprep.subr.mxu0 0.0
    %1369 = vmatpush1.xpose.msra.mxu0 0.0
    %1370 = vmatprep.subr.mxu0 0.0
    %1371 = vmatpush1.xpose.msra.mxu0 0.0
    %1372 = vmatprep.subr.mxu0 0.0
    %1373 = vmatpush1.xpose.msra.mxu0 0.0
    %1374 = vmatprep.subr.mxu0 0.0
    %1375 = vmatpush1.xpose.msra.mxu0 0.0
    %1376 = vmatprep.subr.mxu0 0.0
    %1377 = vmatpush1.xpose.msra.mxu0 0.0
    %1378 = vmatprep.subr.mxu0 0.0
    %1379 = vmatpush1.xpose.msra.mxu0 0.0
    %1380 = vmatprep.subr.mxu0 0.0
    %1381 = vmatpush1.xpose.msra.mxu0 0.0
    %1382 = vmatprep.subr.mxu0 0.0
    %1383 = vmatpush1.xpose.msra.mxu0 0.0
    %1384 = vmatprep.subr.mxu0 0.0
    %1385 = vmatpush1.xpose.msra.mxu0 0.0
    %1386 = vmatprep.subr.mxu0 0.0
    %1387 = vmatpush1.xpose.msra.mxu0 0.0
    %1388 = vmatprep.subr.mxu0 0.0
    %1389 = vmatpush1.xpose.msra.mxu0 0.0
    %1390 = vmatprep.subr.mxu0 0.0
    %1391 = vmatpush1.xpose.msra.mxu0 0.0
    %1392 = vmatprep.subr.mxu0 0.0
    %1393 = vmatpush1.xpose.msra.mxu0 0.0
    %1394 = vmatprep.mubr.f32.mxu0 0.0
    %1395 = vmatmul.mubr.f32.gmra.mrb[0].mxu0 %v1283
    %v1396 = vpop.f32.mrb[0].mxu0
    %v1397 = vadd.f32 %v1273, %v1396
    %v1398 = vpop.f32.mrb[0].mxu0
    %1399 = vmatprep.mubr.f32.mxu0 0.0
    %1400 = vmatmul.mubr.f32.gmra.mrb[0].mxu0 %v1286
    %v1401 = vpop.f32.mrb[0].mxu0
    %v1402 = vadd.f32 %v1274, %v1401
    %v1403 = vpop.f32.mrb[0].mxu0
    %1404 = vmatprep.mubr.f32.mxu0 0.0
    %1405 = vmatmul.mubr.f32.gmra.mrb[0].mxu0 %v1289
    %v1406 = vpop.f32.mrb[0].mxu0
    %v1407 = vadd.f32 %v1275, %v1406
    %v1408 = vpop.f32.mrb[0].mxu0
    %1409 = vmatprep.mubr.f32.mxu0 0.0
    %1410 = vmatmul.mubr.f32.gmra.mrb[0].mxu0 %v1292
    %v1411 = vpop.f32.mrb[0].mxu0
    %v1412 = vadd.f32 %v1276, %v1411
    %v1413 = vpop.f32.mrb[0].mxu0
    %1414 = vmatprep.mubr.f32.mxu0 0.0
    %1415 = vmatmul.mubr.f32.gmra.mrb[0].mxu0 %v1295
    %v1416 = vpop.f32.mrb[0].mxu0
    %v1417 = vadd.f32 %v1277, %v1416
    %v1418 = vpop.f32.mrb[0].mxu0
    %1419 = vmatprep.mubr.f32.mxu0 0.0
    %1420 = vmatmul.mubr.f32.gmra.mrb[0].mxu0 %v1298
    %v1421 = vpop.f32.mrb[0].mxu0
    %v1422 = vadd.f32 %v1278, %v1421
    %v1423 = vpop.f32.mrb[0].mxu0
    %1424 = vmatprep.mubr.f32.mxu0 0.0
    %1425 = vmatmul.mubr.f32.gmra.mrb[0].mxu0 %v1301
    %v1426 = vpop.f32.mrb[0].mxu0
    %v1427 = vadd.f32 %v1279, %v1426
    %v1428 = vpop.f32.mrb[0].mxu0
    %1429 = vmatprep.mubr.f32.mxu0 0.0
    %1430 = vmatmul.mubr.f32.gmra.mrb[0].mxu0 %v1304
    %v1431 = vpop.f32.mrb[0].mxu0
    %v1432 = vadd.f32 %v1280, %v1431
    %v1433 = vpop.f32.mrb[0].mxu0
    %1434 = vdwg.mxu0
    %vm1435 = vcmask 523264
    %v1436 = vsel %vm1435, %v1397, -inf
    %1437 = vmax.xlane.f32.xlu0 %v1436
    %v1438 = vpop.xlane.xlu0 %1437
    %v1439 = vsel %vm1435, %v1402, -inf
    %1440 = vmax.xlane.f32.xlu0 %v1439
    %v1441 = vpop.xlane.xlu0 %1440
    %v1442 = vsel %vm1435, %v1407, -inf
    %1443 = vmax.xlane.f32.xlu0 %v1442
    %v1444 = vpop.xlane.xlu0 %1443
    %v1445 = vsel %vm1435, %v1412, -inf
    %1446 = vmax.xlane.f32.xlu0 %v1445
    %v1447 = vpop.xlane.xlu0 %1446
    %v1448 = vsel %vm1435, %v1417, -inf
    %1449 = vmax.xlane.f32.xlu0 %v1448
    %v1450 = vpop.xlane.xlu0 %1449
    %v1451 = vsel %vm1435, %v1422, -inf
    %1452 = vmax.xlane.f32.xlu0 %v1451
    %v1453 = vpop.xlane.xlu0 %1452
    %v1454 = vsel %vm1435, %v1427, -inf
    %1455 = vmax.xlane.f32.xlu0 %v1454
    %v1456 = vpop.xlane.xlu0 %1455
    %v1457 = vsel %vm1435, %v1432, -inf
    %1458 = vmax.xlane.f32.xlu0 %v1457
    %v1459 = vpop.xlane.xlu0 %1458
    %v1460 = vsub.f32 %v1397, %v1438
    %v1461 = vsub.f32 %v1402, %v1441
    %v1462 = vsub.f32 %v1407, %v1444
    %v1463 = vsub.f32 %v1412, %v1447
    %v1464 = vsub.f32 %v1417, %v1450
    %v1465 = vsub.f32 %v1422, %v1453
    %v1466 = vsub.f32 %v1427, %v1456
    %v1467 = vsub.f32 %v1432, %v1459
    %v1468 = vmul.f32 %v1460, 1.442695
    %v1469 = vpow.pop %v1468
    %v1470 = vmul.f32 %v1461, 1.442695
    %v1471 = vpow.pop %v1470
    %v1472 = vmul.f32 %v1462, 1.442695
    %v1473 = vpow.pop %v1472
    %v1474 = vmul.f32 %v1463, 1.442695
    %v1475 = vpow.pop %v1474
    %v1476 = vmul.f32 %v1464, 1.442695
    %v1477 = vpow.pop %v1476
    %v1478 = vmul.f32 %v1465, 1.442695
    %v1479 = vpow.pop %v1478
    %v1480 = vmul.f32 %v1466, 1.442695
    %v1481 = vpow.pop %v1480
    %v1482 = vmul.f32 %v1467, 1.442695
    %v1483 = vpow.pop %v1482
    %v1484 = vsel %vm1435, %v1469, 0.0
    %1485 = vadd.xlane.f32.xlu0 %v1484
    %v1486 = vpop.xlane.xlu0 %1485
    %v1487 = vsel %vm1435, %v1471, 0.0
    %1488 = vadd.xlane.f32.xlu0 %v1487
    %v1489 = vpop.xlane.xlu0 %1488
    %v1490 = vsel %vm1435, %v1473, 0.0
    %1491 = vadd.xlane.f32.xlu0 %v1490
    %v1492 = vpop.xlane.xlu0 %1491
    %v1493 = vsel %vm1435, %v1475, 0.0
    %1494 = vadd.xlane.f32.xlu0 %v1493
    %v1495 = vpop.xlane.xlu0 %1494
    %v1496 = vsel %vm1435, %v1477, 0.0
    %1497 = vadd.xlane.f32.xlu0 %v1496
    %v1498 = vpop.xlane.xlu0 %1497
    %v1499 = vsel %vm1435, %v1479, 0.0
    %1500 = vadd.xlane.f32.xlu0 %v1499
    %v1501 = vpop.xlane.xlu0 %1500
    %v1502 = vsel %vm1435, %v1481, 0.0
    %1503 = vadd.xlane.f32.xlu0 %v1502
    %v1504 = vpop.xlane.xlu0 %1503
    %v1505 = vsel %vm1435, %v1483, 0.0
    %1506 = vadd.xlane.f32.xlu0 %v1505
    %v1507 = vpop.xlane.xlu0 %1506
    %v1508 = vrcp.pop %v1486
    %v1509 = vrcp.pop %v1489
    %v1510 = vrcp.pop %v1492
    %v1511 = vrcp.pop %v1495
    %v1512 = vrcp.pop %v1498
    %v1513 = vrcp.pop %v1501
    %v1514 = vrcp.pop %v1504
    %v1515 = vrcp.pop %v1507
    %v1516 = vmul.f32 %v1469, %v1508
    %v1517 = vmul.f32 %v1471, %v1509
    %v1518 = vmul.f32 %v1473, %v1510
    %v1519 = vmul.f32 %v1475, %v1511
    %v1520 = vmul.f32 %v1477, %v1512
    %v1521 = vmul.f32 %v1479, %v1513
    %v1522 = vmul.f32 %v1481, %v1514
    %v1523 = vmul.f32 %v1483, %v1515
    %v1525 = vsel %vm1435, %v1516, 0
    %v1528 = vsel %vm1435, %v1517, 0
    %v1531 = vsel %vm1435, %v1518, 0
    %v1534 = vsel %vm1435, %v1519, 0
    %v1537 = vsel %vm1435, %v1520, 0
    %v1540 = vsel %vm1435, %v1521, 0
    %v1543 = vsel %vm1435, %v1522, 0
    %v1546 = vsel %vm1435, %v1523, 0
    %1548 = vmatprep.subr.mxu0 0.0
    %1549 = vmatpush1.msra.mxu0 %v1235
    %1550 = vmatprep.subr.mxu0 0.0
    %1551 = vmatpush1.msra.mxu0 %v1240
    %1552 = vmatprep.subr.mxu0 0.0
    %1553 = vmatpush1.msra.mxu0 %v1245
    %1554 = vmatprep.subr.mxu0 0.0
    %1555 = vmatpush1.msra.mxu0 %v1250
    %1556 = vmatprep.subr.mxu0 0.0
    %1557 = vmatpush1.msra.mxu0 %v1255
    %1558 = vmatprep.subr.mxu0 0.0
    %1559 = vmatpush1.msra.mxu0 %v1260
    %1560 = vmatprep.subr.mxu0 0.0
    %1561 = vmatpush1.msra.mxu0 %v1265
    %1562 = vmatprep.subr.mxu0 0.0
    %1563 = vmatpush1.msra.mxu0 %v1270
    %1564 = vmatprep.subr.mxu0 0.0
    %1565 = vmatpush1.msra.mxu0 0.0
    %1566 = vmatprep.subr.mxu0 0.0
    %1567 = vmatpush1.msra.mxu0 0.0
    %1568 = vmatprep.subr.mxu0 0.0
    %1569 = vmatpush1.msra.mxu0 0.0
    %1570 = vmatprep.subr.mxu0 0.0
    %1571 = vmatpush1.msra.mxu0 0.0
    %1572 = vmatprep.subr.mxu0 0.0
    %1573 = vmatpush1.msra.mxu0 0.0
    %1574 = vmatprep.subr.mxu0 0.0
    %1575 = vmatpush1.msra.mxu0 0.0
    %1576 = vmatprep.subr.mxu0 0.0
    %1577 = vmatpush1.msra.mxu0 0.0
    %1578 = vmatprep.subr.mxu0 0.0
    %1579 = vmatpush1.msra.mxu0 0.0
    %1580 = vmatprep.subr.mxu0 0.0
    %1581 = vmatpush1.msra.mxu0 0.0
    %1582 = vmatprep.subr.mxu0 0.0
    %1583 = vmatpush1.msra.mxu0 0.0
    %1584 = vmatprep.subr.mxu0 0.0
    %1585 = vmatpush1.msra.mxu0 0.0
    %1586 = vmatprep.subr.mxu0 0.0
    %1587 = vmatpush1.msra.mxu0 0.0
    %1588 = vmatprep.subr.mxu0 0.0
    %1589 = vmatpush1.msra.mxu0 0.0
    %1590 = vmatprep.subr.mxu0 0.0
    %1591 = vmatpush1.msra.mxu0 0.0
    %1592 = vmatprep.subr.mxu0 0.0
    %1593 = vmatpush1.msra.mxu0 0.0
    %1594 = vmatprep.subr.mxu0 0.0
    %1595 = vmatpush1.msra.mxu0 0.0
    %1596 = vmatprep.subr.mxu0 0.0
    %1597 = vmatpush1.msra.mxu0 0.0
    %1598 = vmatprep.subr.mxu0 0.0
    %1599 = vmatpush1.msra.mxu0 0.0
    %1600 = vmatprep.subr.mxu0 0.0
    %1601 = vmatpush1.msra.mxu0 0.0
    %1602 = vmatprep.subr.mxu0 0.0
    %1603 = vmatpush1.msra.mxu0 0.0
    %1604 = vmatprep.subr.mxu0 0.0
    %1605 = vmatpush1.msra.mxu0 0.0
    %1606 = vmatprep.subr.mxu0 0.0
    %1607 = vmatpush1.msra.mxu0 0.0
    %1608 = vmatprep.subr.mxu0 0.0
    %1609 = vmatpush1.msra.mxu0 0.0
    %1610 = vmatprep.subr.mxu0 0.0
    %1611 = vmatpush1.msra.mxu0 0.0
    %1612 = vmatprep.mubr.f32.mxu0 0.0
    %1613 = vmatmul.mubr.f32.gmra.mrb[0].mxu0 %v1525
    %v1614 = vpop.f32.mrb[0].mxu0
    %v1615 = vadd.f32 0.0, %v1614
    %v1616 = vpop.f32.mrb[0].mxu0
    %1617 = vmatprep.mubr.f32.mxu0 0.0
    %1618 = vmatmul.mubr.f32.gmra.mrb[0].mxu0 %v1528
    %v1619 = vpop.f32.mrb[0].mxu0
    %v1620 = vadd.f32 0.0, %v1619
    %v1621 = vpop.f32.mrb[0].mxu0
    %1622 = vmatprep.mubr.f32.mxu0 0.0
    %1623 = vmatmul.mubr.f32.gmra.mrb[0].mxu0 %v1531
    %v1624 = vpop.f32.mrb[0].mxu0
    %v1625 = vadd.f32 0.0, %v1624
    %v1626 = vpop.f32.mrb[0].mxu0
    %1627 = vmatprep.mubr.f32.mxu0 0.0
    %1628 = vmatmul.mubr.f32.gmra.mrb[0].mxu0 %v1534
    %v1629 = vpop.f32.mrb[0].mxu0
    %v1630 = vadd.f32 0.0, %v1629
    %v1631 = vpop.f32.mrb[0].mxu0
    %1632 = vmatprep.mubr.f32.mxu0 0.0
    %1633 = vmatmul.mubr.f32.gmra.mrb[0].mxu0 %v1537
    %v1634 = vpop.f32.mrb[0].mxu0
    %v1635 = vadd.f32 0.0, %v1634
    %v1636 = vpop.f32.mrb[0].mxu0
    %1637 = vmatprep.mubr.f32.mxu0 0.0
    %1638 = vmatmul.mubr.f32.gmra.mrb[0].mxu0 %v1540
    %v1639 = vpop.f32.mrb[0].mxu0
    %v1640 = vadd.f32 0.0, %v1639
    %v1641 = vpop.f32.mrb[0].mxu0
    %1642 = vmatprep.mubr.f32.mxu0 0.0
    %1643 = vmatmul.mubr.f32.gmra.mrb[0].mxu0 %v1543
    %v1644 = vpop.f32.mrb[0].mxu0
    %v1645 = vadd.f32 0.0, %v1644
    %v1646 = vpop.f32.mrb[0].mxu0
    %1647 = vmatprep.mubr.f32.mxu0 0.0
    %1648 = vmatmul.mubr.f32.gmra.mrb[0].mxu0 %v1546
    %v1649 = vpop.f32.mrb[0].mxu0
    %v1650 = vadd.f32 0.0, %v1649
    %v1651 = vpop.f32.mrb[0].mxu0
    %1652 = vdwg.mxu0
    %v1653 = vld [vmem:[%s29] sm:$0xff]
    %v1654 = vld [vmem:[%s29 + $0x8] sm:$0xff]
    %v1656 = vsel %vm1281, %v1615, 0
    %v1659 = vsel %vm1281, %v1620, 0
    %v1662 = vsel %vm1281, %v1625, 0
    %v1665 = vsel %vm1281, %v1630, 0
    %v1668 = vsel %vm1281, %v1635, 0
    %v1671 = vsel %vm1281, %v1640, 0
    %v1674 = vsel %vm1281, %v1645, 0
    %v1677 = vsel %vm1281, %v1650, 0
    %1679 = vmatprep.subr.mxu0 0.0
    %1680 = vmatpush1.msra.mxu0 %v1653
    %1681 = vmatprep.subr.mxu0 0.0
    %1682 = vmatpush1.msra.mxu0 %v1654
    %1683 = vmatprep.subr.mxu0 0.0
    %1684 = vmatpush1.msra.mxu0 0.0
    %1685 = vmatprep.subr.mxu0 0.0
    %1686 = vmatpush1.msra.mxu0 0.0
    %1687 = vmatprep.subr.mxu0 0.0
    %1688 = vmatpush1.msra.mxu0 0.0
    %1689 = vmatprep.subr.mxu0 0.0
    %1690 = vmatpush1.msra.mxu0 0.0
    %1691 = vmatprep.subr.mxu0 0.0
    %1692 = vmatpush1.msra.mxu0 0.0
    %1693 = vmatprep.subr.mxu0 0.0
    %1694 = vmatpush1.msra.mxu0 0.0
    %1695 = vmatprep.subr.mxu0 0.0
    %1696 = vmatpush1.msra.mxu0 0.0
    %1697 = vmatprep.subr.mxu0 0.0
    %1698 = vmatpush1.msra.mxu0 0.0
    %1699 = vmatprep.subr.mxu0 0.0
    %1700 = vmatpush1.msra.mxu0 0.0
    %1701 = vmatprep.subr.mxu0 0.0
    %1702 = vmatpush1.msra.mxu0 0.0
    %1703 = vmatprep.subr.mxu0 0.0
    %1704 = vmatpush1.msra.mxu0 0.0
    %1705 = vmatprep.subr.mxu0 0.0
    %1706 = vmatpush1.msra.mxu0 0.0
    %1707 = vmatprep.subr.mxu0 0.0
    %1708 = vmatpush1.msra.mxu0 0.0
    %1709 = vmatprep.subr.mxu0 0.0
    %1710 = vmatpush1.msra.mxu0 0.0
    %1711 = vmatprep.subr.mxu0 0.0
    %1712 = vmatpush1.msra.mxu0 0.0
    %1713 = vmatprep.subr.mxu0 0.0
    %1714 = vmatpush1.msra.mxu0 0.0
    %1715 = vmatprep.subr.mxu0 0.0
    %1716 = vmatpush1.msra.mxu0 0.0
    %1717 = vmatprep.subr.mxu0 0.0
    %1718 = vmatpush1.msra.mxu0 0.0
    %1719 = vmatprep.subr.mxu0 0.0
    %1720 = vmatpush1.msra.mxu0 0.0
    %1721 = vmatprep.subr.mxu0 0.0
    %1722 = vmatpush1.msra.mxu0 0.0
    %1723 = vmatprep.subr.mxu0 0.0
    %1724 = vmatpush1.msra.mxu0 0.0
    %1725 = vmatprep.subr.mxu0 0.0
    %1726 = vmatpush1.msra.mxu0 0.0
    %1727 = vmatprep.subr.mxu0 0.0
    %1728 = vmatpush1.msra.mxu0 0.0
    %1729 = vmatprep.subr.mxu0 0.0
    %1730 = vmatpush1.msra.mxu0 0.0
    %1731 = vmatprep.subr.mxu0 0.0
    %1732 = vmatpush1.msra.mxu0 0.0
    %1733 = vmatprep.subr.mxu0 0.0
    %1734 = vmatpush1.msra.mxu0 0.0
    %1735 = vmatprep.subr.mxu0 0.0
    %1736 = vmatpush1.msra.mxu0 0.0
    %1737 = vmatprep.subr.mxu0 0.0
    %1738 = vmatpush1.msra.mxu0 0.0
    %1739 = vmatprep.subr.mxu0 0.0
    %1740 = vmatpush1.msra.mxu0 0.0
    %1741 = vmatprep.subr.mxu0 0.0
    %1742 = vmatpush1.msra.mxu0 0.0
    %1743 = vmatprep.mubr.f32.mxu0 0.0
    %1744 = vmatmul.mubr.f32.gmra.mrb[0].mxu0 %v1656
    %v1745 = vpop.f32.mrb[0].mxu0
    %v1746 = vadd.f32 0.0, %v1745
    %v1747 = vpop.f32.mrb[0].mxu0
    %1748 = vmatprep.mubr.f32.mxu0 0.0
    %1749 = vmatmul.mubr.f32.gmra.mrb[0].mxu0 %v1659
    %v1750 = vpop.f32.mrb[0].mxu0
    %v1751 = vadd.f32 0.0, %v1750
    %v1752 = vpop.f32.mrb[0].mxu0
    %1753 = vmatprep.mubr.f32.mxu0 0.0
    %1754 = vmatmul.mubr.f32.gmra.mrb[0].mxu0 %v1662
    %v1755 = vpop.f32.mrb[0].mxu0
    %v1756 = vadd.f32 0.0, %v1755
    %v1757 = vpop.f32.mrb[0].mxu0
    %1758 = vmatprep.mubr.f32.mxu0 0.0
    %1759 = vmatmul.mubr.f32.gmra.mrb[0].mxu0 %v1665
    %v1760 = vpop.f32.mrb[0].mxu0
    %v1761 = vadd.f32 0.0, %v1760
    %v1762 = vpop.f32.mrb[0].mxu0
    %1763 = vmatprep.mubr.f32.mxu0 0.0
    %1764 = vmatmul.mubr.f32.gmra.mrb[0].mxu0 %v1668
    %v1765 = vpop.f32.mrb[0].mxu0
    %v1766 = vadd.f32 0.0, %v1765
    %v1767 = vpop.f32.mrb[0].mxu0
    %1768 = vmatprep.mubr.f32.mxu0 0.0
    %1769 = vmatmul.mubr.f32.gmra.mrb[0].mxu0 %v1671
    %v1770 = vpop.f32.mrb[0].mxu0
    %v1771 = vadd.f32 0.0, %v1770
    %v1772 = vpop.f32.mrb[0].mxu0
    %1773 = vmatprep.mubr.f32.mxu0 0.0
    %1774 = vmatmul.mubr.f32.gmra.mrb[0].mxu0 %v1674
    %v1775 = vpop.f32.mrb[0].mxu0
    %v1776 = vadd.f32 0.0, %v1775
    %v1777 = vpop.f32.mrb[0].mxu0
    %1778 = vmatprep.mubr.f32.mxu0 0.0
    %1779 = vmatmul.mubr.f32.gmra.mrb[0].mxu0 %v1677
    %v1780 = vpop.f32.mrb[0].mxu0
    %v1781 = vadd.f32 0.0, %v1780
    %v1782 = vpop.f32.mrb[0].mxu0
    %1783 = vdwg.mxu0
    %v1785 = vlaneseq
    %v1786 = vshrl.u32 %v1785, 7
    %v1787 = vsub.s32 0, %v1786
    %v1788 = vrot.slane %v744, %v1787
    %v1790 = vadd.f32 %v1788, %v1746
    %v1791 = vadd.f32 %v1788, %v1751
    %v1792 = vadd.f32 %v1788, %v1756
    %v1793 = vadd.f32 %v1788, %v1761
    %v1794 = vadd.f32 %v1788, %v1766
    %v1795 = vadd.f32 %v1788, %v1771
    %v1796 = vadd.f32 %v1788, %v1776
    %v1797 = vadd.f32 %v1788, %v1781
    %s1798 = scalar_lea.vmem %s15, 32
    %v1799 = vld [vmem:[%s1798] sm:$0xff]
    %v1800 = vld [vmem:[%s1798 + $0x8] sm:$0xff]
    %v1801 = vld [vmem:[%s1798 + $0x10] sm:$0xff]
    %v1802 = vld [vmem:[%s1798 + $0x18] sm:$0xff]
    %s1803 = scalar_lea.vmem %s21, 1
    %v1804 = vld [vmem:[%s1803] sm:$0x1]
    %v1806 = vlaneseq
    %v1807 = vshrl.u32 %v1806, 7
    %v1808 = vsub.s32 0, %v1807
    %v1809 = vrot.slane %v1804, %v1808
    %1811 = vmatprep.subr.mxu0 0.0
    %1812 = vmatpush1.msra.mxu0 %v1799
    %1813 = vmatprep.subr.mxu0 0.0
    %1814 = vmatpush1.msra.mxu0 %v1800
    %1815 = vmatprep.subr.mxu0 0.0
    %1816 = vmatpush1.msra.mxu0 %v1801
    %1817 = vmatprep.subr.mxu0 0.0
    %1818 = vmatpush1.msra.mxu0 %v1802
    %1819 = vmatprep.subr.mxu0 0.0
    %1820 = vmatpush1.msra.mxu0 0.0
    %1821 = vmatprep.subr.mxu0 0.0
    %1822 = vmatpush1.msra.mxu0 0.0
    %1823 = vmatprep.subr.mxu0 0.0
    %1824 = vmatpush1.msra.mxu0 0.0
    %1825 = vmatprep.subr.mxu0 0.0
    %1826 = vmatpush1.msra.mxu0 0.0
    %1827 = vmatprep.subr.mxu0 0.0
    %1828 = vmatpush1.msra.mxu0 0.0
    %1829 = vmatprep.subr.mxu0 0.0
    %1830 = vmatpush1.msra.mxu0 0.0
    %1831 = vmatprep.subr.mxu0 0.0
    %1832 = vmatpush1.msra.mxu0 0.0
    %1833 = vmatprep.subr.mxu0 0.0
    %1834 = vmatpush1.msra.mxu0 0.0
    %1835 = vmatprep.subr.mxu0 0.0
    %1836 = vmatpush1.msra.mxu0 0.0
    %1837 = vmatprep.subr.mxu0 0.0
    %1838 = vmatpush1.msra.mxu0 0.0
    %1839 = vmatprep.subr.mxu0 0.0
    %1840 = vmatpush1.msra.mxu0 0.0
    %1841 = vmatprep.subr.mxu0 0.0
    %1842 = vmatpush1.msra.mxu0 0.0
    %1843 = vmatprep.subr.mxu0 0.0
    %1844 = vmatpush1.msra.mxu0 0.0
    %1845 = vmatprep.subr.mxu0 0.0
    %1846 = vmatpush1.msra.mxu0 0.0
    %1847 = vmatprep.subr.mxu0 0.0
    %1848 = vmatpush1.msra.mxu0 0.0
    %1849 = vmatprep.subr.mxu0 0.0
    %1850 = vmatpush1.msra.mxu0 0.0
    %1851 = vmatprep.subr.mxu0 0.0
    %1852 = vmatpush1.msra.mxu0 0.0
    %1853 = vmatprep.subr.mxu0 0.0
    %1854 = vmatpush1.msra.mxu0 0.0
    %1855 = vmatprep.subr.mxu0 0.0
    %1856 = vmatpush1.msra.mxu0 0.0
    %1857 = vmatprep.subr.mxu0 0.0
    %1858 = vmatpush1.msra.mxu0 0.0
    %1859 = vmatprep.subr.mxu0 0.0
    %1860 = vmatpush1.msra.mxu0 0.0
    %1861 = vmatprep.subr.mxu0 0.0
    %1862 = vmatpush1.msra.mxu0 0.0
    %1863 = vmatprep.subr.mxu0 0.0
    %1864 = vmatpush1.msra.mxu0 0.0
    %1865 = vmatprep.subr.mxu0 0.0
    %1866 = vmatpush1.msra.mxu0 0.0
    %1867 = vmatprep.subr.mxu0 0.0
    %1868 = vmatpush1.msra.mxu0 0.0
    %1869 = vmatprep.subr.mxu0 0.0
    %1870 = vmatpush1.msra.mxu0 0.0
    %1871 = vmatprep.subr.mxu0 0.0
    %1872 = vmatpush1.msra.mxu0 0.0
    %1873 = vmatprep.subr.mxu0 0.0
    %1874 = vmatpush1.msra.mxu0 0.0
    %1875 = vmatprep.mubr.f32.mxu0 0.0
    %1876 = vmatmul.mubr.f32.gmra.mrb[0].mxu0 %v913
    %v1877 = vpop.f32.mrb[0].mxu0
    %v1878 = vadd.f32 %v1809, %v1877
    %v1879 = vpop.f32.mrb[0].mxu0
    %1880 = vmatprep.mubr.f32.mxu0 0.0
    %1881 = vmatmul.mubr.f32.gmra.mrb[0].mxu0 %v916
    %v1882 = vpop.f32.mrb[0].mxu0
    %v1883 = vadd.f32 %v1809, %v1882
    %v1884 = vpop.f32.mrb[0].mxu0
    %1885 = vmatprep.mubr.f32.mxu0 0.0
    %1886 = vmatmul.mubr.f32.gmra.mrb[0].mxu0 %v919
    %v1887 = vpop.f32.mrb[0].mxu0
    %v1888 = vadd.f32 %v1809, %v1887
    %v1889 = vpop.f32.mrb[0].mxu0
    %1890 = vmatprep.mubr.f32.mxu0 0.0
    %1891 = vmatmul.mubr.f32.gmra.mrb[0].mxu0 %v922
    %v1892 = vpop.f32.mrb[0].mxu0
    %v1893 = vadd.f32 %v1809, %v1892
    %v1894 = vpop.f32.mrb[0].mxu0
    %1895 = vmatprep.mubr.f32.mxu0 0.0
    %1896 = vmatmul.mubr.f32.gmra.mrb[0].mxu0 %v925
    %v1897 = vpop.f32.mrb[0].mxu0
    %v1898 = vadd.f32 %v1809, %v1897
    %v1899 = vpop.f32.mrb[0].mxu0
    %1900 = vmatprep.mubr.f32.mxu0 0.0
    %1901 = vmatmul.mubr.f32.gmra.mrb[0].mxu0 %v928
    %v1902 = vpop.f32.mrb[0].mxu0
    %v1903 = vadd.f32 %v1809, %v1902
    %v1904 = vpop.f32.mrb[0].mxu0
    %1905 = vmatprep.mubr.f32.mxu0 0.0
    %1906 = vmatmul.mubr.f32.gmra.mrb[0].mxu0 %v931
    %v1907 = vpop.f32.mrb[0].mxu0
    %v1908 = vadd.f32 %v1809, %v1907
    %v1909 = vpop.f32.mrb[0].mxu0
    %1910 = vmatprep.mubr.f32.mxu0 0.0
    %1911 = vmatmul.mubr.f32.gmra.mrb[0].mxu0 %v934
    %v1912 = vpop.f32.mrb[0].mxu0
    %v1913 = vadd.f32 %v1809, %v1912
    %v1914 = vpop.f32.mrb[0].mxu0
    %1915 = vdwg.mxu0
    %s1916 = scalar_lea.vmem %s17, 32
    %v1917 = vld [vmem:[%s1916] sm:$0xff]
    %v1918 = vld [vmem:[%s1916 + $0x8] sm:$0xff]
    %v1919 = vld [vmem:[%s1916 + $0x10] sm:$0xff]
    %v1920 = vld [vmem:[%s1916 + $0x18] sm:$0xff]
    %s1921 = scalar_lea.vmem %s23, 1
    %v1922 = vld [vmem:[%s1921] sm:$0x1]
    %v1924 = vlaneseq
    %v1925 = vshrl.u32 %v1924, 7
    %v1926 = vsub.s32 0, %v1925
    %v1927 = vrot.slane %v1922, %v1926
    %1929 = vmatprep.subr.mxu0 0.0
    %1930 = vmatpush1.msra.mxu0 %v1917
    %1931 = vmatprep.subr.mxu0 0.0
    %1932 = vmatpush1.msra.mxu0 %v1918
    %1933 = vmatprep.subr.mxu0 0.0
    %1934 = vmatpush1.msra.mxu0 %v1919
    %1935 = vmatprep.subr.mxu0 0.0
    %1936 = vmatpush1.msra.mxu0 %v1920
    %1937 = vmatprep.subr.mxu0 0.0
    %1938 = vmatpush1.msra.mxu0 0.0
    %1939 = vmatprep.subr.mxu0 0.0
    %1940 = vmatpush1.msra.mxu0 0.0
    %1941 = vmatprep.subr.mxu0 0.0
    %1942 = vmatpush1.msra.mxu0 0.0
    %1943 = vmatprep.subr.mxu0 0.0
    %1944 = vmatpush1.msra.mxu0 0.0
    %1945 = vmatprep.subr.mxu0 0.0
    %1946 = vmatpush1.msra.mxu0 0.0
    %1947 = vmatprep.subr.mxu0 0.0
    %1948 = vmatpush1.msra.mxu0 0.0
    %1949 = vmatprep.subr.mxu0 0.0
    %1950 = vmatpush1.msra.mxu0 0.0
    %1951 = vmatprep.subr.mxu0 0.0
    %1952 = vmatpush1.msra.mxu0 0.0
    %1953 = vmatprep.subr.mxu0 0.0
    %1954 = vmatpush1.msra.mxu0 0.0
    %1955 = vmatprep.subr.mxu0 0.0
    %1956 = vmatpush1.msra.mxu0 0.0
    %1957 = vmatprep.subr.mxu0 0.0
    %1958 = vmatpush1.msra.mxu0 0.0
    %1959 = vmatprep.subr.mxu0 0.0
    %1960 = vmatpush1.msra.mxu0 0.0
    %1961 = vmatprep.subr.mxu0 0.0
    %1962 = vmatpush1.msra.mxu0 0.0
    %1963 = vmatprep.subr.mxu0 0.0
    %1964 = vmatpush1.msra.mxu0 0.0
    %1965 = vmatprep.subr.mxu0 0.0
    %1966 = vmatpush1.msra.mxu0 0.0
    %1967 = vmatprep.subr.mxu0 0.0
    %1968 = vmatpush1.msra.mxu0 0.0
    %1969 = vmatprep.subr.mxu0 0.0
    %1970 = vmatpush1.msra.mxu0 0.0
    %1971 = vmatprep.subr.mxu0 0.0
    %1972 = vmatpush1.msra.mxu0 0.0
    %1973 = vmatprep.subr.mxu0 0.0
    %1974 = vmatpush1.msra.mxu0 0.0
    %1975 = vmatprep.subr.mxu0 0.0
    %1976 = vmatpush1.msra.mxu0 0.0
    %1977 = vmatprep.subr.mxu0 0.0
    %1978 = vmatpush1.msra.mxu0 0.0
    %1979 = vmatprep.subr.mxu0 0.0
    %1980 = vmatpush1.msra.mxu0 0.0
    %1981 = vmatprep.subr.mxu0 0.0
    %1982 = vmatpush1.msra.mxu0 0.0
    %1983 = vmatprep.subr.mxu0 0.0
    %1984 = vmatpush1.msra.mxu0 0.0
    %1985 = vmatprep.subr.mxu0 0.0
    %1986 = vmatpush1.msra.mxu0 0.0
    %1987 = vmatprep.subr.mxu0 0.0
    %1988 = vmatpush1.msra.mxu0 0.0
    %1989 = vmatprep.subr.mxu0 0.0
    %1990 = vmatpush1.msra.mxu0 0.0
    %1991 = vmatprep.subr.mxu0 0.0
    %1992 = vmatpush1.msra.mxu0 0.0
    %1993 = vmatprep.mubr.f32.mxu0 0.0
    %1994 = vmatmul.mubr.f32.gmra.mrb[0].mxu0 %v913
    %v1995 = vpop.f32.mrb[0].mxu0
    %v1996 = vadd.f32 %v1927, %v1995
    %v1997 = vpop.f32.mrb[0].mxu0
    %1998 = vmatprep.mubr.f32.mxu0 0.0
    %1999 = vmatmul.mubr.f32.gmra.mrb[0].mxu0 %v916
    %v2000 = vpop.f32.mrb[0].mxu0
    %v2001 = vadd.f32 %v1927, %v2000
    %v2002 = vpop.f32.mrb[0].mxu0
    %2003 = vmatprep.mubr.f32.mxu0 0.0
    %2004 = vmatmul.mubr.f32.gmra.mrb[0].mxu0 %v919
    %v2005 = vpop.f32.mrb[0].mxu0
    %v2006 = vadd.f32 %v1927, %v2005
    %v2007 = vpop.f32.mrb[0].mxu0
    %2008 = vmatprep.mubr.f32.mxu0 0.0
    %2009 = vmatmul.mubr.f32.gmra.mrb[0].mxu0 %v922
    %v2010 = vpop.f32.mrb[0].mxu0
    %v2011 = vadd.f32 %v1927, %v2010
    %v2012 = vpop.f32.mrb[0].mxu0
    %2013 = vmatprep.mubr.f32.mxu0 0.0
    %2014 = vmatmul.mubr.f32.gmra.mrb[0].mxu0 %v925
    %v2015 = vpop.f32.mrb[0].mxu0
    %v2016 = vadd.f32 %v1927, %v2015
    %v2017 = vpop.f32.mrb[0].mxu0
    %2018 = vmatprep.mubr.f32.mxu0 0.0
    %2019 = vmatmul.mubr.f32.gmra.mrb[0].mxu0 %v928
    %v2020 = vpop.f32.mrb[0].mxu0
    %v2021 = vadd.f32 %v1927, %v2020
    %v2022 = vpop.f32.mrb[0].mxu0
    %2023 = vmatprep.mubr.f32.mxu0 0.0
    %2024 = vmatmul.mubr.f32.gmra.mrb[0].mxu0 %v931
    %v2025 = vpop.f32.mrb[0].mxu0
    %v2026 = vadd.f32 %v1927, %v2025
    %v2027 = vpop.f32.mrb[0].mxu0
    %2028 = vmatprep.mubr.f32.mxu0 0.0
    %2029 = vmatmul.mubr.f32.gmra.mrb[0].mxu0 %v934
    %v2030 = vpop.f32.mrb[0].mxu0
    %v2031 = vadd.f32 %v1927, %v2030
    %v2032 = vpop.f32.mrb[0].mxu0
    %2033 = vdwg.mxu0
    %s2034 = scalar_lea.vmem %s19, 32
    %v2035 = vld [vmem:[%s2034] sm:$0xff]
    %v2036 = vld [vmem:[%s2034 + $0x8] sm:$0xff]
    %v2037 = vld [vmem:[%s2034 + $0x10] sm:$0xff]
    %v2038 = vld [vmem:[%s2034 + $0x18] sm:$0xff]
    %s2039 = scalar_lea.vmem %s25, 1
    %v2040 = vld [vmem:[%s2039] sm:$0x1]
    %v2042 = vlaneseq
    %v2043 = vshrl.u32 %v2042, 7
    %v2044 = vsub.s32 0, %v2043
    %v2045 = vrot.slane %v2040, %v2044
    %2047 = vmatprep.subr.mxu0 0.0
    %2048 = vmatpush1.msra.mxu0 %v2035
    %2049 = vmatprep.subr.mxu0 0.0
    %2050 = vmatpush1.msra.mxu0 %v2036
    %2051 = vmatprep.subr.mxu0 0.0
    %2052 = vmatpush1.msra.mxu0 %v2037
    %2053 = vmatprep.subr.mxu0 0.0
    %2054 = vmatpush1.msra.mxu0 %v2038
    %2055 = vmatprep.subr.mxu0 0.0
    %2056 = vmatpush1.msra.mxu0 0.0
    %2057 = vmatprep.subr.mxu0 0.0
    %2058 = vmatpush1.msra.mxu0 0.0
    %2059 = vmatprep.subr.mxu0 0.0
    %2060 = vmatpush1.msra.mxu0 0.0
    %2061 = vmatprep.subr.mxu0 0.0
    %2062 = vmatpush1.msra.mxu0 0.0
    %2063 = vmatprep.subr.mxu0 0.0
    %2064 = vmatpush1.msra.mxu0 0.0
    %2065 = vmatprep.subr.mxu0 0.0
    %2066 = vmatpush1.msra.mxu0 0.0
    %2067 = vmatprep.subr.mxu0 0.0
    %2068 = vmatpush1.msra.mxu0 0.0
    %2069 = vmatprep.subr.mxu0 0.0
    %2070 = vmatpush1.msra.mxu0 0.0
    %2071 = vmatprep.subr.mxu0 0.0
    %2072 = vmatpush1.msra.mxu0 0.0
    %2073 = vmatprep.subr.mxu0 0.0
    %2074 = vmatpush1.msra.mxu0 0.0
    %2075 = vmatprep.subr.mxu0 0.0
    %2076 = vmatpush1.msra.mxu0 0.0
    %2077 = vmatprep.subr.mxu0 0.0
    %2078 = vmatpush1.msra.mxu0 0.0
    %2079 = vmatprep.subr.mxu0 0.0
    %2080 = vmatpush1.msra.mxu0 0.0
    %2081 = vmatprep.subr.mxu0 0.0
    %2082 = vmatpush1.msra.mxu0 0.0
    %2083 = vmatprep.subr.mxu0 0.0
    %2084 = vmatpush1.msra.mxu0 0.0
    %2085 = vmatprep.subr.mxu0 0.0
    %2086 = vmatpush1.msra.mxu0 0.0
    %2087 = vmatprep.subr.mxu0 0.0
    %2088 = vmatpush1.msra.mxu0 0.0
    %2089 = vmatprep.subr.mxu0 0.0
    %2090 = vmatpush1.msra.mxu0 0.0
    %2091 = vmatprep.subr.mxu0 0.0
    %2092 = vmatpush1.msra.mxu0 0.0
    %2093 = vmatprep.subr.mxu0 0.0
    %2094 = vmatpush1.msra.mxu0 0.0
    %2095 = vmatprep.subr.mxu0 0.0
    %2096 = vmatpush1.msra.mxu0 0.0
    %2097 = vmatprep.subr.mxu0 0.0
    %2098 = vmatpush1.msra.mxu0 0.0
    %2099 = vmatprep.subr.mxu0 0.0
    %2100 = vmatpush1.msra.mxu0 0.0
    %2101 = vmatprep.subr.mxu0 0.0
    %2102 = vmatpush1.msra.mxu0 0.0
    %2103 = vmatprep.subr.mxu0 0.0
    %2104 = vmatpush1.msra.mxu0 0.0
    %2105 = vmatprep.subr.mxu0 0.0
    %2106 = vmatpush1.msra.mxu0 0.0
    %2107 = vmatprep.subr.mxu0 0.0
    %2108 = vmatpush1.msra.mxu0 0.0
    %2109 = vmatprep.subr.mxu0 0.0
    %2110 = vmatpush1.msra.mxu0 0.0
    %2111 = vmatprep.mubr.f32.mxu0 0.0
    %2112 = vmatmul.mubr.f32.gmra.mrb[0].mxu0 %v913
    %v2113 = vpop.f32.mrb[0].mxu0
    %v2114 = vadd.f32 %v2045, %v2113
    %v2115 = vpop.f32.mrb[0].mxu0
    %2116 = vmatprep.mubr.f32.mxu0 0.0
    %2117 = vmatmul.mubr.f32.gmra.mrb[0].mxu0 %v916
    %v2118 = vpop.f32.mrb[0].mxu0
    %v2119 = vadd.f32 %v2045, %v2118
    %v2120 = vpop.f32.mrb[0].mxu0
    %2121 = vmatprep.mubr.f32.mxu0 0.0
    %2122 = vmatmul.mubr.f32.gmra.mrb[0].mxu0 %v919
    %v2123 = vpop.f32.mrb[0].mxu0
    %v2124 = vadd.f32 %v2045, %v2123
    %v2125 = vpop.f32.mrb[0].mxu0
    %2126 = vmatprep.mubr.f32.mxu0 0.0
    %2127 = vmatmul.mubr.f32.gmra.mrb[0].mxu0 %v922
    %v2128 = vpop.f32.mrb[0].mxu0
    %v2129 = vadd.f32 %v2045, %v2128
    %v2130 = vpop.f32.mrb[0].mxu0
    %2131 = vmatprep.mubr.f32.mxu0 0.0
    %2132 = vmatmul.mubr.f32.gmra.mrb[0].mxu0 %v925
    %v2133 = vpop.f32.mrb[0].mxu0
    %v2134 = vadd.f32 %v2045, %v2133
    %v2135 = vpop.f32.mrb[0].mxu0
    %2136 = vmatprep.mubr.f32.mxu0 0.0
    %2137 = vmatmul.mubr.f32.gmra.mrb[0].mxu0 %v928
    %v2138 = vpop.f32.mrb[0].mxu0
    %v2139 = vadd.f32 %v2045, %v2138
    %v2140 = vpop.f32.mrb[0].mxu0
    %2141 = vmatprep.mubr.f32.mxu0 0.0
    %2142 = vmatmul.mubr.f32.gmra.mrb[0].mxu0 %v931
    %v2143 = vpop.f32.mrb[0].mxu0
    %v2144 = vadd.f32 %v2045, %v2143
    %v2145 = vpop.f32.mrb[0].mxu0
    %2146 = vmatprep.mubr.f32.mxu0 0.0
    %2147 = vmatmul.mubr.f32.gmra.mrb[0].mxu0 %v934
    %v2148 = vpop.f32.mrb[0].mxu0
    %v2149 = vadd.f32 %v2045, %v2148
    %v2150 = vpop.f32.mrb[0].mxu0
    %2151 = vdwg.mxu0
    %s2152 = scalar_lea.vmem %s27, 64
    %v2153 = vld [vmem:[%s2152] sm:$0xff]
    %v2154 = vld [vmem:[%s2152 + $0x8] sm:$0xff]
    %v2155 = vld [vmem:[%s2152 + $0x10] sm:$0xff]
    %v2156 = vld [vmem:[%s2152 + $0x18] sm:$0xff]
    %v2157 = vld [vmem:[%s2152 + $0x20] sm:$0xff]
    %v2158 = vld [vmem:[%s2152 + $0x28] sm:$0xff]
    %v2159 = vld [vmem:[%s2152 + $0x30] sm:$0xff]
    %v2160 = vld [vmem:[%s2152 + $0x38] sm:$0xff]
    %v2162 = vsel %vm1281, %v1878, 0
    %v2165 = vsel %vm1281, %v1883, 0
    %v2168 = vsel %vm1281, %v1888, 0
    %v2171 = vsel %vm1281, %v1893, 0
    %v2174 = vsel %vm1281, %v1898, 0
    %v2177 = vsel %vm1281, %v1903, 0
    %v2180 = vsel %vm1281, %v1908, 0
    %v2183 = vsel %vm1281, %v1913, 0
    %v2186 = vsel %vm1281, %v1996, 0
    %v2189 = vsel %vm1281, %v2001, 0
    %v2192 = vsel %vm1281, %v2006, 0
    %v2195 = vsel %vm1281, %v2011, 0
    %v2198 = vsel %vm1281, %v2016, 0
    %v2201 = vsel %vm1281, %v2021, 0
    %v2204 = vsel %vm1281, %v2026, 0
    %v2207 = vsel %vm1281, %v2031, 0
    %2209 = vmatprep.subr.mxu0 0.0
    %2210 = vmatpush1.xpose.msra.mxu0 %v2186
    %2211 = vmatprep.subr.mxu0 0.0
    %2212 = vmatpush1.xpose.msra.mxu0 %v2189
    %2213 = vmatprep.subr.mxu0 0.0
    %2214 = vmatpush1.xpose.msra.mxu0 %v2192
    %2215 = vmatprep.subr.mxu0 0.0
    %2216 = vmatpush1.xpose.msra.mxu0 %v2195
    %2217 = vmatprep.subr.mxu0 0.0
    %2218 = vmatpush1.xpose.msra.mxu0 %v2198
    %2219 = vmatprep.subr.mxu0 0.0
    %2220 = vmatpush1.xpose.msra.mxu0 %v2201
    %2221 = vmatprep.subr.mxu0 0.0
    %2222 = vmatpush1.xpose.msra.mxu0 %v2204
    %2223 = vmatprep.subr.mxu0 0.0
    %2224 = vmatpush1.xpose.msra.mxu0 %v2207
    %2225 = vmatprep.subr.mxu0 0.0
    %2226 = vmatpush1.xpose.msra.mxu0 0.0
    %2227 = vmatprep.subr.mxu0 0.0
    %2228 = vmatpush1.xpose.msra.mxu0 0.0
    %2229 = vmatprep.subr.mxu0 0.0
    %2230 = vmatpush1.xpose.msra.mxu0 0.0
    %2231 = vmatprep.subr.mxu0 0.0
    %2232 = vmatpush1.xpose.msra.mxu0 0.0
    %2233 = vmatprep.subr.mxu0 0.0
    %2234 = vmatpush1.xpose.msra.mxu0 0.0
    %2235 = vmatprep.subr.mxu0 0.0
    %2236 = vmatpush1.xpose.msra.mxu0 0.0
    %2237 = vmatprep.subr.mxu0 0.0
    %2238 = vmatpush1.xpose.msra.mxu0 0.0
    %2239 = vmatprep.subr.mxu0 0.0
    %2240 = vmatpush1.xpose.msra.mxu0 0.0
    %2241 = vmatprep.subr.mxu0 0.0
    %2242 = vmatpush1.xpose.msra.mxu0 0.0
    %2243 = vmatprep.subr.mxu0 0.0
    %2244 = vmatpush1.xpose.msra.mxu0 0.0
    %2245 = vmatprep.subr.mxu0 0.0
    %2246 = vmatpush1.xpose.msra.mxu0 0.0
    %2247 = vmatprep.subr.mxu0 0.0
    %2248 = vmatpush1.xpose.msra.mxu0 0.0
    %2249 = vmatprep.subr.mxu0 0.0
    %2250 = vmatpush1.xpose.msra.mxu0 0.0
    %2251 = vmatprep.subr.mxu0 0.0
    %2252 = vmatpush1.xpose.msra.mxu0 0.0
    %2253 = vmatprep.subr.mxu0 0.0
    %2254 = vmatpush1.xpose.msra.mxu0 0.0
    %2255 = vmatprep.subr.mxu0 0.0
    %2256 = vmatpush1.xpose.msra.mxu0 0.0
    %2257 = vmatprep.subr.mxu0 0.0
    %2258 = vmatpush1.xpose.msra.mxu0 0.0
    %2259 = vmatprep.subr.mxu0 0.0
    %2260 = vmatpush1.xpose.msra.mxu0 0.0
    %2261 = vmatprep.subr.mxu0 0.0
    %2262 = vmatpush1.xpose.msra.mxu0 0.0
    %2263 = vmatprep.subr.mxu0 0.0
    %2264 = vmatpush1.xpose.msra.mxu0 0.0
    %2265 = vmatprep.subr.mxu0 0.0
    %2266 = vmatpush1.xpose.msra.mxu0 0.0
    %2267 = vmatprep.subr.mxu0 0.0
    %2268 = vmatpush1.xpose.msra.mxu0 0.0
    %2269 = vmatprep.subr.mxu0 0.0
    %2270 = vmatpush1.xpose.msra.mxu0 0.0
    %2271 = vmatprep.subr.mxu0 0.0
    %2272 = vmatpush1.xpose.msra.mxu0 0.0
    %2273 = vmatprep.mubr.f32.mxu0 0.0
    %2274 = vmatmul.mubr.f32.gmra.mrb[0].mxu0 %v2162
    %v2275 = vpop.f32.mrb[0].mxu0
    %v2276 = vadd.f32 %v2153, %v2275
    %v2277 = vpop.f32.mrb[0].mxu0
    %2278 = vmatprep.mubr.f32.mxu0 0.0
    %2279 = vmatmul.mubr.f32.gmra.mrb[0].mxu0 %v2165
    %v2280 = vpop.f32.mrb[0].mxu0
    %v2281 = vadd.f32 %v2154, %v2280
    %v2282 = vpop.f32.mrb[0].mxu0
    %2283 = vmatprep.mubr.f32.mxu0 0.0
    %2284 = vmatmul.mubr.f32.gmra.mrb[0].mxu0 %v2168
    %v2285 = vpop.f32.mrb[0].mxu0
    %v2286 = vadd.f32 %v2155, %v2285
    %v2287 = vpop.f32.mrb[0].mxu0
    %2288 = vmatprep.mubr.f32.mxu0 0.0
    %2289 = vmatmul.mubr.f32.gmra.mrb[0].mxu0 %v2171
    %v2290 = vpop.f32.mrb[0].mxu0
    %v2291 = vadd.f32 %v2156, %v2290
    %v2292 = vpop.f32.mrb[0].mxu0
    %2293 = vmatprep.mubr.f32.mxu0 0.0
    %2294 = vmatmul.mubr.f32.gmra.mrb[0].mxu0 %v2174
    %v2295 = vpop.f32.mrb[0].mxu0
    %v2296 = vadd.f32 %v2157, %v2295
    %v2297 = vpop.f32.mrb[0].mxu0
    %2298 = vmatprep.mubr.f32.mxu0 0.0
    %2299 = vmatmul.mubr.f32.gmra.mrb[0].mxu0 %v2177
    %v2300 = vpop.f32.mrb[0].mxu0
    %v2301 = vadd.f32 %v2158, %v2300
    %v2302 = vpop.f32.mrb[0].mxu0
    %2303 = vmatprep.mubr.f32.mxu0 0.0
    %2304 = vmatmul.mubr.f32.gmra.mrb[0].mxu0 %v2180
    %v2305 = vpop.f32.mrb[0].mxu0
    %v2306 = vadd.f32 %v2159, %v2305
    %v2307 = vpop.f32.mrb[0].mxu0
    %2308 = vmatprep.mubr.f32.mxu0 0.0
    %2309 = vmatmul.mubr.f32.gmra.mrb[0].mxu0 %v2183
    %v2310 = vpop.f32.mrb[0].mxu0
    %v2311 = vadd.f32 %v2160, %v2310
    %v2312 = vpop.f32.mrb[0].mxu0
    %2313 = vdwg.mxu0
    %v2314 = vsel %vm1435, %v2276, -inf
    %2315 = vmax.xlane.f32.xlu0 %v2314
    %v2316 = vpop.xlane.xlu0 %2315
    %v2317 = vsel %vm1435, %v2281, -inf
    %2318 = vmax.xlane.f32.xlu0 %v2317
    %v2319 = vpop.xlane.xlu0 %2318
    %v2320 = vsel %vm1435, %v2286, -inf
    %2321 = vmax.xlane.f32.xlu0 %v2320
    %v2322 = vpop.xlane.xlu0 %2321
    %v2323 = vsel %vm1435, %v2291, -inf
    %2324 = vmax.xlane.f32.xlu0 %v2323
    %v2325 = vpop.xlane.xlu0 %2324
    %v2326 = vsel %vm1435, %v2296, -inf
    %2327 = vmax.xlane.f32.xlu0 %v2326
    %v2328 = vpop.xlane.xlu0 %2327
    %v2329 = vsel %vm1435, %v2301, -inf
    %2330 = vmax.xlane.f32.xlu0 %v2329
    %v2331 = vpop.xlane.xlu0 %2330
    %v2332 = vsel %vm1435, %v2306, -inf
    %2333 = vmax.xlane.f32.xlu0 %v2332
    %v2334 = vpop.xlane.xlu0 %2333
    %v2335 = vsel %vm1435, %v2311, -inf
    %2336 = vmax.xlane.f32.xlu0 %v2335
    %v2337 = vpop.xlane.xlu0 %2336
    %v2338 = vsub.f32 %v2276, %v2316
    %v2339 = vsub.f32 %v2281, %v2319
    %v2340 = vsub.f32 %v2286, %v2322
    %v2341 = vsub.f32 %v2291, %v2325
    %v2342 = vsub.f32 %v2296, %v2328
    %v2343 = vsub.f32 %v2301, %v2331
    %v2344 = vsub.f32 %v2306, %v2334
    %v2345 = vsub.f32 %v2311, %v2337
    %v2346 = vmul.f32 %v2338, 1.442695
    %v2347 = vpow.pop %v2346
    %v2348 = vmul.f32 %v2339, 1.442695
    %v2349 = vpow.pop %v2348
    %v2350 = vmul.f32 %v2340, 1.442695
    %v2351 = vpow.pop %v2350
    %v2352 = vmul.f32 %v2341, 1.442695
    %v2353 = vpow.pop %v2352
    %v2354 = vmul.f32 %v2342, 1.442695
    %v2355 = vpow.pop %v2354
    %v2356 = vmul.f32 %v2343, 1.442695
    %v2357 = vpow.pop %v2356
    %v2358 = vmul.f32 %v2344, 1.442695
    %v2359 = vpow.pop %v2358
    %v2360 = vmul.f32 %v2345, 1.442695
    %v2361 = vpow.pop %v2360
    %v2362 = vsel %vm1435, %v2347, 0.0
    %2363 = vadd.xlane.f32.xlu0 %v2362
    %v2364 = vpop.xlane.xlu0 %2363
    %v2365 = vsel %vm1435, %v2349, 0.0
    %2366 = vadd.xlane.f32.xlu0 %v2365
    %v2367 = vpop.xlane.xlu0 %2366
    %v2368 = vsel %vm1435, %v2351, 0.0
    %2369 = vadd.xlane.f32.xlu0 %v2368
    %v2370 = vpop.xlane.xlu0 %2369
    %v2371 = vsel %vm1435, %v2353, 0.0
    %2372 = vadd.xlane.f32.xlu0 %v2371
    %v2373 = vpop.xlane.xlu0 %2372
    %v2374 = vsel %vm1435, %v2355, 0.0
    %2375 = vadd.xlane.f32.xlu0 %v2374
    %v2376 = vpop.xlane.xlu0 %2375
    %v2377 = vsel %vm1435, %v2357, 0.0
    %2378 = vadd.xlane.f32.xlu0 %v2377
    %v2379 = vpop.xlane.xlu0 %2378
    %v2380 = vsel %vm1435, %v2359, 0.0
    %2381 = vadd.xlane.f32.xlu0 %v2380
    %v2382 = vpop.xlane.xlu0 %2381
    %v2383 = vsel %vm1435, %v2361, 0.0
    %2384 = vadd.xlane.f32.xlu0 %v2383
    %v2385 = vpop.xlane.xlu0 %2384
    %v2386 = vrcp.pop %v2364
    %v2387 = vrcp.pop %v2367
    %v2388 = vrcp.pop %v2370
    %v2389 = vrcp.pop %v2373
    %v2390 = vrcp.pop %v2376
    %v2391 = vrcp.pop %v2379
    %v2392 = vrcp.pop %v2382
    %v2393 = vrcp.pop %v2385
    %v2394 = vmul.f32 %v2347, %v2386
    %v2395 = vmul.f32 %v2349, %v2387
    %v2396 = vmul.f32 %v2351, %v2388
    %v2397 = vmul.f32 %v2353, %v2389
    %v2398 = vmul.f32 %v2355, %v2390
    %v2399 = vmul.f32 %v2357, %v2391
    %v2400 = vmul.f32 %v2359, %v2392
    %v2401 = vmul.f32 %v2361, %v2393
    %v2403 = vsel %vm1435, %v2394, 0
    %v2406 = vsel %vm1435, %v2395, 0
    %v2409 = vsel %vm1435, %v2396, 0
    %v2412 = vsel %vm1435, %v2397, 0
    %v2415 = vsel %vm1435, %v2398, 0
    %v2418 = vsel %vm1435, %v2399, 0
    %v2421 = vsel %vm1435, %v2400, 0
    %v2424 = vsel %vm1435, %v2401, 0
    %2426 = vmatprep.subr.mxu0 0.0
    %2427 = vmatpush1.msra.mxu0 %v2114
    %2428 = vmatprep.subr.mxu0 0.0
    %2429 = vmatpush1.msra.mxu0 %v2119
    %2430 = vmatprep.subr.mxu0 0.0
    %2431 = vmatpush1.msra.mxu0 %v2124
    %2432 = vmatprep.subr.mxu0 0.0
    %2433 = vmatpush1.msra.mxu0 %v2129
    %2434 = vmatprep.subr.mxu0 0.0
    %2435 = vmatpush1.msra.mxu0 %v2134
    %2436 = vmatprep.subr.mxu0 0.0
    %2437 = vmatpush1.msra.mxu0 %v2139
    %2438 = vmatprep.subr.mxu0 0.0
    %2439 = vmatpush1.msra.mxu0 %v2144
    %2440 = vmatprep.subr.mxu0 0.0
    %2441 = vmatpush1.msra.mxu0 %v2149
    %2442 = vmatprep.subr.mxu0 0.0
    %2443 = vmatpush1.msra.mxu0 0.0
    %2444 = vmatprep.subr.mxu0 0.0
    %2445 = vmatpush1.msra.mxu0 0.0
    %2446 = vmatprep.subr.mxu0 0.0
    %2447 = vmatpush1.msra.mxu0 0.0
    %2448 = vmatprep.subr.mxu0 0.0
    %2449 = vmatpush1.msra.mxu0 0.0
    %2450 = vmatprep.subr.mxu0 0.0
    %2451 = vmatpush1.msra.mxu0 0.0
    %2452 = vmatprep.subr.mxu0 0.0
    %2453 = vmatpush1.msra.mxu0 0.0
    %2454 = vmatprep.subr.mxu0 0.0
    %2455 = vmatpush1.msra.mxu0 0.0
    %2456 = vmatprep.subr.mxu0 0.0
    %2457 = vmatpush1.msra.mxu0 0.0
    %2458 = vmatprep.subr.mxu0 0.0
    %2459 = vmatpush1.msra.mxu0 0.0
    %2460 = vmatprep.subr.mxu0 0.0
    %2461 = vmatpush1.msra.mxu0 0.0
    %2462 = vmatprep.subr.mxu0 0.0
    %2463 = vmatpush1.msra.mxu0 0.0
    %2464 = vmatprep.subr.mxu0 0.0
    %2465 = vmatpush1.msra.mxu0 0.0
    %2466 = vmatprep.subr.mxu0 0.0
    %2467 = vmatpush1.msra.mxu0 0.0
    %2468 = vmatprep.subr.mxu0 0.0
    %2469 = vmatpush1.msra.mxu0 0.0
    %2470 = vmatprep.subr.mxu0 0.0
    %2471 = vmatpush1.msra.mxu0 0.0
    %2472 = vmatprep.subr.mxu0 0.0
    %2473 = vmatpush1.msra.mxu0 0.0
    %2474 = vmatprep.subr.mxu0 0.0
    %2475 = vmatpush1.msra.mxu0 0.0
    %2476 = vmatprep.subr.mxu0 0.0
    %2477 = vmatpush1.msra.mxu0 0.0
    %2478 = vmatprep.subr.mxu0 0.0
    %2479 = vmatpush1.msra.mxu0 0.0
    %2480 = vmatprep.subr.mxu0 0.0
    %2481 = vmatpush1.msra.mxu0 0.0
    %2482 = vmatprep.subr.mxu0 0.0
    %2483 = vmatpush1.msra.mxu0 0.0
    %2484 = vmatprep.subr.mxu0 0.0
    %2485 = vmatpush1.msra.mxu0 0.0
    %2486 = vmatprep.subr.mxu0 0.0
    %2487 = vmatpush1.msra.mxu0 0.0
    %2488 = vmatprep.subr.mxu0 0.0
    %2489 = vmatpush1.msra.mxu0 0.0
    %2490 = vmatprep.mubr.f32.mxu0 0.0
    %2491 = vmatmul.mubr.f32.gmra.mrb[0].mxu0 %v2403
    %v2492 = vpop.f32.mrb[0].mxu0
    %v2493 = vadd.f32 0.0, %v2492
    %v2494 = vpop.f32.mrb[0].mxu0
    %2495 = vmatprep.mubr.f32.mxu0 0.0
    %2496 = vmatmul.mubr.f32.gmra.mrb[0].mxu0 %v2406
    %v2497 = vpop.f32.mrb[0].mxu0
    %v2498 = vadd.f32 0.0, %v2497
    %v2499 = vpop.f32.mrb[0].mxu0
    %2500 = vmatprep.mubr.f32.mxu0 0.0
    %2501 = vmatmul.mubr.f32.gmra.mrb[0].mxu0 %v2409
    %v2502 = vpop.f32.mrb[0].mxu0
    %v2503 = vadd.f32 0.0, %v2502
    %v2504 = vpop.f32.mrb[0].mxu0
    %2505 = vmatprep.mubr.f32.mxu0 0.0
    %2506 = vmatmul.mubr.f32.gmra.mrb[0].mxu0 %v2412
    %v2507 = vpop.f32.mrb[0].mxu0
    %v2508 = vadd.f32 0.0, %v2507
    %v2509 = vpop.f32.mrb[0].mxu0
    %2510 = vmatprep.mubr.f32.mxu0 0.0
    %2511 = vmatmul.mubr.f32.gmra.mrb[0].mxu0 %v2415
    %v2512 = vpop.f32.mrb[0].mxu0
    %v2513 = vadd.f32 0.0, %v2512
    %v2514 = vpop.f32.mrb[0].mxu0
    %2515 = vmatprep.mubr.f32.mxu0 0.0
    %2516 = vmatmul.mubr.f32.gmra.mrb[0].mxu0 %v2418
    %v2517 = vpop.f32.mrb[0].mxu0
    %v2518 = vadd.f32 0.0, %v2517
    %v2519 = vpop.f32.mrb[0].mxu0
    %2520 = vmatprep.mubr.f32.mxu0 0.0
    %2521 = vmatmul.mubr.f32.gmra.mrb[0].mxu0 %v2421
    %v2522 = vpop.f32.mrb[0].mxu0
    %v2523 = vadd.f32 0.0, %v2522
    %v2524 = vpop.f32.mrb[0].mxu0
    %2525 = vmatprep.mubr.f32.mxu0 0.0
    %2526 = vmatmul.mubr.f32.gmra.mrb[0].mxu0 %v2424
    %v2527 = vpop.f32.mrb[0].mxu0
    %v2528 = vadd.f32 0.0, %v2527
    %v2529 = vpop.f32.mrb[0].mxu0
    %2530 = vdwg.mxu0
    %s2531 = scalar_lea.vmem %s29, 16
    %v2532 = vld [vmem:[%s2531] sm:$0xff]
    %v2533 = vld [vmem:[%s2531 + $0x8] sm:$0xff]
    %v2535 = vsel %vm1281, %v2493, 0
    %v2538 = vsel %vm1281, %v2498, 0
    %v2541 = vsel %vm1281, %v2503, 0
    %v2544 = vsel %vm1281, %v2508, 0
    %v2547 = vsel %vm1281, %v2513, 0
    %v2550 = vsel %vm1281, %v2518, 0
    %v2553 = vsel %vm1281, %v2523, 0
    %v2556 = vsel %vm1281, %v2528, 0
    %2558 = vmatprep.subr.mxu0 0.0
    %2559 = vmatpush1.msra.mxu0 %v2532
    %2560 = vmatprep.subr.mxu0 0.0
    %2561 = vmatpush1.msra.mxu0 %v2533
    %2562 = vmatprep.subr.mxu0 0.0
    %2563 = vmatpush1.msra.mxu0 0.0
    %2564 = vmatprep.subr.mxu0 0.0
    %2565 = vmatpush1.msra.mxu0 0.0
    %2566 = vmatprep.subr.mxu0 0.0
    %2567 = vmatpush1.msra.mxu0 0.0
    %2568 = vmatprep.subr.mxu0 0.0
    %2569 = vmatpush1.msra.mxu0 0.0
    %2570 = vmatprep.subr.mxu0 0.0
    %2571 = vmatpush1.msra.mxu0 0.0
    %2572 = vmatprep.subr.mxu0 0.0
    %2573 = vmatpush1.msra.mxu0 0.0
    %2574 = vmatprep.subr.mxu0 0.0
    %2575 = vmatpush1.msra.mxu0 0.0
    %2576 = vmatprep.subr.mxu0 0.0
    %2577 = vmatpush1.msra.mxu0 0.0
    %2578 = vmatprep.subr.mxu0 0.0
    %2579 = vmatpush1.msra.mxu0 0.0
    %2580 = vmatprep.subr.mxu0 0.0
    %2581 = vmatpush1.msra.mxu0 0.0
    %2582 = vmatprep.subr.mxu0 0.0
    %2583 = vmatpush1.msra.mxu0 0.0
    %2584 = vmatprep.subr.mxu0 0.0
    %2585 = vmatpush1.msra.mxu0 0.0
    %2586 = vmatprep.subr.mxu0 0.0
    %2587 = vmatpush1.msra.mxu0 0.0
    %2588 = vmatprep.subr.mxu0 0.0
    %2589 = vmatpush1.msra.mxu0 0.0
    %2590 = vmatprep.subr.mxu0 0.0
    %2591 = vmatpush1.msra.mxu0 0.0
    %2592 = vmatprep.subr.mxu0 0.0
    %2593 = vmatpush1.msra.mxu0 0.0
    %2594 = vmatprep.subr.mxu0 0.0
    %2595 = vmatpush1.msra.mxu0 0.0
    %2596 = vmatprep.subr.mxu0 0.0
    %2597 = vmatpush1.msra.mxu0 0.0
    %2598 = vmatprep.subr.mxu0 0.0
    %2599 = vmatpush1.msra.mxu0 0.0
    %2600 = vmatprep.subr.mxu0 0.0
    %2601 = vmatpush1.msra.mxu0 0.0
    %2602 = vmatprep.subr.mxu0 0.0
    %2603 = vmatpush1.msra.mxu0 0.0
    %2604 = vmatprep.subr.mxu0 0.0
    %2605 = vmatpush1.msra.mxu0 0.0
    %2606 = vmatprep.subr.mxu0 0.0
    %2607 = vmatpush1.msra.mxu0 0.0
    %2608 = vmatprep.subr.mxu0 0.0
    %2609 = vmatpush1.msra.mxu0 0.0
    %2610 = vmatprep.subr.mxu0 0.0
    %2611 = vmatpush1.msra.mxu0 0.0
    %2612 = vmatprep.subr.mxu0 0.0
    %2613 = vmatpush1.msra.mxu0 0.0
    %2614 = vmatprep.subr.mxu0 0.0
    %2615 = vmatpush1.msra.mxu0 0.0
    %2616 = vmatprep.subr.mxu0 0.0
    %2617 = vmatpush1.msra.mxu0 0.0
    %2618 = vmatprep.subr.mxu0 0.0
    %2619 = vmatpush1.msra.mxu0 0.0
    %2620 = vmatprep.subr.mxu0 0.0
    %2621 = vmatpush1.msra.mxu0 0.0
    %2622 = vmatprep.mubr.f32.mxu0 0.0
    %2623 = vmatmul.mubr.f32.gmra.mrb[0].mxu0 %v2535
    %v2624 = vpop.f32.mrb[0].mxu0
    %v2625 = vadd.f32 0.0, %v2624
    %v2626 = vpop.f32.mrb[0].mxu0
    %2627 = vmatprep.mubr.f32.mxu0 0.0
    %2628 = vmatmul.mubr.f32.gmra.mrb[0].mxu0 %v2538
    %v2629 = vpop.f32.mrb[0].mxu0
    %v2630 = vadd.f32 0.0, %v2629
    %v2631 = vpop.f32.mrb[0].mxu0
    %2632 = vmatprep.mubr.f32.mxu0 0.0
    %2633 = vmatmul.mubr.f32.gmra.mrb[0].mxu0 %v2541
    %v2634 = vpop.f32.mrb[0].mxu0
    %v2635 = vadd.f32 0.0, %v2634
    %v2636 = vpop.f32.mrb[0].mxu0
    %2637 = vmatprep.mubr.f32.mxu0 0.0
    %2638 = vmatmul.mubr.f32.gmra.mrb[0].mxu0 %v2544
    %v2639 = vpop.f32.mrb[0].mxu0
    %v2640 = vadd.f32 0.0, %v2639
    %v2641 = vpop.f32.mrb[0].mxu0
    %2642 = vmatprep.mubr.f32.mxu0 0.0
    %2643 = vmatmul.mubr.f32.gmra.mrb[0].mxu0 %v2547
    %v2644 = vpop.f32.mrb[0].mxu0
    %v2645 = vadd.f32 0.0, %v2644
    %v2646 = vpop.f32.mrb[0].mxu0
    %2647 = vmatprep.mubr.f32.mxu0 0.0
    %2648 = vmatmul.mubr.f32.gmra.mrb[0].mxu0 %v2550
    %v2649 = vpop.f32.mrb[0].mxu0
    %v2650 = vadd.f32 0.0, %v2649
    %v2651 = vpop.f32.mrb[0].mxu0
    %2652 = vmatprep.mubr.f32.mxu0 0.0
    %2653 = vmatmul.mubr.f32.gmra.mrb[0].mxu0 %v2553
    %v2654 = vpop.f32.mrb[0].mxu0
    %v2655 = vadd.f32 0.0, %v2654
    %v2656 = vpop.f32.mrb[0].mxu0
    %2657 = vmatprep.mubr.f32.mxu0 0.0
    %2658 = vmatmul.mubr.f32.gmra.mrb[0].mxu0 %v2556
    %v2659 = vpop.f32.mrb[0].mxu0
    %v2660 = vadd.f32 0.0, %v2659
    %v2661 = vpop.f32.mrb[0].mxu0
    %2662 = vdwg.mxu0
    %v2663 = vadd.f32 %v1790, %v2625
    %v2664 = vadd.f32 %v1791, %v2630
    %v2665 = vadd.f32 %v1792, %v2635
    %v2666 = vadd.f32 %v1793, %v2640
    %v2667 = vadd.f32 %v1794, %v2645
    %v2668 = vadd.f32 %v1795, %v2650
    %v2669 = vadd.f32 %v1796, %v2655
    %v2670 = vadd.f32 %v1797, %v2660
    %v2671 = vadd.f32 %v734, %v2663
    %v2672 = vadd.f32 %v735, %v2664
    %v2673 = vadd.f32 %v736, %v2665
    %v2674 = vadd.f32 %v737, %v2666
    %v2675 = vadd.f32 %v738, %v2667
    %v2676 = vadd.f32 %v739, %v2668
    %v2677 = vadd.f32 %v740, %v2669
    %v2678 = vadd.f32 %v741, %v2670
    %v2679 = vsel %vm608, %v2671, 0.0
    %2680 = vadd.xlane.f32.xlu0 %v2679
    %v2681 = vpop.xlane.xlu0 %2680
    %v2682 = vsel %vm608, %v2672, 0.0
    %2683 = vadd.xlane.f32.xlu0 %v2682
    %v2684 = vpop.xlane.xlu0 %2683
    %v2685 = vsel %vm608, %v2673, 0.0
    %2686 = vadd.xlane.f32.xlu0 %v2685
    %v2687 = vpop.xlane.xlu0 %2686
    %v2688 = vsel %vm608, %v2674, 0.0
    %2689 = vadd.xlane.f32.xlu0 %v2688
    %v2690 = vpop.xlane.xlu0 %2689
    %v2691 = vsel %vm608, %v2675, 0.0
    %2692 = vadd.xlane.f32.xlu0 %v2691
    %v2693 = vpop.xlane.xlu0 %2692
    %v2694 = vsel %vm608, %v2676, 0.0
    %2695 = vadd.xlane.f32.xlu0 %v2694
    %v2696 = vpop.xlane.xlu0 %2695
    %v2697 = vsel %vm608, %v2677, 0.0
    %2698 = vadd.xlane.f32.xlu0 %v2697
    %v2699 = vpop.xlane.xlu0 %2698
    %v2700 = vsel %vm608, %v2678, 0.0
    %2701 = vadd.xlane.f32.xlu0 %v2700
    %v2702 = vpop.xlane.xlu0 %2701
    %v2703 = vmul.f32 %v2681, %v633
    %v2704 = vmul.f32 %v2684, %v633
    %v2705 = vmul.f32 %v2687, %v633
    %v2706 = vmul.f32 %v2690, %v633
    %v2707 = vmul.f32 %v2693, %v633
    %v2708 = vmul.f32 %v2696, %v633
    %v2709 = vmul.f32 %v2699, %v633
    %v2710 = vmul.f32 %v2702, %v633
    %v2711 = vsub.f32 %v2671, %v2703
    %v2712 = vsub.f32 %v2672, %v2704
    %v2713 = vsub.f32 %v2673, %v2705
    %v2714 = vsub.f32 %v2674, %v2706
    %v2715 = vsub.f32 %v2675, %v2707
    %v2716 = vsub.f32 %v2676, %v2708
    %v2717 = vsub.f32 %v2677, %v2709
    %v2718 = vsub.f32 %v2678, %v2710
    %v2719 = vmul.f32 %v2711, %v2711
    %v2720 = vmul.f32 %v2712, %v2712
    %v2721 = vmul.f32 %v2713, %v2713
    %v2722 = vmul.f32 %v2714, %v2714
    %v2723 = vmul.f32 %v2715, %v2715
    %v2724 = vmul.f32 %v2716, %v2716
    %v2725 = vmul.f32 %v2717, %v2717
    %v2726 = vmul.f32 %v2718, %v2718
    %v2727 = vsel %vm608, %v2719, 0.0
    %2728 = vadd.xlane.f32.xlu0 %v2727
    %v2729 = vpop.xlane.xlu0 %2728
    %v2730 = vsel %vm608, %v2720, 0.0
    %2731 = vadd.xlane.f32.xlu0 %v2730
    %v2732 = vpop.xlane.xlu0 %2731
    %v2733 = vsel %vm608, %v2721, 0.0
    %2734 = vadd.xlane.f32.xlu0 %v2733
    %v2735 = vpop.xlane.xlu0 %2734
    %v2736 = vsel %vm608, %v2722, 0.0
    %2737 = vadd.xlane.f32.xlu0 %v2736
    %v2738 = vpop.xlane.xlu0 %2737
    %v2739 = vsel %vm608, %v2723, 0.0
    %2740 = vadd.xlane.f32.xlu0 %v2739
    %v2741 = vpop.xlane.xlu0 %2740
    %v2742 = vsel %vm608, %v2724, 0.0
    %2743 = vadd.xlane.f32.xlu0 %v2742
    %v2744 = vpop.xlane.xlu0 %2743
    %v2745 = vsel %vm608, %v2725, 0.0
    %2746 = vadd.xlane.f32.xlu0 %v2745
    %v2747 = vpop.xlane.xlu0 %2746
    %v2748 = vsel %vm608, %v2726, 0.0
    %2749 = vadd.xlane.f32.xlu0 %v2748
    %v2750 = vpop.xlane.xlu0 %2749
    %v2751 = vmul.f32 %v2729, %v633
    %v2752 = vmul.f32 %v2732, %v633
    %v2753 = vmul.f32 %v2735, %v633
    %v2754 = vmul.f32 %v2738, %v633
    %v2755 = vmul.f32 %v2741, %v633
    %v2756 = vmul.f32 %v2744, %v633
    %v2757 = vmul.f32 %v2747, %v633
    %v2758 = vmul.f32 %v2750, %v633
    %v2759 = vadd.f32 %v2751, 1e-05
    %v2760 = vadd.f32 %v2752, 1e-05
    %v2761 = vadd.f32 %v2753, 1e-05
    %v2762 = vadd.f32 %v2754, 1e-05
    %v2763 = vadd.f32 %v2755, 1e-05
    %v2764 = vadd.f32 %v2756, 1e-05
    %v2765 = vadd.f32 %v2757, 1e-05
    %v2766 = vadd.f32 %v2758, 1e-05
    %v2767 = vrsqrt.pop %v2759
    %v2768 = vrsqrt.pop %v2760
    %v2769 = vrsqrt.pop %v2761
    %v2770 = vrsqrt.pop %v2762
    %v2771 = vrsqrt.pop %v2763
    %v2772 = vrsqrt.pop %v2764
    %v2773 = vrsqrt.pop %v2765
    %v2774 = vrsqrt.pop %v2766
    %v2775 = vmul.f32 %v2711, %v2767
    %v2776 = vmul.f32 %v2712, %v2768
    %v2777 = vmul.f32 %v2713, %v2769
    %v2778 = vmul.f32 %v2714, %v2770
    %v2779 = vmul.f32 %v2715, %v2771
    %v2780 = vmul.f32 %v2716, %v2772
    %v2781 = vmul.f32 %v2717, %v2773
    %v2782 = vmul.f32 %v2718, %v2774
    %v2784 = vlaneseq
    %v2785 = vshrl.u32 %v2784, 7
    %v2786 = vsub.s32 0, %v2785
    %v2787 = vrot.slane %v745, %v2786
    %v2789 = vmul.f32 %v2775, %v2787
    %v2790 = vmul.f32 %v2776, %v2787
    %v2791 = vmul.f32 %v2777, %v2787
    %v2792 = vmul.f32 %v2778, %v2787
    %v2793 = vmul.f32 %v2779, %v2787
    %v2794 = vmul.f32 %v2780, %v2787
    %v2795 = vmul.f32 %v2781, %v2787
    %v2796 = vmul.f32 %v2782, %v2787
    %v2798 = vlaneseq
    %v2799 = vshrl.u32 %v2798, 7
    %v2800 = vsub.s32 0, %v2799
    %v2801 = vrot.slane %v746, %v2800
    %v2803 = vadd.f32 %v2789, %v2801
    %v2804 = vadd.f32 %v2790, %v2801
    %v2805 = vadd.f32 %v2791, %v2801
    %v2806 = vadd.f32 %v2792, %v2801
    %v2807 = vadd.f32 %v2793, %v2801
    %v2808 = vadd.f32 %v2794, %v2801
    %v2809 = vadd.f32 %v2795, %v2801
    %v2810 = vadd.f32 %v2796, %v2801
    %v2812 = vlaneseq
    %v2813 = vshrl.u32 %v2812, 7
    %v2814 = vsub.s32 0, %v2813
    %v2815 = vrot.slane %v751, %v2814
    %v2818 = vsel %vm608, %v2803, 0
    %v2821 = vsel %vm608, %v2804, 0
    %v2824 = vsel %vm608, %v2805, 0
    %v2827 = vsel %vm608, %v2806, 0
    %v2830 = vsel %vm608, %v2807, 0
    %v2833 = vsel %vm608, %v2808, 0
    %v2836 = vsel %vm608, %v2809, 0
    %v2839 = vsel %vm608, %v2810, 0
    %2841 = vmatprep.subr.mxu0 0.0
    %2842 = vmatpush1.msra.mxu0 %v747
    %2843 = vmatprep.subr.mxu0 0.0
    %2844 = vmatpush1.msra.mxu0 %v748
    %2845 = vmatprep.subr.mxu0 0.0
    %2846 = vmatpush1.msra.mxu0 %v749
    %2847 = vmatprep.subr.mxu0 0.0
    %2848 = vmatpush1.msra.mxu0 %v750
    %2849 = vmatprep.subr.mxu0 0.0
    %2850 = vmatpush1.msra.mxu0 0.0
    %2851 = vmatprep.subr.mxu0 0.0
    %2852 = vmatpush1.msra.mxu0 0.0
    %2853 = vmatprep.subr.mxu0 0.0
    %2854 = vmatpush1.msra.mxu0 0.0
    %2855 = vmatprep.subr.mxu0 0.0
    %2856 = vmatpush1.msra.mxu0 0.0
    %2857 = vmatprep.subr.mxu0 0.0
    %2858 = vmatpush1.msra.mxu0 0.0
    %2859 = vmatprep.subr.mxu0 0.0
    %2860 = vmatpush1.msra.mxu0 0.0
    %2861 = vmatprep.subr.mxu0 0.0
    %2862 = vmatpush1.msra.mxu0 0.0
    %2863 = vmatprep.subr.mxu0 0.0
    %2864 = vmatpush1.msra.mxu0 0.0
    %2865 = vmatprep.subr.mxu0 0.0
    %2866 = vmatpush1.msra.mxu0 0.0
    %2867 = vmatprep.subr.mxu0 0.0
    %2868 = vmatpush1.msra.mxu0 0.0
    %2869 = vmatprep.subr.mxu0 0.0
    %2870 = vmatpush1.msra.mxu0 0.0
    %2871 = vmatprep.subr.mxu0 0.0
    %2872 = vmatpush1.msra.mxu0 0.0
    %2873 = vmatprep.subr.mxu0 0.0
    %2874 = vmatpush1.msra.mxu0 0.0
    %2875 = vmatprep.subr.mxu0 0.0
    %2876 = vmatpush1.msra.mxu0 0.0
    %2877 = vmatprep.subr.mxu0 0.0
    %2878 = vmatpush1.msra.mxu0 0.0
    %2879 = vmatprep.subr.mxu0 0.0
    %2880 = vmatpush1.msra.mxu0 0.0
    %2881 = vmatprep.subr.mxu0 0.0
    %2882 = vmatpush1.msra.mxu0 0.0
    %2883 = vmatprep.subr.mxu0 0.0
    %2884 = vmatpush1.msra.mxu0 0.0
    %2885 = vmatprep.subr.mxu0 0.0
    %2886 = vmatpush1.msra.mxu0 0.0
    %2887 = vmatprep.subr.mxu0 0.0
    %2888 = vmatpush1.msra.mxu0 0.0
    %2889 = vmatprep.subr.mxu0 0.0
    %2890 = vmatpush1.msra.mxu0 0.0
    %2891 = vmatprep.subr.mxu0 0.0
    %2892 = vmatpush1.msra.mxu0 0.0
    %2893 = vmatprep.subr.mxu0 0.0
    %2894 = vmatpush1.msra.mxu0 0.0
    %2895 = vmatprep.subr.mxu0 0.0
    %2896 = vmatpush1.msra.mxu0 0.0
    %2897 = vmatprep.subr.mxu0 0.0
    %2898 = vmatpush1.msra.mxu0 0.0
    %2899 = vmatprep.subr.mxu0 0.0
    %2900 = vmatpush1.msra.mxu0 0.0
    %2901 = vmatprep.subr.mxu0 0.0
    %2902 = vmatpush1.msra.mxu0 0.0
    %2903 = vmatprep.subr.mxu0 0.0
    %2904 = vmatpush1.msra.mxu0 0.0
    %2905 = vmatprep.mubr.f32.mxu0 0.0
    %2906 = vmatmul.mubr.f32.gmra.mrb[0].mxu0 %v2818
    %v2907 = vpop.f32.mrb[0].mxu0
    %v2908 = vadd.f32 %v2815, %v2907
    %v2909 = vpop.f32.mrb[0].mxu0
    %2910 = vmatprep.mubr.f32.mxu0 0.0
    %2911 = vmatmul.mubr.f32.gmra.mrb[0].mxu0 %v2821
    %v2912 = vpop.f32.mrb[0].mxu0
    %v2913 = vadd.f32 %v2815, %v2912
    %v2914 = vpop.f32.mrb[0].mxu0
    %2915 = vmatprep.mubr.f32.mxu0 0.0
    %2916 = vmatmul.mubr.f32.gmra.mrb[0].mxu0 %v2824
    %v2917 = vpop.f32.mrb[0].mxu0
    %v2918 = vadd.f32 %v2815, %v2917
    %v2919 = vpop.f32.mrb[0].mxu0
    %2920 = vmatprep.mubr.f32.mxu0 0.0
    %2921 = vmatmul.mubr.f32.gmra.mrb[0].mxu0 %v2827
    %v2922 = vpop.f32.mrb[0].mxu0
    %v2923 = vadd.f32 %v2815, %v2922
    %v2924 = vpop.f32.mrb[0].mxu0
    %2925 = vmatprep.mubr.f32.mxu0 0.0
    %2926 = vmatmul.mubr.f32.gmra.mrb[0].mxu0 %v2830
    %v2927 = vpop.f32.mrb[0].mxu0
    %v2928 = vadd.f32 %v2815, %v2927
    %v2929 = vpop.f32.mrb[0].mxu0
    %2930 = vmatprep.mubr.f32.mxu0 0.0
    %2931 = vmatmul.mubr.f32.gmra.mrb[0].mxu0 %v2833
    %v2932 = vpop.f32.mrb[0].mxu0
    %v2933 = vadd.f32 %v2815, %v2932
    %v2934 = vpop.f32.mrb[0].mxu0
    %2935 = vmatprep.mubr.f32.mxu0 0.0
    %2936 = vmatmul.mubr.f32.gmra.mrb[0].mxu0 %v2836
    %v2937 = vpop.f32.mrb[0].mxu0
    %v2938 = vadd.f32 %v2815, %v2937
    %v2939 = vpop.f32.mrb[0].mxu0
    %2940 = vmatprep.mubr.f32.mxu0 0.0
    %2941 = vmatmul.mubr.f32.gmra.mrb[0].mxu0 %v2839
    %v2942 = vpop.f32.mrb[0].mxu0
    %v2943 = vadd.f32 %v2815, %v2942
    %v2944 = vpop.f32.mrb[0].mxu0
    %2945 = vdwg.mxu0
    %v2946 = vmul.f32 %v2908, 0.5
    %v2947 = vmul.f32 %v2913, 0.5
    %v2948 = vmul.f32 %v2918, 0.5
    %v2949 = vmul.f32 %v2923, 0.5
    %v2950 = vmul.f32 %v2928, 0.5
    %v2951 = vmul.f32 %v2933, 0.5
    %v2952 = vmul.f32 %v2938, 0.5
    %v2953 = vmul.f32 %v2943, 0.5
    %v2954 = vmul.f32 %v2908, 0.044715
    %v2955 = vmul.f32 %v2913, 0.044715
    %v2956 = vmul.f32 %v2918, 0.044715
    %v2957 = vmul.f32 %v2923, 0.044715
    %v2958 = vmul.f32 %v2928, 0.044715
    %v2959 = vmul.f32 %v2933, 0.044715
    %v2960 = vmul.f32 %v2938, 0.044715
    %v2961 = vmul.f32 %v2943, 0.044715
    %v2962 = vmul.f32 %v2954, %v2908
    %v2963 = vmul.f32 %v2955, %v2913
    %v2964 = vmul.f32 %v2956, %v2918
    %v2965 = vmul.f32 %v2957, %v2923
    %v2966 = vmul.f32 %v2958, %v2928
    %v2967 = vmul.f32 %v2959, %v2933
    %v2968 = vmul.f32 %v2960, %v2938
    %v2969 = vmul.f32 %v2961, %v2943
    %v2970 = vmul.f32 %v2962, %v2908
    %v2971 = vmul.f32 %v2963, %v2913
    %v2972 = vmul.f32 %v2964, %v2918
    %v2973 = vmul.f32 %v2965, %v2923
    %v2974 = vmul.f32 %v2966, %v2928
    %v2975 = vmul.f32 %v2967, %v2933
    %v2976 = vmul.f32 %v2968, %v2938
    %v2977 = vmul.f32 %v2969, %v2943
    %v2978 = vadd.f32 %v2908, %v2970
    %v2979 = vadd.f32 %v2913, %v2971
    %v2980 = vadd.f32 %v2918, %v2972
    %v2981 = vadd.f32 %v2923, %v2973
    %v2982 = vadd.f32 %v2928, %v2974
    %v2983 = vadd.f32 %v2933, %v2975
    %v2984 = vadd.f32 %v2938, %v2976
    %v2985 = vadd.f32 %v2943, %v2977
    %v2986 = vmul.f32 %v2978, 0.7978846
    %v2987 = vmul.f32 %v2979, 0.7978846
    %v2988 = vmul.f32 %v2980, 0.7978846
    %v2989 = vmul.f32 %v2981, 0.7978846
    %v2990 = vmul.f32 %v2982, 0.7978846
    %v2991 = vmul.f32 %v2983, 0.7978846
    %v2992 = vmul.f32 %v2984, 0.7978846
    %v2993 = vmul.f32 %v2985, 0.7978846
    %v2994 = vtanh.pop %v2986
    %v2995 = vtanh.pop %v2987
    %v2996 = vtanh.pop %v2988
    %v2997 = vtanh.pop %v2989
    %v2998 = vtanh.pop %v2990
    %v2999 = vtanh.pop %v2991
    %v3000 = vtanh.pop %v2992
    %v3001 = vtanh.pop %v2993
    %v3002 = vadd.f32 %v2994, 1.0
    %v3003 = vadd.f32 %v2995, 1.0
    %v3004 = vadd.f32 %v2996, 1.0
    %v3005 = vadd.f32 %v2997, 1.0
    %v3006 = vadd.f32 %v2998, 1.0
    %v3007 = vadd.f32 %v2999, 1.0
    %v3008 = vadd.f32 %v3000, 1.0
    %v3009 = vadd.f32 %v3001, 1.0
    %v3010 = vmul.f32 %v2946, %v3002
    %v3011 = vmul.f32 %v2947, %v3003
    %v3012 = vmul.f32 %v2948, %v3004
    %v3013 = vmul.f32 %v2949, %v3005
    %v3014 = vmul.f32 %v2950, %v3006
    %v3015 = vmul.f32 %v2951, %v3007
    %v3016 = vmul.f32 %v2952, %v3008
    %v3017 = vmul.f32 %v2953, %v3009
    %v3019 = vlaneseq
    %v3020 = vshrl.u32 %v3019, 7
    %v3021 = vsub.s32 0, %v3020
    %v3022 = vrot.slane %v768, %v3021
    %3024 = vmatprep.subr.mxu0 0.0
    %3025 = vmatpush1.msra.mxu0 %v752
    %3026 = vmatprep.subr.mxu0 0.0
    %3027 = vmatpush1.msra.mxu0 %v753
    %3028 = vmatprep.subr.mxu0 0.0
    %3029 = vmatpush1.msra.mxu0 %v754
    %3030 = vmatprep.subr.mxu0 0.0
    %3031 = vmatpush1.msra.mxu0 %v755
    %3032 = vmatprep.subr.mxu0 0.0
    %3033 = vmatpush1.msra.mxu0 %v756
    %3034 = vmatprep.subr.mxu0 0.0
    %3035 = vmatpush1.msra.mxu0 %v757
    %3036 = vmatprep.subr.mxu0 0.0
    %3037 = vmatpush1.msra.mxu0 %v758
    %3038 = vmatprep.subr.mxu0 0.0
    %3039 = vmatpush1.msra.mxu0 %v759
    %3040 = vmatprep.subr.mxu0 0.0
    %3041 = vmatpush1.msra.mxu0 %v760
    %3042 = vmatprep.subr.mxu0 0.0
    %3043 = vmatpush1.msra.mxu0 %v761
    %3044 = vmatprep.subr.mxu0 0.0
    %3045 = vmatpush1.msra.mxu0 %v762
    %3046 = vmatprep.subr.mxu0 0.0
    %3047 = vmatpush1.msra.mxu0 %v763
    %3048 = vmatprep.subr.mxu0 0.0
    %3049 = vmatpush1.msra.mxu0 %v764
    %3050 = vmatprep.subr.mxu0 0.0
    %3051 = vmatpush1.msra.mxu0 %v765
    %3052 = vmatprep.subr.mxu0 0.0
    %3053 = vmatpush1.msra.mxu0 %v766
    %3054 = vmatprep.subr.mxu0 0.0
    %3055 = vmatpush1.msra.mxu0 %v767
    %3056 = vmatprep.subr.mxu0 0.0
    %3057 = vmatpush1.msra.mxu0 0.0
    %3058 = vmatprep.subr.mxu0 0.0
    %3059 = vmatpush1.msra.mxu0 0.0
    %3060 = vmatprep.subr.mxu0 0.0
    %3061 = vmatpush1.msra.mxu0 0.0
    %3062 = vmatprep.subr.mxu0 0.0
    %3063 = vmatpush1.msra.mxu0 0.0
    %3064 = vmatprep.subr.mxu0 0.0
    %3065 = vmatpush1.msra.mxu0 0.0
    %3066 = vmatprep.subr.mxu0 0.0
    %3067 = vmatpush1.msra.mxu0 0.0
    %3068 = vmatprep.subr.mxu0 0.0
    %3069 = vmatpush1.msra.mxu0 0.0
    %3070 = vmatprep.subr.mxu0 0.0
    %3071 = vmatpush1.msra.mxu0 0.0
    %3072 = vmatprep.subr.mxu0 0.0
    %3073 = vmatpush1.msra.mxu0 0.0
    %3074 = vmatprep.subr.mxu0 0.0
    %3075 = vmatpush1.msra.mxu0 0.0
    %3076 = vmatprep.subr.mxu0 0.0
    %3077 = vmatpush1.msra.mxu0 0.0
    %3078 = vmatprep.subr.mxu0 0.0
    %3079 = vmatpush1.msra.mxu0 0.0
    %3080 = vmatprep.subr.mxu0 0.0
    %3081 = vmatpush1.msra.mxu0 0.0
    %3082 = vmatprep.subr.mxu0 0.0
    %3083 = vmatpush1.msra.mxu0 0.0
    %3084 = vmatprep.subr.mxu0 0.0
    %3085 = vmatpush1.msra.mxu0 0.0
    %3086 = vmatprep.subr.mxu0 0.0
    %3087 = vmatpush1.msra.mxu0 0.0
    %3088 = vmatprep.mubr.f32.mxu0 0.0
    %3089 = vmatmul.mubr.f32.gmra.mrb[0].mxu0 %v3010
    %v3090 = vpop.f32.mrb[0].mxu0
    %v3091 = vadd.f32 %v3022, %v3090
    %v3092 = vpop.f32.mrb[0].mxu0
    %3093 = vmatprep.mubr.f32.mxu0 0.0
    %3094 = vmatmul.mubr.f32.gmra.mrb[0].mxu0 %v3011
    %v3095 = vpop.f32.mrb[0].mxu0
    %v3096 = vadd.f32 %v3022, %v3095
    %v3097 = vpop.f32.mrb[0].mxu0
    %3098 = vmatprep.mubr.f32.mxu0 0.0
    %3099 = vmatmul.mubr.f32.gmra.mrb[0].mxu0 %v3012
    %v3100 = vpop.f32.mrb[0].mxu0
    %v3101 = vadd.f32 %v3022, %v3100
    %v3102 = vpop.f32.mrb[0].mxu0
    %3103 = vmatprep.mubr.f32.mxu0 0.0
    %3104 = vmatmul.mubr.f32.gmra.mrb[0].mxu0 %v3013
    %v3105 = vpop.f32.mrb[0].mxu0
    %v3106 = vadd.f32 %v3022, %v3105
    %v3107 = vpop.f32.mrb[0].mxu0
    %3108 = vmatprep.mubr.f32.mxu0 0.0
    %3109 = vmatmul.mubr.f32.gmra.mrb[0].mxu0 %v3014
    %v3110 = vpop.f32.mrb[0].mxu0
    %v3111 = vadd.f32 %v3022, %v3110
    %v3112 = vpop.f32.mrb[0].mxu0
    %3113 = vmatprep.mubr.f32.mxu0 0.0
    %3114 = vmatmul.mubr.f32.gmra.mrb[0].mxu0 %v3015
    %v3115 = vpop.f32.mrb[0].mxu0
    %v3116 = vadd.f32 %v3022, %v3115
    %v3117 = vpop.f32.mrb[0].mxu0
    %3118 = vmatprep.mubr.f32.mxu0 0.0
    %3119 = vmatmul.mubr.f32.gmra.mrb[0].mxu0 %v3016
    %v3120 = vpop.f32.mrb[0].mxu0
    %v3121 = vadd.f32 %v3022, %v3120
    %v3122 = vpop.f32.mrb[0].mxu0
    %3123 = vmatprep.mubr.f32.mxu0 0.0
    %3124 = vmatmul.mubr.f32.gmra.mrb[0].mxu0 %v3017
    %v3125 = vpop.f32.mrb[0].mxu0
    %v3126 = vadd.f32 %v3022, %v3125
    %v3127 = vpop.f32.mrb[0].mxu0
    %3128 = vdwg.mxu0
    %v3129 = vadd.f32 %v2671, %v3091
    %v3130 = vadd.f32 %v2672, %v3096
    %v3131 = vadd.f32 %v2673, %v3101
    %v3132 = vadd.f32 %v2674, %v3106
    %v3133 = vadd.f32 %v2675, %v3111
    %v3134 = vadd.f32 %v2676, %v3116
    %v3135 = vadd.f32 %v2677, %v3121
    %v3136 = vadd.f32 %v2678, %v3126
    %v3137 = vld [vmem:[%s45] sm:$0x1]
    %v3138 = vld [vmem:[#allocation2] sm:$0x1]
    %v3139 = vld [vmem:[#allocation4] sm:$0x1]
    %v3140 = vld [vmem:[#allocation6] sm:$0x1]
    %v3141 = vld [vmem:[#allocation7] sm:$0x1]
    %v3142 = vld [vmem:[%s71] sm:$0xff]
    %v3143 = vld [vmem:[%s71 + $0x8] sm:$0xff]
    %v3144 = vld [vmem:[%s71 + $0x10] sm:$0xff]
    %v3145 = vld [vmem:[%s71 + $0x18] sm:$0xff]
    %v3146 = vld [vmem:[#allocation9] sm:$0x1]
    %v3147 = vld [vmem:[%s75] sm:$0xff]
    %v3148 = vld [vmem:[%s75 + $0x8] sm:$0xff]
    %v3149 = vld [vmem:[%s75 + $0x10] sm:$0xff]
    %v3150 = vld [vmem:[%s75 + $0x18] sm:$0xff]
    %v3151 = vld [vmem:[%s75 + $0x20] sm:$0xff]
    %v3152 = vld [vmem:[%s75 + $0x28] sm:$0xff]
    %v3153 = vld [vmem:[%s75 + $0x30] sm:$0xff]
    %v3154 = vld [vmem:[%s75 + $0x38] sm:$0xff]
    %v3155 = vld [vmem:[%s75 + $0x40] sm:$0xff]
    %v3156 = vld [vmem:[%s75 + $0x48] sm:$0xff]
    %v3157 = vld [vmem:[%s75 + $0x50] sm:$0xff]
    %v3158 = vld [vmem:[%s75 + $0x58] sm:$0xff]
    %v3159 = vld [vmem:[%s75 + $0x60] sm:$0xff]
    %v3160 = vld [vmem:[%s75 + $0x68] sm:$0xff]
    %v3161 = vld [vmem:[%s75 + $0x70] sm:$0xff]
    %v3162 = vld [vmem:[%s75 + $0x78] sm:$0xff]
    %v3163 = vld [vmem:[#allocation10] sm:$0x1]
    %v3164 = vsel %vm608, %v3129, 0.0
    %3165 = vadd.xlane.f32.xlu0 %v3164
    %v3166 = vpop.xlane.xlu0 %3165
    %v3167 = vsel %vm608, %v3130, 0.0
    %3168 = vadd.xlane.f32.xlu0 %v3167
    %v3169 = vpop.xlane.xlu0 %3168
    %v3170 = vsel %vm608, %v3131, 0.0
    %3171 = vadd.xlane.f32.xlu0 %v3170
    %v3172 = vpop.xlane.xlu0 %3171
    %v3173 = vsel %vm608, %v3132, 0.0
    %3174 = vadd.xlane.f32.xlu0 %v3173
    %v3175 = vpop.xlane.xlu0 %3174
    %v3176 = vsel %vm608, %v3133, 0.0
    %3177 = vadd.xlane.f32.xlu0 %v3176
    %v3178 = vpop.xlane.xlu0 %3177
    %v3179 = vsel %vm608, %v3134, 0.0
    %3180 = vadd.xlane.f32.xlu0 %v3179
    %v3181 = vpop.xlane.xlu0 %3180
    %v3182 = vsel %vm608, %v3135, 0.0
    %3183 = vadd.xlane.f32.xlu0 %v3182
    %v3184 = vpop.xlane.xlu0 %3183
    %v3185 = vsel %vm608, %v3136, 0.0
    %3186 = vadd.xlane.f32.xlu0 %v3185
    %v3187 = vpop.xlane.xlu0 %3186
    %v3188 = vmul.f32 %v3166, %v633
    %v3189 = vmul.f32 %v3169, %v633
    %v3190 = vmul.f32 %v3172, %v633
    %v3191 = vmul.f32 %v3175, %v633
    %v3192 = vmul.f32 %v3178, %v633
    %v3193 = vmul.f32 %v3181, %v633
    %v3194 = vmul.f32 %v3184, %v633
    %v3195 = vmul.f32 %v3187, %v633
    %v3196 = vsub.f32 %v3129, %v3188
    %v3197 = vsub.f32 %v3130, %v3189
    %v3198 = vsub.f32 %v3131, %v3190
    %v3199 = vsub.f32 %v3132, %v3191
    %v3200 = vsub.f32 %v3133, %v3192
    %v3201 = vsub.f32 %v3134, %v3193
    %v3202 = vsub.f32 %v3135, %v3194
    %v3203 = vsub.f32 %v3136, %v3195
    %v3204 = vmul.f32 %v3196, %v3196
    %v3205 = vmul.f32 %v3197, %v3197
    %v3206 = vmul.f32 %v3198, %v3198
    %v3207 = vmul.f32 %v3199, %v3199
    %v3208 = vmul.f32 %v3200, %v3200
    %v3209 = vmul.f32 %v3201, %v3201
    %v3210 = vmul.f32 %v3202, %v3202
    %v3211 = vmul.f32 %v3203, %v3203
    %v3212 = vsel %vm608, %v3204, 0.0
    %3213 = vadd.xlane.f32.xlu0 %v3212
    %v3214 = vpop.xlane.xlu0 %3213
    %v3215 = vsel %vm608, %v3205, 0.0
    %3216 = vadd.xlane.f32.xlu0 %v3215
    %v3217 = vpop.xlane.xlu0 %3216
    %v3218 = vsel %vm608, %v3206, 0.0
    %3219 = vadd.xlane.f32.xlu0 %v3218
    %v3220 = vpop.xlane.xlu0 %3219
    %v3221 = vsel %vm608, %v3207, 0.0
    %3222 = vadd.xlane.f32.xlu0 %v3221
    %v3223 = vpop.xlane.xlu0 %3222
    %v3224 = vsel %vm608, %v3208, 0.0
    %3225 = vadd.xlane.f32.xlu0 %v3224
    %v3226 = vpop.xlane.xlu0 %3225
    %v3227 = vsel %vm608, %v3209, 0.0
    %3228 = vadd.xlane.f32.xlu0 %v3227
    %v3229 = vpop.xlane.xlu0 %3228
    %v3230 = vsel %vm608, %v3210, 0.0
    %3231 = vadd.xlane.f32.xlu0 %v3230
    %v3232 = vpop.xlane.xlu0 %3231
    %v3233 = vsel %vm608, %v3211, 0.0
    %3234 = vadd.xlane.f32.xlu0 %v3233
    %v3235 = vpop.xlane.xlu0 %3234
    %v3236 = vmul.f32 %v3214, %v633
    %v3237 = vmul.f32 %v3217, %v633
    %v3238 = vmul.f32 %v3220, %v633
    %v3239 = vmul.f32 %v3223, %v633
    %v3240 = vmul.f32 %v3226, %v633
    %v3241 = vmul.f32 %v3229, %v633
    %v3242 = vmul.f32 %v3232, %v633
    %v3243 = vmul.f32 %v3235, %v633
    %v3244 = vadd.f32 %v3236, 1e-05
    %v3245 = vadd.f32 %v3237, 1e-05
    %v3246 = vadd.f32 %v3238, 1e-05
    %v3247 = vadd.f32 %v3239, 1e-05
    %v3248 = vadd.f32 %v3240, 1e-05
    %v3249 = vadd.f32 %v3241, 1e-05
    %v3250 = vadd.f32 %v3242, 1e-05
    %v3251 = vadd.f32 %v3243, 1e-05
    %v3252 = vrsqrt.pop %v3244
    %v3253 = vrsqrt.pop %v3245
    %v3254 = vrsqrt.pop %v3246
    %v3255 = vrsqrt.pop %v3247
    %v3256 = vrsqrt.pop %v3248
    %v3257 = vrsqrt.pop %v3249
    %v3258 = vrsqrt.pop %v3250
    %v3259 = vrsqrt.pop %v3251
    %v3260 = vmul.f32 %v3196, %v3252
    %v3261 = vmul.f32 %v3197, %v3253
    %v3262 = vmul.f32 %v3198, %v3254
    %v3263 = vmul.f32 %v3199, %v3255
    %v3264 = vmul.f32 %v3200, %v3256
    %v3265 = vmul.f32 %v3201, %v3257
    %v3266 = vmul.f32 %v3202, %v3258
    %v3267 = vmul.f32 %v3203, %v3259
    %v3269 = vlaneseq
    %v3270 = vshrl.u32 %v3269, 7
    %v3271 = vsub.s32 0, %v3270
    %v3272 = vrot.slane %v3137, %v3271
    %v3274 = vmul.f32 %v3260, %v3272
    %v3275 = vmul.f32 %v3261, %v3272
    %v3276 = vmul.f32 %v3262, %v3272
    %v3277 = vmul.f32 %v3263, %v3272
    %v3278 = vmul.f32 %v3264, %v3272
    %v3279 = vmul.f32 %v3265, %v3272
    %v3280 = vmul.f32 %v3266, %v3272
    %v3281 = vmul.f32 %v3267, %v3272
    %v3283 = vlaneseq
    %v3284 = vshrl.u32 %v3283, 7
    %v3285 = vsub.s32 0, %v3284
    %v3286 = vrot.slane %v3138, %v3285
    %v3288 = vadd.f32 %v3274, %v3286
    %v3289 = vadd.f32 %v3275, %v3286
    %v3290 = vadd.f32 %v3276, %v3286
    %v3291 = vadd.f32 %v3277, %v3286
    %v3292 = vadd.f32 %v3278, %v3286
    %v3293 = vadd.f32 %v3279, %v3286
    %v3294 = vadd.f32 %v3280, %v3286
    %v3295 = vadd.f32 %v3281, %v3286
    %v3296 = vld [vmem:[%s49] sm:$0xff]
    %v3297 = vld [vmem:[%s49 + $0x8] sm:$0xff]
    %v3298 = vld [vmem:[%s49 + $0x10] sm:$0xff]
    %v3299 = vld [vmem:[%s49 + $0x18] sm:$0xff]
    %v3300 = vld [vmem:[%s55] sm:$0x1]
    %v3302 = vlaneseq
    %v3303 = vshrl.u32 %v3302, 7
    %v3304 = vsub.s32 0, %v3303
    %v3305 = vrot.slane %v3300, %v3304
    %v3308 = vsel %vm608, %v3288, 0
    %v3311 = vsel %vm608, %v3289, 0
    %v3314 = vsel %vm608, %v3290, 0
    %v3317 = vsel %vm608, %v3291, 0
    %v3320 = vsel %vm608, %v3292, 0
    %v3323 = vsel %vm608, %v3293, 0
    %v3326 = vsel %vm608, %v3294, 0
    %v3329 = vsel %vm608, %v3295, 0
    %3331 = vmatprep.subr.mxu0 0.0
    %3332 = vmatpush1.msra.mxu0 %v3296
    %3333 = vmatprep.subr.mxu0 0.0
    %3334 = vmatpush1.msra.mxu0 %v3297
    %3335 = vmatprep.subr.mxu0 0.0
    %3336 = vmatpush1.msra.mxu0 %v3298
    %3337 = vmatprep.subr.mxu0 0.0
    %3338 = vmatpush1.msra.mxu0 %v3299
    %3339 = vmatprep.subr.mxu0 0.0
    %3340 = vmatpush1.msra.mxu0 0.0
    %3341 = vmatprep.subr.mxu0 0.0
    %3342 = vmatpush1.msra.mxu0 0.0
    %3343 = vmatprep.subr.mxu0 0.0
    %3344 = vmatpush1.msra.mxu0 0.0
    %3345 = vmatprep.subr.mxu0 0.0
    %3346 = vmatpush1.msra.mxu0 0.0
    %3347 = vmatprep.subr.mxu0 0.0
    %3348 = vmatpush1.msra.mxu0 0.0
    %3349 = vmatprep.subr.mxu0 0.0
    %3350 = vmatpush1.msra.mxu0 0.0
    %3351 = vmatprep.subr.mxu0 0.0
    %3352 = vmatpush1.msra.mxu0 0.0
    %3353 = vmatprep.subr.mxu0 0.0
    %3354 = vmatpush1.msra.mxu0 0.0
    %3355 = vmatprep.subr.mxu0 0.0
    %3356 = vmatpush1.msra.mxu0 0.0
    %3357 = vmatprep.subr.mxu0 0.0
    %3358 = vmatpush1.msra.mxu0 0.0
    %3359 = vmatprep.subr.mxu0 0.0
    %3360 = vmatpush1.msra.mxu0 0.0
    %3361 = vmatprep.subr.mxu0 0.0
    %3362 = vmatpush1.msra.mxu0 0.0
    %3363 = vmatprep.subr.mxu0 0.0
    %3364 = vmatpush1.msra.mxu0 0.0
    %3365 = vmatprep.subr.mxu0 0.0
    %3366 = vmatpush1.msra.mxu0 0.0
    %3367 = vmatprep.subr.mxu0 0.0
    %3368 = vmatpush1.msra.mxu0 0.0
    %3369 = vmatprep.subr.mxu0 0.0
    %3370 = vmatpush1.msra.mxu0 0.0
    %3371 = vmatprep.subr.mxu0 0.0
    %3372 = vmatpush1.msra.mxu0 0.0
    %3373 = vmatprep.subr.mxu0 0.0
    %3374 = vmatpush1.msra.mxu0 0.0
    %3375 = vmatprep.subr.mxu0 0.0
    %3376 = vmatpush1.msra.mxu0 0.0
    %3377 = vmatprep.subr.mxu0 0.0
    %3378 = vmatpush1.msra.mxu0 0.0
    %3379 = vmatprep.subr.mxu0 0.0
    %3380 = vmatpush1.msra.mxu0 0.0
    %3381 = vmatprep.subr.mxu0 0.0
    %3382 = vmatpush1.msra.mxu0 0.0
    %3383 = vmatprep.subr.mxu0 0.0
    %3384 = vmatpush1.msra.mxu0 0.0
    %3385 = vmatprep.subr.mxu0 0.0
    %3386 = vmatpush1.msra.mxu0 0.0
    %3387 = vmatprep.subr.mxu0 0.0
    %3388 = vmatpush1.msra.mxu0 0.0
    %3389 = vmatprep.subr.mxu0 0.0
    %3390 = vmatpush1.msra.mxu0 0.0
    %3391 = vmatprep.subr.mxu0 0.0
    %3392 = vmatpush1.msra.mxu0 0.0
    %3393 = vmatprep.subr.mxu0 0.0
    %3394 = vmatpush1.msra.mxu0 0.0
    %3395 = vmatprep.mubr.f32.mxu0 0.0
    %3396 = vmatmul.mubr.f32.gmra.mrb[0].mxu0 %v3308
    %v3397 = vpop.f32.mrb[0].mxu0
    %v3398 = vadd.f32 %v3305, %v3397
    %v3399 = vpop.f32.mrb[0].mxu0
    %3400 = vmatprep.mubr.f32.mxu0 0.0
    %3401 = vmatmul.mubr.f32.gmra.mrb[0].mxu0 %v3311
    %v3402 = vpop.f32.mrb[0].mxu0
    %v3403 = vadd.f32 %v3305, %v3402
    %v3404 = vpop.f32.mrb[0].mxu0
    %3405 = vmatprep.mubr.f32.mxu0 0.0
    %3406 = vmatmul.mubr.f32.gmra.mrb[0].mxu0 %v3314
    %v3407 = vpop.f32.mrb[0].mxu0
    %v3408 = vadd.f32 %v3305, %v3407
    %v3409 = vpop.f32.mrb[0].mxu0
    %3410 = vmatprep.mubr.f32.mxu0 0.0
    %3411 = vmatmul.mubr.f32.gmra.mrb[0].mxu0 %v3317
    %v3412 = vpop.f32.mrb[0].mxu0
    %v3413 = vadd.f32 %v3305, %v3412
    %v3414 = vpop.f32.mrb[0].mxu0
    %3415 = vmatprep.mubr.f32.mxu0 0.0
    %3416 = vmatmul.mubr.f32.gmra.mrb[0].mxu0 %v3320
    %v3417 = vpop.f32.mrb[0].mxu0
    %v3418 = vadd.f32 %v3305, %v3417
    %v3419 = vpop.f32.mrb[0].mxu0
    %3420 = vmatprep.mubr.f32.mxu0 0.0
    %3421 = vmatmul.mubr.f32.gmra.mrb[0].mxu0 %v3323
    %v3422 = vpop.f32.mrb[0].mxu0
    %v3423 = vadd.f32 %v3305, %v3422
    %v3424 = vpop.f32.mrb[0].mxu0
    %3425 = vmatprep.mubr.f32.mxu0 0.0
    %3426 = vmatmul.mubr.f32.gmra.mrb[0].mxu0 %v3326
    %v3427 = vpop.f32.mrb[0].mxu0
    %v3428 = vadd.f32 %v3305, %v3427
    %v3429 = vpop.f32.mrb[0].mxu0
    %3430 = vmatprep.mubr.f32.mxu0 0.0
    %3431 = vmatmul.mubr.f32.gmra.mrb[0].mxu0 %v3329
    %v3432 = vpop.f32.mrb[0].mxu0
    %v3433 = vadd.f32 %v3305, %v3432
    %v3434 = vpop.f32.mrb[0].mxu0
    %3435 = vdwg.mxu0
    %v3436 = vld [vmem:[%s51] sm:$0xff]
    %v3437 = vld [vmem:[%s51 + $0x8] sm:$0xff]
    %v3438 = vld [vmem:[%s51 + $0x10] sm:$0xff]
    %v3439 = vld [vmem:[%s51 + $0x18] sm:$0xff]
    %v3440 = vld [vmem:[%s57] sm:$0x1]
    %v3442 = vlaneseq
    %v3443 = vshrl.u32 %v3442, 7
    %v3444 = vsub.s32 0, %v3443
    %v3445 = vrot.slane %v3440, %v3444
    %3447 = vmatprep.subr.mxu0 0.0
    %3448 = vmatpush1.msra.mxu0 %v3436
    %3449 = vmatprep.subr.mxu0 0.0
    %3450 = vmatpush1.msra.mxu0 %v3437
    %3451 = vmatprep.subr.mxu0 0.0
    %3452 = vmatpush1.msra.mxu0 %v3438
    %3453 = vmatprep.subr.mxu0 0.0
    %3454 = vmatpush1.msra.mxu0 %v3439
    %3455 = vmatprep.subr.mxu0 0.0
    %3456 = vmatpush1.msra.mxu0 0.0
    %3457 = vmatprep.subr.mxu0 0.0
    %3458 = vmatpush1.msra.mxu0 0.0
    %3459 = vmatprep.subr.mxu0 0.0
    %3460 = vmatpush1.msra.mxu0 0.0
    %3461 = vmatprep.subr.mxu0 0.0
    %3462 = vmatpush1.msra.mxu0 0.0
    %3463 = vmatprep.subr.mxu0 0.0
    %3464 = vmatpush1.msra.mxu0 0.0
    %3465 = vmatprep.subr.mxu0 0.0
    %3466 = vmatpush1.msra.mxu0 0.0
    %3467 = vmatprep.subr.mxu0 0.0
    %3468 = vmatpush1.msra.mxu0 0.0
    %3469 = vmatprep.subr.mxu0 0.0
    %3470 = vmatpush1.msra.mxu0 0.0
    %3471 = vmatprep.subr.mxu0 0.0
    %3472 = vmatpush1.msra.mxu0 0.0
    %3473 = vmatprep.subr.mxu0 0.0
    %3474 = vmatpush1.msra.mxu0 0.0
    %3475 = vmatprep.subr.mxu0 0.0
    %3476 = vmatpush1.msra.mxu0 0.0
    %3477 = vmatprep.subr.mxu0 0.0
    %3478 = vmatpush1.msra.mxu0 0.0
    %3479 = vmatprep.subr.mxu0 0.0
    %3480 = vmatpush1.msra.mxu0 0.0
    %3481 = vmatprep.subr.mxu0 0.0
    %3482 = vmatpush1.msra.mxu0 0.0
    %3483 = vmatprep.subr.mxu0 0.0
    %3484 = vmatpush1.msra.mxu0 0.0
    %3485 = vmatprep.subr.mxu0 0.0
    %3486 = vmatpush1.msra.mxu0 0.0
    %3487 = vmatprep.subr.mxu0 0.0
    %3488 = vmatpush1.msra.mxu0 0.0
    %3489 = vmatprep.subr.mxu0 0.0
    %3490 = vmatpush1.msra.mxu0 0.0
    %3491 = vmatprep.subr.mxu0 0.0
    %3492 = vmatpush1.msra.mxu0 0.0
    %3493 = vmatprep.subr.mxu0 0.0
    %3494 = vmatpush1.msra.mxu0 0.0
    %3495 = vmatprep.subr.mxu0 0.0
    %3496 = vmatpush1.msra.mxu0 0.0
    %3497 = vmatprep.subr.mxu0 0.0
    %3498 = vmatpush1.msra.mxu0 0.0
    %3499 = vmatprep.subr.mxu0 0.0
    %3500 = vmatpush1.msra.mxu0 0.0
    %3501 = vmatprep.subr.mxu0 0.0
    %3502 = vmatpush1.msra.mxu0 0.0
    %3503 = vmatprep.subr.mxu0 0.0
    %3504 = vmatpush1.msra.mxu0 0.0
    %3505 = vmatprep.subr.mxu0 0.0
    %3506 = vmatpush1.msra.mxu0 0.0
    %3507 = vmatprep.subr.mxu0 0.0
    %3508 = vmatpush1.msra.mxu0 0.0
    %3509 = vmatprep.subr.mxu0 0.0
    %3510 = vmatpush1.msra.mxu0 0.0
    %3511 = vmatprep.mubr.f32.mxu0 0.0
    %3512 = vmatmul.mubr.f32.gmra.mrb[0].mxu0 %v3308
    %v3513 = vpop.f32.mrb[0].mxu0
    %v3514 = vadd.f32 %v3445, %v3513
    %v3515 = vpop.f32.mrb[0].mxu0
    %3516 = vmatprep.mubr.f32.mxu0 0.0
    %3517 = vmatmul.mubr.f32.gmra.mrb[0].mxu0 %v3311
    %v3518 = vpop.f32.mrb[0].mxu0
    %v3519 = vadd.f32 %v3445, %v3518
    %v3520 = vpop.f32.mrb[0].mxu0
    %3521 = vmatprep.mubr.f32.mxu0 0.0
    %3522 = vmatmul.mubr.f32.gmra.mrb[0].mxu0 %v3314
    %v3523 = vpop.f32.mrb[0].mxu0
    %v3524 = vadd.f32 %v3445, %v3523
    %v3525 = vpop.f32.mrb[0].mxu0
    %3526 = vmatprep.mubr.f32.mxu0 0.0
    %3527 = vmatmul.mubr.f32.gmra.mrb[0].mxu0 %v3317
    %v3528 = vpop.f32.mrb[0].mxu0
    %v3529 = vadd.f32 %v3445, %v3528
    %v3530 = vpop.f32.mrb[0].mxu0
    %3531 = vmatprep.mubr.f32.mxu0 0.0
    %3532 = vmatmul.mubr.f32.gmra.mrb[0].mxu0 %v3320
    %v3533 = vpop.f32.mrb[0].mxu0
    %v3534 = vadd.f32 %v3445, %v3533
    %v3535 = vpop.f32.mrb[0].mxu0
    %3536 = vmatprep.mubr.f32.mxu0 0.0
    %3537 = vmatmul.mubr.f32.gmra.mrb[0].mxu0 %v3323
    %v3538 = vpop.f32.mrb[0].mxu0
    %v3539 = vadd.f32 %v3445, %v3538
    %v3540 = vpop.f32.mrb[0].mxu0
    %3541 = vmatprep.mubr.f32.mxu0 0.0
    %3542 = vmatmul.mubr.f32.gmra.mrb[0].mxu0 %v3326
    %v3543 = vpop.f32.mrb[0].mxu0
    %v3544 = vadd.f32 %v3445, %v3543
    %v3545 = vpop.f32.mrb[0].mxu0
    %3546 = vmatprep.mubr.f32.mxu0 0.0
    %3547 = vmatmul.mubr.f32.gmra.mrb[0].mxu0 %v3329
    %v3548 = vpop.f32.mrb[0].mxu0
    %v3549 = vadd.f32 %v3445, %v3548
    %v3550 = vpop.f32.mrb[0].mxu0
    %3551 = vdwg.mxu0
    %v3552 = vld [vmem:[%s53] sm:$0xff]
    %v3553 = vld [vmem:[%s53 + $0x8] sm:$0xff]
    %v3554 = vld [vmem:[%s53 + $0x10] sm:$0xff]
    %v3555 = vld [vmem:[%s53 + $0x18] sm:$0xff]
    %v3556 = vld [vmem:[%s59] sm:$0x1]
    %v3558 = vlaneseq
    %v3559 = vshrl.u32 %v3558, 7
    %v3560 = vsub.s32 0, %v3559
    %v3561 = vrot.slane %v3556, %v3560
    %3563 = vmatprep.subr.mxu0 0.0
    %3564 = vmatpush1.msra.mxu0 %v3552
    %3565 = vmatprep.subr.mxu0 0.0
    %3566 = vmatpush1.msra.mxu0 %v3553
    %3567 = vmatprep.subr.mxu0 0.0
    %3568 = vmatpush1.msra.mxu0 %v3554
    %3569 = vmatprep.subr.mxu0 0.0
    %3570 = vmatpush1.msra.mxu0 %v3555
    %3571 = vmatprep.subr.mxu0 0.0
    %3572 = vmatpush1.msra.mxu0 0.0
    %3573 = vmatprep.subr.mxu0 0.0
    %3574 = vmatpush1.msra.mxu0 0.0
    %3575 = vmatprep.subr.mxu0 0.0
    %3576 = vmatpush1.msra.mxu0 0.0
    %3577 = vmatprep.subr.mxu0 0.0
    %3578 = vmatpush1.msra.mxu0 0.0
    %3579 = vmatprep.subr.mxu0 0.0
    %3580 = vmatpush1.msra.mxu0 0.0
    %3581 = vmatprep.subr.mxu0 0.0
    %3582 = vmatpush1.msra.mxu0 0.0
    %3583 = vmatprep.subr.mxu0 0.0
    %3584 = vmatpush1.msra.mxu0 0.0
    %3585 = vmatprep.subr.mxu0 0.0
    %3586 = vmatpush1.msra.mxu0 0.0
    %3587 = vmatprep.subr.mxu0 0.0
    %3588 = vmatpush1.msra.mxu0 0.0
    %3589 = vmatprep.subr.mxu0 0.0
    %3590 = vmatpush1.msra.mxu0 0.0
    %3591 = vmatprep.subr.mxu0 0.0
    %3592 = vmatpush1.msra.mxu0 0.0
    %3593 = vmatprep.subr.mxu0 0.0
    %3594 = vmatpush1.msra.mxu0 0.0
    %3595 = vmatprep.subr.mxu0 0.0
    %3596 = vmatpush1.msra.mxu0 0.0
    %3597 = vmatprep.subr.mxu0 0.0
    %3598 = vmatpush1.msra.mxu0 0.0
    %3599 = vmatprep.subr.mxu0 0.0
    %3600 = vmatpush1.msra.mxu0 0.0
    %3601 = vmatprep.subr.mxu0 0.0
    %3602 = vmatpush1.msra.mxu0 0.0
    %3603 = vmatprep.subr.mxu0 0.0
    %3604 = vmatpush1.msra.mxu0 0.0
    %3605 = vmatprep.subr.mxu0 0.0
    %3606 = vmatpush1.msra.mxu0 0.0
    %3607 = vmatprep.subr.mxu0 0.0
    %3608 = vmatpush1.msra.mxu0 0.0
    %3609 = vmatprep.subr.mxu0 0.0
    %3610 = vmatpush1.msra.mxu0 0.0
    %3611 = vmatprep.subr.mxu0 0.0
    %3612 = vmatpush1.msra.mxu0 0.0
    %3613 = vmatprep.subr.mxu0 0.0
    %3614 = vmatpush1.msra.mxu0 0.0
    %3615 = vmatprep.subr.mxu0 0.0
    %3616 = vmatpush1.msra.mxu0 0.0
    %3617 = vmatprep.subr.mxu0 0.0
    %3618 = vmatpush1.msra.mxu0 0.0
    %3619 = vmatprep.subr.mxu0 0.0
    %3620 = vmatpush1.msra.mxu0 0.0
    %3621 = vmatprep.subr.mxu0 0.0
    %3622 = vmatpush1.msra.mxu0 0.0
    %3623 = vmatprep.subr.mxu0 0.0
    %3624 = vmatpush1.msra.mxu0 0.0
    %3625 = vmatprep.subr.mxu0 0.0
    %3626 = vmatpush1.msra.mxu0 0.0
    %3627 = vmatprep.mubr.f32.mxu0 0.0
    %3628 = vmatmul.mubr.f32.gmra.mrb[0].mxu0 %v3308
    %v3629 = vpop.f32.mrb[0].mxu0
    %v3630 = vadd.f32 %v3561, %v3629
    %v3631 = vpop.f32.mrb[0].mxu0
    %3632 = vmatprep.mubr.f32.mxu0 0.0
    %3633 = vmatmul.mubr.f32.gmra.mrb[0].mxu0 %v3311
    %v3634 = vpop.f32.mrb[0].mxu0
    %v3635 = vadd.f32 %v3561, %v3634
    %v3636 = vpop.f32.mrb[0].mxu0
    %3637 = vmatprep.mubr.f32.mxu0 0.0
    %3638 = vmatmul.mubr.f32.gmra.mrb[0].mxu0 %v3314
    %v3639 = vpop.f32.mrb[0].mxu0
    %v3640 = vadd.f32 %v3561, %v3639
    %v3641 = vpop.f32.mrb[0].mxu0
    %3642 = vmatprep.mubr.f32.mxu0 0.0
    %3643 = vmatmul.mubr.f32.gmra.mrb[0].mxu0 %v3317
    %v3644 = vpop.f32.mrb[0].mxu0
    %v3645 = vadd.f32 %v3561, %v3644
    %v3646 = vpop.f32.mrb[0].mxu0
    %3647 = vmatprep.mubr.f32.mxu0 0.0
    %3648 = vmatmul.mubr.f32.gmra.mrb[0].mxu0 %v3320
    %v3649 = vpop.f32.mrb[0].mxu0
    %v3650 = vadd.f32 %v3561, %v3649
    %v3651 = vpop.f32.mrb[0].mxu0
    %3652 = vmatprep.mubr.f32.mxu0 0.0
    %3653 = vmatmul.mubr.f32.gmra.mrb[0].mxu0 %v3323
    %v3654 = vpop.f32.mrb[0].mxu0
    %v3655 = vadd.f32 %v3561, %v3654
    %v3656 = vpop.f32.mrb[0].mxu0
    %3657 = vmatprep.mubr.f32.mxu0 0.0
    %3658 = vmatmul.mubr.f32.gmra.mrb[0].mxu0 %v3326
    %v3659 = vpop.f32.mrb[0].mxu0
    %v3660 = vadd.f32 %v3561, %v3659
    %v3661 = vpop.f32.mrb[0].mxu0
    %3662 = vmatprep.mubr.f32.mxu0 0.0
    %3663 = vmatmul.mubr.f32.gmra.mrb[0].mxu0 %v3329
    %v3664 = vpop.f32.mrb[0].mxu0
    %v3665 = vadd.f32 %v3561, %v3664
    %v3666 = vpop.f32.mrb[0].mxu0
    %3667 = vdwg.mxu0
    %v3668 = vld [vmem:[%s61] sm:$0xff]
    %v3669 = vld [vmem:[%s61 + $0x8] sm:$0xff]
    %v3670 = vld [vmem:[%s61 + $0x10] sm:$0xff]
    %v3671 = vld [vmem:[%s61 + $0x18] sm:$0xff]
    %v3672 = vld [vmem:[%s61 + $0x20] sm:$0xff]
    %v3673 = vld [vmem:[%s61 + $0x28] sm:$0xff]
    %v3674 = vld [vmem:[%s61 + $0x30] sm:$0xff]
    %v3675 = vld [vmem:[%s61 + $0x38] sm:$0xff]
    %v3677 = vsel %vm1281, %v3398, 0
    %v3680 = vsel %vm1281, %v3403, 0
    %v3683 = vsel %vm1281, %v3408, 0
    %v3686 = vsel %vm1281, %v3413, 0
    %v3689 = vsel %vm1281, %v3418, 0
    %v3692 = vsel %vm1281, %v3423, 0
    %v3695 = vsel %vm1281, %v3428, 0
    %v3698 = vsel %vm1281, %v3433, 0
    %v3701 = vsel %vm1281, %v3514, 0
    %v3704 = vsel %vm1281, %v3519, 0
    %v3707 = vsel %vm1281, %v3524, 0
    %v3710 = vsel %vm1281, %v3529, 0
    %v3713 = vsel %vm1281, %v3534, 0
    %v3716 = vsel %vm1281, %v3539, 0
    %v3719 = vsel %vm1281, %v3544, 0
    %v3722 = vsel %vm1281, %v3549, 0
    %3724 = vmatprep.subr.mxu0 0.0
    %3725 = vmatpush1.xpose.msra.mxu0 %v3701
    %3726 = vmatprep.subr.mxu0 0.0
    %3727 = vmatpush1.xpose.msra.mxu0 %v3704
    %3728 = vmatprep.subr.mxu0 0.0
    %3729 = vmatpush1.xpose.msra.mxu0 %v3707
    %3730 = vmatprep.subr.mxu0 0.0
    %3731 = vmatpush1.xpose.msra.mxu0 %v3710
    %3732 = vmatprep.subr.mxu0 0.0
    %3733 = vmatpush1.xpose.msra.mxu0 %v3713
    %3734 = vmatprep.subr.mxu0 0.0
    %3735 = vmatpush1.xpose.msra.mxu0 %v3716
    %3736 = vmatprep.subr.mxu0 0.0
    %3737 = vmatpush1.xpose.msra.mxu0 %v3719
    %3738 = vmatprep.subr.mxu0 0.0
    %3739 = vmatpush1.xpose.msra.mxu0 %v3722
    %3740 = vmatprep.subr.mxu0 0.0
    %3741 = vmatpush1.xpose.msra.mxu0 0.0
    %3742 = vmatprep.subr.mxu0 0.0
    %3743 = vmatpush1.xpose.msra.mxu0 0.0
    %3744 = vmatprep.subr.mxu0 0.0
    %3745 = vmatpush1.xpose.msra.mxu0 0.0
    %3746 = vmatprep.subr.mxu0 0.0
    %3747 = vmatpush1.xpose.msra.mxu0 0.0
    %3748 = vmatprep.subr.mxu0 0.0
    %3749 = vmatpush1.xpose.msra.mxu0 0.0
    %3750 = vmatprep.subr.mxu0 0.0
    %3751 = vmatpush1.xpose.msra.mxu0 0.0
    %3752 = vmatprep.subr.mxu0 0.0
    %3753 = vmatpush1.xpose.msra.mxu0 0.0
    %3754 = vmatprep.subr.mxu0 0.0
    %3755 = vmatpush1.xpose.msra.mxu0 0.0
    %3756 = vmatprep.subr.mxu0 0.0
    %3757 = vmatpush1.xpose.msra.mxu0 0.0
    %3758 = vmatprep.subr.mxu0 0.0
    %3759 = vmatpush1.xpose.msra.mxu0 0.0
    %3760 = vmatprep.subr.mxu0 0.0
    %3761 = vmatpush1.xpose.msra.mxu0 0.0
    %3762 = vmatprep.subr.mxu0 0.0
    %3763 = vmatpush1.xpose.msra.mxu0 0.0
    %3764 = vmatprep.subr.mxu0 0.0
    %3765 = vmatpush1.xpose.msra.mxu0 0.0
    %3766 = vmatprep.subr.mxu0 0.0
    %3767 = vmatpush1.xpose.msra.mxu0 0.0
    %3768 = vmatprep.subr.mxu0 0.0
    %3769 = vmatpush1.xpose.msra.mxu0 0.0
    %3770 = vmatprep.subr.mxu0 0.0
    %3771 = vmatpush1.xpose.msra.mxu0 0.0
    %3772 = vmatprep.subr.mxu0 0.0
    %3773 = vmatpush1.xpose.msra.mxu0 0.0
    %3774 = vmatprep.subr.mxu0 0.0
    %3775 = vmatpush1.xpose.msra.mxu0 0.0
    %3776 = vmatprep.subr.mxu0 0.0
    %3777 = vmatpush1.xpose.msra.mxu0 0.0
    %3778 = vmatprep.subr.mxu0 0.0
    %3779 = vmatpush1.xpose.msra.mxu0 0.0
    %3780 = vmatprep.subr.mxu0 0.0
    %3781 = vmatpush1.xpose.msra.mxu0 0.0
    %3782 = vmatprep.subr.mxu0 0.0
    %3783 = vmatpush1.xpose.msra.mxu0 0.0
    %3784 = vmatprep.subr.mxu0 0.0
    %3785 = vmatpush1.xpose.msra.mxu0 0.0
    %3786 = vmatprep.subr.mxu0 0.0
    %3787 = vmatpush1.xpose.msra.mxu0 0.0
    %3788 = vmatprep.mubr.f32.mxu0 0.0
    %3789 = vmatmul.mubr.f32.gmra.mrb[0].mxu0 %v3677
    %v3790 = vpop.f32.mrb[0].mxu0
    %v3791 = vadd.f32 %v3668, %v3790
    %v3792 = vpop.f32.mrb[0].mxu0
    %3793 = vmatprep.mubr.f32.mxu0 0.0
    %3794 = vmatmul.mubr.f32.gmra.mrb[0].mxu0 %v3680
    %v3795 = vpop.f32.mrb[0].mxu0
    %v3796 = vadd.f32 %v3669, %v3795
    %v3797 = vpop.f32.mrb[0].mxu0
    %3798 = vmatprep.mubr.f32.mxu0 0.0
    %3799 = vmatmul.mubr.f32.gmra.mrb[0].mxu0 %v3683
    %v3800 = vpop.f32.mrb[0].mxu0
    %v3801 = vadd.f32 %v3670, %v3800
    %v3802 = vpop.f32.mrb[0].mxu0
    %3803 = vmatprep.mubr.f32.mxu0 0.0
    %3804 = vmatmul.mubr.f32.gmra.mrb[0].mxu0 %v3686
    %v3805 = vpop.f32.mrb[0].mxu0
    %v3806 = vadd.f32 %v3671, %v3805
    %v3807 = vpop.f32.mrb[0].mxu0
    %3808 = vmatprep.mubr.f32.mxu0 0.0
    %3809 = vmatmul.mubr.f32.gmra.mrb[0].mxu0 %v3689
    %v3810 = vpop.f32.mrb[0].mxu0
    %v3811 = vadd.f32 %v3672, %v3810
    %v3812 = vpop.f32.mrb[0].mxu0
    %3813 = vmatprep.mubr.f32.mxu0 0.0
    %3814 = vmatmul.mubr.f32.gmra.mrb[0].mxu0 %v3692
    %v3815 = vpop.f32.mrb[0].mxu0
    %v3816 = vadd.f32 %v3673, %v3815
    %v3817 = vpop.f32.mrb[0].mxu0
    %3818 = vmatprep.mubr.f32.mxu0 0.0
    %3819 = vmatmul.mubr.f32.gmra.mrb[0].mxu0 %v3695
    %v3820 = vpop.f32.mrb[0].mxu0
    %v3821 = vadd.f32 %v3674, %v3820
    %v3822 = vpop.f32.mrb[0].mxu0
    %3823 = vmatprep.mubr.f32.mxu0 0.0
    %3824 = vmatmul.mubr.f32.gmra.mrb[0].mxu0 %v3698
    %v3825 = vpop.f32.mrb[0].mxu0
    %v3826 = vadd.f32 %v3675, %v3825
    %v3827 = vpop.f32.mrb[0].mxu0
    %3828 = vdwg.mxu0
    %v3829 = vsel %vm1435, %v3791, -inf
    %3830 = vmax.xlane.f32.xlu0 %v3829
    %v3831 = vpop.xlane.xlu0 %3830
    %v3832 = vsel %vm1435, %v3796, -inf
    %3833 = vmax.xlane.f32.xlu0 %v3832
    %v3834 = vpop.xlane.xlu0 %3833
    %v3835 = vsel %vm1435, %v3801, -inf
    %3836 = vmax.xlane.f32.xlu0 %v3835
    %v3837 = vpop.xlane.xlu0 %3836
    %v3838 = vsel %vm1435, %v3806, -inf
    %3839 = vmax.xlane.f32.xlu0 %v3838
    %v3840 = vpop.xlane.xlu0 %3839
    %v3841 = vsel %vm1435, %v3811, -inf
    %3842 = vmax.xlane.f32.xlu0 %v3841
    %v3843 = vpop.xlane.xlu0 %3842
    %v3844 = vsel %vm1435, %v3816, -inf
    %3845 = vmax.xlane.f32.xlu0 %v3844
    %v3846 = vpop.xlane.xlu0 %3845
    %v3847 = vsel %vm1435, %v3821, -inf
    %3848 = vmax.xlane.f32.xlu0 %v3847
    %v3849 = vpop.xlane.xlu0 %3848
    %v3850 = vsel %vm1435, %v3826, -inf
    %3851 = vmax.xlane.f32.xlu0 %v3850
    %v3852 = vpop.xlane.xlu0 %3851
    %v3853 = vsub.f32 %v3791, %v3831
    %v3854 = vsub.f32 %v3796, %v3834
    %v3855 = vsub.f32 %v3801, %v3837
    %v3856 = vsub.f32 %v3806, %v3840
    %v3857 = vsub.f32 %v3811, %v3843
    %v3858 = vsub.f32 %v3816, %v3846
    %v3859 = vsub.f32 %v3821, %v3849
    %v3860 = vsub.f32 %v3826, %v3852
    %v3861 = vmul.f32 %v3853, 1.442695
    %v3862 = vpow.pop %v3861
    %v3863 = vmul.f32 %v3854, 1.442695
    %v3864 = vpow.pop %v3863
    %v3865 = vmul.f32 %v3855, 1.442695
    %v3866 = vpow.pop %v3865
    %v3867 = vmul.f32 %v3856, 1.442695
    %v3868 = vpow.pop %v3867
    %v3869 = vmul.f32 %v3857, 1.442695
    %v3870 = vpow.pop %v3869
    %v3871 = vmul.f32 %v3858, 1.442695
    %v3872 = vpow.pop %v3871
    %v3873 = vmul.f32 %v3859, 1.442695
    %v3874 = vpow.pop %v3873
    %v3875 = vmul.f32 %v3860, 1.442695
    %v3876 = vpow.pop %v3875
    %v3877 = vsel %vm1435, %v3862, 0.0
    %3878 = vadd.xlane.f32.xlu0 %v3877
    %v3879 = vpop.xlane.xlu0 %3878
    %v3880 = vsel %vm1435, %v3864, 0.0
    %3881 = vadd.xlane.f32.xlu0 %v3880
    %v3882 = vpop.xlane.xlu0 %3881
    %v3883 = vsel %vm1435, %v3866, 0.0
    %3884 = vadd.xlane.f32.xlu0 %v3883
    %v3885 = vpop.xlane.xlu0 %3884
    %v3886 = vsel %vm1435, %v3868, 0.0
    %3887 = vadd.xlane.f32.xlu0 %v3886
    %v3888 = vpop.xlane.xlu0 %3887
    %v3889 = vsel %vm1435, %v3870, 0.0
    %3890 = vadd.xlane.f32.xlu0 %v3889
    %v3891 = vpop.xlane.xlu0 %3890
    %v3892 = vsel %vm1435, %v3872, 0.0
    %3893 = vadd.xlane.f32.xlu0 %v3892
    %v3894 = vpop.xlane.xlu0 %3893
    %v3895 = vsel %vm1435, %v3874, 0.0
    %3896 = vadd.xlane.f32.xlu0 %v3895
    %v3897 = vpop.xlane.xlu0 %3896
    %v3898 = vsel %vm1435, %v3876, 0.0
    %3899 = vadd.xlane.f32.xlu0 %v3898
    %v3900 = vpop.xlane.xlu0 %3899
    %v3901 = vrcp.pop %v3879
    %v3902 = vrcp.pop %v3882
    %v3903 = vrcp.pop %v3885
    %v3904 = vrcp.pop %v3888
    %v3905 = vrcp.pop %v3891
    %v3906 = vrcp.pop %v3894
    %v3907 = vrcp.pop %v3897
    %v3908 = vrcp.pop %v3900
    %v3909 = vmul.f32 %v3862, %v3901
    %v3910 = vmul.f32 %v3864, %v3902
    %v3911 = vmul.f32 %v3866, %v3903
    %v3912 = vmul.f32 %v3868, %v3904
    %v3913 = vmul.f32 %v3870, %v3905
    %v3914 = vmul.f32 %v3872, %v3906
    %v3915 = vmul.f32 %v3874, %v3907
    %v3916 = vmul.f32 %v3876, %v3908
    %v3918 = vsel %vm1435, %v3909, 0
    %v3921 = vsel %vm1435, %v3910, 0
    %v3924 = vsel %vm1435, %v3911, 0
    %v3927 = vsel %vm1435, %v3912, 0
    %v3930 = vsel %vm1435, %v3913, 0
    %v3933 = vsel %vm1435, %v3914, 0
    %v3936 = vsel %vm1435, %v3915, 0
    %v3939 = vsel %vm1435, %v3916, 0
    %3941 = vmatprep.subr.mxu0 0.0
    %3942 = vmatpush1.msra.mxu0 %v3630
    %3943 = vmatprep.subr.mxu0 0.0
    %3944 = vmatpush1.msra.mxu0 %v3635
    %3945 = vmatprep.subr.mxu0 0.0
    %3946 = vmatpush1.msra.mxu0 %v3640
    %3947 = vmatprep.subr.mxu0 0.0
    %3948 = vmatpush1.msra.mxu0 %v3645
    %3949 = vmatprep.subr.mxu0 0.0
    %3950 = vmatpush1.msra.mxu0 %v3650
    %3951 = vmatprep.subr.mxu0 0.0
    %3952 = vmatpush1.msra.mxu0 %v3655
    %3953 = vmatprep.subr.mxu0 0.0
    %3954 = vmatpush1.msra.mxu0 %v3660
    %3955 = vmatprep.subr.mxu0 0.0
    %3956 = vmatpush1.msra.mxu0 %v3665
    %3957 = vmatprep.subr.mxu0 0.0
    %3958 = vmatpush1.msra.mxu0 0.0
    %3959 = vmatprep.subr.mxu0 0.0
    %3960 = vmatpush1.msra.mxu0 0.0
    %3961 = vmatprep.subr.mxu0 0.0
    %3962 = vmatpush1.msra.mxu0 0.0
    %3963 = vmatprep.subr.mxu0 0.0
    %3964 = vmatpush1.msra.mxu0 0.0
    %3965 = vmatprep.subr.mxu0 0.0
    %3966 = vmatpush1.msra.mxu0 0.0
    %3967 = vmatprep.subr.mxu0 0.0
    %3968 = vmatpush1.msra.mxu0 0.0
    %3969 = vmatprep.subr.mxu0 0.0
    %3970 = vmatpush1.msra.mxu0 0.0
    %3971 = vmatprep.subr.mxu0 0.0
    %3972 = vmatpush1.msra.mxu0 0.0
    %3973 = vmatprep.subr.mxu0 0.0
    %3974 = vmatpush1.msra.mxu0 0.0
    %3975 = vmatprep.subr.mxu0 0.0
    %3976 = vmatpush1.msra.mxu0 0.0
    %3977 = vmatprep.subr.mxu0 0.0
    %3978 = vmatpush1.msra.mxu0 0.0
    %3979 = vmatprep.subr.mxu0 0.0
    %3980 = vmatpush1.msra.mxu0 0.0
    %3981 = vmatprep.subr.mxu0 0.0
    %3982 = vmatpush1.msra.mxu0 0.0
    %3983 = vmatprep.subr.mxu0 0.0
    %3984 = vmatpush1.msra.mxu0 0.0
    %3985 = vmatprep.subr.mxu0 0.0
    %3986 = vmatpush1.msra.mxu0 0.0
    %3987 = vmatprep.subr.mxu0 0.0
    %3988 = vmatpush1.msra.mxu0 0.0
    %3989 = vmatprep.subr.mxu0 0.0
    %3990 = vmatpush1.msra.mxu0 0.0
    %3991 = vmatprep.subr.mxu0 0.0
    %3992 = vmatpush1.msra.mxu0 0.0
    %3993 = vmatprep.subr.mxu0 0.0
    %3994 = vmatpush1.msra.mxu0 0.0
    %3995 = vmatprep.subr.mxu0 0.0
    %3996 = vmatpush1.msra.mxu0 0.0
    %3997 = vmatprep.subr.mxu0 0.0
    %3998 = vmatpush1.msra.mxu0 0.0
    %3999 = vmatprep.subr.mxu0 0.0
    %4000 = vmatpush1.msra.mxu0 0.0
    %4001 = vmatprep.subr.mxu0 0.0
    %4002 = vmatpush1.msra.mxu0 0.0
    %4003 = vmatprep.subr.mxu0 0.0
    %4004 = vmatpush1.msra.mxu0 0.0
    %4005 = vmatprep.mubr.f32.mxu0 0.0
    %4006 = vmatmul.mubr.f32.gmra.mrb[0].mxu0 %v3918
    %v4007 = vpop.f32.mrb[0].mxu0
    %v4008 = vadd.f32 0.0, %v4007
    %v4009 = vpop.f32.mrb[0].mxu0
    %4010 = vmatprep.mubr.f32.mxu0 0.0
    %4011 = vmatmul.mubr.f32.gmra.mrb[0].mxu0 %v3921
    %v4012 = vpop.f32.mrb[0].mxu0
    %v4013 = vadd.f32 0.0, %v4012
    %v4014 = vpop.f32.mrb[0].mxu0
    %4015 = vmatprep.mubr.f32.mxu0 0.0
    %4016 = vmatmul.mubr.f32.gmra.mrb[0].mxu0 %v3924
    %v4017 = vpop.f32.mrb[0].mxu0
    %v4018 = vadd.f32 0.0, %v4017
    %v4019 = vpop.f32.mrb[0].mxu0
    %4020 = vmatprep.mubr.f32.mxu0 0.0
    %4021 = vmatmul.mubr.f32.gmra.mrb[0].mxu0 %v3927
    %v4022 = vpop.f32.mrb[0].mxu0
    %v4023 = vadd.f32 0.0, %v4022
    %v4024 = vpop.f32.mrb[0].mxu0
    %4025 = vmatprep.mubr.f32.mxu0 0.0
    %4026 = vmatmul.mubr.f32.gmra.mrb[0].mxu0 %v3930
    %v4027 = vpop.f32.mrb[0].mxu0
    %v4028 = vadd.f32 0.0, %v4027
    %v4029 = vpop.f32.mrb[0].mxu0
    %4030 = vmatprep.mubr.f32.mxu0 0.0
    %4031 = vmatmul.mubr.f32.gmra.mrb[0].mxu0 %v3933
    %v4032 = vpop.f32.mrb[0].mxu0
    %v4033 = vadd.f32 0.0, %v4032
    %v4034 = vpop.f32.mrb[0].mxu0
    %4035 = vmatprep.mubr.f32.mxu0 0.0
    %4036 = vmatmul.mubr.f32.gmra.mrb[0].mxu0 %v3936
    %v4037 = vpop.f32.mrb[0].mxu0
    %v4038 = vadd.f32 0.0, %v4037
    %v4039 = vpop.f32.mrb[0].mxu0
    %4040 = vmatprep.mubr.f32.mxu0 0.0
    %4041 = vmatmul.mubr.f32.gmra.mrb[0].mxu0 %v3939
    %v4042 = vpop.f32.mrb[0].mxu0
    %v4043 = vadd.f32 0.0, %v4042
    %v4044 = vpop.f32.mrb[0].mxu0
    %4045 = vdwg.mxu0
    %v4046 = vld [vmem:[%s63] sm:$0xff]
    %v4047 = vld [vmem:[%s63 + $0x8] sm:$0xff]
    %v4049 = vsel %vm1281, %v4008, 0
    %v4052 = vsel %vm1281, %v4013, 0
    %v4055 = vsel %vm1281, %v4018, 0
    %v4058 = vsel %vm1281, %v4023, 0
    %v4061 = vsel %vm1281, %v4028, 0
    %v4064 = vsel %vm1281, %v4033, 0
    %v4067 = vsel %vm1281, %v4038, 0
    %v4070 = vsel %vm1281, %v4043, 0
    %4072 = vmatprep.subr.mxu0 0.0
    %4073 = vmatpush1.msra.mxu0 %v4046
    %4074 = vmatprep.subr.mxu0 0.0
    %4075 = vmatpush1.msra.mxu0 %v4047
    %4076 = vmatprep.subr.mxu0 0.0
    %4077 = vmatpush1.msra.mxu0 0.0
    %4078 = vmatprep.subr.mxu0 0.0
    %4079 = vmatpush1.msra.mxu0 0.0
    %4080 = vmatprep.subr.mxu0 0.0
    %4081 = vmatpush1.msra.mxu0 0.0
    %4082 = vmatprep.subr.mxu0 0.0
    %4083 = vmatpush1.msra.mxu0 0.0
    %4084 = vmatprep.subr.mxu0 0.0
    %4085 = vmatpush1.msra.mxu0 0.0
    %4086 = vmatprep.subr.mxu0 0.0
    %4087 = vmatpush1.msra.mxu0 0.0
    %4088 = vmatprep.subr.mxu0 0.0
    %4089 = vmatpush1.msra.mxu0 0.0
    %4090 = vmatprep.subr.mxu0 0.0
    %4091 = vmatpush1.msra.mxu0 0.0
    %4092 = vmatprep.subr.mxu0 0.0
    %4093 = vmatpush1.msra.mxu0 0.0
    %4094 = vmatprep.subr.mxu0 0.0
    %4095 = vmatpush1.msra.mxu0 0.0
    %4096 = vmatprep.subr.mxu0 0.0
    %4097 = vmatpush1.msra.mxu0 0.0
    %4098 = vmatprep.subr.mxu0 0.0
    %4099 = vmatpush1.msra.mxu0 0.0
    %4100 = vmatprep.subr.mxu0 0.0
    %4101 = vmatpush1.msra.mxu0 0.0
    %4102 = vmatprep.subr.mxu0 0.0
    %4103 = vmatpush1.msra.mxu0 0.0
    %4104 = vmatprep.subr.mxu0 0.0
    %4105 = vmatpush1.msra.mxu0 0.0
    %4106 = vmatprep.subr.mxu0 0.0
    %4107 = vmatpush1.msra.mxu0 0.0
    %4108 = vmatprep.subr.mxu0 0.0
    %4109 = vmatpush1.msra.mxu0 0.0
    %4110 = vmatprep.subr.mxu0 0.0
    %4111 = vmatpush1.msra.mxu0 0.0
    %4112 = vmatprep.subr.mxu0 0.0
    %4113 = vmatpush1.msra.mxu0 0.0
    %4114 = vmatprep.subr.mxu0 0.0
    %4115 = vmatpush1.msra.mxu0 0.0
    %4116 = vmatprep.subr.mxu0 0.0
    %4117 = vmatpush1.msra.mxu0 0.0
    %4118 = vmatprep.subr.mxu0 0.0
    %4119 = vmatpush1.msra.mxu0 0.0
    %4120 = vmatprep.subr.mxu0 0.0
    %4121 = vmatpush1.msra.mxu0 0.0
    %4122 = vmatprep.subr.mxu0 0.0
    %4123 = vmatpush1.msra.mxu0 0.0
    %4124 = vmatprep.subr.mxu0 0.0
    %4125 = vmatpush1.msra.mxu0 0.0
    %4126 = vmatprep.subr.mxu0 0.0
    %4127 = vmatpush1.msra.mxu0 0.0
    %4128 = vmatprep.subr.mxu0 0.0
    %4129 = vmatpush1.msra.mxu0 0.0
    %4130 = vmatprep.subr.mxu0 0.0
    %4131 = vmatpush1.msra.mxu0 0.0
    %4132 = vmatprep.subr.mxu0 0.0
    %4133 = vmatpush1.msra.mxu0 0.0
    %4134 = vmatprep.subr.mxu0 0.0
    %4135 = vmatpush1.msra.mxu0 0.0
    %4136 = vmatprep.mubr.f32.mxu0 0.0
    %4137 = vmatmul.mubr.f32.gmra.mrb[0].mxu0 %v4049
    %v4138 = vpop.f32.mrb[0].mxu0
    %v4139 = vadd.f32 0.0, %v4138
    %v4140 = vpop.f32.mrb[0].mxu0
    %4141 = vmatprep.mubr.f32.mxu0 0.0
    %4142 = vmatmul.mubr.f32.gmra.mrb[0].mxu0 %v4052
    %v4143 = vpop.f32.mrb[0].mxu0
    %v4144 = vadd.f32 0.0, %v4143
    %v4145 = vpop.f32.mrb[0].mxu0
    %4146 = vmatprep.mubr.f32.mxu0 0.0
    %4147 = vmatmul.mubr.f32.gmra.mrb[0].mxu0 %v4055
    %v4148 = vpop.f32.mrb[0].mxu0
    %v4149 = vadd.f32 0.0, %v4148
    %v4150 = vpop.f32.mrb[0].mxu0
    %4151 = vmatprep.mubr.f32.mxu0 0.0
    %4152 = vmatmul.mubr.f32.gmra.mrb[0].mxu0 %v4058
    %v4153 = vpop.f32.mrb[0].mxu0
    %v4154 = vadd.f32 0.0, %v4153
    %v4155 = vpop.f32.mrb[0].mxu0
    %4156 = vmatprep.mubr.f32.mxu0 0.0
    %4157 = vmatmul.mubr.f32.gmra.mrb[0].mxu0 %v4061
    %v4158 = vpop.f32.mrb[0].mxu0
    %v4159 = vadd.f32 0.0, %v4158
    %v4160 = vpop.f32.mrb[0].mxu0
    %4161 = vmatprep.mubr.f32.mxu0 0.0
    %4162 = vmatmul.mubr.f32.gmra.mrb[0].mxu0 %v4064
    %v4163 = vpop.f32.mrb[0].mxu0
    %v4164 = vadd.f32 0.0, %v4163
    %v4165 = vpop.f32.mrb[0].mxu0
    %4166 = vmatprep.mubr.f32.mxu0 0.0
    %4167 = vmatmul.mubr.f32.gmra.mrb[0].mxu0 %v4067
    %v4168 = vpop.f32.mrb[0].mxu0
    %v4169 = vadd.f32 0.0, %v4168
    %v4170 = vpop.f32.mrb[0].mxu0
    %4171 = vmatprep.mubr.f32.mxu0 0.0
    %4172 = vmatmul.mubr.f32.gmra.mrb[0].mxu0 %v4070
    %v4173 = vpop.f32.mrb[0].mxu0
    %v4174 = vadd.f32 0.0, %v4173
    %v4175 = vpop.f32.mrb[0].mxu0
    %4176 = vdwg.mxu0
    %v4178 = vlaneseq
    %v4179 = vshrl.u32 %v4178, 7
    %v4180 = vsub.s32 0, %v4179
    %v4181 = vrot.slane %v3139, %v4180
    %v4183 = vadd.f32 %v4181, %v4139
    %v4184 = vadd.f32 %v4181, %v4144
    %v4185 = vadd.f32 %v4181, %v4149
    %v4186 = vadd.f32 %v4181, %v4154
    %v4187 = vadd.f32 %v4181, %v4159
    %v4188 = vadd.f32 %v4181, %v4164
    %v4189 = vadd.f32 %v4181, %v4169
    %v4190 = vadd.f32 %v4181, %v4174
    %s4191 = scalar_lea.vmem %s49, 32
    %v4192 = vld [vmem:[%s4191] sm:$0xff]
    %v4193 = vld [vmem:[%s4191 + $0x8] sm:$0xff]
    %v4194 = vld [vmem:[%s4191 + $0x10] sm:$0xff]
    %v4195 = vld [vmem:[%s4191 + $0x18] sm:$0xff]
    %s4196 = scalar_lea.vmem %s55, 1
    %v4197 = vld [vmem:[%s4196] sm:$0x1]
    %v4199 = vlaneseq
    %v4200 = vshrl.u32 %v4199, 7
    %v4201 = vsub.s32 0, %v4200
    %v4202 = vrot.slane %v4197, %v4201
    %4204 = vmatprep.subr.mxu0 0.0
    %4205 = vmatpush1.msra.mxu0 %v4192
    %4206 = vmatprep.subr.mxu0 0.0
    %4207 = vmatpush1.msra.mxu0 %v4193
    %4208 = vmatprep.subr.mxu0 0.0
    %4209 = vmatpush1.msra.mxu0 %v4194
    %4210 = vmatprep.subr.mxu0 0.0
    %4211 = vmatpush1.msra.mxu0 %v4195
    %4212 = vmatprep.subr.mxu0 0.0
    %4213 = vmatpush1.msra.mxu0 0.0
    %4214 = vmatprep.subr.mxu0 0.0
    %4215 = vmatpush1.msra.mxu0 0.0
    %4216 = vmatprep.subr.mxu0 0.0
    %4217 = vmatpush1.msra.mxu0 0.0
    %4218 = vmatprep.subr.mxu0 0.0
    %4219 = vmatpush1.msra.mxu0 0.0
    %4220 = vmatprep.subr.mxu0 0.0
    %4221 = vmatpush1.msra.mxu0 0.0
    %4222 = vmatprep.subr.mxu0 0.0
    %4223 = vmatpush1.msra.mxu0 0.0
    %4224 = vmatprep.subr.mxu0 0.0
    %4225 = vmatpush1.msra.mxu0 0.0
    %4226 = vmatprep.subr.mxu0 0.0
    %4227 = vmatpush1.msra.mxu0 0.0
    %4228 = vmatprep.subr.mxu0 0.0
    %4229 = vmatpush1.msra.mxu0 0.0
    %4230 = vmatprep.subr.mxu0 0.0
    %4231 = vmatpush1.msra.mxu0 0.0
    %4232 = vmatprep.subr.mxu0 0.0
    %4233 = vmatpush1.msra.mxu0 0.0
    %4234 = vmatprep.subr.mxu0 0.0
    %4235 = vmatpush1.msra.mxu0 0.0
    %4236 = vmatprep.subr.mxu0 0.0
    %4237 = vmatpush1.msra.mxu0 0.0
    %4238 = vmatprep.subr.mxu0 0.0
    %4239 = vmatpush1.msra.mxu0 0.0
    %4240 = vmatprep.subr.mxu0 0.0
    %4241 = vmatpush1.msra.mxu0 0.0
    %4242 = vmatprep.subr.mxu0 0.0
    %4243 = vmatpush1.msra.mxu0 0.0
    %4244 = vmatprep.subr.mxu0 0.0
    %4245 = vmatpush1.msra.mxu0 0.0
    %4246 = vmatprep.subr.mxu0 0.0
    %4247 = vmatpush1.msra.mxu0 0.0
    %4248 = vmatprep.subr.mxu0 0.0
    %4249 = vmatpush1.msra.mxu0 0.0
    %4250 = vmatprep.subr.mxu0 0.0
    %4251 = vmatpush1.msra.mxu0 0.0
    %4252 = vmatprep.subr.mxu0 0.0
    %4253 = vmatpush1.msra.mxu0 0.0
    %4254 = vmatprep.subr.mxu0 0.0
    %4255 = vmatpush1.msra.mxu0 0.0
    %4256 = vmatprep.subr.mxu0 0.0
    %4257 = vmatpush1.msra.mxu0 0.0
    %4258 = vmatprep.subr.mxu0 0.0
    %4259 = vmatpush1.msra.mxu0 0.0
    %4260 = vmatprep.subr.mxu0 0.0
    %4261 = vmatpush1.msra.mxu0 0.0
    %4262 = vmatprep.subr.mxu0 0.0
    %4263 = vmatpush1.msra.mxu0 0.0
    %4264 = vmatprep.subr.mxu0 0.0
    %4265 = vmatpush1.msra.mxu0 0.0
    %4266 = vmatprep.subr.mxu0 0.0
    %4267 = vmatpush1.msra.mxu0 0.0
    %4268 = vmatprep.mubr.f32.mxu0 0.0
    %4269 = vmatmul.mubr.f32.gmra.mrb[0].mxu0 %v3308
    %v4270 = vpop.f32.mrb[0].mxu0
    %v4271 = vadd.f32 %v4202, %v4270
    %v4272 = vpop.f32.mrb[0].mxu0
    %4273 = vmatprep.mubr.f32.mxu0 0.0
    %4274 = vmatmul.mubr.f32.gmra.mrb[0].mxu0 %v3311
    %v4275 = vpop.f32.mrb[0].mxu0
    %v4276 = vadd.f32 %v4202, %v4275
    %v4277 = vpop.f32.mrb[0].mxu0
    %4278 = vmatprep.mubr.f32.mxu0 0.0
    %4279 = vmatmul.mubr.f32.gmra.mrb[0].mxu0 %v3314
    %v4280 = vpop.f32.mrb[0].mxu0
    %v4281 = vadd.f32 %v4202, %v4280
    %v4282 = vpop.f32.mrb[0].mxu0
    %4283 = vmatprep.mubr.f32.mxu0 0.0
    %4284 = vmatmul.mubr.f32.gmra.mrb[0].mxu0 %v3317
    %v4285 = vpop.f32.mrb[0].mxu0
    %v4286 = vadd.f32 %v4202, %v4285
    %v4287 = vpop.f32.mrb[0].mxu0
    %4288 = vmatprep.mubr.f32.mxu0 0.0
    %4289 = vmatmul.mubr.f32.gmra.mrb[0].mxu0 %v3320
    %v4290 = vpop.f32.mrb[0].mxu0
    %v4291 = vadd.f32 %v4202, %v4290
    %v4292 = vpop.f32.mrb[0].mxu0
    %4293 = vmatprep.mubr.f32.mxu0 0.0
    %4294 = vmatmul.mubr.f32.gmra.mrb[0].mxu0 %v3323
    %v4295 = vpop.f32.mrb[0].mxu0
    %v4296 = vadd.f32 %v4202, %v4295
    %v4297 = vpop.f32.mrb[0].mxu0
    %4298 = vmatprep.mubr.f32.mxu0 0.0
    %4299 = vmatmul.mubr.f32.gmra.mrb[0].mxu0 %v3326
    %v4300 = vpop.f32.mrb[0].mxu0
    %v4301 = vadd.f32 %v4202, %v4300
    %v4302 = vpop.f32.mrb[0].mxu0
    %4303 = vmatprep.mubr.f32.mxu0 0.0
    %4304 = vmatmul.mubr.f32.gmra.mrb[0].mxu0 %v3329
    %v4305 = vpop.f32.mrb[0].mxu0
    %v4306 = vadd.f32 %v4202, %v4305
    %v4307 = vpop.f32.mrb[0].mxu0
    %4308 = vdwg.mxu0
    %s4309 = scalar_lea.vmem %s51, 32
    %v4310 = vld [vmem:[%s4309] sm:$0xff]
    %v4311 = vld [vmem:[%s4309 + $0x8] sm:$0xff]
    %v4312 = vld [vmem:[%s4309 + $0x10] sm:$0xff]
    %v4313 = vld [vmem:[%s4309 + $0x18] sm:$0xff]
    %s4314 = scalar_lea.vmem %s57, 1
    %v4315 = vld [vmem:[%s4314] sm:$0x1]
    %v4317 = vlaneseq
    %v4318 = vshrl.u32 %v4317, 7
    %v4319 = vsub.s32 0, %v4318
    %v4320 = vrot.slane %v4315, %v4319
    %4322 = vmatprep.subr.mxu0 0.0
    %4323 = vmatpush1.msra.mxu0 %v4310
    %4324 = vmatprep.subr.mxu0 0.0
    %4325 = vmatpush1.msra.mxu0 %v4311
    %4326 = vmatprep.subr.mxu0 0.0
    %4327 = vmatpush1.msra.mxu0 %v4312
    %4328 = vmatprep.subr.mxu0 0.0
    %4329 = vmatpush1.msra.mxu0 %v4313
    %4330 = vmatprep.subr.mxu0 0.0
    %4331 = vmatpush1.msra.mxu0 0.0
    %4332 = vmatprep.subr.mxu0 0.0
    %4333 = vmatpush1.msra.mxu0 0.0
    %4334 = vmatprep.subr.mxu0 0.0
    %4335 = vmatpush1.msra.mxu0 0.0
    %4336 = vmatprep.subr.mxu0 0.0
    %4337 = vmatpush1.msra.mxu0 0.0
    %4338 = vmatprep.subr.mxu0 0.0
    %4339 = vmatpush1.msra.mxu0 0.0
    %4340 = vmatprep.subr.mxu0 0.0
    %4341 = vmatpush1.msra.mxu0 0.0
    %4342 = vmatprep.subr.mxu0 0.0
    %4343 = vmatpush1.msra.mxu0 0.0
    %4344 = vmatprep.subr.mxu0 0.0
    %4345 = vmatpush1.msra.mxu0 0.0
    %4346 = vmatprep.subr.mxu0 0.0
    %4347 = vmatpush1.msra.mxu0 0.0
    %4348 = vmatprep.subr.mxu0 0.0
    %4349 = vmatpush1.msra.mxu0 0.0
    %4350 = vmatprep.subr.mxu0 0.0
    %4351 = vmatpush1.msra.mxu0 0.0
    %4352 = vmatprep.subr.mxu0 0.0
    %4353 = vmatpush1.msra.mxu0 0.0
    %4354 = vmatprep.subr.mxu0 0.0
    %4355 = vmatpush1.msra.mxu0 0.0
    %4356 = vmatprep.subr.mxu0 0.0
    %4357 = vmatpush1.msra.mxu0 0.0
    %4358 = vmatprep.subr.mxu0 0.0
    %4359 = vmatpush1.msra.mxu0 0.0
    %4360 = vmatprep.subr.mxu0 0.0
    %4361 = vmatpush1.msra.mxu0 0.0
    %4362 = vmatprep.subr.mxu0 0.0
    %4363 = vmatpush1.msra.mxu0 0.0
    %4364 = vmatprep.subr.mxu0 0.0
    %4365 = vmatpush1.msra.mxu0 0.0
    %4366 = vmatprep.subr.mxu0 0.0
    %4367 = vmatpush1.msra.mxu0 0.0
    %4368 = vmatprep.subr.mxu0 0.0
    %4369 = vmatpush1.msra.mxu0 0.0
    %4370 = vmatprep.subr.mxu0 0.0
    %4371 = vmatpush1.msra.mxu0 0.0
    %4372 = vmatprep.subr.mxu0 0.0
    %4373 = vmatpush1.msra.mxu0 0.0
    %4374 = vmatprep.subr.mxu0 0.0
    %4375 = vmatpush1.msra.mxu0 0.0
    %4376 = vmatprep.subr.mxu0 0.0
    %4377 = vmatpush1.msra.mxu0 0.0
    %4378 = vmatprep.subr.mxu0 0.0
    %4379 = vmatpush1.msra.mxu0 0.0
    %4380 = vmatprep.subr.mxu0 0.0
    %4381 = vmatpush1.msra.mxu0 0.0
    %4382 = vmatprep.subr.mxu0 0.0
    %4383 = vmatpush1.msra.mxu0 0.0
    %4384 = vmatprep.subr.mxu0 0.0
    %4385 = vmatpush1.msra.mxu0 0.0
    %4386 = vmatprep.mubr.f32.mxu0 0.0
    %4387 = vmatmul.mubr.f32.gmra.mrb[0].mxu0 %v3308
    %v4388 = vpop.f32.mrb[0].mxu0
    %v4389 = vadd.f32 %v4320, %v4388
    %v4390 = vpop.f32.mrb[0].mxu0
    %4391 = vmatprep.mubr.f32.mxu0 0.0
    %4392 = vmatmul.mubr.f32.gmra.mrb[0].mxu0 %v3311
    %v4393 = vpop.f32.mrb[0].mxu0
    %v4394 = vadd.f32 %v4320, %v4393
    %v4395 = vpop.f32.mrb[0].mxu0
    %4396 = vmatprep.mubr.f32.mxu0 0.0
    %4397 = vmatmul.mubr.f32.gmra.mrb[0].mxu0 %v3314
    %v4398 = vpop.f32.mrb[0].mxu0
    %v4399 = vadd.f32 %v4320, %v4398
    %v4400 = vpop.f32.mrb[0].mxu0
    %4401 = vmatprep.mubr.f32.mxu0 0.0
    %4402 = vmatmul.mubr.f32.gmra.mrb[0].mxu0 %v3317
    %v4403 = vpop.f32.mrb[0].mxu0
    %v4404 = vadd.f32 %v4320, %v4403
    %v4405 = vpop.f32.mrb[0].mxu0
    %4406 = vmatprep.mubr.f32.mxu0 0.0
    %4407 = vmatmul.mubr.f32.gmra.mrb[0].mxu0 %v3320
    %v4408 = vpop.f32.mrb[0].mxu0
    %v4409 = vadd.f32 %v4320, %v4408
    %v4410 = vpop.f32.mrb[0].mxu0
    %4411 = vmatprep.mubr.f32.mxu0 0.0
    %4412 = vmatmul.mubr.f32.gmra.mrb[0].mxu0 %v3323
    %v4413 = vpop.f32.mrb[0].mxu0
    %v4414 = vadd.f32 %v4320, %v4413
    %v4415 = vpop.f32.mrb[0].mxu0
    %4416 = vmatprep.mubr.f32.mxu0 0.0
    %4417 = vmatmul.mubr.f32.gmra.mrb[0].mxu0 %v3326
    %v4418 = vpop.f32.mrb[0].mxu0
    %v4419 = vadd.f32 %v4320, %v4418
    %v4420 = vpop.f32.mrb[0].mxu0
    %4421 = vmatprep.mubr.f32.mxu0 0.0
    %4422 = vmatmul.mubr.f32.gmra.mrb[0].mxu0 %v3329
    %v4423 = vpop.f32.mrb[0].mxu0
    %v4424 = vadd.f32 %v4320, %v4423
    %v4425 = vpop.f32.mrb[0].mxu0
    %4426 = vdwg.mxu0
    %s4427 = scalar_lea.vmem %s53, 32
    %v4428 = vld [vmem:[%s4427] sm:$0xff]
    %v4429 = vld [vmem:[%s4427 + $0x8] sm:$0xff]
    %v4430 = vld [vmem:[%s4427 + $0x10] sm:$0xff]
    %v4431 = vld [vmem:[%s4427 + $0x18] sm:$0xff]
    %s4432 = scalar_lea.vmem %s59, 1
    %v4433 = vld [vmem:[%s4432] sm:$0x1]
    %v4435 = vlaneseq
    %v4436 = vshrl.u32 %v4435, 7
    %v4437 = vsub.s32 0, %v4436
    %v4438 = vrot.slane %v4433, %v4437
    %4440 = vmatprep.subr.mxu0 0.0
    %4441 = vmatpush1.msra.mxu0 %v4428
    %4442 = vmatprep.subr.mxu0 0.0
    %4443 = vmatpush1.msra.mxu0 %v4429
    %4444 = vmatprep.subr.mxu0 0.0
    %4445 = vmatpush1.msra.mxu0 %v4430
    %4446 = vmatprep.subr.mxu0 0.0
    %4447 = vmatpush1.msra.mxu0 %v4431
    %4448 = vmatprep.subr.mxu0 0.0
    %4449 = vmatpush1.msra.mxu0 0.0
    %4450 = vmatprep.subr.mxu0 0.0
    %4451 = vmatpush1.msra.mxu0 0.0
    %4452 = vmatprep.subr.mxu0 0.0
    %4453 = vmatpush1.msra.mxu0 0.0
    %4454 = vmatprep.subr.mxu0 0.0
    %4455 = vmatpush1.msra.mxu0 0.0
    %4456 = vmatprep.subr.mxu0 0.0
    %4457 = vmatpush1.msra.mxu0 0.0
    %4458 = vmatprep.subr.mxu0 0.0
    %4459 = vmatpush1.msra.mxu0 0.0
    %4460 = vmatprep.subr.mxu0 0.0
    %4461 = vmatpush1.msra.mxu0 0.0
    %4462 = vmatprep.subr.mxu0 0.0
    %4463 = vmatpush1.msra.mxu0 0.0
    %4464 = vmatprep.subr.mxu0 0.0
    %4465 = vmatpush1.msra.mxu0 0.0
    %4466 = vmatprep.subr.mxu0 0.0
    %4467 = vmatpush1.msra.mxu0 0.0
    %4468 = vmatprep.subr.mxu0 0.0
    %4469 = vmatpush1.msra.mxu0 0.0
    %4470 = vmatprep.subr.mxu0 0.0
    %4471 = vmatpush1.msra.mxu0 0.0
    %4472 = vmatprep.subr.mxu0 0.0
    %4473 = vmatpush1.msra.mxu0 0.0
    %4474 = vmatprep.subr.mxu0 0.0
    %4475 = vmatpush1.msra.mxu0 0.0
    %4476 = vmatprep.subr.mxu0 0.0
    %4477 = vmatpush1.msra.mxu0 0.0
    %4478 = vmatprep.subr.mxu0 0.0
    %4479 = vmatpush1.msra.mxu0 0.0
    %4480 = vmatprep.subr.mxu0 0.0
    %4481 = vmatpush1.msra.mxu0 0.0
    %4482 = vmatprep.subr.mxu0 0.0
    %4483 = vmatpush1.msra.mxu0 0.0
    %4484 = vmatprep.subr.mxu0 0.0
    %4485 = vmatpush1.msra.mxu0 0.0
    %4486 = vmatprep.subr.mxu0 0.0
    %4487 = vmatpush1.msra.mxu0 0.0
    %4488 = vmatprep.subr.mxu0 0.0
    %4489 = vmatpush1.msra.mxu0 0.0
    %4490 = vmatprep.subr.mxu0 0.0
    %4491 = vmatpush1.msra.mxu0 0.0
    %4492 = vmatprep.subr.mxu0 0.0
    %4493 = vmatpush1.msra.mxu0 0.0
    %4494 = vmatprep.subr.mxu0 0.0
    %4495 = vmatpush1.msra.mxu0 0.0
    %4496 = vmatprep.subr.mxu0 0.0
    %4497 = vmatpush1.msra.mxu0 0.0
    %4498 = vmatprep.subr.mxu0 0.0
    %4499 = vmatpush1.msra.mxu0 0.0
    %4500 = vmatprep.subr.mxu0 0.0
    %4501 = vmatpush1.msra.mxu0 0.0
    %4502 = vmatprep.subr.mxu0 0.0
    %4503 = vmatpush1.msra.mxu0 0.0
    %4504 = vmatprep.mubr.f32.mxu0 0.0
    %4505 = vmatmul.mubr.f32.gmra.mrb[0].mxu0 %v3308
    %v4506 = vpop.f32.mrb[0].mxu0
    %v4507 = vadd.f32 %v4438, %v4506
    %v4508 = vpop.f32.mrb[0].mxu0
    %4509 = vmatprep.mubr.f32.mxu0 0.0
    %4510 = vmatmul.mubr.f32.gmra.mrb[0].mxu0 %v3311
    %v4511 = vpop.f32.mrb[0].mxu0
    %v4512 = vadd.f32 %v4438, %v4511
    %v4513 = vpop.f32.mrb[0].mxu0
    %4514 = vmatprep.mubr.f32.mxu0 0.0
    %4515 = vmatmul.mubr.f32.gmra.mrb[0].mxu0 %v3314
    %v4516 = vpop.f32.mrb[0].mxu0
    %v4517 = vadd.f32 %v4438, %v4516
    %v4518 = vpop.f32.mrb[0].mxu0
    %4519 = vmatprep.mubr.f32.mxu0 0.0
    %4520 = vmatmul.mubr.f32.gmra.mrb[0].mxu0 %v3317
    %v4521 = vpop.f32.mrb[0].mxu0
    %v4522 = vadd.f32 %v4438, %v4521
    %v4523 = vpop.f32.mrb[0].mxu0
    %4524 = vmatprep.mubr.f32.mxu0 0.0
    %4525 = vmatmul.mubr.f32.gmra.mrb[0].mxu0 %v3320
    %v4526 = vpop.f32.mrb[0].mxu0
    %v4527 = vadd.f32 %v4438, %v4526
    %v4528 = vpop.f32.mrb[0].mxu0
    %4529 = vmatprep.mubr.f32.mxu0 0.0
    %4530 = vmatmul.mubr.f32.gmra.mrb[0].mxu0 %v3323
    %v4531 = vpop.f32.mrb[0].mxu0
    %v4532 = vadd.f32 %v4438, %v4531
    %v4533 = vpop.f32.mrb[0].mxu0
    %4534 = vmatprep.mubr.f32.mxu0 0.0
    %4535 = vmatmul.mubr.f32.gmra.mrb[0].mxu0 %v3326
    %v4536 = vpop.f32.mrb[0].mxu0
    %v4537 = vadd.f32 %v4438, %v4536
    %v4538 = vpop.f32.mrb[0].mxu0
    %4539 = vmatprep.mubr.f32.mxu0 0.0
    %4540 = vmatmul.mubr.f32.gmra.mrb[0].mxu0 %v3329
    %v4541 = vpop.f32.mrb[0].mxu0
    %v4542 = vadd.f32 %v4438, %v4541
    %v4543 = vpop.f32.mrb[0].mxu0
    %4544 = vdwg.mxu0
    %s4545 = scalar_lea.vmem %s61, 64
    %v4546 = vld [vmem:[%s4545] sm:$0xff]
    %v4547 = vld [vmem:[%s4545 + $0x8] sm:$0xff]
    %v4548 = vld [vmem:[%s4545 + $0x10] sm:$0xff]
    %v4549 = vld [vmem:[%s4545 + $0x18] sm:$0xff]
    %v4550 = vld [vmem:[%s4545 + $0x20] sm:$0xff]
    %v4551 = vld [vmem:[%s4545 + $0x28] sm:$0xff]
    %v4552 = vld [vmem:[%s4545 + $0x30] sm:$0xff]
    %v4553 = vld [vmem:[%s4545 + $0x38] sm:$0xff]
    %v4555 = vsel %vm1281, %v4271, 0
    %v4558 = vsel %vm1281, %v4276, 0
    %v4561 = vsel %vm1281, %v4281, 0
    %v4564 = vsel %vm1281, %v4286, 0
    %v4567 = vsel %vm1281, %v4291, 0
    %v4570 = vsel %vm1281, %v4296, 0
    %v4573 = vsel %vm1281, %v4301, 0
    %v4576 = vsel %vm1281, %v4306, 0
    %v4579 = vsel %vm1281, %v4389, 0
    %v4582 = vsel %vm1281, %v4394, 0
    %v4585 = vsel %vm1281, %v4399, 0
    %v4588 = vsel %vm1281, %v4404, 0
    %v4591 = vsel %vm1281, %v4409, 0
    %v4594 = vsel %vm1281, %v4414, 0
    %v4597 = vsel %vm1281, %v4419, 0
    %v4600 = vsel %vm1281, %v4424, 0
    %4602 = vmatprep.subr.mxu0 0.0
    %4603 = vmatpush1.xpose.msra.mxu0 %v4579
    %4604 = vmatprep.subr.mxu0 0.0
    %4605 = vmatpush1.xpose.msra.mxu0 %v4582
    %4606 = vmatprep.subr.mxu0 0.0
    %4607 = vmatpush1.xpose.msra.mxu0 %v4585
    %4608 = vmatprep.subr.mxu0 0.0
    %4609 = vmatpush1.xpose.msra.mxu0 %v4588
    %4610 = vmatprep.subr.mxu0 0.0
    %4611 = vmatpush1.xpose.msra.mxu0 %v4591
    %4612 = vmatprep.subr.mxu0 0.0
    %4613 = vmatpush1.xpose.msra.mxu0 %v4594
    %4614 = vmatprep.subr.mxu0 0.0
    %4615 = vmatpush1.xpose.msra.mxu0 %v4597
    %4616 = vmatprep.subr.mxu0 0.0
    %4617 = vmatpush1.xpose.msra.mxu0 %v4600
    %4618 = vmatprep.subr.mxu0 0.0
    %4619 = vmatpush1.xpose.msra.mxu0 0.0
    %4620 = vmatprep.subr.mxu0 0.0
    %4621 = vmatpush1.xpose.msra.mxu0 0.0
    %4622 = vmatprep.subr.mxu0 0.0
    %4623 = vmatpush1.xpose.msra.mxu0 0.0
    %4624 = vmatprep.subr.mxu0 0.0
    %4625 = vmatpush1.xpose.msra.mxu0 0.0
    %4626 = vmatprep.subr.mxu0 0.0
    %4627 = vmatpush1.xpose.msra.mxu0 0.0
    %4628 = vmatprep.subr.mxu0 0.0
    %4629 = vmatpush1.xpose.msra.mxu0 0.0
    %4630 = vmatprep.subr.mxu0 0.0
    %4631 = vmatpush1.xpose.msra.mxu0 0.0
    %4632 = vmatprep.subr.mxu0 0.0
    %4633 = vmatpush1.xpose.msra.mxu0 0.0
    %4634 = vmatprep.subr.mxu0 0.0
    %4635 = vmatpush1.xpose.msra.mxu0 0.0
    %4636 = vmatprep.subr.mxu0 0.0
    %4637 = vmatpush1.xpose.msra.mxu0 0.0
    %4638 = vmatprep.subr.mxu0 0.0
    %4639 = vmatpush1.xpose.msra.mxu0 0.0
    %4640 = vmatprep.subr.mxu0 0.0
    %4641 = vmatpush1.xpose.msra.mxu0 0.0
    %4642 = vmatprep.subr.mxu0 0.0
    %4643 = vmatpush1.xpose.msra.mxu0 0.0
    %4644 = vmatprep.subr.mxu0 0.0
    %4645 = vmatpush1.xpose.msra.mxu0 0.0
    %4646 = vmatprep.subr.mxu0 0.0
    %4647 = vmatpush1.xpose.msra.mxu0 0.0
    %4648 = vmatprep.subr.mxu0 0.0
    %4649 = vmatpush1.xpose.msra.mxu0 0.0
    %4650 = vmatprep.subr.mxu0 0.0
    %4651 = vmatpush1.xpose.msra.mxu0 0.0
    %4652 = vmatprep.subr.mxu0 0.0
    %4653 = vmatpush1.xpose.msra.mxu0 0.0
    %4654 = vmatprep.subr.mxu0 0.0
    %4655 = vmatpush1.xpose.msra.mxu0 0.0
    %4656 = vmatprep.subr.mxu0 0.0
    %4657 = vmatpush1.xpose.msra.mxu0 0.0
    %4658 = vmatprep.subr.mxu0 0.0
    %4659 = vmatpush1.xpose.msra.mxu0 0.0
    %4660 = vmatprep.subr.mxu0 0.0
    %4661 = vmatpush1.xpose.msra.mxu0 0.0
    %4662 = vmatprep.subr.mxu0 0.0
    %4663 = vmatpush1.xpose.msra.mxu0 0.0
    %4664 = vmatprep.subr.mxu0 0.0
    %4665 = vmatpush1.xpose.msra.mxu0 0.0
    %4666 = vmatprep.mubr.f32.mxu0 0.0
    %4667 = vmatmul.mubr.f32.gmra.mrb[0].mxu0 %v4555
    %v4668 = vpop.f32.mrb[0].mxu0
    %v4669 = vadd.f32 %v4546, %v4668
    %v4670 = vpop.f32.mrb[0].mxu0
    %4671 = vmatprep.mubr.f32.mxu0 0.0
    %4672 = vmatmul.mubr.f32.gmra.mrb[0].mxu0 %v4558
    %v4673 = vpop.f32.mrb[0].mxu0
    %v4674 = vadd.f32 %v4547, %v4673
    %v4675 = vpop.f32.mrb[0].mxu0
    %4676 = vmatprep.mubr.f32.mxu0 0.0
    %4677 = vmatmul.mubr.f32.gmra.mrb[0].mxu0 %v4561
    %v4678 = vpop.f32.mrb[0].mxu0
    %v4679 = vadd.f32 %v4548, %v4678
    %v4680 = vpop.f32.mrb[0].mxu0
    %4681 = vmatprep.mubr.f32.mxu0 0.0
    %4682 = vmatmul.mubr.f32.gmra.mrb[0].mxu0 %v4564
    %v4683 = vpop.f32.mrb[0].mxu0
    %v4684 = vadd.f32 %v4549, %v4683
    %v4685 = vpop.f32.mrb[0].mxu0
    %4686 = vmatprep.mubr.f32.mxu0 0.0
    %4687 = vmatmul.mubr.f32.gmra.mrb[0].mxu0 %v4567
    %v4688 = vpop.f32.mrb[0].mxu0
    %v4689 = vadd.f32 %v4550, %v4688
    %v4690 = vpop.f32.mrb[0].mxu0
    %4691 = vmatprep.mubr.f32.mxu0 0.0
    %4692 = vmatmul.mubr.f32.gmra.mrb[0].mxu0 %v4570
    %v4693 = vpop.f32.mrb[0].mxu0
    %v4694 = vadd.f32 %v4551, %v4693
    %v4695 = vpop.f32.mrb[0].mxu0
    %4696 = vmatprep.mubr.f32.mxu0 0.0
    %4697 = vmatmul.mubr.f32.gmra.mrb[0].mxu0 %v4573
    %v4698 = vpop.f32.mrb[0].mxu0
    %v4699 = vadd.f32 %v4552, %v4698
    %v4700 = vpop.f32.mrb[0].mxu0
    %4701 = vmatprep.mubr.f32.mxu0 0.0
    %4702 = vmatmul.mubr.f32.gmra.mrb[0].mxu0 %v4576
    %v4703 = vpop.f32.mrb[0].mxu0
    %v4704 = vadd.f32 %v4553, %v4703
    %v4705 = vpop.f32.mrb[0].mxu0
    %4706 = vdwg.mxu0
    %v4707 = vsel %vm1435, %v4669, -inf
    %4708 = vmax.xlane.f32.xlu0 %v4707
    %v4709 = vpop.xlane.xlu0 %4708
    %v4710 = vsel %vm1435, %v4674, -inf
    %4711 = vmax.xlane.f32.xlu0 %v4710
    %v4712 = vpop.xlane.xlu0 %4711
    %v4713 = vsel %vm1435, %v4679, -inf
    %4714 = vmax.xlane.f32.xlu0 %v4713
    %v4715 = vpop.xlane.xlu0 %4714
    %v4716 = vsel %vm1435, %v4684, -inf
    %4717 = vmax.xlane.f32.xlu0 %v4716
    %v4718 = vpop.xlane.xlu0 %4717
    %v4719 = vsel %vm1435, %v4689, -inf
    %4720 = vmax.xlane.f32.xlu0 %v4719
    %v4721 = vpop.xlane.xlu0 %4720
    %v4722 = vsel %vm1435, %v4694, -inf
    %4723 = vmax.xlane.f32.xlu0 %v4722
    %v4724 = vpop.xlane.xlu0 %4723
    %v4725 = vsel %vm1435, %v4699, -inf
    %4726 = vmax.xlane.f32.xlu0 %v4725
    %v4727 = vpop.xlane.xlu0 %4726
    %v4728 = vsel %vm1435, %v4704, -inf
    %4729 = vmax.xlane.f32.xlu0 %v4728
    %v4730 = vpop.xlane.xlu0 %4729
    %v4731 = vsub.f32 %v4669, %v4709
    %v4732 = vsub.f32 %v4674, %v4712
    %v4733 = vsub.f32 %v4679, %v4715
    %v4734 = vsub.f32 %v4684, %v4718
    %v4735 = vsub.f32 %v4689, %v4721
    %v4736 = vsub.f32 %v4694, %v4724
    %v4737 = vsub.f32 %v4699, %v4727
    %v4738 = vsub.f32 %v4704, %v4730
    %v4739 = vmul.f32 %v4731, 1.442695
    %v4740 = vpow.pop %v4739
    %v4741 = vmul.f32 %v4732, 1.442695
    %v4742 = vpow.pop %v4741
    %v4743 = vmul.f32 %v4733, 1.442695
    %v4744 = vpow.pop %v4743
    %v4745 = vmul.f32 %v4734, 1.442695
    %v4746 = vpow.pop %v4745
    %v4747 = vmul.f32 %v4735, 1.442695
    %v4748 = vpow.pop %v4747
    %v4749 = vmul.f32 %v4736, 1.442695
    %v4750 = vpow.pop %v4749
    %v4751 = vmul.f32 %v4737, 1.442695
    %v4752 = vpow.pop %v4751
    %v4753 = vmul.f32 %v4738, 1.442695
    %v4754 = vpow.pop %v4753
    %v4755 = vsel %vm1435, %v4740, 0.0
    %4756 = vadd.xlane.f32.xlu0 %v4755
    %v4757 = vpop.xlane.xlu0 %4756
    %v4758 = vsel %vm1435, %v4742, 0.0
    %4759 = vadd.xlane.f32.xlu0 %v4758
    %v4760 = vpop.xlane.xlu0 %4759
    %v4761 = vsel %vm1435, %v4744, 0.0
    %4762 = vadd.xlane.f32.xlu0 %v4761
    %v4763 = vpop.xlane.xlu0 %4762
    %v4764 = vsel %vm1435, %v4746, 0.0
    %4765 = vadd.xlane.f32.xlu0 %v4764
    %v4766 = vpop.xlane.xlu0 %4765
    %v4767 = vsel %vm1435, %v4748, 0.0
    %4768 = vadd.xlane.f32.xlu0 %v4767
    %v4769 = vpop.xlane.xlu0 %4768
    %v4770 = vsel %vm1435, %v4750, 0.0
    %4771 = vadd.xlane.f32.xlu0 %v4770
    %v4772 = vpop.xlane.xlu0 %4771
    %v4773 = vsel %vm1435, %v4752, 0.0
    %4774 = vadd.xlane.f32.xlu0 %v4773
    %v4775 = vpop.xlane.xlu0 %4774
    %v4776 = vsel %vm1435, %v4754, 0.0
    %4777 = vadd.xlane.f32.xlu0 %v4776
    %v4778 = vpop.xlane.xlu0 %4777
    %v4779 = vrcp.pop %v4757
    %v4780 = vrcp.pop %v4760
    %v4781 = vrcp.pop %v4763
    %v4782 = vrcp.pop %v4766
    %v4783 = vrcp.pop %v4769
    %v4784 = vrcp.pop %v4772
    %v4785 = vrcp.pop %v4775
    %v4786 = vrcp.pop %v4778
    %v4787 = vmul.f32 %v4740, %v4779
    %v4788 = vmul.f32 %v4742, %v4780
    %v4789 = vmul.f32 %v4744, %v4781
    %v4790 = vmul.f32 %v4746, %v4782
    %v4791 = vmul.f32 %v4748, %v4783
    %v4792 = vmul.f32 %v4750, %v4784
    %v4793 = vmul.f32 %v4752, %v4785
    %v4794 = vmul.f32 %v4754, %v4786
    %v4796 = vsel %vm1435, %v4787, 0
    %v4799 = vsel %vm1435, %v4788, 0
    %v4802 = vsel %vm1435, %v4789, 0
    %v4805 = vsel %vm1435, %v4790, 0
    %v4808 = vsel %vm1435, %v4791, 0
    %v4811 = vsel %vm1435, %v4792, 0
    %v4814 = vsel %vm1435, %v4793, 0
    %v4817 = vsel %vm1435, %v4794, 0
    %4819 = vmatprep.subr.mxu0 0.0
    %4820 = vmatpush1.msra.mxu0 %v4507
    %4821 = vmatprep.subr.mxu0 0.0
    %4822 = vmatpush1.msra.mxu0 %v4512
    %4823 = vmatprep.subr.mxu0 0.0
    %4824 = vmatpush1.msra.mxu0 %v4517
    %4825 = vmatprep.subr.mxu0 0.0
    %4826 = vmatpush1.msra.mxu0 %v4522
    %4827 = vmatprep.subr.mxu0 0.0
    %4828 = vmatpush1.msra.mxu0 %v4527
    %4829 = vmatprep.subr.mxu0 0.0
    %4830 = vmatpush1.msra.mxu0 %v4532
    %4831 = vmatprep.subr.mxu0 0.0
    %4832 = vmatpush1.msra.mxu0 %v4537
    %4833 = vmatprep.subr.mxu0 0.0
    %4834 = vmatpush1.msra.mxu0 %v4542
    %4835 = vmatprep.subr.mxu0 0.0
    %4836 = vmatpush1.msra.mxu0 0.0
    %4837 = vmatprep.subr.mxu0 0.0
    %4838 = vmatpush1.msra.mxu0 0.0
    %4839 = vmatprep.subr.mxu0 0.0
    %4840 = vmatpush1.msra.mxu0 0.0
    %4841 = vmatprep.subr.mxu0 0.0
    %4842 = vmatpush1.msra.mxu0 0.0
    %4843 = vmatprep.subr.mxu0 0.0
    %4844 = vmatpush1.msra.mxu0 0.0
    %4845 = vmatprep.subr.mxu0 0.0
    %4846 = vmatpush1.msra.mxu0 0.0
    %4847 = vmatprep.subr.mxu0 0.0
    %4848 = vmatpush1.msra.mxu0 0.0
    %4849 = vmatprep.subr.mxu0 0.0
    %4850 = vmatpush1.msra.mxu0 0.0
    %4851 = vmatprep.subr.mxu0 0.0
    %4852 = vmatpush1.msra.mxu0 0.0
    %4853 = vmatprep.subr.mxu0 0.0
    %4854 = vmatpush1.msra.mxu0 0.0
    %4855 = vmatprep.subr.mxu0 0.0
    %4856 = vmatpush1.msra.mxu0 0.0
    %4857 = vmatprep.subr.mxu0 0.0
    %4858 = vmatpush1.msra.mxu0 0.0
    %4859 = vmatprep.subr.mxu0 0.0
    %4860 = vmatpush1.msra.mxu0 0.0
    %4861 = vmatprep.subr.mxu0 0.0
    %4862 = vmatpush1.msra.mxu0 0.0
    %4863 = vmatprep.subr.mxu0 0.0
    %4864 = vmatpush1.msra.mxu0 0.0
    %4865 = vmatprep.subr.mxu0 0.0
    %4866 = vmatpush1.msra.mxu0 0.0
    %4867 = vmatprep.subr.mxu0 0.0
    %4868 = vmatpush1.msra.mxu0 0.0
    %4869 = vmatprep.subr.mxu0 0.0
    %4870 = vmatpush1.msra.mxu0 0.0
    %4871 = vmatprep.subr.mxu0 0.0
    %4872 = vmatpush1.msra.mxu0 0.0
    %4873 = vmatprep.subr.mxu0 0.0
    %4874 = vmatpush1.msra.mxu0 0.0
    %4875 = vmatprep.subr.mxu0 0.0
    %4876 = vmatpush1.msra.mxu0 0.0
    %4877 = vmatprep.subr.mxu0 0.0
    %4878 = vmatpush1.msra.mxu0 0.0
    %4879 = vmatprep.subr.mxu0 0.0
    %4880 = vmatpush1.msra.mxu0 0.0
    %4881 = vmatprep.subr.mxu0 0.0
    %4882 = vmatpush1.msra.mxu0 0.0
    %4883 = vmatprep.mubr.f32.mxu0 0.0
    %4884 = vmatmul.mubr.f32.gmra.mrb[0].mxu0 %v4796
    %v4885 = vpop.f32.mrb[0].mxu0
    %v4886 = vadd.f32 0.0, %v4885
    %v4887 = vpop.f32.mrb[0].mxu0
    %4888 = vmatprep.mubr.f32.mxu0 0.0
    %4889 = vmatmul.mubr.f32.gmra.mrb[0].mxu0 %v4799
    %v4890 = vpop.f32.mrb[0].mxu0
    %v4891 = vadd.f32 0.0, %v4890
    %v4892 = vpop.f32.mrb[0].mxu0
    %4893 = vmatprep.mubr.f32.mxu0 0.0
    %4894 = vmatmul.mubr.f32.gmra.mrb[0].mxu0 %v4802
    %v4895 = vpop.f32.mrb[0].mxu0
    %v4896 = vadd.f32 0.0, %v4895
    %v4897 = vpop.f32.mrb[0].mxu0
    %4898 = vmatprep.mubr.f32.mxu0 0.0
    %4899 = vmatmul.mubr.f32.gmra.mrb[0].mxu0 %v4805
    %v4900 = vpop.f32.mrb[0].mxu0
    %v4901 = vadd.f32 0.0, %v4900
    %v4902 = vpop.f32.mrb[0].mxu0
    %4903 = vmatprep.mubr.f32.mxu0 0.0
    %4904 = vmatmul.mubr.f32.gmra.mrb[0].mxu0 %v4808
    %v4905 = vpop.f32.mrb[0].mxu0
    %v4906 = vadd.f32 0.0, %v4905
    %v4907 = vpop.f32.mrb[0].mxu0
    %4908 = vmatprep.mubr.f32.mxu0 0.0
    %4909 = vmatmul.mubr.f32.gmra.mrb[0].mxu0 %v4811
    %v4910 = vpop.f32.mrb[0].mxu0
    %v4911 = vadd.f32 0.0, %v4910
    %v4912 = vpop.f32.mrb[0].mxu0
    %4913 = vmatprep.mubr.f32.mxu0 0.0
    %4914 = vmatmul.mubr.f32.gmra.mrb[0].mxu0 %v4814
    %v4915 = vpop.f32.mrb[0].mxu0
    %v4916 = vadd.f32 0.0, %v4915
    %v4917 = vpop.f32.mrb[0].mxu0
    %4918 = vmatprep.mubr.f32.mxu0 0.0
    %4919 = vmatmul.mubr.f32.gmra.mrb[0].mxu0 %v4817
    %v4920 = vpop.f32.mrb[0].mxu0
    %v4921 = vadd.f32 0.0, %v4920
    %v4922 = vpop.f32.mrb[0].mxu0
    %4923 = vdwg.mxu0
    %s4924 = scalar_lea.vmem %s63, 16
    %v4925 = vld [vmem:[%s4924] sm:$0xff]
    %v4926 = vld [vmem:[%s4924 + $0x8] sm:$0xff]
    %v4928 = vsel %vm1281, %v4886, 0
    %v4931 = vsel %vm1281, %v4891, 0
    %v4934 = vsel %vm1281, %v4896, 0
    %v4937 = vsel %vm1281, %v4901, 0
    %v4940 = vsel %vm1281, %v4906, 0
    %v4943 = vsel %vm1281, %v4911, 0
    %v4946 = vsel %vm1281, %v4916, 0
    %v4949 = vsel %vm1281, %v4921, 0
    %4951 = vmatprep.subr.mxu0 0.0
    %4952 = vmatpush1.msra.mxu0 %v4925
    %4953 = vmatprep.subr.mxu0 0.0
    %4954 = vmatpush1.msra.mxu0 %v4926
    %4955 = vmatprep.subr.mxu0 0.0
    %4956 = vmatpush1.msra.mxu0 0.0
    %4957 = vmatprep.subr.mxu0 0.0
    %4958 = vmatpush1.msra.mxu0 0.0
    %4959 = vmatprep.subr.mxu0 0.0
    %4960 = vmatpush1.msra.mxu0 0.0
    %4961 = vmatprep.subr.mxu0 0.0
    %4962 = vmatpush1.msra.mxu0 0.0
    %4963 = vmatprep.subr.mxu0 0.0
    %4964 = vmatpush1.msra.mxu0 0.0
    %4965 = vmatprep.subr.mxu0 0.0
    %4966 = vmatpush1.msra.mxu0 0.0
    %4967 = vmatprep.subr.mxu0 0.0
    %4968 = vmatpush1.msra.mxu0 0.0
    %4969 = vmatprep.subr.mxu0 0.0
    %4970 = vmatpush1.msra.mxu0 0.0
    %4971 = vmatprep.subr.mxu0 0.0
    %4972 = vmatpush1.msra.mxu0 0.0
    %4973 = vmatprep.subr.mxu0 0.0
    %4974 = vmatpush1.msra.mxu0 0.0
    %4975 = vmatprep.subr.mxu0 0.0
    %4976 = vmatpush1.msra.mxu0 0.0
    %4977 = vmatprep.subr.mxu0 0.0
    %4978 = vmatpush1.msra.mxu0 0.0
    %4979 = vmatprep.subr.mxu0 0.0
    %4980 = vmatpush1.msra.mxu0 0.0
    %4981 = vmatprep.subr.mxu0 0.0
    %4982 = vmatpush1.msra.mxu0 0.0
    %4983 = vmatprep.subr.mxu0 0.0
    %4984 = vmatpush1.msra.mxu0 0.0
    %4985 = vmatprep.subr.mxu0 0.0
    %4986 = vmatpush1.msra.mxu0 0.0
    %4987 = vmatprep.subr.mxu0 0.0
    %4988 = vmatpush1.msra.mxu0 0.0
    %4989 = vmatprep.subr.mxu0 0.0
    %4990 = vmatpush1.msra.mxu0 0.0
    %4991 = vmatprep.subr.mxu0 0.0
    %4992 = vmatpush1.msra.mxu0 0.0
    %4993 = vmatprep.subr.mxu0 0.0
    %4994 = vmatpush1.msra.mxu0 0.0
    %4995 = vmatprep.subr.mxu0 0.0
    %4996 = vmatpush1.msra.mxu0 0.0
    %4997 = vmatprep.subr.mxu0 0.0
    %4998 = vmatpush1.msra.mxu0 0.0
    %4999 = vmatprep.subr.mxu0 0.0
    %5000 = vmatpush1.msra.mxu0 0.0
    %5001 = vmatprep.subr.mxu0 0.0
    %5002 = vmatpush1.msra.mxu0 0.0
    %5003 = vmatprep.subr.mxu0 0.0
    %5004 = vmatpush1.msra.mxu0 0.0
    %5005 = vmatprep.subr.mxu0 0.0
    %5006 = vmatpush1.msra.mxu0 0.0
    %5007 = vmatprep.subr.mxu0 0.0
    %5008 = vmatpush1.msra.mxu0 0.0
    %5009 = vmatprep.subr.mxu0 0.0
    %5010 = vmatpush1.msra.mxu0 0.0
    %5011 = vmatprep.subr.mxu0 0.0
    %5012 = vmatpush1.msra.mxu0 0.0
    %5013 = vmatprep.subr.mxu0 0.0
    %5014 = vmatpush1.msra.mxu0 0.0
    %5015 = vmatprep.mubr.f32.mxu0 0.0
    %5016 = vmatmul.mubr.f32.gmra.mrb[0].mxu0 %v4928
    %v5017 = vpop.f32.mrb[0].mxu0
    %v5018 = vadd.f32 0.0, %v5017
    %v5019 = vpop.f32.mrb[0].mxu0
    %5020 = vmatprep.mubr.f32.mxu0 0.0
    %5021 = vmatmul.mubr.f32.gmra.mrb[0].mxu0 %v4931
    %v5022 = vpop.f32.mrb[0].mxu0
    %v5023 = vadd.f32 0.0, %v5022
    %v5024 = vpop.f32.mrb[0].mxu0
    %5025 = vmatprep.mubr.f32.mxu0 0.0
    %5026 = vmatmul.mubr.f32.gmra.mrb[0].mxu0 %v4934
    %v5027 = vpop.f32.mrb[0].mxu0
    %v5028 = vadd.f32 0.0, %v5027
    %v5029 = vpop.f32.mrb[0].mxu0
    %5030 = vmatprep.mubr.f32.mxu0 0.0
    %5031 = vmatmul.mubr.f32.gmra.mrb[0].mxu0 %v4937
    %v5032 = vpop.f32.mrb[0].mxu0
    %v5033 = vadd.f32 0.0, %v5032
    %v5034 = vpop.f32.mrb[0].mxu0
    %5035 = vmatprep.mubr.f32.mxu0 0.0
    %5036 = vmatmul.mubr.f32.gmra.mrb[0].mxu0 %v4940
    %v5037 = vpop.f32.mrb[0].mxu0
    %v5038 = vadd.f32 0.0, %v5037
    %v5039 = vpop.f32.mrb[0].mxu0
    %5040 = vmatprep.mubr.f32.mxu0 0.0
    %5041 = vmatmul.mubr.f32.gmra.mrb[0].mxu0 %v4943
    %v5042 = vpop.f32.mrb[0].mxu0
    %v5043 = vadd.f32 0.0, %v5042
    %v5044 = vpop.f32.mrb[0].mxu0
    %5045 = vmatprep.mubr.f32.mxu0 0.0
    %5046 = vmatmul.mubr.f32.gmra.mrb[0].mxu0 %v4946
    %v5047 = vpop.f32.mrb[0].mxu0
    %v5048 = vadd.f32 0.0, %v5047
    %v5049 = vpop.f32.mrb[0].mxu0
    %5050 = vmatprep.mubr.f32.mxu0 0.0
    %5051 = vmatmul.mubr.f32.gmra.mrb[0].mxu0 %v4949
    %v5052 = vpop.f32.mrb[0].mxu0
    %v5053 = vadd.f32 0.0, %v5052
    %v5054 = vpop.f32.mrb[0].mxu0
    %5055 = vdwg.mxu0
    %v5056 = vadd.f32 %v4183, %v5018
    %v5057 = vadd.f32 %v4184, %v5023
    %v5058 = vadd.f32 %v4185, %v5028
    %v5059 = vadd.f32 %v4186, %v5033
    %v5060 = vadd.f32 %v4187, %v5038
    %v5061 = vadd.f32 %v4188, %v5043
    %v5062 = vadd.f32 %v4189, %v5048
    %v5063 = vadd.f32 %v4190, %v5053
    %v5064 = vadd.f32 %v3129, %v5056
    %v5065 = vadd.f32 %v3130, %v5057
    %v5066 = vadd.f32 %v3131, %v5058
    %v5067 = vadd.f32 %v3132, %v5059
    %v5068 = vadd.f32 %v3133, %v5060
    %v5069 = vadd.f32 %v3134, %v5061
    %v5070 = vadd.f32 %v3135, %v5062
    %v5071 = vadd.f32 %v3136, %v5063
    %v5072 = vsel %vm608, %v5064, 0.0
    %5073 = vadd.xlane.f32.xlu0 %v5072
    %v5074 = vpop.xlane.xlu0 %5073
    %v5075 = vsel %vm608, %v5065, 0.0
    %5076 = vadd.xlane.f32.xlu0 %v5075
    %v5077 = vpop.xlane.xlu0 %5076
    %v5078 = vsel %vm608, %v5066, 0.0
    %5079 = vadd.xlane.f32.xlu0 %v5078
    %v5080 = vpop.xlane.xlu0 %5079
    %v5081 = vsel %vm608, %v5067, 0.0
    %5082 = vadd.xlane.f32.xlu0 %v5081
    %v5083 = vpop.xlane.xlu0 %5082
    %v5084 = vsel %vm608, %v5068, 0.0
    %5085 = vadd.xlane.f32.xlu0 %v5084
    %v5086 = vpop.xlane.xlu0 %5085
    %v5087 = vsel %vm608, %v5069, 0.0
    %5088 = vadd.xlane.f32.xlu0 %v5087
    %v5089 = vpop.xlane.xlu0 %5088
    %v5090 = vsel %vm608, %v5070, 0.0
    %5091 = vadd.xlane.f32.xlu0 %v5090
    %v5092 = vpop.xlane.xlu0 %5091
    %v5093 = vsel %vm608, %v5071, 0.0
    %5094 = vadd.xlane.f32.xlu0 %v5093
    %v5095 = vpop.xlane.xlu0 %5094
    %v5096 = vmul.f32 %v5074, %v633
    %v5097 = vmul.f32 %v5077, %v633
    %v5098 = vmul.f32 %v5080, %v633
    %v5099 = vmul.f32 %v5083, %v633
    %v5100 = vmul.f32 %v5086, %v633
    %v5101 = vmul.f32 %v5089, %v633
    %v5102 = vmul.f32 %v5092, %v633
    %v5103 = vmul.f32 %v5095, %v633
    %v5104 = vsub.f32 %v5064, %v5096
    %v5105 = vsub.f32 %v5065, %v5097
    %v5106 = vsub.f32 %v5066, %v5098
    %v5107 = vsub.f32 %v5067, %v5099
    %v5108 = vsub.f32 %v5068, %v5100
    %v5109 = vsub.f32 %v5069, %v5101
    %v5110 = vsub.f32 %v5070, %v5102
    %v5111 = vsub.f32 %v5071, %v5103
    %v5112 = vmul.f32 %v5104, %v5104
    %v5113 = vmul.f32 %v5105, %v5105
    %v5114 = vmul.f32 %v5106, %v5106
    %v5115 = vmul.f32 %v5107, %v5107
    %v5116 = vmul.f32 %v5108, %v5108
    %v5117 = vmul.f32 %v5109, %v5109
    %v5118 = vmul.f32 %v5110, %v5110
    %v5119 = vmul.f32 %v5111, %v5111
    %v5120 = vsel %vm608, %v5112, 0.0
    %5121 = vadd.xlane.f32.xlu0 %v5120
    %v5122 = vpop.xlane.xlu0 %5121
    %v5123 = vsel %vm608, %v5113, 0.0
    %5124 = vadd.xlane.f32.xlu0 %v5123
    %v5125 = vpop.xlane.xlu0 %5124
    %v5126 = vsel %vm608, %v5114, 0.0
    %5127 = vadd.xlane.f32.xlu0 %v5126
    %v5128 = vpop.xlane.xlu0 %5127
    %v5129 = vsel %vm608, %v5115, 0.0
    %5130 = vadd.xlane.f32.xlu0 %v5129
    %v5131 = vpop.xlane.xlu0 %5130
    %v5132 = vsel %vm608, %v5116, 0.0
    %5133 = vadd.xlane.f32.xlu0 %v5132
    %v5134 = vpop.xlane.xlu0 %5133
    %v5135 = vsel %vm608, %v5117, 0.0
    %5136 = vadd.xlane.f32.xlu0 %v5135
    %v5137 = vpop.xlane.xlu0 %5136
    %v5138 = vsel %vm608, %v5118, 0.0
    %5139 = vadd.xlane.f32.xlu0 %v5138
    %v5140 = vpop.xlane.xlu0 %5139
    %v5141 = vsel %vm608, %v5119, 0.0
    %5142 = vadd.xlane.f32.xlu0 %v5141
    %v5143 = vpop.xlane.xlu0 %5142
    %v5144 = vmul.f32 %v5122, %v633
    %v5145 = vmul.f32 %v5125, %v633
    %v5146 = vmul.f32 %v5128, %v633
    %v5147 = vmul.f32 %v5131, %v633
    %v5148 = vmul.f32 %v5134, %v633
    %v5149 = vmul.f32 %v5137, %v633
    %v5150 = vmul.f32 %v5140, %v633
    %v5151 = vmul.f32 %v5143, %v633
    %v5152 = vadd.f32 %v5144, 1e-05
    %v5153 = vadd.f32 %v5145, 1e-05
    %v5154 = vadd.f32 %v5146, 1e-05
    %v5155 = vadd.f32 %v5147, 1e-05
    %v5156 = vadd.f32 %v5148, 1e-05
    %v5157 = vadd.f32 %v5149, 1e-05
    %v5158 = vadd.f32 %v5150, 1e-05
    %v5159 = vadd.f32 %v5151, 1e-05
    %v5160 = vrsqrt.pop %v5152
    %v5161 = vrsqrt.pop %v5153
    %v5162 = vrsqrt.pop %v5154
    %v5163 = vrsqrt.pop %v5155
    %v5164 = vrsqrt.pop %v5156
    %v5165 = vrsqrt.pop %v5157
    %v5166 = vrsqrt.pop %v5158
    %v5167 = vrsqrt.pop %v5159
    %v5168 = vmul.f32 %v5104, %v5160
    %v5169 = vmul.f32 %v5105, %v5161
    %v5170 = vmul.f32 %v5106, %v5162
    %v5171 = vmul.f32 %v5107, %v5163
    %v5172 = vmul.f32 %v5108, %v5164
    %v5173 = vmul.f32 %v5109, %v5165
    %v5174 = vmul.f32 %v5110, %v5166
    %v5175 = vmul.f32 %v5111, %v5167
    %v5177 = vlaneseq
    %v5178 = vshrl.u32 %v5177, 7
    %v5179 = vsub.s32 0, %v5178
    %v5180 = vrot.slane %v3140, %v5179
    %v5182 = vmul.f32 %v5168, %v5180
    %v5183 = vmul.f32 %v5169, %v5180
    %v5184 = vmul.f32 %v5170, %v5180
    %v5185 = vmul.f32 %v5171, %v5180
    %v5186 = vmul.f32 %v5172, %v5180
    %v5187 = vmul.f32 %v5173, %v5180
    %v5188 = vmul.f32 %v5174, %v5180
    %v5189 = vmul.f32 %v5175, %v5180
    %v5191 = vlaneseq
    %v5192 = vshrl.u32 %v5191, 7
    %v5193 = vsub.s32 0, %v5192
    %v5194 = vrot.slane %v3141, %v5193
    %v5196 = vadd.f32 %v5182, %v5194
    %v5197 = vadd.f32 %v5183, %v5194
    %v5198 = vadd.f32 %v5184, %v5194
    %v5199 = vadd.f32 %v5185, %v5194
    %v5200 = vadd.f32 %v5186, %v5194
    %v5201 = vadd.f32 %v5187, %v5194
    %v5202 = vadd.f32 %v5188, %v5194
    %v5203 = vadd.f32 %v5189, %v5194
    %v5205 = vlaneseq
    %v5206 = vshrl.u32 %v5205, 7
    %v5207 = vsub.s32 0, %v5206
    %v5208 = vrot.slane %v3146, %v5207
    %v5211 = vsel %vm608, %v5196, 0
    %v5214 = vsel %vm608, %v5197, 0
    %v5217 = vsel %vm608, %v5198, 0
    %v5220 = vsel %vm608, %v5199, 0
    %v5223 = vsel %vm608, %v5200, 0
    %v5226 = vsel %vm608, %v5201, 0
    %v5229 = vsel %vm608, %v5202, 0
    %v5232 = vsel %vm608, %v5203, 0
    %5234 = vmatprep.subr.mxu0 0.0
    %5235 = vmatpush1.msra.mxu0 %v3142
    %5236 = vmatprep.subr.mxu0 0.0
    %5237 = vmatpush1.msra.mxu0 %v3143
    %5238 = vmatprep.subr.mxu0 0.0
    %5239 = vmatpush1.msra.mxu0 %v3144
    %5240 = vmatprep.subr.mxu0 0.0
    %5241 = vmatpush1.msra.mxu0 %v3145
    %5242 = vmatprep.subr.mxu0 0.0
    %5243 = vmatpush1.msra.mxu0 0.0
    %5244 = vmatprep.subr.mxu0 0.0
    %5245 = vmatpush1.msra.mxu0 0.0
    %5246 = vmatprep.subr.mxu0 0.0
    %5247 = vmatpush1.msra.mxu0 0.0
    %5248 = vmatprep.subr.mxu0 0.0
    %5249 = vmatpush1.msra.mxu0 0.0
    %5250 = vmatprep.subr.mxu0 0.0
    %5251 = vmatpush1.msra.mxu0 0.0
    %5252 = vmatprep.subr.mxu0 0.0
    %5253 = vmatpush1.msra.mxu0 0.0
    %5254 = vmatprep.subr.mxu0 0.0
    %5255 = vmatpush1.msra.mxu0 0.0
    %5256 = vmatprep.subr.mxu0 0.0
    %5257 = vmatpush1.msra.mxu0 0.0
    %5258 = vmatprep.subr.mxu0 0.0
    %5259 = vmatpush1.msra.mxu0 0.0
    %5260 = vmatprep.subr.mxu0 0.0
    %5261 = vmatpush1.msra.mxu0 0.0
    %5262 = vmatprep.subr.mxu0 0.0
    %5263 = vmatpush1.msra.mxu0 0.0
    %5264 = vmatprep.subr.mxu0 0.0
    %5265 = vmatpush1.msra.mxu0 0.0
    %5266 = vmatprep.subr.mxu0 0.0
    %5267 = vmatpush1.msra.mxu0 0.0
    %5268 = vmatprep.subr.mxu0 0.0
    %5269 = vmatpush1.msra.mxu0 0.0
    %5270 = vmatprep.subr.mxu0 0.0
    %5271 = vmatpush1.msra.mxu0 0.0
    %5272 = vmatprep.subr.mxu0 0.0
    %5273 = vmatpush1.msra.mxu0 0.0
    %5274 = vmatprep.subr.mxu0 0.0
    %5275 = vmatpush1.msra.mxu0 0.0
    %5276 = vmatprep.subr.mxu0 0.0
    %5277 = vmatpush1.msra.mxu0 0.0
    %5278 = vmatprep.subr.mxu0 0.0
    %5279 = vmatpush1.msra.mxu0 0.0
    %5280 = vmatprep.subr.mxu0 0.0
    %5281 = vmatpush1.msra.mxu0 0.0
    %5282 = vmatprep.subr.mxu0 0.0
    %5283 = vmatpush1.msra.mxu0 0.0
    %5284 = vmatprep.subr.mxu0 0.0
    %5285 = vmatpush1.msra.mxu0 0.0
    %5286 = vmatprep.subr.mxu0 0.0
    %5287 = vmatpush1.msra.mxu0 0.0
    %5288 = vmatprep.subr.mxu0 0.0
    %5289 = vmatpush1.msra.mxu0 0.0
    %5290 = vmatprep.subr.mxu0 0.0
    %5291 = vmatpush1.msra.mxu0 0.0
    %5292 = vmatprep.subr.mxu0 0.0
    %5293 = vmatpush1.msra.mxu0 0.0
    %5294 = vmatprep.subr.mxu0 0.0
    %5295 = vmatpush1.msra.mxu0 0.0
    %5296 = vmatprep.subr.mxu0 0.0
    %5297 = vmatpush1.msra.mxu0 0.0
    %5298 = vmatprep.mubr.f32.mxu0 0.0
    %5299 = vmatmul.mubr.f32.gmra.mrb[0].mxu0 %v5211
    %v5300 = vpop.f32.mrb[0].mxu0
    %v5301 = vadd.f32 %v5208, %v5300
    %v5302 = vpop.f32.mrb[0].mxu0
    %5303 = vmatprep.mubr.f32.mxu0 0.0
    %5304 = vmatmul.mubr.f32.gmra.mrb[0].mxu0 %v5214
    %v5305 = vpop.f32.mrb[0].mxu0
    %v5306 = vadd.f32 %v5208, %v5305
    %v5307 = vpop.f32.mrb[0].mxu0
    %5308 = vmatprep.mubr.f32.mxu0 0.0
    %5309 = vmatmul.mubr.f32.gmra.mrb[0].mxu0 %v5217
    %v5310 = vpop.f32.mrb[0].mxu0
    %v5311 = vadd.f32 %v5208, %v5310
    %v5312 = vpop.f32.mrb[0].mxu0
    %5313 = vmatprep.mubr.f32.mxu0 0.0
    %5314 = vmatmul.mubr.f32.gmra.mrb[0].mxu0 %v5220
    %v5315 = vpop.f32.mrb[0].mxu0
    %v5316 = vadd.f32 %v5208, %v5315
    %v5317 = vpop.f32.mrb[0].mxu0
    %5318 = vmatprep.mubr.f32.mxu0 0.0
    %5319 = vmatmul.mubr.f32.gmra.mrb[0].mxu0 %v5223
    %v5320 = vpop.f32.mrb[0].mxu0
    %v5321 = vadd.f32 %v5208, %v5320
    %v5322 = vpop.f32.mrb[0].mxu0
    %5323 = vmatprep.mubr.f32.mxu0 0.0
    %5324 = vmatmul.mubr.f32.gmra.mrb[0].mxu0 %v5226
    %v5325 = vpop.f32.mrb[0].mxu0
    %v5326 = vadd.f32 %v5208, %v5325
    %v5327 = vpop.f32.mrb[0].mxu0
    %5328 = vmatprep.mubr.f32.mxu0 0.0
    %5329 = vmatmul.mubr.f32.gmra.mrb[0].mxu0 %v5229
    %v5330 = vpop.f32.mrb[0].mxu0
    %v5331 = vadd.f32 %v5208, %v5330
    %v5332 = vpop.f32.mrb[0].mxu0
    %5333 = vmatprep.mubr.f32.mxu0 0.0
    %5334 = vmatmul.mubr.f32.gmra.mrb[0].mxu0 %v5232
    %v5335 = vpop.f32.mrb[0].mxu0
    %v5336 = vadd.f32 %v5208, %v5335
    %v5337 = vpop.f32.mrb[0].mxu0
    %5338 = vdwg.mxu0
    %v5339 = vmul.f32 %v5301, 0.5
    %v5340 = vmul.f32 %v5306, 0.5
    %v5341 = vmul.f32 %v5311, 0.5
    %v5342 = vmul.f32 %v5316, 0.5
    %v5343 = vmul.f32 %v5321, 0.5
    %v5344 = vmul.f32 %v5326, 0.5
    %v5345 = vmul.f32 %v5331, 0.5
    %v5346 = vmul.f32 %v5336, 0.5
    %v5347 = vmul.f32 %v5301, 0.044715
    %v5348 = vmul.f32 %v5306, 0.044715
    %v5349 = vmul.f32 %v5311, 0.044715
    %v5350 = vmul.f32 %v5316, 0.044715
    %v5351 = vmul.f32 %v5321, 0.044715
    %v5352 = vmul.f32 %v5326, 0.044715
    %v5353 = vmul.f32 %v5331, 0.044715
    %v5354 = vmul.f32 %v5336, 0.044715
    %v5355 = vmul.f32 %v5347, %v5301
    %v5356 = vmul.f32 %v5348, %v5306
    %v5357 = vmul.f32 %v5349, %v5311
    %v5358 = vmul.f32 %v5350, %v5316
    %v5359 = vmul.f32 %v5351, %v5321
    %v5360 = vmul.f32 %v5352, %v5326
    %v5361 = vmul.f32 %v5353, %v5331
    %v5362 = vmul.f32 %v5354, %v5336
    %v5363 = vmul.f32 %v5355, %v5301
    %v5364 = vmul.f32 %v5356, %v5306
    %v5365 = vmul.f32 %v5357, %v5311
    %v5366 = vmul.f32 %v5358, %v5316
    %v5367 = vmul.f32 %v5359, %v5321
    %v5368 = vmul.f32 %v5360, %v5326
    %v5369 = vmul.f32 %v5361, %v5331
    %v5370 = vmul.f32 %v5362, %v5336
    %v5371 = vadd.f32 %v5301, %v5363
    %v5372 = vadd.f32 %v5306, %v5364
    %v5373 = vadd.f32 %v5311, %v5365
    %v5374 = vadd.f32 %v5316, %v5366
    %v5375 = vadd.f32 %v5321, %v5367
    %v5376 = vadd.f32 %v5326, %v5368
    %v5377 = vadd.f32 %v5331, %v5369
    %v5378 = vadd.f32 %v5336, %v5370
    %v5379 = vmul.f32 %v5371, 0.7978846
    %v5380 = vmul.f32 %v5372, 0.7978846
    %v5381 = vmul.f32 %v5373, 0.7978846
    %v5382 = vmul.f32 %v5374, 0.7978846
    %v5383 = vmul.f32 %v5375, 0.7978846
    %v5384 = vmul.f32 %v5376, 0.7978846
    %v5385 = vmul.f32 %v5377, 0.7978846
    %v5386 = vmul.f32 %v5378, 0.7978846
    %v5387 = vtanh.pop %v5379
    %v5388 = vtanh.pop %v5380
    %v5389 = vtanh.pop %v5381
    %v5390 = vtanh.pop %v5382
    %v5391 = vtanh.pop %v5383
    %v5392 = vtanh.pop %v5384
    %v5393 = vtanh.pop %v5385
    %v5394 = vtanh.pop %v5386
    %v5395 = vadd.f32 %v5387, 1.0
    %v5396 = vadd.f32 %v5388, 1.0
    %v5397 = vadd.f32 %v5389, 1.0
    %v5398 = vadd.f32 %v5390, 1.0
    %v5399 = vadd.f32 %v5391, 1.0
    %v5400 = vadd.f32 %v5392, 1.0
    %v5401 = vadd.f32 %v5393, 1.0
    %v5402 = vadd.f32 %v5394, 1.0
    %v5403 = vmul.f32 %v5339, %v5395
    %v5404 = vmul.f32 %v5340, %v5396
    %v5405 = vmul.f32 %v5341, %v5397
    %v5406 = vmul.f32 %v5342, %v5398
    %v5407 = vmul.f32 %v5343, %v5399
    %v5408 = vmul.f32 %v5344, %v5400
    %v5409 = vmul.f32 %v5345, %v5401
    %v5410 = vmul.f32 %v5346, %v5402
    %v5412 = vlaneseq
    %v5413 = vshrl.u32 %v5412, 7
    %v5414 = vsub.s32 0, %v5413
    %v5415 = vrot.slane %v3163, %v5414
    %5417 = vmatprep.subr.mxu0 0.0
    %5418 = vmatpush1.msra.mxu0 %v3147
    %5419 = vmatprep.subr.mxu0 0.0
    %5420 = vmatpush1.msra.mxu0 %v3148
    %5421 = vmatprep.subr.mxu0 0.0
    %5422 = vmatpush1.msra.mxu0 %v3149
    %5423 = vmatprep.subr.mxu0 0.0
    %5424 = vmatpush1.msra.mxu0 %v3150
    %5425 = vmatprep.subr.mxu0 0.0
    %5426 = vmatpush1.msra.mxu0 %v3151
    %5427 = vmatprep.subr.mxu0 0.0
    %5428 = vmatpush1.msra.mxu0 %v3152
    %5429 = vmatprep.subr.mxu0 0.0
    %5430 = vmatpush1.msra.mxu0 %v3153
    %5431 = vmatprep.subr.mxu0 0.0
    %5432 = vmatpush1.msra.mxu0 %v3154
    %5433 = vmatprep.subr.mxu0 0.0
    %5434 = vmatpush1.msra.mxu0 %v3155
    %5435 = vmatprep.subr.mxu0 0.0
    %5436 = vmatpush1.msra.mxu0 %v3156
    %5437 = vmatprep.subr.mxu0 0.0
    %5438 = vmatpush1.msra.mxu0 %v3157
    %5439 = vmatprep.subr.mxu0 0.0
    %5440 = vmatpush1.msra.mxu0 %v3158
    %5441 = vmatprep.subr.mxu0 0.0
    %5442 = vmatpush1.msra.mxu0 %v3159
    %5443 = vmatprep.subr.mxu0 0.0
    %5444 = vmatpush1.msra.mxu0 %v3160
    %5445 = vmatprep.subr.mxu0 0.0
    %5446 = vmatpush1.msra.mxu0 %v3161
    %5447 = vmatprep.subr.mxu0 0.0
    %5448 = vmatpush1.msra.mxu0 %v3162
    %5449 = vmatprep.subr.mxu0 0.0
    %5450 = vmatpush1.msra.mxu0 0.0
    %5451 = vmatprep.subr.mxu0 0.0
    %5452 = vmatpush1.msra.mxu0 0.0
    %5453 = vmatprep.subr.mxu0 0.0
    %5454 = vmatpush1.msra.mxu0 0.0
    %5455 = vmatprep.subr.mxu0 0.0
    %5456 = vmatpush1.msra.mxu0 0.0
    %5457 = vmatprep.subr.mxu0 0.0
    %5458 = vmatpush1.msra.mxu0 0.0
    %5459 = vmatprep.subr.mxu0 0.0
    %5460 = vmatpush1.msra.mxu0 0.0
    %5461 = vmatprep.subr.mxu0 0.0
    %5462 = vmatpush1.msra.mxu0 0.0
    %5463 = vmatprep.subr.mxu0 0.0
    %5464 = vmatpush1.msra.mxu0 0.0
    %5465 = vmatprep.subr.mxu0 0.0
    %5466 = vmatpush1.msra.mxu0 0.0
    %5467 = vmatprep.subr.mxu0 0.0
    %5468 = vmatpush1.msra.mxu0 0.0
    %5469 = vmatprep.subr.mxu0 0.0
    %5470 = vmatpush1.msra.mxu0 0.0
    %5471 = vmatprep.subr.mxu0 0.0
    %5472 = vmatpush1.msra.mxu0 0.0
    %5473 = vmatprep.subr.mxu0 0.0
    %5474 = vmatpush1.msra.mxu0 0.0
    %5475 = vmatprep.subr.mxu0 0.0
    %5476 = vmatpush1.msra.mxu0 0.0
    %5477 = vmatprep.subr.mxu0 0.0
    %5478 = vmatpush1.msra.mxu0 0.0
    %5479 = vmatprep.subr.mxu0 0.0
    %5480 = vmatpush1.msra.mxu0 0.0
    %5481 = vmatprep.mubr.f32.mxu0 0.0
    %5482 = vmatmul.mubr.f32.gmra.mrb[0].mxu0 %v5403
    %v5483 = vpop.f32.mrb[0].mxu0
    %v5484 = vadd.f32 %v5415, %v5483
    %v5485 = vpop.f32.mrb[0].mxu0
    %5486 = vmatprep.mubr.f32.mxu0 0.0
    %5487 = vmatmul.mubr.f32.gmra.mrb[0].mxu0 %v5404
    %v5488 = vpop.f32.mrb[0].mxu0
    %v5489 = vadd.f32 %v5415, %v5488
    %v5490 = vpop.f32.mrb[0].mxu0
    %5491 = vmatprep.mubr.f32.mxu0 0.0
    %5492 = vmatmul.mubr.f32.gmra.mrb[0].mxu0 %v5405
    %v5493 = vpop.f32.mrb[0].mxu0
    %v5494 = vadd.f32 %v5415, %v5493
    %v5495 = vpop.f32.mrb[0].mxu0
    %5496 = vmatprep.mubr.f32.mxu0 0.0
    %5497 = vmatmul.mubr.f32.gmra.mrb[0].mxu0 %v5406
    %v5498 = vpop.f32.mrb[0].mxu0
    %v5499 = vadd.f32 %v5415, %v5498
    %v5500 = vpop.f32.mrb[0].mxu0
    %5501 = vmatprep.mubr.f32.mxu0 0.0
    %5502 = vmatmul.mubr.f32.gmra.mrb[0].mxu0 %v5407
    %v5503 = vpop.f32.mrb[0].mxu0
    %v5504 = vadd.f32 %v5415, %v5503
    %v5505 = vpop.f32.mrb[0].mxu0
    %5506 = vmatprep.mubr.f32.mxu0 0.0
    %5507 = vmatmul.mubr.f32.gmra.mrb[0].mxu0 %v5408
    %v5508 = vpop.f32.mrb[0].mxu0
    %v5509 = vadd.f32 %v5415, %v5508
    %v5510 = vpop.f32.mrb[0].mxu0
    %5511 = vmatprep.mubr.f32.mxu0 0.0
    %5512 = vmatmul.mubr.f32.gmra.mrb[0].mxu0 %v5409
    %v5513 = vpop.f32.mrb[0].mxu0
    %v5514 = vadd.f32 %v5415, %v5513
    %v5515 = vpop.f32.mrb[0].mxu0
    %5516 = vmatprep.mubr.f32.mxu0 0.0
    %5517 = vmatmul.mubr.f32.gmra.mrb[0].mxu0 %v5410
    %v5518 = vpop.f32.mrb[0].mxu0
    %v5519 = vadd.f32 %v5415, %v5518
    %v5520 = vpop.f32.mrb[0].mxu0
    %5521 = vdwg.mxu0
    %v5522 = vadd.f32 %v5064, %v5484
    %v5523 = vadd.f32 %v5065, %v5489
    %v5524 = vadd.f32 %v5066, %v5494
    %v5525 = vadd.f32 %v5067, %v5499
    %v5526 = vadd.f32 %v5068, %v5504
    %v5527 = vadd.f32 %v5069, %v5509
    %v5528 = vadd.f32 %v5070, %v5514
    %v5529 = vadd.f32 %v5071, %v5519
    %v5530 = vld [vmem:[#allocation12] sm:$0x1]
    %v5531 = vld [vmem:[%s79] sm:$0xff]
    %v5532 = vld [vmem:[%s79 + $0x8] sm:$0xff]
    %v5534 = vsel %vm1435, %v5531, 0
    %v5537 = vsel %vm1435, %v5532, 0
    %5539 = vmatprep.subr.mxu0 0.0
    %5540 = vmatpush1.msra.mxu0 %v5522
    %5541 = vmatprep.subr.mxu0 0.0
    %5542 = vmatpush1.msra.mxu0 %v5523
    %5543 = vmatprep.subr.mxu0 0.0
    %5544 = vmatpush1.msra.mxu0 %v5524
    %5545 = vmatprep.subr.mxu0 0.0
    %5546 = vmatpush1.msra.mxu0 %v5525
    %5547 = vmatprep.subr.mxu0 0.0
    %5548 = vmatpush1.msra.mxu0 %v5526
    %5549 = vmatprep.subr.mxu0 0.0
    %5550 = vmatpush1.msra.mxu0 %v5527
    %5551 = vmatprep.subr.mxu0 0.0
    %5552 = vmatpush1.msra.mxu0 %v5528
    %5553 = vmatprep.subr.mxu0 0.0
    %5554 = vmatpush1.msra.mxu0 %v5529
    %5555 = vmatprep.subr.mxu0 0.0
    %5556 = vmatpush1.msra.mxu0 0.0
    %5557 = vmatprep.subr.mxu0 0.0
    %5558 = vmatpush1.msra.mxu0 0.0
    %5559 = vmatprep.subr.mxu0 0.0
    %5560 = vmatpush1.msra.mxu0 0.0
    %5561 = vmatprep.subr.mxu0 0.0
    %5562 = vmatpush1.msra.mxu0 0.0
    %5563 = vmatprep.subr.mxu0 0.0
    %5564 = vmatpush1.msra.mxu0 0.0
    %5565 = vmatprep.subr.mxu0 0.0
    %5566 = vmatpush1.msra.mxu0 0.0
    %5567 = vmatprep.subr.mxu0 0.0
    %5568 = vmatpush1.msra.mxu0 0.0
    %5569 = vmatprep.subr.mxu0 0.0
    %5570 = vmatpush1.msra.mxu0 0.0
    %5571 = vmatprep.subr.mxu0 0.0
    %5572 = vmatpush1.msra.mxu0 0.0
    %5573 = vmatprep.subr.mxu0 0.0
    %5574 = vmatpush1.msra.mxu0 0.0
    %5575 = vmatprep.subr.mxu0 0.0
    %5576 = vmatpush1.msra.mxu0 0.0
    %5577 = vmatprep.subr.mxu0 0.0
    %5578 = vmatpush1.msra.mxu0 0.0
    %5579 = vmatprep.subr.mxu0 0.0
    %5580 = vmatpush1.msra.mxu0 0.0
    %5581 = vmatprep.subr.mxu0 0.0
    %5582 = vmatpush1.msra.mxu0 0.0
    %5583 = vmatprep.subr.mxu0 0.0
    %5584 = vmatpush1.msra.mxu0 0.0
    %5585 = vmatprep.subr.mxu0 0.0
    %5586 = vmatpush1.msra.mxu0 0.0
    %5587 = vmatprep.subr.mxu0 0.0
    %5588 = vmatpush1.msra.mxu0 0.0
    %5589 = vmatprep.subr.mxu0 0.0
    %5590 = vmatpush1.msra.mxu0 0.0
    %5591 = vmatprep.subr.mxu0 0.0
    %5592 = vmatpush1.msra.mxu0 0.0
    %5593 = vmatprep.subr.mxu0 0.0
    %5594 = vmatpush1.msra.mxu0 0.0
    %5595 = vmatprep.subr.mxu0 0.0
    %5596 = vmatpush1.msra.mxu0 0.0
    %5597 = vmatprep.subr.mxu0 0.0
    %5598 = vmatpush1.msra.mxu0 0.0
    %5599 = vmatprep.subr.mxu0 0.0
    %5600 = vmatpush1.msra.mxu0 0.0
    %5601 = vmatprep.subr.mxu0 0.0
    %5602 = vmatpush1.msra.mxu0 0.0
    %5603 = vmatprep.mubr.f32.mxu0 0.0
    %5604 = vmatmul.mubr.f32.gmra.mrb[0].mxu0 %v5534
    %v5605 = vpop.f32.mrb[0].mxu0
    %v5606 = vadd.f32 0.0, %v5605
    %v5607 = vpop.f32.mrb[0].mxu0
    %5608 = vmatprep.mubr.f32.mxu0 0.0
    %5609 = vmatmul.mubr.f32.gmra.mrb[0].mxu0 %v5537
    %v5610 = vpop.f32.mrb[0].mxu0
    %v5611 = vadd.f32 0.0, %v5610
    %v5612 = vpop.f32.mrb[0].mxu0
    %5613 = vdwg.mxu0
    %s5614 = scalar_lea.vmem %s79, 16
    %v5615 = vld [vmem:[%s5614] sm:$0xff]
    %v5616 = vld [vmem:[%s5614 + $0x8] sm:$0xff]
    %v5618 = vsel %vm1435, %v5615, 0
    %v5621 = vsel %vm1435, %v5616, 0
    %5623 = vmatprep.subr.mxu0 0.0
    %5624 = vmatpush1.msra.mxu0 %v5522
    %5625 = vmatprep.subr.mxu0 0.0
    %5626 = vmatpush1.msra.mxu0 %v5523
    %5627 = vmatprep.subr.mxu0 0.0
    %5628 = vmatpush1.msra.mxu0 %v5524
    %5629 = vmatprep.subr.mxu0 0.0
    %5630 = vmatpush1.msra.mxu0 %v5525
    %5631 = vmatprep.subr.mxu0 0.0
    %5632 = vmatpush1.msra.mxu0 %v5526
    %5633 = vmatprep.subr.mxu0 0.0
    %5634 = vmatpush1.msra.mxu0 %v5527
    %5635 = vmatprep.subr.mxu0 0.0
    %5636 = vmatpush1.msra.mxu0 %v5528
    %5637 = vmatprep.subr.mxu0 0.0
    %5638 = vmatpush1.msra.mxu0 %v5529
    %5639 = vmatprep.subr.mxu0 0.0
    %5640 = vmatpush1.msra.mxu0 0.0
    %5641 = vmatprep.subr.mxu0 0.0
    %5642 = vmatpush1.msra.mxu0 0.0
    %5643 = vmatprep.subr.mxu0 0.0
    %5644 = vmatpush1.msra.mxu0 0.0
    %5645 = vmatprep.subr.mxu0 0.0
    %5646 = vmatpush1.msra.mxu0 0.0
    %5647 = vmatprep.subr.mxu0 0.0
    %5648 = vmatpush1.msra.mxu0 0.0
    %5649 = vmatprep.subr.mxu0 0.0
    %5650 = vmatpush1.msra.mxu0 0.0
    %5651 = vmatprep.subr.mxu0 0.0
    %5652 = vmatpush1.msra.mxu0 0.0
    %5653 = vmatprep.subr.mxu0 0.0
    %5654 = vmatpush1.msra.mxu0 0.0
    %5655 = vmatprep.subr.mxu0 0.0
    %5656 = vmatpush1.msra.mxu0 0.0
    %5657 = vmatprep.subr.mxu0 0.0
    %5658 = vmatpush1.msra.mxu0 0.0
    %5659 = vmatprep.subr.mxu0 0.0
    %5660 = vmatpush1.msra.mxu0 0.0
    %5661 = vmatprep.subr.mxu0 0.0
    %5662 = vmatpush1.msra.mxu0 0.0
    %5663 = vmatprep.subr.mxu0 0.0
    %5664 = vmatpush1.msra.mxu0 0.0
    %5665 = vmatprep.subr.mxu0 0.0
    %5666 = vmatpush1.msra.mxu0 0.0
    %5667 = vmatprep.subr.mxu0 0.0
    %5668 = vmatpush1.msra.mxu0 0.0
    %5669 = vmatprep.subr.mxu0 0.0
    %5670 = vmatpush1.msra.mxu0 0.0
    %5671 = vmatprep.subr.mxu0 0.0
    %5672 = vmatpush1.msra.mxu0 0.0
    %5673 = vmatprep.subr.mxu0 0.0
    %5674 = vmatpush1.msra.mxu0 0.0
    %5675 = vmatprep.subr.mxu0 0.0
    %5676 = vmatpush1.msra.mxu0 0.0
    %5677 = vmatprep.subr.mxu0 0.0
    %5678 = vmatpush1.msra.mxu0 0.0
    %5679 = vmatprep.subr.mxu0 0.0
    %5680 = vmatpush1.msra.mxu0 0.0
    %5681 = vmatprep.subr.mxu0 0.0
    %5682 = vmatpush1.msra.mxu0 0.0
    %5683 = vmatprep.subr.mxu0 0.0
    %5684 = vmatpush1.msra.mxu0 0.0
    %5685 = vmatprep.subr.mxu0 0.0
    %5686 = vmatpush1.msra.mxu0 0.0
    %5687 = vmatprep.mubr.f32.mxu0 0.0
    %5688 = vmatmul.mubr.f32.gmra.mrb[0].mxu0 %v5618
    %v5689 = vpop.f32.mrb[0].mxu0
    %v5690 = vadd.f32 0.0, %v5689
    %v5691 = vpop.f32.mrb[0].mxu0
    %5692 = vmatprep.mubr.f32.mxu0 0.0
    %5693 = vmatmul.mubr.f32.gmra.mrb[0].mxu0 %v5621
    %v5694 = vpop.f32.mrb[0].mxu0
    %v5695 = vadd.f32 0.0, %v5694
    %v5696 = vpop.f32.mrb[0].mxu0
    %5697 = vdwg.mxu0
    %s5698 = scalar_lea.vmem %s79, 32
    %v5699 = vld [vmem:[%s5698] sm:$0xff]
    %v5700 = vld [vmem:[%s5698 + $0x8] sm:$0xff]
    %v5702 = vsel %vm1435, %v5699, 0
    %v5705 = vsel %vm1435, %v5700, 0
    %5707 = vmatprep.subr.mxu0 0.0
    %5708 = vmatpush1.msra.mxu0 %v5522
    %5709 = vmatprep.subr.mxu0 0.0
    %5710 = vmatpush1.msra.mxu0 %v5523
    %5711 = vmatprep.subr.mxu0 0.0
    %5712 = vmatpush1.msra.mxu0 %v5524
    %5713 = vmatprep.subr.mxu0 0.0
    %5714 = vmatpush1.msra.mxu0 %v5525
    %5715 = vmatprep.subr.mxu0 0.0
    %5716 = vmatpush1.msra.mxu0 %v5526
    %5717 = vmatprep.subr.mxu0 0.0
    %5718 = vmatpush1.msra.mxu0 %v5527
    %5719 = vmatprep.subr.mxu0 0.0
    %5720 = vmatpush1.msra.mxu0 %v5528
    %5721 = vmatprep.subr.mxu0 0.0
    %5722 = vmatpush1.msra.mxu0 %v5529
    %5723 = vmatprep.subr.mxu0 0.0
    %5724 = vmatpush1.msra.mxu0 0.0
    %5725 = vmatprep.subr.mxu0 0.0
    %5726 = vmatpush1.msra.mxu0 0.0
    %5727 = vmatprep.subr.mxu0 0.0
    %5728 = vmatpush1.msra.mxu0 0.0
    %5729 = vmatprep.subr.mxu0 0.0
    %5730 = vmatpush1.msra.mxu0 0.0
    %5731 = vmatprep.subr.mxu0 0.0
    %5732 = vmatpush1.msra.mxu0 0.0
    %5733 = vmatprep.subr.mxu0 0.0
    %5734 = vmatpush1.msra.mxu0 0.0
    %5735 = vmatprep.subr.mxu0 0.0
    %5736 = vmatpush1.msra.mxu0 0.0
    %5737 = vmatprep.subr.mxu0 0.0
    %5738 = vmatpush1.msra.mxu0 0.0
    %5739 = vmatprep.subr.mxu0 0.0
    %5740 = vmatpush1.msra.mxu0 0.0
    %5741 = vmatprep.subr.mxu0 0.0
    %5742 = vmatpush1.msra.mxu0 0.0
    %5743 = vmatprep.subr.mxu0 0.0
    %5744 = vmatpush1.msra.mxu0 0.0
    %5745 = vmatprep.subr.mxu0 0.0
    %5746 = vmatpush1.msra.mxu0 0.0
    %5747 = vmatprep.subr.mxu0 0.0
    %5748 = vmatpush1.msra.mxu0 0.0
    %5749 = vmatprep.subr.mxu0 0.0
    %5750 = vmatpush1.msra.mxu0 0.0
    %5751 = vmatprep.subr.mxu0 0.0
    %5752 = vmatpush1.msra.mxu0 0.0
    %5753 = vmatprep.subr.mxu0 0.0
    %5754 = vmatpush1.msra.mxu0 0.0
    %5755 = vmatprep.subr.mxu0 0.0
    %5756 = vmatpush1.msra.mxu0 0.0
    %5757 = vmatprep.subr.mxu0 0.0
    %5758 = vmatpush1.msra.mxu0 0.0
    %5759 = vmatprep.subr.mxu0 0.0
    %5760 = vmatpush1.msra.mxu0 0.0
    %5761 = vmatprep.subr.mxu0 0.0
    %5762 = vmatpush1.msra.mxu0 0.0
    %5763 = vmatprep.subr.mxu0 0.0
    %5764 = vmatpush1.msra.mxu0 0.0
    %5765 = vmatprep.subr.mxu0 0.0
    %5766 = vmatpush1.msra.mxu0 0.0
    %5767 = vmatprep.subr.mxu0 0.0
    %5768 = vmatpush1.msra.mxu0 0.0
    %5769 = vmatprep.subr.mxu0 0.0
    %5770 = vmatpush1.msra.mxu0 0.0
    %5771 = vmatprep.mubr.f32.mxu0 0.0
    %5772 = vmatmul.mubr.f32.gmra.mrb[0].mxu0 %v5702
    %v5773 = vpop.f32.mrb[0].mxu0
    %v5774 = vadd.f32 0.0, %v5773
    %v5775 = vpop.f32.mrb[0].mxu0
    %5776 = vmatprep.mubr.f32.mxu0 0.0
    %5777 = vmatmul.mubr.f32.gmra.mrb[0].mxu0 %v5705
    %v5778 = vpop.f32.mrb[0].mxu0
    %v5779 = vadd.f32 0.0, %v5778
    %v5780 = vpop.f32.mrb[0].mxu0
    %5781 = vdwg.mxu0
    %s5782 = scalar_lea.vmem %s79, 48
    %v5783 = vld [vmem:[%s5782] sm:$0xff]
    %v5784 = vld [vmem:[%s5782 + $0x8] sm:$0xff]
    %v5786 = vsel %vm1435, %v5783, 0
    %v5789 = vsel %vm1435, %v5784, 0
    %5791 = vmatprep.subr.mxu0 0.0
    %5792 = vmatpush1.msra.mxu0 %v5522
    %5793 = vmatprep.subr.mxu0 0.0
    %5794 = vmatpush1.msra.mxu0 %v5523
    %5795 = vmatprep.subr.mxu0 0.0
    %5796 = vmatpush1.msra.mxu0 %v5524
    %5797 = vmatprep.subr.mxu0 0.0
    %5798 = vmatpush1.msra.mxu0 %v5525
    %5799 = vmatprep.subr.mxu0 0.0
    %5800 = vmatpush1.msra.mxu0 %v5526
    %5801 = vmatprep.subr.mxu0 0.0
    %5802 = vmatpush1.msra.mxu0 %v5527
    %5803 = vmatprep.subr.mxu0 0.0
    %5804 = vmatpush1.msra.mxu0 %v5528
    %5805 = vmatprep.subr.mxu0 0.0
    %5806 = vmatpush1.msra.mxu0 %v5529
    %5807 = vmatprep.subr.mxu0 0.0
    %5808 = vmatpush1.msra.mxu0 0.0
    %5809 = vmatprep.subr.mxu0 0.0
    %5810 = vmatpush1.msra.mxu0 0.0
    %5811 = vmatprep.subr.mxu0 0.0
    %5812 = vmatpush1.msra.mxu0 0.0
    %5813 = vmatprep.subr.mxu0 0.0
    %5814 = vmatpush1.msra.mxu0 0.0
    %5815 = vmatprep.subr.mxu0 0.0
    %5816 = vmatpush1.msra.mxu0 0.0
    %5817 = vmatprep.subr.mxu0 0.0
    %5818 = vmatpush1.msra.mxu0 0.0
    %5819 = vmatprep.subr.mxu0 0.0
    %5820 = vmatpush1.msra.mxu0 0.0
    %5821 = vmatprep.subr.mxu0 0.0
    %5822 = vmatpush1.msra.mxu0 0.0
    %5823 = vmatprep.subr.mxu0 0.0
    %5824 = vmatpush1.msra.mxu0 0.0
    %5825 = vmatprep.subr.mxu0 0.0
    %5826 = vmatpush1.msra.mxu0 0.0
    %5827 = vmatprep.subr.mxu0 0.0
    %5828 = vmatpush1.msra.mxu0 0.0
    %5829 = vmatprep.subr.mxu0 0.0
    %5830 = vmatpush1.msra.mxu0 0.0
    %5831 = vmatprep.subr.mxu0 0.0
    %5832 = vmatpush1.msra.mxu0 0.0
    %5833 = vmatprep.subr.mxu0 0.0
    %5834 = vmatpush1.msra.mxu0 0.0
    %5835 = vmatprep.subr.mxu0 0.0
    %5836 = vmatpush1.msra.mxu0 0.0
    %5837 = vmatprep.subr.mxu0 0.0
    %5838 = vmatpush1.msra.mxu0 0.0
    %5839 = vmatprep.subr.mxu0 0.0
    %5840 = vmatpush1.msra.mxu0 0.0
    %5841 = vmatprep.subr.mxu0 0.0
    %5842 = vmatpush1.msra.mxu0 0.0
    %5843 = vmatprep.subr.mxu0 0.0
    %5844 = vmatpush1.msra.mxu0 0.0
    %5845 = vmatprep.subr.mxu0 0.0
    %5846 = vmatpush1.msra.mxu0 0.0
    %5847 = vmatprep.subr.mxu0 0.0
    %5848 = vmatpush1.msra.mxu0 0.0
    %5849 = vmatprep.subr.mxu0 0.0
    %5850 = vmatpush1.msra.mxu0 0.0
    %5851 = vmatprep.subr.mxu0 0.0
    %5852 = vmatpush1.msra.mxu0 0.0
    %5853 = vmatprep.subr.mxu0 0.0
    %5854 = vmatpush1.msra.mxu0 0.0
    %5855 = vmatprep.mubr.f32.mxu0 0.0
    %5856 = vmatmul.mubr.f32.gmra.mrb[0].mxu0 %v5786
    %v5857 = vpop.f32.mrb[0].mxu0
    %v5858 = vadd.f32 0.0, %v5857
    %v5859 = vpop.f32.mrb[0].mxu0
    %5860 = vmatprep.mubr.f32.mxu0 0.0
    %5861 = vmatmul.mubr.f32.gmra.mrb[0].mxu0 %v5789
    %v5862 = vpop.f32.mrb[0].mxu0
    %v5863 = vadd.f32 0.0, %v5862
    %v5864 = vpop.f32.mrb[0].mxu0
    %5865 = vdwg.mxu0
    %v5866 = vsel %vm608, %v5606, 0.0
    %5867 = vadd.xlane.f32.xlu0 %v5866
    %v5868 = vpop.xlane.xlu0 %5867
    %v5869 = vsel %vm608, %v5611, 0.0
    %5870 = vadd.xlane.f32.xlu0 %v5869
    %v5871 = vpop.xlane.xlu0 %5870
    %v5872 = vadd.f32 %v5868, 0.0
    %v5873 = vadd.f32 %v5871, 0.0
    %v5874 = vsel %vm608, %v5690, 0.0
    %5875 = vadd.xlane.f32.xlu0 %v5874
    %v5876 = vpop.xlane.xlu0 %5875
    %v5877 = vsel %vm608, %v5695, 0.0
    %5878 = vadd.xlane.f32.xlu0 %v5877
    %v5879 = vpop.xlane.xlu0 %5878
    %v5880 = vadd.f32 %v5872, %v5876
    %v5881 = vadd.f32 %v5873, %v5879
    %v5882 = vsel %vm608, %v5774, 0.0
    %5883 = vadd.xlane.f32.xlu0 %v5882
    %v5884 = vpop.xlane.xlu0 %5883
    %v5885 = vsel %vm608, %v5779, 0.0
    %5886 = vadd.xlane.f32.xlu0 %v5885
    %v5887 = vpop.xlane.xlu0 %5886
    %v5888 = vadd.f32 %v5880, %v5884
    %v5889 = vadd.f32 %v5881, %v5887
    %v5890 = vsel %vm608, %v5858, 0.0
    %5891 = vadd.xlane.f32.xlu0 %v5890
    %v5892 = vpop.xlane.xlu0 %5891
    %v5893 = vsel %vm608, %v5863, 0.0
    %5894 = vadd.xlane.f32.xlu0 %v5893
    %v5895 = vpop.xlane.xlu0 %5894
    %v5896 = vadd.f32 %v5888, %v5892
    %v5897 = vadd.f32 %v5889, %v5895
    %v5898 = vrcp.pop 128.0
    %v5899 = vmul.f32 %v5896, %v5898
    %v5900 = vmul.f32 %v5897, %v5898
    %v5901 = vsub.f32 %v5606, %v5899
    %v5902 = vsub.f32 %v5611, %v5900
    %v5903 = vmul.f32 %v5901, %v5901
    %v5904 = vmul.f32 %v5902, %v5902
    %v5905 = vsel %vm608, %v5903, 0.0
    %5906 = vadd.xlane.f32.xlu0 %v5905
    %v5907 = vpop.xlane.xlu0 %5906
    %v5908 = vsel %vm608, %v5904, 0.0
    %5909 = vadd.xlane.f32.xlu0 %v5908
    %v5910 = vpop.xlane.xlu0 %5909
    %v5911 = vadd.f32 %v5907, 0.0
    %v5912 = vadd.f32 %v5910, 0.0
    %v5913 = vsub.f32 %v5690, %v5899
    %v5914 = vsub.f32 %v5695, %v5900
    %v5915 = vmul.f32 %v5913, %v5913
    %v5916 = vmul.f32 %v5914, %v5914
    %v5917 = vsel %vm608, %v5915, 0.0
    %5918 = vadd.xlane.f32.xlu0 %v5917
    %v5919 = vpop.xlane.xlu0 %5918
    %v5920 = vsel %vm608, %v5916, 0.0
    %5921 = vadd.xlane.f32.xlu0 %v5920
    %v5922 = vpop.xlane.xlu0 %5921
    %v5923 = vadd.f32 %v5911, %v5919
    %v5924 = vadd.f32 %v5912, %v5922
    %v5925 = vsub.f32 %v5774, %v5899
    %v5926 = vsub.f32 %v5779, %v5900
    %v5927 = vmul.f32 %v5925, %v5925
    %v5928 = vmul.f32 %v5926, %v5926
    %v5929 = vsel %vm608, %v5927, 0.0
    %5930 = vadd.xlane.f32.xlu0 %v5929
    %v5931 = vpop.xlane.xlu0 %5930
    %v5932 = vsel %vm608, %v5928, 0.0
    %5933 = vadd.xlane.f32.xlu0 %v5932
    %v5934 = vpop.xlane.xlu0 %5933
    %v5935 = vadd.f32 %v5923, %v5931
    %v5936 = vadd.f32 %v5924, %v5934
    %v5937 = vsub.f32 %v5858, %v5899
    %v5938 = vsub.f32 %v5863, %v5900
    %v5939 = vmul.f32 %v5937, %v5937
    %v5940 = vmul.f32 %v5938, %v5938
    %v5941 = vsel %vm608, %v5939, 0.0
    %5942 = vadd.xlane.f32.xlu0 %v5941
    %v5943 = vpop.xlane.xlu0 %5942
    %v5944 = vsel %vm608, %v5940, 0.0
    %5945 = vadd.xlane.f32.xlu0 %v5944
    %v5946 = vpop.xlane.xlu0 %5945
    %v5947 = vadd.f32 %v5935, %v5943
    %v5948 = vadd.f32 %v5936, %v5946
    %v5949 = vmul.f32 %v5947, %v5898
    %v5950 = vmul.f32 %v5948, %v5898
    %v5951 = vadd.f32 %v5949, 1e-05
    %v5952 = vadd.f32 %v5950, 1e-05
    %v5953 = vrsqrt.pop %v5951
    %v5954 = vrsqrt.pop %v5952
    %v5955 = vmul.f32 %v5901, %v5953
    %v5956 = vmul.f32 %v5902, %v5954
    %v5957 = vld [vmem:[%s81] sm:$0x1]
    %v5959 = vlaneseq
    %v5960 = vshrl.u32 %v5959, 7
    %v5961 = vsub.s32 0, %v5960
    %v5962 = vrot.slane %v5957, %v5961
    %v5964 = vmul.f32 %v5955, %v5962
    %v5965 = vmul.f32 %v5956, %v5962
    %v5966 = vld [vmem:[%s83] sm:$0x1]
    %v5968 = vlaneseq
    %v5969 = vshrl.u32 %v5968, 7
    %v5970 = vsub.s32 0, %v5969
    %v5971 = vrot.slane %v5966, %v5970
    %v5973 = vadd.f32 %v5964, %v5971
    %v5974 = vadd.f32 %v5965, %v5971
    %v5975 = vld [vmem:[%s85] sm:$0xff]
    %v5976 = vld [vmem:[%s85 + $0x8] sm:$0xff]
    %v5977 = vld [vmem:[%s85 + $0x10] sm:$0xff]
    %v5978 = vld [vmem:[%s85 + $0x18] sm:$0xff]
    %v5980 = vsel %vm608, %v5973, 0
    %v5983 = vsel %vm608, %v5974, 0
    %5985 = vmatprep.subr.mxu0 0.0
    %5986 = vmatpush1.msra.mxu0 %v5975
    %5987 = vmatprep.subr.mxu0 0.0
    %5988 = vmatpush1.msra.mxu0 %v5976
    %5989 = vmatprep.subr.mxu0 0.0
    %5990 = vmatpush1.msra.mxu0 %v5977
    %5991 = vmatprep.subr.mxu0 0.0
    %5992 = vmatpush1.msra.mxu0 %v5978
    %5993 = vmatprep.subr.mxu0 0.0
    %5994 = vmatpush1.msra.mxu0 0.0
    %5995 = vmatprep.subr.mxu0 0.0
    %5996 = vmatpush1.msra.mxu0 0.0
    %5997 = vmatprep.subr.mxu0 0.0
    %5998 = vmatpush1.msra.mxu0 0.0
    %5999 = vmatprep.subr.mxu0 0.0
    %6000 = vmatpush1.msra.mxu0 0.0
    %6001 = vmatprep.subr.mxu0 0.0
    %6002 = vmatpush1.msra.mxu0 0.0
    %6003 = vmatprep.subr.mxu0 0.0
    %6004 = vmatpush1.msra.mxu0 0.0
    %6005 = vmatprep.subr.mxu0 0.0
    %6006 = vmatpush1.msra.mxu0 0.0
    %6007 = vmatprep.subr.mxu0 0.0
    %6008 = vmatpush1.msra.mxu0 0.0
    %6009 = vmatprep.subr.mxu0 0.0
    %6010 = vmatpush1.msra.mxu0 0.0
    %6011 = vmatprep.subr.mxu0 0.0
    %6012 = vmatpush1.msra.mxu0 0.0
    %6013 = vmatprep.subr.mxu0 0.0
    %6014 = vmatpush1.msra.mxu0 0.0
    %6015 = vmatprep.subr.mxu0 0.0
    %6016 = vmatpush1.msra.mxu0 0.0
    %6017 = vmatprep.subr.mxu0 0.0
    %6018 = vmatpush1.msra.mxu0 0.0
    %6019 = vmatprep.subr.mxu0 0.0
    %6020 = vmatpush1.msra.mxu0 0.0
    %6021 = vmatprep.subr.mxu0 0.0
    %6022 = vmatpush1.msra.mxu0 0.0
    %6023 = vmatprep.subr.mxu0 0.0
    %6024 = vmatpush1.msra.mxu0 0.0
    %6025 = vmatprep.subr.mxu0 0.0
    %6026 = vmatpush1.msra.mxu0 0.0
    %6027 = vmatprep.subr.mxu0 0.0
    %6028 = vmatpush1.msra.mxu0 0.0
    %6029 = vmatprep.subr.mxu0 0.0
    %6030 = vmatpush1.msra.mxu0 0.0
    %6031 = vmatprep.subr.mxu0 0.0
    %6032 = vmatpush1.msra.mxu0 0.0
    %6033 = vmatprep.subr.mxu0 0.0
    %6034 = vmatpush1.msra.mxu0 0.0
    %6035 = vmatprep.subr.mxu0 0.0
    %6036 = vmatpush1.msra.mxu0 0.0
    %6037 = vmatprep.subr.mxu0 0.0
    %6038 = vmatpush1.msra.mxu0 0.0
    %6039 = vmatprep.subr.mxu0 0.0
    %6040 = vmatpush1.msra.mxu0 0.0
    %6041 = vmatprep.subr.mxu0 0.0
    %6042 = vmatpush1.msra.mxu0 0.0
    %6043 = vmatprep.subr.mxu0 0.0
    %6044 = vmatpush1.msra.mxu0 0.0
    %6045 = vmatprep.subr.mxu0 0.0
    %6046 = vmatpush1.msra.mxu0 0.0
    %6047 = vmatprep.subr.mxu0 0.0
    %6048 = vmatpush1.msra.mxu0 0.0
    %6049 = vmatprep.mubr.f32.mxu0 0.0
    %6050 = vmatmul.mubr.f32.gmra.mrb[0].mxu0 %v5980
    %v6051 = vpop.f32.mrb[0].mxu0
    %v6052 = vadd.f32 0.0, %v6051
    %v6053 = vpop.f32.mrb[0].mxu0
    %6054 = vmatprep.mubr.f32.mxu0 0.0
    %6055 = vmatmul.mubr.f32.gmra.mrb[0].mxu0 %v5983
    %v6056 = vpop.f32.mrb[0].mxu0
    %v6057 = vadd.f32 0.0, %v6056
    %v6058 = vpop.f32.mrb[0].mxu0
    %6059 = vdwg.mxu0
    %v6061 = vlaneseq
    %v6062 = vshrl.u32 %v6061, 7
    %v6063 = vsub.s32 0, %v6062
    %v6064 = vrot.slane %v5530, %v6063
    %v6066 = vadd.f32 %v6064, %v6052
    %v6067 = vadd.f32 %v6064, %v6057
    %v6068 = vmul.f32 %v5913, %v5953
    %v6069 = vmul.f32 %v5914, %v5954
    %s6070 = scalar_lea.vmem %s81, 1
    %v6071 = vld [vmem:[%s6070] sm:$0x1]
    %v6073 = vlaneseq
    %v6074 = vshrl.u32 %v6073, 7
    %v6075 = vsub.s32 0, %v6074
    %v6076 = vrot.slane %v6071, %v6075
    %v6078 = vmul.f32 %v6068, %v6076
    %v6079 = vmul.f32 %v6069, %v6076
    %s6080 = scalar_lea.vmem %s83, 1
    %v6081 = vld [vmem:[%s6080] sm:$0x1]
    %v6083 = vlaneseq
    %v6084 = vshrl.u32 %v6083, 7
    %v6085 = vsub.s32 0, %v6084
    %v6086 = vrot.slane %v6081, %v6085
    %v6088 = vadd.f32 %v6078, %v6086
    %v6089 = vadd.f32 %v6079, %v6086
    %s6090 = scalar_lea.vmem %s85, 32
    %v6091 = vld [vmem:[%s6090] sm:$0xff]
    %v6092 = vld [vmem:[%s6090 + $0x8] sm:$0xff]
    %v6093 = vld [vmem:[%s6090 + $0x10] sm:$0xff]
    %v6094 = vld [vmem:[%s6090 + $0x18] sm:$0xff]
    %v6096 = vsel %vm608, %v6088, 0
    %v6099 = vsel %vm608, %v6089, 0
    %6101 = vmatprep.subr.mxu0 0.0
    %6102 = vmatpush1.msra.mxu0 %v6091
    %6103 = vmatprep.subr.mxu0 0.0
    %6104 = vmatpush1.msra.mxu0 %v6092
    %6105 = vmatprep.subr.mxu0 0.0
    %6106 = vmatpush1.msra.mxu0 %v6093
    %6107 = vmatprep.subr.mxu0 0.0
    %6108 = vmatpush1.msra.mxu0 %v6094
    %6109 = vmatprep.subr.mxu0 0.0
    %6110 = vmatpush1.msra.mxu0 0.0
    %6111 = vmatprep.subr.mxu0 0.0
    %6112 = vmatpush1.msra.mxu0 0.0
    %6113 = vmatprep.subr.mxu0 0.0
    %6114 = vmatpush1.msra.mxu0 0.0
    %6115 = vmatprep.subr.mxu0 0.0
    %6116 = vmatpush1.msra.mxu0 0.0
    %6117 = vmatprep.subr.mxu0 0.0
    %6118 = vmatpush1.msra.mxu0 0.0
    %6119 = vmatprep.subr.mxu0 0.0
    %6120 = vmatpush1.msra.mxu0 0.0
    %6121 = vmatprep.subr.mxu0 0.0
    %6122 = vmatpush1.msra.mxu0 0.0
    %6123 = vmatprep.subr.mxu0 0.0
    %6124 = vmatpush1.msra.mxu0 0.0
    %6125 = vmatprep.subr.mxu0 0.0
    %6126 = vmatpush1.msra.mxu0 0.0
    %6127 = vmatprep.subr.mxu0 0.0
    %6128 = vmatpush1.msra.mxu0 0.0
    %6129 = vmatprep.subr.mxu0 0.0
    %6130 = vmatpush1.msra.mxu0 0.0
    %6131 = vmatprep.subr.mxu0 0.0
    %6132 = vmatpush1.msra.mxu0 0.0
    %6133 = vmatprep.subr.mxu0 0.0
    %6134 = vmatpush1.msra.mxu0 0.0
    %6135 = vmatprep.subr.mxu0 0.0
    %6136 = vmatpush1.msra.mxu0 0.0
    %6137 = vmatprep.subr.mxu0 0.0
    %6138 = vmatpush1.msra.mxu0 0.0
    %6139 = vmatprep.subr.mxu0 0.0
    %6140 = vmatpush1.msra.mxu0 0.0
    %6141 = vmatprep.subr.mxu0 0.0
    %6142 = vmatpush1.msra.mxu0 0.0
    %6143 = vmatprep.subr.mxu0 0.0
    %6144 = vmatpush1.msra.mxu0 0.0
    %6145 = vmatprep.subr.mxu0 0.0
    %6146 = vmatpush1.msra.mxu0 0.0
    %6147 = vmatprep.subr.mxu0 0.0
    %6148 = vmatpush1.msra.mxu0 0.0
    %6149 = vmatprep.subr.mxu0 0.0
    %6150 = vmatpush1.msra.mxu0 0.0
    %6151 = vmatprep.subr.mxu0 0.0
    %6152 = vmatpush1.msra.mxu0 0.0
    %6153 = vmatprep.subr.mxu0 0.0
    %6154 = vmatpush1.msra.mxu0 0.0
    %6155 = vmatprep.subr.mxu0 0.0
    %6156 = vmatpush1.msra.mxu0 0.0
    %6157 = vmatprep.subr.mxu0 0.0
    %6158 = vmatpush1.msra.mxu0 0.0
    %6159 = vmatprep.subr.mxu0 0.0
    %6160 = vmatpush1.msra.mxu0 0.0
    %6161 = vmatprep.subr.mxu0 0.0
    %6162 = vmatpush1.msra.mxu0 0.0
    %6163 = vmatprep.subr.mxu0 0.0
    %6164 = vmatpush1.msra.mxu0 0.0
    %6165 = vmatprep.mubr.f32.mxu0 0.0
    %6166 = vmatmul.mubr.f32.gmra.mrb[0].mxu0 %v6096
    %v6167 = vpop.f32.mrb[0].mxu0
    %v6168 = vadd.f32 0.0, %v6167
    %v6169 = vpop.f32.mrb[0].mxu0
    %6170 = vmatprep.mubr.f32.mxu0 0.0
    %6171 = vmatmul.mubr.f32.gmra.mrb[0].mxu0 %v6099
    %v6172 = vpop.f32.mrb[0].mxu0
    %v6173 = vadd.f32 0.0, %v6172
    %v6174 = vpop.f32.mrb[0].mxu0
    %6175 = vdwg.mxu0
    %v6176 = vadd.f32 %v6066, %v6168
    %v6177 = vadd.f32 %v6067, %v6173
    %v6178 = vmul.f32 %v5925, %v5953
    %v6179 = vmul.f32 %v5926, %v5954
    %s6180 = scalar_lea.vmem %s81, 2
    %v6181 = vld [vmem:[%s6180] sm:$0x1]
    %v6183 = vlaneseq
    %v6184 = vshrl.u32 %v6183, 7
    %v6185 = vsub.s32 0, %v6184
    %v6186 = vrot.slane %v6181, %v6185
    %v6188 = vmul.f32 %v6178, %v6186
    %v6189 = vmul.f32 %v6179, %v6186
    %s6190 = scalar_lea.vmem %s83, 2
    %v6191 = vld [vmem:[%s6190] sm:$0x1]
    %v6193 = vlaneseq
    %v6194 = vshrl.u32 %v6193, 7
    %v6195 = vsub.s32 0, %v6194
    %v6196 = vrot.slane %v6191, %v6195
    %v6198 = vadd.f32 %v6188, %v6196
    %v6199 = vadd.f32 %v6189, %v6196
    %s6200 = scalar_lea.vmem %s85, 64
    %v6201 = vld [vmem:[%s6200] sm:$0xff]
    %v6202 = vld [vmem:[%s6200 + $0x8] sm:$0xff]
    %v6203 = vld [vmem:[%s6200 + $0x10] sm:$0xff]
    %v6204 = vld [vmem:[%s6200 + $0x18] sm:$0xff]
    %v6206 = vsel %vm608, %v6198, 0
    %v6209 = vsel %vm608, %v6199, 0
    %6211 = vmatprep.subr.mxu0 0.0
    %6212 = vmatpush1.msra.mxu0 %v6201
    %6213 = vmatprep.subr.mxu0 0.0
    %6214 = vmatpush1.msra.mxu0 %v6202
    %6215 = vmatprep.subr.mxu0 0.0
    %6216 = vmatpush1.msra.mxu0 %v6203
    %6217 = vmatprep.subr.mxu0 0.0
    %6218 = vmatpush1.msra.mxu0 %v6204
    %6219 = vmatprep.subr.mxu0 0.0
    %6220 = vmatpush1.msra.mxu0 0.0
    %6221 = vmatprep.subr.mxu0 0.0
    %6222 = vmatpush1.msra.mxu0 0.0
    %6223 = vmatprep.subr.mxu0 0.0
    %6224 = vmatpush1.msra.mxu0 0.0
    %6225 = vmatprep.subr.mxu0 0.0
    %6226 = vmatpush1.msra.mxu0 0.0
    %6227 = vmatprep.subr.mxu0 0.0
    %6228 = vmatpush1.msra.mxu0 0.0
    %6229 = vmatprep.subr.mxu0 0.0
    %6230 = vmatpush1.msra.mxu0 0.0
    %6231 = vmatprep.subr.mxu0 0.0
    %6232 = vmatpush1.msra.mxu0 0.0
    %6233 = vmatprep.subr.mxu0 0.0
    %6234 = vmatpush1.msra.mxu0 0.0
    %6235 = vmatprep.subr.mxu0 0.0
    %6236 = vmatpush1.msra.mxu0 0.0
    %6237 = vmatprep.subr.mxu0 0.0
    %6238 = vmatpush1.msra.mxu0 0.0
    %6239 = vmatprep.subr.mxu0 0.0
    %6240 = vmatpush1.msra.mxu0 0.0
    %6241 = vmatprep.subr.mxu0 0.0
    %6242 = vmatpush1.msra.mxu0 0.0
    %6243 = vmatprep.subr.mxu0 0.0
    %6244 = vmatpush1.msra.mxu0 0.0
    %6245 = vmatprep.subr.mxu0 0.0
    %6246 = vmatpush1.msra.mxu0 0.0
    %6247 = vmatprep.subr.mxu0 0.0
    %6248 = vmatpush1.msra.mxu0 0.0
    %6249 = vmatprep.subr.mxu0 0.0
    %6250 = vmatpush1.msra.mxu0 0.0
    %6251 = vmatprep.subr.mxu0 0.0
    %6252 = vmatpush1.msra.mxu0 0.0
    %6253 = vmatprep.subr.mxu0 0.0
    %6254 = vmatpush1.msra.mxu0 0.0
    %6255 = vmatprep.subr.mxu0 0.0
    %6256 = vmatpush1.msra.mxu0 0.0
    %6257 = vmatprep.subr.mxu0 0.0
    %6258 = vmatpush1.msra.mxu0 0.0
    %6259 = vmatprep.subr.mxu0 0.0
    %6260 = vmatpush1.msra.mxu0 0.0
    %6261 = vmatprep.subr.mxu0 0.0
    %6262 = vmatpush1.msra.mxu0 0.0
    %6263 = vmatprep.subr.mxu0 0.0
    %6264 = vmatpush1.msra.mxu0 0.0
    %6265 = vmatprep.subr.mxu0 0.0
    %6266 = vmatpush1.msra.mxu0 0.0
    %6267 = vmatprep.subr.mxu0 0.0
    %6268 = vmatpush1.msra.mxu0 0.0
    %6269 = vmatprep.subr.mxu0 0.0
    %6270 = vmatpush1.msra.mxu0 0.0
    %6271 = vmatprep.subr.mxu0 0.0
    %6272 = vmatpush1.msra.mxu0 0.0
    %6273 = vmatprep.subr.mxu0 0.0
    %6274 = vmatpush1.msra.mxu0 0.0
    %6275 = vmatprep.mubr.f32.mxu0 0.0
    %6276 = vmatmul.mubr.f32.gmra.mrb[0].mxu0 %v6206
    %v6277 = vpop.f32.mrb[0].mxu0
    %v6278 = vadd.f32 0.0, %v6277
    %v6279 = vpop.f32.mrb[0].mxu0
    %6280 = vmatprep.mubr.f32.mxu0 0.0
    %6281 = vmatmul.mubr.f32.gmra.mrb[0].mxu0 %v6209
    %v6282 = vpop.f32.mrb[0].mxu0
    %v6283 = vadd.f32 0.0, %v6282
    %v6284 = vpop.f32.mrb[0].mxu0
    %6285 = vdwg.mxu0
    %v6286 = vadd.f32 %v6176, %v6278
    %v6287 = vadd.f32 %v6177, %v6283
    %v6288 = vmul.f32 %v5937, %v5953
    %v6289 = vmul.f32 %v5938, %v5954
    %s6290 = scalar_lea.vmem %s81, 3
    %v6291 = vld [vmem:[%s6290] sm:$0x1]
    %v6293 = vlaneseq
    %v6294 = vshrl.u32 %v6293, 7
    %v6295 = vsub.s32 0, %v6294
    %v6296 = vrot.slane %v6291, %v6295
    %v6298 = vmul.f32 %v6288, %v6296
    %v6299 = vmul.f32 %v6289, %v6296
    %s6300 = scalar_lea.vmem %s83, 3
    %v6301 = vld [vmem:[%s6300] sm:$0x1]
    %v6303 = vlaneseq
    %v6304 = vshrl.u32 %v6303, 7
    %v6305 = vsub.s32 0, %v6304
    %v6306 = vrot.slane %v6301, %v6305
    %v6308 = vadd.f32 %v6298, %v6306
    %v6309 = vadd.f32 %v6299, %v6306
    %s6310 = scalar_lea.vmem %s85, 96
    %v6311 = vld [vmem:[%s6310] sm:$0xff]
    %v6312 = vld [vmem:[%s6310 + $0x8] sm:$0xff]
    %v6313 = vld [vmem:[%s6310 + $0x10] sm:$0xff]
    %v6314 = vld [vmem:[%s6310 + $0x18] sm:$0xff]
    %v6316 = vsel %vm608, %v6308, 0
    %v6319 = vsel %vm608, %v6309, 0
    %6321 = vmatprep.subr.mxu0 0.0
    %6322 = vmatpush1.msra.mxu0 %v6311
    %6323 = vmatprep.subr.mxu0 0.0
    %6324 = vmatpush1.msra.mxu0 %v6312
    %6325 = vmatprep.subr.mxu0 0.0
    %6326 = vmatpush1.msra.mxu0 %v6313
    %6327 = vmatprep.subr.mxu0 0.0
    %6328 = vmatpush1.msra.mxu0 %v6314
    %6329 = vmatprep.subr.mxu0 0.0
    %6330 = vmatpush1.msra.mxu0 0.0
    %6331 = vmatprep.subr.mxu0 0.0
    %6332 = vmatpush1.msra.mxu0 0.0
    %6333 = vmatprep.subr.mxu0 0.0
    %6334 = vmatpush1.msra.mxu0 0.0
    %6335 = vmatprep.subr.mxu0 0.0
    %6336 = vmatpush1.msra.mxu0 0.0
    %6337 = vmatprep.subr.mxu0 0.0
    %6338 = vmatpush1.msra.mxu0 0.0
    %6339 = vmatprep.subr.mxu0 0.0
    %6340 = vmatpush1.msra.mxu0 0.0
    %6341 = vmatprep.subr.mxu0 0.0
    %6342 = vmatpush1.msra.mxu0 0.0
    %6343 = vmatprep.subr.mxu0 0.0
    %6344 = vmatpush1.msra.mxu0 0.0
    %6345 = vmatprep.subr.mxu0 0.0
    %6346 = vmatpush1.msra.mxu0 0.0
    %6347 = vmatprep.subr.mxu0 0.0
    %6348 = vmatpush1.msra.mxu0 0.0
    %6349 = vmatprep.subr.mxu0 0.0
    %6350 = vmatpush1.msra.mxu0 0.0
    %6351 = vmatprep.subr.mxu0 0.0
    %6352 = vmatpush1.msra.mxu0 0.0
    %6353 = vmatprep.subr.mxu0 0.0
    %6354 = vmatpush1.msra.mxu0 0.0
    %6355 = vmatprep.subr.mxu0 0.0
    %6356 = vmatpush1.msra.mxu0 0.0
    %6357 = vmatprep.subr.mxu0 0.0
    %6358 = vmatpush1.msra.mxu0 0.0
    %6359 = vmatprep.subr.mxu0 0.0
    %6360 = vmatpush1.msra.mxu0 0.0
    %6361 = vmatprep.subr.mxu0 0.0
    %6362 = vmatpush1.msra.mxu0 0.0
    %6363 = vmatprep.subr.mxu0 0.0
    %6364 = vmatpush1.msra.mxu0 0.0
    %6365 = vmatprep.subr.mxu0 0.0
    %6366 = vmatpush1.msra.mxu0 0.0
    %6367 = vmatprep.subr.mxu0 0.0
    %6368 = vmatpush1.msra.mxu0 0.0
    %6369 = vmatprep.subr.mxu0 0.0
    %6370 = vmatpush1.msra.mxu0 0.0
    %6371 = vmatprep.subr.mxu0 0.0
    %6372 = vmatpush1.msra.mxu0 0.0
    %6373 = vmatprep.subr.mxu0 0.0
    %6374 = vmatpush1.msra.mxu0 0.0
    %6375 = vmatprep.subr.mxu0 0.0
    %6376 = vmatpush1.msra.mxu0 0.0
    %6377 = vmatprep.subr.mxu0 0.0
    %6378 = vmatpush1.msra.mxu0 0.0
    %6379 = vmatprep.subr.mxu0 0.0
    %6380 = vmatpush1.msra.mxu0 0.0
    %6381 = vmatprep.subr.mxu0 0.0
    %6382 = vmatpush1.msra.mxu0 0.0
    %6383 = vmatprep.subr.mxu0 0.0
    %6384 = vmatpush1.msra.mxu0 0.0
    %6385 = vmatprep.mubr.f32.mxu0 0.0
    %6386 = vmatmul.mubr.f32.gmra.mrb[0].mxu0 %v6316
    %v6387 = vpop.f32.mrb[0].mxu0
    %v6388 = vadd.f32 0.0, %v6387
    %v6389 = vpop.f32.mrb[0].mxu0
    %6390 = vmatprep.mubr.f32.mxu0 0.0
    %6391 = vmatmul.mubr.f32.gmra.mrb[0].mxu0 %v6319
    %v6392 = vpop.f32.mrb[0].mxu0
    %v6393 = vadd.f32 0.0, %v6392
    %v6394 = vpop.f32.mrb[0].mxu0
    %6395 = vdwg.mxu0
    %v6396 = vadd.f32 %v6286, %v6388
    %v6397 = vadd.f32 %v6287, %v6393
    %v6398 = vld [vmem:[#allocation13] sm:$0x1]
    %v6399 = vld [vmem:[#allocation15] sm:$0x1]
    %v6400 = vld [vmem:[#allocation16] sm:$0x1]
    %v6401 = vld [vmem:[#allocation18] sm:$0x1]
    %v6402 = vld [vmem:[#allocation19] sm:$0x1]
    %v6403 = vld [vmem:[%s115] sm:$0xff]
    %v6404 = vld [vmem:[%s115 + $0x8] sm:$0xff]
    %v6405 = vld [vmem:[%s115 + $0x10] sm:$0xff]
    %v6406 = vld [vmem:[%s115 + $0x18] sm:$0xff]
    %v6407 = vld [vmem:[%s115 + $0x20] sm:$0xff]
    %v6408 = vld [vmem:[%s115 + $0x28] sm:$0xff]
    %v6409 = vld [vmem:[%s115 + $0x30] sm:$0xff]
    %v6410 = vld [vmem:[%s115 + $0x38] sm:$0xff]
    %v6411 = vld [vmem:[%s115 + $0x40] sm:$0xff]
    %v6412 = vld [vmem:[%s115 + $0x48] sm:$0xff]
    %v6413 = vld [vmem:[%s115 + $0x50] sm:$0xff]
    %v6414 = vld [vmem:[%s115 + $0x58] sm:$0xff]
    %v6415 = vld [vmem:[%s115 + $0x60] sm:$0xff]
    %v6416 = vld [vmem:[%s115 + $0x68] sm:$0xff]
    %v6417 = vld [vmem:[%s115 + $0x70] sm:$0xff]
    %v6418 = vld [vmem:[%s115 + $0x78] sm:$0xff]
    %v6419 = vld [vmem:[%s117] sm:$0x3]
    %v6420 = vld [vmem:[%s119] sm:$0xff]
    %v6421 = vld [vmem:[%s119 + $0x8] sm:$0xff]
    %v6422 = vld [vmem:[%s119 + $0x10] sm:$0xff]
    %v6423 = vld [vmem:[%s119 + $0x18] sm:$0xff]
    %v6424 = vld [vmem:[%s119 + $0x20] sm:$0xff]
    %v6425 = vld [vmem:[%s119 + $0x28] sm:$0xff]
    %v6426 = vld [vmem:[%s119 + $0x30] sm:$0xff]
    %v6427 = vld [vmem:[%s119 + $0x38] sm:$0xff]
    %v6428 = vld [vmem:[%s119 + $0x40] sm:$0xff]
    %v6429 = vld [vmem:[%s119 + $0x48] sm:$0xff]
    %v6430 = vld [vmem:[%s119 + $0x50] sm:$0xff]
    %v6431 = vld [vmem:[%s119 + $0x58] sm:$0xff]
    %v6432 = vld [vmem:[%s119 + $0x60] sm:$0xff]
    %v6433 = vld [vmem:[%s119 + $0x68] sm:$0xff]
    %v6434 = vld [vmem:[%s119 + $0x70] sm:$0xff]
    %v6435 = vld [vmem:[%s119 + $0x78] sm:$0xff]
    %v6436 = vld [vmem:[%s119 + $0x80] sm:$0xff]
    %v6437 = vld [vmem:[%s119 + $0x88] sm:$0xff]
    %v6438 = vld [vmem:[%s119 + $0x90] sm:$0xff]
    %v6439 = vld [vmem:[%s119 + $0x98] sm:$0xff]
    %v6440 = vld [vmem:[%s119 + $0xa0] sm:$0xff]
    %v6441 = vld [vmem:[%s119 + $0xa8] sm:$0xff]
    %v6442 = vld [vmem:[%s119 + $0xb0] sm:$0xff]
    %v6443 = vld [vmem:[%s119 + $0xb8] sm:$0xff]
    %v6444 = vld [vmem:[%s119 + $0xc0] sm:$0xff]
    %v6445 = vld [vmem:[%s119 + $0xc8] sm:$0xff]
    %v6446 = vld [vmem:[%s119 + $0xd0] sm:$0xff]
    %v6447 = vld [vmem:[%s119 + $0xd8] sm:$0xff]
    %v6448 = vld [vmem:[%s119 + $0xe0] sm:$0xff]
    %v6449 = vld [vmem:[%s119 + $0xe8] sm:$0xff]
    %v6450 = vld [vmem:[%s119 + $0xf0] sm:$0xff]
    %v6451 = vld [vmem:[%s119 + $0xf8] sm:$0xff]
    %v6452 = vld [vmem:[#allocation21] sm:$0x1]
    %v6453 = vsel %vm1435, %v6396, 0.0
    %6454 = vadd.xlane.f32.xlu0 %v6453
    %v6455 = vpop.xlane.xlu0 %6454
    %v6456 = vsel %vm1435, %v6397, 0.0
    %6457 = vadd.xlane.f32.xlu0 %v6456
    %v6458 = vpop.xlane.xlu0 %6457
    %v6459 = vrcp.pop 64.0
    %v6460 = vmul.f32 %v6455, %v6459
    %v6461 = vmul.f32 %v6458, %v6459
    %v6462 = vsub.f32 %v6396, %v6460
    %v6463 = vsub.f32 %v6397, %v6461
    %v6464 = vmul.f32 %v6462, %v6462
    %v6465 = vmul.f32 %v6463, %v6463
    %v6466 = vsel %vm1435, %v6464, 0.0
    %6467 = vadd.xlane.f32.xlu0 %v6466
    %v6468 = vpop.xlane.xlu0 %6467
    %v6469 = vsel %vm1435, %v6465, 0.0
    %6470 = vadd.xlane.f32.xlu0 %v6469
    %v6471 = vpop.xlane.xlu0 %6470
    %v6472 = vmul.f32 %v6468, %v6459
    %v6473 = vmul.f32 %v6471, %v6459
    %v6474 = vadd.f32 %v6472, 1e-05
    %v6475 = vadd.f32 %v6473, 1e-05
    %v6476 = vrsqrt.pop %v6474
    %v6477 = vrsqrt.pop %v6475
    %v6478 = vmul.f32 %v6462, %v6476
    %v6479 = vmul.f32 %v6463, %v6477
    %v6481 = vlaneseq
    %v6482 = vshrl.u32 %v6481, 7
    %v6483 = vsub.s32 0, %v6482
    %v6484 = vrot.slane %v6398, %v6483
    %v6486 = vmul.f32 %v6478, %v6484
    %v6487 = vmul.f32 %v6479, %v6484
    %v6489 = vlaneseq
    %v6490 = vshrl.u32 %v6489, 7
    %v6491 = vsub.s32 0, %v6490
    %v6492 = vrot.slane %v6399, %v6491
    %v6494 = vadd.f32 %v6486, %v6492
    %v6495 = vadd.f32 %v6487, %v6492
    %v6496 = vld [vmem:[%s93] sm:$0xff]
    %v6497 = vld [vmem:[%s93 + $0x8] sm:$0xff]
    %v6498 = vld [vmem:[%s93 + $0x10] sm:$0xff]
    %v6499 = vld [vmem:[%s93 + $0x18] sm:$0xff]
    %v6500 = vld [vmem:[%s93 + $0x20] sm:$0xff]
    %v6501 = vld [vmem:[%s93 + $0x28] sm:$0xff]
    %v6502 = vld [vmem:[%s93 + $0x30] sm:$0xff]
    %v6503 = vld [vmem:[%s93 + $0x38] sm:$0xff]
    %v6504 = vld [vmem:[%s99] sm:$0x1]
    %v6506 = vlaneseq
    %v6507 = vshrl.u32 %v6506, 7
    %v6508 = vsub.s32 0, %v6507
    %v6509 = vrot.slane %v6504, %v6508
    %v6512 = vsel %vm1435, %v6494, 0
    %v6515 = vsel %vm1435, %v6495, 0
    %6517 = vmatprep.subr.mxu0 0.0
    %6518 = vmatpush1.msra.mxu0 %v6496
    %6519 = vmatprep.subr.mxu0 0.0
    %6520 = vmatpush1.msra.mxu0 %v6497
    %6521 = vmatprep.subr.mxu0 0.0
    %6522 = vmatpush1.msra.mxu0 %v6498
    %6523 = vmatprep.subr.mxu0 0.0
    %6524 = vmatpush1.msra.mxu0 %v6499
    %6525 = vmatprep.subr.mxu0 0.0
    %6526 = vmatpush1.msra.mxu0 %v6500
    %6527 = vmatprep.subr.mxu0 0.0
    %6528 = vmatpush1.msra.mxu0 %v6501
    %6529 = vmatprep.subr.mxu0 0.0
    %6530 = vmatpush1.msra.mxu0 %v6502
    %6531 = vmatprep.subr.mxu0 0.0
    %6532 = vmatpush1.msra.mxu0 %v6503
    %6533 = vmatprep.subr.mxu0 0.0
    %6534 = vmatpush1.msra.mxu0 0.0
    %6535 = vmatprep.subr.mxu0 0.0
    %6536 = vmatpush1.msra.mxu0 0.0
    %6537 = vmatprep.subr.mxu0 0.0
    %6538 = vmatpush1.msra.mxu0 0.0
    %6539 = vmatprep.subr.mxu0 0.0
    %6540 = vmatpush1.msra.mxu0 0.0
    %6541 = vmatprep.subr.mxu0 0.0
    %6542 = vmatpush1.msra.mxu0 0.0
    %6543 = vmatprep.subr.mxu0 0.0
    %6544 = vmatpush1.msra.mxu0 0.0
    %6545 = vmatprep.subr.mxu0 0.0
    %6546 = vmatpush1.msra.mxu0 0.0
    %6547 = vmatprep.subr.mxu0 0.0
    %6548 = vmatpush1.msra.mxu0 0.0
    %6549 = vmatprep.subr.mxu0 0.0
    %6550 = vmatpush1.msra.mxu0 0.0
    %6551 = vmatprep.subr.mxu0 0.0
    %6552 = vmatpush1.msra.mxu0 0.0
    %6553 = vmatprep.subr.mxu0 0.0
    %6554 = vmatpush1.msra.mxu0 0.0
    %6555 = vmatprep.subr.mxu0 0.0
    %6556 = vmatpush1.msra.mxu0 0.0
    %6557 = vmatprep.subr.mxu0 0.0
    %6558 = vmatpush1.msra.mxu0 0.0
    %6559 = vmatprep.subr.mxu0 0.0
    %6560 = vmatpush1.msra.mxu0 0.0
    %6561 = vmatprep.subr.mxu0 0.0
    %6562 = vmatpush1.msra.mxu0 0.0
    %6563 = vmatprep.subr.mxu0 0.0
    %6564 = vmatpush1.msra.mxu0 0.0
    %6565 = vmatprep.subr.mxu0 0.0
    %6566 = vmatpush1.msra.mxu0 0.0
    %6567 = vmatprep.subr.mxu0 0.0
    %6568 = vmatpush1.msra.mxu0 0.0
    %6569 = vmatprep.subr.mxu0 0.0
    %6570 = vmatpush1.msra.mxu0 0.0
    %6571 = vmatprep.subr.mxu0 0.0
    %6572 = vmatpush1.msra.mxu0 0.0
    %6573 = vmatprep.subr.mxu0 0.0
    %6574 = vmatpush1.msra.mxu0 0.0
    %6575 = vmatprep.subr.mxu0 0.0
    %6576 = vmatpush1.msra.mxu0 0.0
    %6577 = vmatprep.subr.mxu0 0.0
    %6578 = vmatpush1.msra.mxu0 0.0
    %6579 = vmatprep.subr.mxu0 0.0
    %6580 = vmatpush1.msra.mxu0 0.0
    %6581 = vmatprep.mubr.f32.mxu0 0.0
    %6582 = vmatmul.mubr.f32.gmra.mrb[0].mxu0 %v6512
    %v6583 = vpop.f32.mrb[0].mxu0
    %v6584 = vadd.f32 %v6509, %v6583
    %v6585 = vpop.f32.mrb[0].mxu0
    %6586 = vmatprep.mubr.f32.mxu0 0.0
    %6587 = vmatmul.mubr.f32.gmra.mrb[0].mxu0 %v6515
    %v6588 = vpop.f32.mrb[0].mxu0
    %v6589 = vadd.f32 %v6509, %v6588
    %v6590 = vpop.f32.mrb[0].mxu0
    %6591 = vdwg.mxu0
    %v6592 = vld [vmem:[%s95] sm:$0xff]
    %v6593 = vld [vmem:[%s95 + $0x8] sm:$0xff]
    %v6594 = vld [vmem:[%s95 + $0x10] sm:$0xff]
    %v6595 = vld [vmem:[%s95 + $0x18] sm:$0xff]
    %v6596 = vld [vmem:[%s95 + $0x20] sm:$0xff]
    %v6597 = vld [vmem:[%s95 + $0x28] sm:$0xff]
    %v6598 = vld [vmem:[%s95 + $0x30] sm:$0xff]
    %v6599 = vld [vmem:[%s95 + $0x38] sm:$0xff]
    %v6600 = vld [vmem:[%s101] sm:$0x1]
    %v6602 = vlaneseq
    %v6603 = vshrl.u32 %v6602, 7
    %v6604 = vsub.s32 0, %v6603
    %v6605 = vrot.slane %v6600, %v6604
    %6607 = vmatprep.subr.mxu0 0.0
    %6608 = vmatpush1.msra.mxu0 %v6592
    %6609 = vmatprep.subr.mxu0 0.0
    %6610 = vmatpush1.msra.mxu0 %v6593
    %6611 = vmatprep.subr.mxu0 0.0
    %6612 = vmatpush1.msra.mxu0 %v6594
    %6613 = vmatprep.subr.mxu0 0.0
    %6614 = vmatpush1.msra.mxu0 %v6595
    %6615 = vmatprep.subr.mxu0 0.0
    %6616 = vmatpush1.msra.mxu0 %v6596
    %6617 = vmatprep.subr.mxu0 0.0
    %6618 = vmatpush1.msra.mxu0 %v6597
    %6619 = vmatprep.subr.mxu0 0.0
    %6620 = vmatpush1.msra.mxu0 %v6598
    %6621 = vmatprep.subr.mxu0 0.0
    %6622 = vmatpush1.msra.mxu0 %v6599
    %6623 = vmatprep.subr.mxu0 0.0
    %6624 = vmatpush1.msra.mxu0 0.0
    %6625 = vmatprep.subr.mxu0 0.0
    %6626 = vmatpush1.msra.mxu0 0.0
    %6627 = vmatprep.subr.mxu0 0.0
    %6628 = vmatpush1.msra.mxu0 0.0
    %6629 = vmatprep.subr.mxu0 0.0
    %6630 = vmatpush1.msra.mxu0 0.0
    %6631 = vmatprep.subr.mxu0 0.0
    %6632 = vmatpush1.msra.mxu0 0.0
    %6633 = vmatprep.subr.mxu0 0.0
    %6634 = vmatpush1.msra.mxu0 0.0
    %6635 = vmatprep.subr.mxu0 0.0
    %6636 = vmatpush1.msra.mxu0 0.0
    %6637 = vmatprep.subr.mxu0 0.0
    %6638 = vmatpush1.msra.mxu0 0.0
    %6639 = vmatprep.subr.mxu0 0.0
    %6640 = vmatpush1.msra.mxu0 0.0
    %6641 = vmatprep.subr.mxu0 0.0
    %6642 = vmatpush1.msra.mxu0 0.0
    %6643 = vmatprep.subr.mxu0 0.0
    %6644 = vmatpush1.msra.mxu0 0.0
    %6645 = vmatprep.subr.mxu0 0.0
    %6646 = vmatpush1.msra.mxu0 0.0
    %6647 = vmatprep.subr.mxu0 0.0
    %6648 = vmatpush1.msra.mxu0 0.0
    %6649 = vmatprep.subr.mxu0 0.0
    %6650 = vmatpush1.msra.mxu0 0.0
    %6651 = vmatprep.subr.mxu0 0.0
    %6652 = vmatpush1.msra.mxu0 0.0
    %6653 = vmatprep.subr.mxu0 0.0
    %6654 = vmatpush1.msra.mxu0 0.0
    %6655 = vmatprep.subr.mxu0 0.0
    %6656 = vmatpush1.msra.mxu0 0.0
    %6657 = vmatprep.subr.mxu0 0.0
    %6658 = vmatpush1.msra.mxu0 0.0
    %6659 = vmatprep.subr.mxu0 0.0
    %6660 = vmatpush1.msra.mxu0 0.0
    %6661 = vmatprep.subr.mxu0 0.0
    %6662 = vmatpush1.msra.mxu0 0.0
    %6663 = vmatprep.subr.mxu0 0.0
    %6664 = vmatpush1.msra.mxu0 0.0
    %6665 = vmatprep.subr.mxu0 0.0
    %6666 = vmatpush1.msra.mxu0 0.0
    %6667 = vmatprep.subr.mxu0 0.0
    %6668 = vmatpush1.msra.mxu0 0.0
    %6669 = vmatprep.subr.mxu0 0.0
    %6670 = vmatpush1.msra.mxu0 0.0
    %6671 = vmatprep.mubr.f32.mxu0 0.0
    %6672 = vmatmul.mubr.f32.gmra.mrb[0].mxu0 %v6512
    %v6673 = vpop.f32.mrb[0].mxu0
    %v6674 = vadd.f32 %v6605, %v6673
    %v6675 = vpop.f32.mrb[0].mxu0
    %6676 = vmatprep.mubr.f32.mxu0 0.0
    %6677 = vmatmul.mubr.f32.gmra.mrb[0].mxu0 %v6515
    %v6678 = vpop.f32.mrb[0].mxu0
    %v6679 = vadd.f32 %v6605, %v6678
    %v6680 = vpop.f32.mrb[0].mxu0
    %6681 = vdwg.mxu0
    %v6682 = vld [vmem:[%s97] sm:$0xff]
    %v6683 = vld [vmem:[%s97 + $0x8] sm:$0xff]
    %v6684 = vld [vmem:[%s97 + $0x10] sm:$0xff]
    %v6685 = vld [vmem:[%s97 + $0x18] sm:$0xff]
    %v6686 = vld [vmem:[%s97 + $0x20] sm:$0xff]
    %v6687 = vld [vmem:[%s97 + $0x28] sm:$0xff]
    %v6688 = vld [vmem:[%s97 + $0x30] sm:$0xff]
    %v6689 = vld [vmem:[%s97 + $0x38] sm:$0xff]
    %v6690 = vld [vmem:[%s103] sm:$0x1]
    %v6692 = vlaneseq
    %v6693 = vshrl.u32 %v6692, 7
    %v6694 = vsub.s32 0, %v6693
    %v6695 = vrot.slane %v6690, %v6694
    %6697 = vmatprep.subr.mxu0 0.0
    %6698 = vmatpush1.msra.mxu0 %v6682
    %6699 = vmatprep.subr.mxu0 0.0
    %6700 = vmatpush1.msra.mxu0 %v6683
    %6701 = vmatprep.subr.mxu0 0.0
    %6702 = vmatpush1.msra.mxu0 %v6684
    %6703 = vmatprep.subr.mxu0 0.0
    %6704 = vmatpush1.msra.mxu0 %v6685
    %6705 = vmatprep.subr.mxu0 0.0
    %6706 = vmatpush1.msra.mxu0 %v6686
    %6707 = vmatprep.subr.mxu0 0.0
    %6708 = vmatpush1.msra.mxu0 %v6687
    %6709 = vmatprep.subr.mxu0 0.0
    %6710 = vmatpush1.msra.mxu0 %v6688
    %6711 = vmatprep.subr.mxu0 0.0
    %6712 = vmatpush1.msra.mxu0 %v6689
    %6713 = vmatprep.subr.mxu0 0.0
    %6714 = vmatpush1.msra.mxu0 0.0
    %6715 = vmatprep.subr.mxu0 0.0
    %6716 = vmatpush1.msra.mxu0 0.0
    %6717 = vmatprep.subr.mxu0 0.0
    %6718 = vmatpush1.msra.mxu0 0.0
    %6719 = vmatprep.subr.mxu0 0.0
    %6720 = vmatpush1.msra.mxu0 0.0
    %6721 = vmatprep.subr.mxu0 0.0
    %6722 = vmatpush1.msra.mxu0 0.0
    %6723 = vmatprep.subr.mxu0 0.0
    %6724 = vmatpush1.msra.mxu0 0.0
    %6725 = vmatprep.subr.mxu0 0.0
    %6726 = vmatpush1.msra.mxu0 0.0
    %6727 = vmatprep.subr.mxu0 0.0
    %6728 = vmatpush1.msra.mxu0 0.0
    %6729 = vmatprep.subr.mxu0 0.0
    %6730 = vmatpush1.msra.mxu0 0.0
    %6731 = vmatprep.subr.mxu0 0.0
    %6732 = vmatpush1.msra.mxu0 0.0
    %6733 = vmatprep.subr.mxu0 0.0
    %6734 = vmatpush1.msra.mxu0 0.0
    %6735 = vmatprep.subr.mxu0 0.0
    %6736 = vmatpush1.msra.mxu0 0.0
    %6737 = vmatprep.subr.mxu0 0.0
    %6738 = vmatpush1.msra.mxu0 0.0
    %6739 = vmatprep.subr.mxu0 0.0
    %6740 = vmatpush1.msra.mxu0 0.0
    %6741 = vmatprep.subr.mxu0 0.0
    %6742 = vmatpush1.msra.mxu0 0.0
    %6743 = vmatprep.subr.mxu0 0.0
    %6744 = vmatpush1.msra.mxu0 0.0
    %6745 = vmatprep.subr.mxu0 0.0
    %6746 = vmatpush1.msra.mxu0 0.0
    %6747 = vmatprep.subr.mxu0 0.0
    %6748 = vmatpush1.msra.mxu0 0.0
    %6749 = vmatprep.subr.mxu0 0.0
    %6750 = vmatpush1.msra.mxu0 0.0
    %6751 = vmatprep.subr.mxu0 0.0
    %6752 = vmatpush1.msra.mxu0 0.0
    %6753 = vmatprep.subr.mxu0 0.0
    %6754 = vmatpush1.msra.mxu0 0.0
    %6755 = vmatprep.subr.mxu0 0.0
    %6756 = vmatpush1.msra.mxu0 0.0
    %6757 = vmatprep.subr.mxu0 0.0
    %6758 = vmatpush1.msra.mxu0 0.0
    %6759 = vmatprep.subr.mxu0 0.0
    %6760 = vmatpush1.msra.mxu0 0.0
    %6761 = vmatprep.mubr.f32.mxu0 0.0
    %6762 = vmatmul.mubr.f32.gmra.mrb[0].mxu0 %v6512
    %v6763 = vpop.f32.mrb[0].mxu0
    %v6764 = vadd.f32 %v6695, %v6763
    %v6765 = vpop.f32.mrb[0].mxu0
    %6766 = vmatprep.mubr.f32.mxu0 0.0
    %6767 = vmatmul.mubr.f32.gmra.mrb[0].mxu0 %v6515
    %v6768 = vpop.f32.mrb[0].mxu0
    %v6769 = vadd.f32 %v6695, %v6768
    %v6770 = vpop.f32.mrb[0].mxu0
    %6771 = vdwg.mxu0
    %v6772 = vld [vmem:[%s105] sm:$0xff]
    %v6773 = vld [vmem:[%s105 + $0x8] sm:$0xff]
    %v6775 = vsel %vm1281, %v6584, 0
    %v6778 = vsel %vm1281, %v6589, 0
    %v6781 = vsel %vm1281, %v6674, 0
    %v6784 = vsel %vm1281, %v6679, 0
    %6786 = vmatprep.subr.mxu0 0.0
    %6787 = vmatpush1.xpose.msra.mxu0 %v6781
    %6788 = vmatprep.subr.mxu0 0.0
    %6789 = vmatpush1.xpose.msra.mxu0 %v6784
    %6790 = vmatprep.subr.mxu0 0.0
    %6791 = vmatpush1.xpose.msra.mxu0 0.0
    %6792 = vmatprep.subr.mxu0 0.0
    %6793 = vmatpush1.xpose.msra.mxu0 0.0
    %6794 = vmatprep.subr.mxu0 0.0
    %6795 = vmatpush1.xpose.msra.mxu0 0.0
    %6796 = vmatprep.subr.mxu0 0.0
    %6797 = vmatpush1.xpose.msra.mxu0 0.0
    %6798 = vmatprep.subr.mxu0 0.0
    %6799 = vmatpush1.xpose.msra.mxu0 0.0
    %6800 = vmatprep.subr.mxu0 0.0
    %6801 = vmatpush1.xpose.msra.mxu0 0.0
    %6802 = vmatprep.subr.mxu0 0.0
    %6803 = vmatpush1.xpose.msra.mxu0 0.0
    %6804 = vmatprep.subr.mxu0 0.0
    %6805 = vmatpush1.xpose.msra.mxu0 0.0
    %6806 = vmatprep.subr.mxu0 0.0
    %6807 = vmatpush1.xpose.msra.mxu0 0.0
    %6808 = vmatprep.subr.mxu0 0.0
    %6809 = vmatpush1.xpose.msra.mxu0 0.0
    %6810 = vmatprep.subr.mxu0 0.0
    %6811 = vmatpush1.xpose.msra.mxu0 0.0
    %6812 = vmatprep.subr.mxu0 0.0
    %6813 = vmatpush1.xpose.msra.mxu0 0.0
    %6814 = vmatprep.subr.mxu0 0.0
    %6815 = vmatpush1.xpose.msra.mxu0 0.0
    %6816 = vmatprep.subr.mxu0 0.0
    %6817 = vmatpush1.xpose.msra.mxu0 0.0
    %6818 = vmatprep.subr.mxu0 0.0
    %6819 = vmatpush1.xpose.msra.mxu0 0.0
    %6820 = vmatprep.subr.mxu0 0.0
    %6821 = vmatpush1.xpose.msra.mxu0 0.0
    %6822 = vmatprep.subr.mxu0 0.0
    %6823 = vmatpush1.xpose.msra.mxu0 0.0
    %6824 = vmatprep.subr.mxu0 0.0
    %6825 = vmatpush1.xpose.msra.mxu0 0.0
    %6826 = vmatprep.subr.mxu0 0.0
    %6827 = vmatpush1.xpose.msra.mxu0 0.0
    %6828 = vmatprep.subr.mxu0 0.0
    %6829 = vmatpush1.xpose.msra.mxu0 0.0
    %6830 = vmatprep.subr.mxu0 0.0
    %6831 = vmatpush1.xpose.msra.mxu0 0.0
    %6832 = vmatprep.subr.mxu0 0.0
    %6833 = vmatpush1.xpose.msra.mxu0 0.0
    %6834 = vmatprep.subr.mxu0 0.0
    %6835 = vmatpush1.xpose.msra.mxu0 0.0
    %6836 = vmatprep.subr.mxu0 0.0
    %6837 = vmatpush1.xpose.msra.mxu0 0.0
    %6838 = vmatprep.subr.mxu0 0.0
    %6839 = vmatpush1.xpose.msra.mxu0 0.0
    %6840 = vmatprep.subr.mxu0 0.0
    %6841 = vmatpush1.xpose.msra.mxu0 0.0
    %6842 = vmatprep.subr.mxu0 0.0
    %6843 = vmatpush1.xpose.msra.mxu0 0.0
    %6844 = vmatprep.subr.mxu0 0.0
    %6845 = vmatpush1.xpose.msra.mxu0 0.0
    %6846 = vmatprep.subr.mxu0 0.0
    %6847 = vmatpush1.xpose.msra.mxu0 0.0
    %6848 = vmatprep.subr.mxu0 0.0
    %6849 = vmatpush1.xpose.msra.mxu0 0.0
    %6850 = vmatprep.mubr.f32.mxu0 0.0
    %6851 = vmatmul.mubr.f32.gmra.mrb[0].mxu0 %v6775
    %v6852 = vpop.f32.mrb[0].mxu0
    %v6853 = vadd.f32 %v6772, %v6852
    %v6854 = vpop.f32.mrb[0].mxu0
    %6855 = vmatprep.mubr.f32.mxu0 0.0
    %6856 = vmatmul.mubr.f32.gmra.mrb[0].mxu0 %v6778
    %v6857 = vpop.f32.mrb[0].mxu0
    %v6858 = vadd.f32 %v6773, %v6857
    %v6859 = vpop.f32.mrb[0].mxu0
    %6860 = vdwg.mxu0
    %v6861 = vsel %vm1281, %v6853, -inf
    %6862 = vmax.xlane.f32.xlu0 %v6861
    %v6863 = vpop.xlane.xlu0 %6862
    %v6864 = vsel %vm1281, %v6858, -inf
    %6865 = vmax.xlane.f32.xlu0 %v6864
    %v6866 = vpop.xlane.xlu0 %6865
    %v6867 = vsub.f32 %v6853, %v6863
    %v6868 = vsub.f32 %v6858, %v6866
    %v6869 = vmul.f32 %v6867, 1.442695
    %v6870 = vpow.pop %v6869
    %v6871 = vmul.f32 %v6868, 1.442695
    %v6872 = vpow.pop %v6871
    %v6873 = vsel %vm1281, %v6870, 0.0
    %6874 = vadd.xlane.f32.xlu0 %v6873
    %v6875 = vpop.xlane.xlu0 %6874
    %v6876 = vsel %vm1281, %v6872, 0.0
    %6877 = vadd.xlane.f32.xlu0 %v6876
    %v6878 = vpop.xlane.xlu0 %6877
    %v6879 = vrcp.pop %v6875
    %v6880 = vrcp.pop %v6878
    %v6881 = vmul.f32 %v6870, %v6879
    %v6882 = vmul.f32 %v6872, %v6880
    %v6884 = vsel %vm1281, %v6881, 0
    %v6887 = vsel %vm1281, %v6882, 0
    %6889 = vmatprep.subr.mxu0 0.0
    %6890 = vmatpush1.msra.mxu0 %v6764
    %6891 = vmatprep.subr.mxu0 0.0
    %6892 = vmatpush1.msra.mxu0 %v6769
    %6893 = vmatprep.subr.mxu0 0.0
    %6894 = vmatpush1.msra.mxu0 0.0
    %6895 = vmatprep.subr.mxu0 0.0
    %6896 = vmatpush1.msra.mxu0 0.0
    %6897 = vmatprep.subr.mxu0 0.0
    %6898 = vmatpush1.msra.mxu0 0.0
    %6899 = vmatprep.subr.mxu0 0.0
    %6900 = vmatpush1.msra.mxu0 0.0
    %6901 = vmatprep.subr.mxu0 0.0
    %6902 = vmatpush1.msra.mxu0 0.0
    %6903 = vmatprep.subr.mxu0 0.0
    %6904 = vmatpush1.msra.mxu0 0.0
    %6905 = vmatprep.subr.mxu0 0.0
    %6906 = vmatpush1.msra.mxu0 0.0
    %6907 = vmatprep.subr.mxu0 0.0
    %6908 = vmatpush1.msra.mxu0 0.0
    %6909 = vmatprep.subr.mxu0 0.0
    %6910 = vmatpush1.msra.mxu0 0.0
    %6911 = vmatprep.subr.mxu0 0.0
    %6912 = vmatpush1.msra.mxu0 0.0
    %6913 = vmatprep.subr.mxu0 0.0
    %6914 = vmatpush1.msra.mxu0 0.0
    %6915 = vmatprep.subr.mxu0 0.0
    %6916 = vmatpush1.msra.mxu0 0.0
    %6917 = vmatprep.subr.mxu0 0.0
    %6918 = vmatpush1.msra.mxu0 0.0
    %6919 = vmatprep.subr.mxu0 0.0
    %6920 = vmatpush1.msra.mxu0 0.0
    %6921 = vmatprep.subr.mxu0 0.0
    %6922 = vmatpush1.msra.mxu0 0.0
    %6923 = vmatprep.subr.mxu0 0.0
    %6924 = vmatpush1.msra.mxu0 0.0
    %6925 = vmatprep.subr.mxu0 0.0
    %6926 = vmatpush1.msra.mxu0 0.0
    %6927 = vmatprep.subr.mxu0 0.0
    %6928 = vmatpush1.msra.mxu0 0.0
    %6929 = vmatprep.subr.mxu0 0.0
    %6930 = vmatpush1.msra.mxu0 0.0
    %6931 = vmatprep.subr.mxu0 0.0
    %6932 = vmatpush1.msra.mxu0 0.0
    %6933 = vmatprep.subr.mxu0 0.0
    %6934 = vmatpush1.msra.mxu0 0.0
    %6935 = vmatprep.subr.mxu0 0.0
    %6936 = vmatpush1.msra.mxu0 0.0
    %6937 = vmatprep.subr.mxu0 0.0
    %6938 = vmatpush1.msra.mxu0 0.0
    %6939 = vmatprep.subr.mxu0 0.0
    %6940 = vmatpush1.msra.mxu0 0.0
    %6941 = vmatprep.subr.mxu0 0.0
    %6942 = vmatpush1.msra.mxu0 0.0
    %6943 = vmatprep.subr.mxu0 0.0
    %6944 = vmatpush1.msra.mxu0 0.0
    %6945 = vmatprep.subr.mxu0 0.0
    %6946 = vmatpush1.msra.mxu0 0.0
    %6947 = vmatprep.subr.mxu0 0.0
    %6948 = vmatpush1.msra.mxu0 0.0
    %6949 = vmatprep.subr.mxu0 0.0
    %6950 = vmatpush1.msra.mxu0 0.0
    %6951 = vmatprep.subr.mxu0 0.0
    %6952 = vmatpush1.msra.mxu0 0.0
    %6953 = vmatprep.mubr.f32.mxu0 0.0
    %6954 = vmatmul.mubr.f32.gmra.mrb[0].mxu0 %v6884
    %v6955 = vpop.f32.mrb[0].mxu0
    %v6956 = vadd.f32 0.0, %v6955
    %v6957 = vpop.f32.mrb[0].mxu0
    %6958 = vmatprep.mubr.f32.mxu0 0.0
    %6959 = vmatmul.mubr.f32.gmra.mrb[0].mxu0 %v6887
    %v6960 = vpop.f32.mrb[0].mxu0
    %v6961 = vadd.f32 0.0, %v6960
    %v6962 = vpop.f32.mrb[0].mxu0
    %6963 = vdwg.mxu0
    %v6964 = vld [vmem:[%s107] sm:$0xff]
    %v6965 = vld [vmem:[%s107 + $0x8] sm:$0xff]
    %v6967 = vsel %vm1281, %v6956, 0
    %v6970 = vsel %vm1281, %v6961, 0
    %6972 = vmatprep.subr.mxu0 0.0
    %6973 = vmatpush1.msra.mxu0 %v6964
    %6974 = vmatprep.subr.mxu0 0.0
    %6975 = vmatpush1.msra.mxu0 %v6965
    %6976 = vmatprep.subr.mxu0 0.0
    %6977 = vmatpush1.msra.mxu0 0.0
    %6978 = vmatprep.subr.mxu0 0.0
    %6979 = vmatpush1.msra.mxu0 0.0
    %6980 = vmatprep.subr.mxu0 0.0
    %6981 = vmatpush1.msra.mxu0 0.0
    %6982 = vmatprep.subr.mxu0 0.0
    %6983 = vmatpush1.msra.mxu0 0.0
    %6984 = vmatprep.subr.mxu0 0.0
    %6985 = vmatpush1.msra.mxu0 0.0
    %6986 = vmatprep.subr.mxu0 0.0
    %6987 = vmatpush1.msra.mxu0 0.0
    %6988 = vmatprep.subr.mxu0 0.0
    %6989 = vmatpush1.msra.mxu0 0.0
    %6990 = vmatprep.subr.mxu0 0.0
    %6991 = vmatpush1.msra.mxu0 0.0
    %6992 = vmatprep.subr.mxu0 0.0
    %6993 = vmatpush1.msra.mxu0 0.0
    %6994 = vmatprep.subr.mxu0 0.0
    %6995 = vmatpush1.msra.mxu0 0.0
    %6996 = vmatprep.subr.mxu0 0.0
    %6997 = vmatpush1.msra.mxu0 0.0
    %6998 = vmatprep.subr.mxu0 0.0
    %6999 = vmatpush1.msra.mxu0 0.0
    %7000 = vmatprep.subr.mxu0 0.0
    %7001 = vmatpush1.msra.mxu0 0.0
    %7002 = vmatprep.subr.mxu0 0.0
    %7003 = vmatpush1.msra.mxu0 0.0
    %7004 = vmatprep.subr.mxu0 0.0
    %7005 = vmatpush1.msra.mxu0 0.0
    %7006 = vmatprep.subr.mxu0 0.0
    %7007 = vmatpush1.msra.mxu0 0.0
    %7008 = vmatprep.subr.mxu0 0.0
    %7009 = vmatpush1.msra.mxu0 0.0
    %7010 = vmatprep.subr.mxu0 0.0
    %7011 = vmatpush1.msra.mxu0 0.0
    %7012 = vmatprep.subr.mxu0 0.0
    %7013 = vmatpush1.msra.mxu0 0.0
    %7014 = vmatprep.subr.mxu0 0.0
    %7015 = vmatpush1.msra.mxu0 0.0
    %7016 = vmatprep.subr.mxu0 0.0
    %7017 = vmatpush1.msra.mxu0 0.0
    %7018 = vmatprep.subr.mxu0 0.0
    %7019 = vmatpush1.msra.mxu0 0.0
    %7020 = vmatprep.subr.mxu0 0.0
    %7021 = vmatpush1.msra.mxu0 0.0
    %7022 = vmatprep.subr.mxu0 0.0
    %7023 = vmatpush1.msra.mxu0 0.0
    %7024 = vmatprep.subr.mxu0 0.0
    %7025 = vmatpush1.msra.mxu0 0.0
    %7026 = vmatprep.subr.mxu0 0.0
    %7027 = vmatpush1.msra.mxu0 0.0
    %7028 = vmatprep.subr.mxu0 0.0
    %7029 = vmatpush1.msra.mxu0 0.0
    %7030 = vmatprep.subr.mxu0 0.0
    %7031 = vmatpush1.msra.mxu0 0.0
    %7032 = vmatprep.subr.mxu0 0.0
    %7033 = vmatpush1.msra.mxu0 0.0
    %7034 = vmatprep.subr.mxu0 0.0
    %7035 = vmatpush1.msra.mxu0 0.0
    %7036 = vmatprep.mubr.f32.mxu0 0.0
    %7037 = vmatmul.mubr.f32.gmra.mrb[0].mxu0 %v6967
    %v7038 = vpop.f32.mrb[0].mxu0
    %v7039 = vadd.f32 0.0, %v7038
    %v7040 = vpop.f32.mrb[0].mxu0
    %7041 = vmatprep.mubr.f32.mxu0 0.0
    %7042 = vmatmul.mubr.f32.gmra.mrb[0].mxu0 %v6970
    %v7043 = vpop.f32.mrb[0].mxu0
    %v7044 = vadd.f32 0.0, %v7043
    %v7045 = vpop.f32.mrb[0].mxu0
    %7046 = vdwg.mxu0
    %v7048 = vlaneseq
    %v7049 = vshrl.u32 %v7048, 7
    %v7050 = vsub.s32 0, %v7049
    %v7051 = vrot.slane %v6400, %v7050
    %v7053 = vadd.f32 %v7051, %v7039
    %v7054 = vadd.f32 %v7051, %v7044
    %s7055 = scalar_lea.vmem %s93, 64
    %v7056 = vld [vmem:[%s7055] sm:$0xff]
    %v7057 = vld [vmem:[%s7055 + $0x8] sm:$0xff]
    %v7058 = vld [vmem:[%s7055 + $0x10] sm:$0xff]
    %v7059 = vld [vmem:[%s7055 + $0x18] sm:$0xff]
    %v7060 = vld [vmem:[%s7055 + $0x20] sm:$0xff]
    %v7061 = vld [vmem:[%s7055 + $0x28] sm:$0xff]
    %v7062 = vld [vmem:[%s7055 + $0x30] sm:$0xff]
    %v7063 = vld [vmem:[%s7055 + $0x38] sm:$0xff]
    %s7064 = scalar_lea.vmem %s99, 1
    %v7065 = vld [vmem:[%s7064] sm:$0x1]
    %v7067 = vlaneseq
    %v7068 = vshrl.u32 %v7067, 7
    %v7069 = vsub.s32 0, %v7068
    %v7070 = vrot.slane %v7065, %v7069
    %7072 = vmatprep.subr.mxu0 0.0
    %7073 = vmatpush1.msra.mxu0 %v7056
    %7074 = vmatprep.subr.mxu0 0.0
    %7075 = vmatpush1.msra.mxu0 %v7057
    %7076 = vmatprep.subr.mxu0 0.0
    %7077 = vmatpush1.msra.mxu0 %v7058
    %7078 = vmatprep.subr.mxu0 0.0
    %7079 = vmatpush1.msra.mxu0 %v7059
    %7080 = vmatprep.subr.mxu0 0.0
    %7081 = vmatpush1.msra.mxu0 %v7060
    %7082 = vmatprep.subr.mxu0 0.0
    %7083 = vmatpush1.msra.mxu0 %v7061
    %7084 = vmatprep.subr.mxu0 0.0
    %7085 = vmatpush1.msra.mxu0 %v7062
    %7086 = vmatprep.subr.mxu0 0.0
    %7087 = vmatpush1.msra.mxu0 %v7063
    %7088 = vmatprep.subr.mxu0 0.0
    %7089 = vmatpush1.msra.mxu0 0.0
    %7090 = vmatprep.subr.mxu0 0.0
    %7091 = vmatpush1.msra.mxu0 0.0
    %7092 = vmatprep.subr.mxu0 0.0
    %7093 = vmatpush1.msra.mxu0 0.0
    %7094 = vmatprep.subr.mxu0 0.0
    %7095 = vmatpush1.msra.mxu0 0.0
    %7096 = vmatprep.subr.mxu0 0.0
    %7097 = vmatpush1.msra.mxu0 0.0
    %7098 = vmatprep.subr.mxu0 0.0
    %7099 = vmatpush1.msra.mxu0 0.0
    %7100 = vmatprep.subr.mxu0 0.0
    %7101 = vmatpush1.msra.mxu0 0.0
    %7102 = vmatprep.subr.mxu0 0.0
    %7103 = vmatpush1.msra.mxu0 0.0
    %7104 = vmatprep.subr.mxu0 0.0
    %7105 = vmatpush1.msra.mxu0 0.0
    %7106 = vmatprep.subr.mxu0 0.0
    %7107 = vmatpush1.msra.mxu0 0.0
    %7108 = vmatprep.subr.mxu0 0.0
    %7109 = vmatpush1.msra.mxu0 0.0
    %7110 = vmatprep.subr.mxu0 0.0
    %7111 = vmatpush1.msra.mxu0 0.0
    %7112 = vmatprep.subr.mxu0 0.0
    %7113 = vmatpush1.msra.mxu0 0.0
    %7114 = vmatprep.subr.mxu0 0.0
    %7115 = vmatpush1.msra.mxu0 0.0
    %7116 = vmatprep.subr.mxu0 0.0
    %7117 = vmatpush1.msra.mxu0 0.0
    %7118 = vmatprep.subr.mxu0 0.0
    %7119 = vmatpush1.msra.mxu0 0.0
    %7120 = vmatprep.subr.mxu0 0.0
    %7121 = vmatpush1.msra.mxu0 0.0
    %7122 = vmatprep.subr.mxu0 0.0
    %7123 = vmatpush1.msra.mxu0 0.0
    %7124 = vmatprep.subr.mxu0 0.0
    %7125 = vmatpush1.msra.mxu0 0.0
    %7126 = vmatprep.subr.mxu0 0.0
    %7127 = vmatpush1.msra.mxu0 0.0
    %7128 = vmatprep.subr.mxu0 0.0
    %7129 = vmatpush1.msra.mxu0 0.0
    %7130 = vmatprep.subr.mxu0 0.0
    %7131 = vmatpush1.msra.mxu0 0.0
    %7132 = vmatprep.subr.mxu0 0.0
    %7133 = vmatpush1.msra.mxu0 0.0
    %7134 = vmatprep.subr.mxu0 0.0
    %7135 = vmatpush1.msra.mxu0 0.0
    %7136 = vmatprep.mubr.f32.mxu0 0.0
    %7137 = vmatmul.mubr.f32.gmra.mrb[0].mxu0 %v6512
    %v7138 = vpop.f32.mrb[0].mxu0
    %v7139 = vadd.f32 %v7070, %v7138
    %v7140 = vpop.f32.mrb[0].mxu0
    %7141 = vmatprep.mubr.f32.mxu0 0.0
    %7142 = vmatmul.mubr.f32.gmra.mrb[0].mxu0 %v6515
    %v7143 = vpop.f32.mrb[0].mxu0
    %v7144 = vadd.f32 %v7070, %v7143
    %v7145 = vpop.f32.mrb[0].mxu0
    %7146 = vdwg.mxu0
    %s7147 = scalar_lea.vmem %s95, 64
    %v7148 = vld [vmem:[%s7147] sm:$0xff]
    %v7149 = vld [vmem:[%s7147 + $0x8] sm:$0xff]
    %v7150 = vld [vmem:[%s7147 + $0x10] sm:$0xff]
    %v7151 = vld [vmem:[%s7147 + $0x18] sm:$0xff]
    %v7152 = vld [vmem:[%s7147 + $0x20] sm:$0xff]
    %v7153 = vld [vmem:[%s7147 + $0x28] sm:$0xff]
    %v7154 = vld [vmem:[%s7147 + $0x30] sm:$0xff]
    %v7155 = vld [vmem:[%s7147 + $0x38] sm:$0xff]
    %s7156 = scalar_lea.vmem %s101, 1
    %v7157 = vld [vmem:[%s7156] sm:$0x1]
    %v7159 = vlaneseq
    %v7160 = vshrl.u32 %v7159, 7
    %v7161 = vsub.s32 0, %v7160
    %v7162 = vrot.slane %v7157, %v7161
    %7164 = vmatprep.subr.mxu0 0.0
    %7165 = vmatpush1.msra.mxu0 %v7148
    %7166 = vmatprep.subr.mxu0 0.0
    %7167 = vmatpush1.msra.mxu0 %v7149
    %7168 = vmatprep.subr.mxu0 0.0
    %7169 = vmatpush1.msra.mxu0 %v7150
    %7170 = vmatprep.subr.mxu0 0.0
    %7171 = vmatpush1.msra.mxu0 %v7151
    %7172 = vmatprep.subr.mxu0 0.0
    %7173 = vmatpush1.msra.mxu0 %v7152
    %7174 = vmatprep.subr.mxu0 0.0
    %7175 = vmatpush1.msra.mxu0 %v7153
    %7176 = vmatprep.subr.mxu0 0.0
    %7177 = vmatpush1.msra.mxu0 %v7154
    %7178 = vmatprep.subr.mxu0 0.0
    %7179 = vmatpush1.msra.mxu0 %v7155
    %7180 = vmatprep.subr.mxu0 0.0
    %7181 = vmatpush1.msra.mxu0 0.0
    %7182 = vmatprep.subr.mxu0 0.0
    %7183 = vmatpush1.msra.mxu0 0.0
    %7184 = vmatprep.subr.mxu0 0.0
    %7185 = vmatpush1.msra.mxu0 0.0
    %7186 = vmatprep.subr.mxu0 0.0
    %7187 = vmatpush1.msra.mxu0 0.0
    %7188 = vmatprep.subr.mxu0 0.0
    %7189 = vmatpush1.msra.mxu0 0.0
    %7190 = vmatprep.subr.mxu0 0.0
    %7191 = vmatpush1.msra.mxu0 0.0
    %7192 = vmatprep.subr.mxu0 0.0
    %7193 = vmatpush1.msra.mxu0 0.0
    %7194 = vmatprep.subr.mxu0 0.0
    %7195 = vmatpush1.msra.mxu0 0.0
    %7196 = vmatprep.subr.mxu0 0.0
    %7197 = vmatpush1.msra.mxu0 0.0
    %7198 = vmatprep.subr.mxu0 0.0
    %7199 = vmatpush1.msra.mxu0 0.0
    %7200 = vmatprep.subr.mxu0 0.0
    %7201 = vmatpush1.msra.mxu0 0.0
    %7202 = vmatprep.subr.mxu0 0.0
    %7203 = vmatpush1.msra.mxu0 0.0
    %7204 = vmatprep.subr.mxu0 0.0
    %7205 = vmatpush1.msra.mxu0 0.0
    %7206 = vmatprep.subr.mxu0 0.0
    %7207 = vmatpush1.msra.mxu0 0.0
    %7208 = vmatprep.subr.mxu0 0.0
    %7209 = vmatpush1.msra.mxu0 0.0
    %7210 = vmatprep.subr.mxu0 0.0
    %7211 = vmatpush1.msra.mxu0 0.0
    %7212 = vmatprep.subr.mxu0 0.0
    %7213 = vmatpush1.msra.mxu0 0.0
    %7214 = vmatprep.subr.mxu0 0.0
    %7215 = vmatpush1.msra.mxu0 0.0
    %7216 = vmatprep.subr.mxu0 0.0
    %7217 = vmatpush1.msra.mxu0 0.0
    %7218 = vmatprep.subr.mxu0 0.0
    %7219 = vmatpush1.msra.mxu0 0.0
    %7220 = vmatprep.subr.mxu0 0.0
    %7221 = vmatpush1.msra.mxu0 0.0
    %7222 = vmatprep.subr.mxu0 0.0
    %7223 = vmatpush1.msra.mxu0 0.0
    %7224 = vmatprep.subr.mxu0 0.0
    %7225 = vmatpush1.msra.mxu0 0.0
    %7226 = vmatprep.subr.mxu0 0.0
    %7227 = vmatpush1.msra.mxu0 0.0
    %7228 = vmatprep.mubr.f32.mxu0 0.0
    %7229 = vmatmul.mubr.f32.gmra.mrb[0].mxu0 %v6512
    %v7230 = vpop.f32.mrb[0].mxu0
    %v7231 = vadd.f32 %v7162, %v7230
    %v7232 = vpop.f32.mrb[0].mxu0
    %7233 = vmatprep.mubr.f32.mxu0 0.0
    %7234 = vmatmul.mubr.f32.gmra.mrb[0].mxu0 %v6515
    %v7235 = vpop.f32.mrb[0].mxu0
    %v7236 = vadd.f32 %v7162, %v7235
    %v7237 = vpop.f32.mrb[0].mxu0
    %7238 = vdwg.mxu0
    %s7239 = scalar_lea.vmem %s97, 64
    %v7240 = vld [vmem:[%s7239] sm:$0xff]
    %v7241 = vld [vmem:[%s7239 + $0x8] sm:$0xff]
    %v7242 = vld [vmem:[%s7239 + $0x10] sm:$0xff]
    %v7243 = vld [vmem:[%s7239 + $0x18] sm:$0xff]
    %v7244 = vld [vmem:[%s7239 + $0x20] sm:$0xff]
    %v7245 = vld [vmem:[%s7239 + $0x28] sm:$0xff]
    %v7246 = vld [vmem:[%s7239 + $0x30] sm:$0xff]
    %v7247 = vld [vmem:[%s7239 + $0x38] sm:$0xff]
    %s7248 = scalar_lea.vmem %s103, 1
    %v7249 = vld [vmem:[%s7248] sm:$0x1]
    %v7251 = vlaneseq
    %v7252 = vshrl.u32 %v7251, 7
    %v7253 = vsub.s32 0, %v7252
    %v7254 = vrot.slane %v7249, %v7253
    %7256 = vmatprep.subr.mxu0 0.0
    %7257 = vmatpush1.msra.mxu0 %v7240
    %7258 = vmatprep.subr.mxu0 0.0
    %7259 = vmatpush1.msra.mxu0 %v7241
    %7260 = vmatprep.subr.mxu0 0.0
    %7261 = vmatpush1.msra.mxu0 %v7242
    %7262 = vmatprep.subr.mxu0 0.0
    %7263 = vmatpush1.msra.mxu0 %v7243
    %7264 = vmatprep.subr.mxu0 0.0
    %7265 = vmatpush1.msra.mxu0 %v7244
    %7266 = vmatprep.subr.mxu0 0.0
    %7267 = vmatpush1.msra.mxu0 %v7245
    %7268 = vmatprep.subr.mxu0 0.0
    %7269 = vmatpush1.msra.mxu0 %v7246
    %7270 = vmatprep.subr.mxu0 0.0
    %7271 = vmatpush1.msra.mxu0 %v7247
    %7272 = vmatprep.subr.mxu0 0.0
    %7273 = vmatpush1.msra.mxu0 0.0
    %7274 = vmatprep.subr.mxu0 0.0
    %7275 = vmatpush1.msra.mxu0 0.0
    %7276 = vmatprep.subr.mxu0 0.0
    %7277 = vmatpush1.msra.mxu0 0.0
    %7278 = vmatprep.subr.mxu0 0.0
    %7279 = vmatpush1.msra.mxu0 0.0
    %7280 = vmatprep.subr.mxu0 0.0
    %7281 = vmatpush1.msra.mxu0 0.0
    %7282 = vmatprep.subr.mxu0 0.0
    %7283 = vmatpush1.msra.mxu0 0.0
    %7284 = vmatprep.subr.mxu0 0.0
    %7285 = vmatpush1.msra.mxu0 0.0
    %7286 = vmatprep.subr.mxu0 0.0
    %7287 = vmatpush1.msra.mxu0 0.0
    %7288 = vmatprep.subr.mxu0 0.0
    %7289 = vmatpush1.msra.mxu0 0.0
    %7290 = vmatprep.subr.mxu0 0.0
    %7291 = vmatpush1.msra.mxu0 0.0
    %7292 = vmatprep.subr.mxu0 0.0
    %7293 = vmatpush1.msra.mxu0 0.0
    %7294 = vmatprep.subr.mxu0 0.0
    %7295 = vmatpush1.msra.mxu0 0.0
    %7296 = vmatprep.subr.mxu0 0.0
    %7297 = vmatpush1.msra.mxu0 0.0
    %7298 = vmatprep.subr.mxu0 0.0
    %7299 = vmatpush1.msra.mxu0 0.0
    %7300 = vmatprep.subr.mxu0 0.0
    %7301 = vmatpush1.msra.mxu0 0.0
    %7302 = vmatprep.subr.mxu0 0.0
    %7303 = vmatpush1.msra.mxu0 0.0
    %7304 = vmatprep.subr.mxu0 0.0
    %7305 = vmatpush1.msra.mxu0 0.0
    %7306 = vmatprep.subr.mxu0 0.0
    %7307 = vmatpush1.msra.mxu0 0.0
    %7308 = vmatprep.subr.mxu0 0.0
    %7309 = vmatpush1.msra.mxu0 0.0
    %7310 = vmatprep.subr.mxu0 0.0
    %7311 = vmatpush1.msra.mxu0 0.0
    %7312 = vmatprep.subr.mxu0 0.0
    %7313 = vmatpush1.msra.mxu0 0.0
    %7314 = vmatprep.subr.mxu0 0.0
    %7315 = vmatpush1.msra.mxu0 0.0
    %7316 = vmatprep.subr.mxu0 0.0
    %7317 = vmatpush1.msra.mxu0 0.0
    %7318 = vmatprep.subr.mxu0 0.0
    %7319 = vmatpush1.msra.mxu0 0.0
    %7320 = vmatprep.mubr.f32.mxu0 0.0
    %7321 = vmatmul.mubr.f32.gmra.mrb[0].mxu0 %v6512
    %v7322 = vpop.f32.mrb[0].mxu0
    %v7323 = vadd.f32 %v7254, %v7322
    %v7324 = vpop.f32.mrb[0].mxu0
    %7325 = vmatprep.mubr.f32.mxu0 0.0
    %7326 = vmatmul.mubr.f32.gmra.mrb[0].mxu0 %v6515
    %v7327 = vpop.f32.mrb[0].mxu0
    %v7328 = vadd.f32 %v7254, %v7327
    %v7329 = vpop.f32.mrb[0].mxu0
    %7330 = vdwg.mxu0
    %s7331 = scalar_lea.vmem %s105, 16
    %v7332 = vld [vmem:[%s7331] sm:$0xff]
    %v7333 = vld [vmem:[%s7331 + $0x8] sm:$0xff]
    %v7335 = vsel %vm1281, %v7139, 0
    %v7338 = vsel %vm1281, %v7144, 0
    %v7341 = vsel %vm1281, %v7231, 0
    %v7344 = vsel %vm1281, %v7236, 0
    %7346 = vmatprep.subr.mxu0 0.0
    %7347 = vmatpush1.xpose.msra.mxu0 %v7341
    %7348 = vmatprep.subr.mxu0 0.0
    %7349 = vmatpush1.xpose.msra.mxu0 %v7344
    %7350 = vmatprep.subr.mxu0 0.0
    %7351 = vmatpush1.xpose.msra.mxu0 0.0
    %7352 = vmatprep.subr.mxu0 0.0
    %7353 = vmatpush1.xpose.msra.mxu0 0.0
    %7354 = vmatprep.subr.mxu0 0.0
    %7355 = vmatpush1.xpose.msra.mxu0 0.0
    %7356 = vmatprep.subr.mxu0 0.0
    %7357 = vmatpush1.xpose.msra.mxu0 0.0
    %7358 = vmatprep.subr.mxu0 0.0
    %7359 = vmatpush1.xpose.msra.mxu0 0.0
    %7360 = vmatprep.subr.mxu0 0.0
    %7361 = vmatpush1.xpose.msra.mxu0 0.0
    %7362 = vmatprep.subr.mxu0 0.0
    %7363 = vmatpush1.xpose.msra.mxu0 0.0
    %7364 = vmatprep.subr.mxu0 0.0
    %7365 = vmatpush1.xpose.msra.mxu0 0.0
    %7366 = vmatprep.subr.mxu0 0.0
    %7367 = vmatpush1.xpose.msra.mxu0 0.0
    %7368 = vmatprep.subr.mxu0 0.0
    %7369 = vmatpush1.xpose.msra.mxu0 0.0
    %7370 = vmatprep.subr.mxu0 0.0
    %7371 = vmatpush1.xpose.msra.mxu0 0.0
    %7372 = vmatprep.subr.mxu0 0.0
    %7373 = vmatpush1.xpose.msra.mxu0 0.0
    %7374 = vmatprep.subr.mxu0 0.0
    %7375 = vmatpush1.xpose.msra.mxu0 0.0
    %7376 = vmatprep.subr.mxu0 0.0
    %7377 = vmatpush1.xpose.msra.mxu0 0.0
    %7378 = vmatprep.subr.mxu0 0.0
    %7379 = vmatpush1.xpose.msra.mxu0 0.0
    %7380 = vmatprep.subr.mxu0 0.0
    %7381 = vmatpush1.xpose.msra.mxu0 0.0
    %7382 = vmatprep.subr.mxu0 0.0
    %7383 = vmatpush1.xpose.msra.mxu0 0.0
    %7384 = vmatprep.subr.mxu0 0.0
    %7385 = vmatpush1.xpose.msra.mxu0 0.0
    %7386 = vmatprep.subr.mxu0 0.0
    %7387 = vmatpush1.xpose.msra.mxu0 0.0
    %7388 = vmatprep.subr.mxu0 0.0
    %7389 = vmatpush1.xpose.msra.mxu0 0.0
    %7390 = vmatprep.subr.mxu0 0.0
    %7391 = vmatpush1.xpose.msra.mxu0 0.0
    %7392 = vmatprep.subr.mxu0 0.0
    %7393 = vmatpush1.xpose.msra.mxu0 0.0
    %7394 = vmatprep.subr.mxu0 0.0
    %7395 = vmatpush1.xpose.msra.mxu0 0.0
    %7396 = vmatprep.subr.mxu0 0.0
    %7397 = vmatpush1.xpose.msra.mxu0 0.0
    %7398 = vmatprep.subr.mxu0 0.0
    %7399 = vmatpush1.xpose.msra.mxu0 0.0
    %7400 = vmatprep.subr.mxu0 0.0
    %7401 = vmatpush1.xpose.msra.mxu0 0.0
    %7402 = vmatprep.subr.mxu0 0.0
    %7403 = vmatpush1.xpose.msra.mxu0 0.0
    %7404 = vmatprep.subr.mxu0 0.0
    %7405 = vmatpush1.xpose.msra.mxu0 0.0
    %7406 = vmatprep.subr.mxu0 0.0
    %7407 = vmatpush1.xpose.msra.mxu0 0.0
    %7408 = vmatprep.subr.mxu0 0.0
    %7409 = vmatpush1.xpose.msra.mxu0 0.0
    %7410 = vmatprep.mubr.f32.mxu0 0.0
    %7411 = vmatmul.mubr.f32.gmra.mrb[0].mxu0 %v7335
    %v7412 = vpop.f32.mrb[0].mxu0
    %v7413 = vadd.f32 %v7332, %v7412
    %v7414 = vpop.f32.mrb[0].mxu0
    %7415 = vmatprep.mubr.f32.mxu0 0.0
    %7416 = vmatmul.mubr.f32.gmra.mrb[0].mxu0 %v7338
    %v7417 = vpop.f32.mrb[0].mxu0
    %v7418 = vadd.f32 %v7333, %v7417
    %v7419 = vpop.f32.mrb[0].mxu0
    %7420 = vdwg.mxu0
    %v7421 = vsel %vm1281, %v7413, -inf
    %7422 = vmax.xlane.f32.xlu0 %v7421
    %v7423 = vpop.xlane.xlu0 %7422
    %v7424 = vsel %vm1281, %v7418, -inf
    %7425 = vmax.xlane.f32.xlu0 %v7424
    %v7426 = vpop.xlane.xlu0 %7425
    %v7427 = vsub.f32 %v7413, %v7423
    %v7428 = vsub.f32 %v7418, %v7426
    %v7429 = vmul.f32 %v7427, 1.442695
    %v7430 = vpow.pop %v7429
    %v7431 = vmul.f32 %v7428, 1.442695
    %v7432 = vpow.pop %v7431
    %v7433 = vsel %vm1281, %v7430, 0.0
    %7434 = vadd.xlane.f32.xlu0 %v7433
    %v7435 = vpop.xlane.xlu0 %7434
    %v7436 = vsel %vm1281, %v7432, 0.0
    %7437 = vadd.xlane.f32.xlu0 %v7436
    %v7438 = vpop.xlane.xlu0 %7437
    %v7439 = vrcp.pop %v7435
    %v7440 = vrcp.pop %v7438
    %v7441 = vmul.f32 %v7430, %v7439
    %v7442 = vmul.f32 %v7432, %v7440
    %v7444 = vsel %vm1281, %v7441, 0
    %v7447 = vsel %vm1281, %v7442, 0
    %7449 = vmatprep.subr.mxu0 0.0
    %7450 = vmatpush1.msra.mxu0 %v7323
    %7451 = vmatprep.subr.mxu0 0.0
    %7452 = vmatpush1.msra.mxu0 %v7328
    %7453 = vmatprep.subr.mxu0 0.0
    %7454 = vmatpush1.msra.mxu0 0.0
    %7455 = vmatprep.subr.mxu0 0.0
    %7456 = vmatpush1.msra.mxu0 0.0
    %7457 = vmatprep.subr.mxu0 0.0
    %7458 = vmatpush1.msra.mxu0 0.0
    %7459 = vmatprep.subr.mxu0 0.0
    %7460 = vmatpush1.msra.mxu0 0.0
    %7461 = vmatprep.subr.mxu0 0.0
    %7462 = vmatpush1.msra.mxu0 0.0
    %7463 = vmatprep.subr.mxu0 0.0
    %7464 = vmatpush1.msra.mxu0 0.0
    %7465 = vmatprep.subr.mxu0 0.0
    %7466 = vmatpush1.msra.mxu0 0.0
    %7467 = vmatprep.subr.mxu0 0.0
    %7468 = vmatpush1.msra.mxu0 0.0
    %7469 = vmatprep.subr.mxu0 0.0
    %7470 = vmatpush1.msra.mxu0 0.0
    %7471 = vmatprep.subr.mxu0 0.0
    %7472 = vmatpush1.msra.mxu0 0.0
    %7473 = vmatprep.subr.mxu0 0.0
    %7474 = vmatpush1.msra.mxu0 0.0
    %7475 = vmatprep.subr.mxu0 0.0
    %7476 = vmatpush1.msra.mxu0 0.0
    %7477 = vmatprep.subr.mxu0 0.0
    %7478 = vmatpush1.msra.mxu0 0.0
    %7479 = vmatprep.subr.mxu0 0.0
    %7480 = vmatpush1.msra.mxu0 0.0
    %7481 = vmatprep.subr.mxu0 0.0
    %7482 = vmatpush1.msra.mxu0 0.0
    %7483 = vmatprep.subr.mxu0 0.0
    %7484 = vmatpush1.msra.mxu0 0.0
    %7485 = vmatprep.subr.mxu0 0.0
    %7486 = vmatpush1.msra.mxu0 0.0
    %7487 = vmatprep.subr.mxu0 0.0
    %7488 = vmatpush1.msra.mxu0 0.0
    %7489 = vmatprep.subr.mxu0 0.0
    %7490 = vmatpush1.msra.mxu0 0.0
    %7491 = vmatprep.subr.mxu0 0.0
    %7492 = vmatpush1.msra.mxu0 0.0
    %7493 = vmatprep.subr.mxu0 0.0
    %7494 = vmatpush1.msra.mxu0 0.0
    %7495 = vmatprep.subr.mxu0 0.0
    %7496 = vmatpush1.msra.mxu0 0.0
    %7497 = vmatprep.subr.mxu0 0.0
    %7498 = vmatpush1.msra.mxu0 0.0
    %7499 = vmatprep.subr.mxu0 0.0
    %7500 = vmatpush1.msra.mxu0 0.0
    %7501 = vmatprep.subr.mxu0 0.0
    %7502 = vmatpush1.msra.mxu0 0.0
    %7503 = vmatprep.subr.mxu0 0.0
    %7504 = vmatpush1.msra.mxu0 0.0
    %7505 = vmatprep.subr.mxu0 0.0
    %7506 = vmatpush1.msra.mxu0 0.0
    %7507 = vmatprep.subr.mxu0 0.0
    %7508 = vmatpush1.msra.mxu0 0.0
    %7509 = vmatprep.subr.mxu0 0.0
    %7510 = vmatpush1.msra.mxu0 0.0
    %7511 = vmatprep.subr.mxu0 0.0
    %7512 = vmatpush1.msra.mxu0 0.0
    %7513 = vmatprep.mubr.f32.mxu0 0.0
    %7514 = vmatmul.mubr.f32.gmra.mrb[0].mxu0 %v7444
    %v7515 = vpop.f32.mrb[0].mxu0
    %v7516 = vadd.f32 0.0, %v7515
    %v7517 = vpop.f32.mrb[0].mxu0
    %7518 = vmatprep.mubr.f32.mxu0 0.0
    %7519 = vmatmul.mubr.f32.gmra.mrb[0].mxu0 %v7447
    %v7520 = vpop.f32.mrb[0].mxu0
    %v7521 = vadd.f32 0.0, %v7520
    %v7522 = vpop.f32.mrb[0].mxu0
    %7523 = vdwg.mxu0
    %s7524 = scalar_lea.vmem %s107, 16
    %v7525 = vld [vmem:[%s7524] sm:$0xff]
    %v7526 = vld [vmem:[%s7524 + $0x8] sm:$0xff]
    %v7528 = vsel %vm1281, %v7516, 0
    %v7531 = vsel %vm1281, %v7521, 0
    %7533 = vmatprep.subr.mxu0 0.0
    %7534 = vmatpush1.msra.mxu0 %v7525
    %7535 = vmatprep.subr.mxu0 0.0
    %7536 = vmatpush1.msra.mxu0 %v7526
    %7537 = vmatprep.subr.mxu0 0.0
    %7538 = vmatpush1.msra.mxu0 0.0
    %7539 = vmatprep.subr.mxu0 0.0
    %7540 = vmatpush1.msra.mxu0 0.0
    %7541 = vmatprep.subr.mxu0 0.0
    %7542 = vmatpush1.msra.mxu0 0.0
    %7543 = vmatprep.subr.mxu0 0.0
    %7544 = vmatpush1.msra.mxu0 0.0
    %7545 = vmatprep.subr.mxu0 0.0
    %7546 = vmatpush1.msra.mxu0 0.0
    %7547 = vmatprep.subr.mxu0 0.0
    %7548 = vmatpush1.msra.mxu0 0.0
    %7549 = vmatprep.subr.mxu0 0.0
    %7550 = vmatpush1.msra.mxu0 0.0
    %7551 = vmatprep.subr.mxu0 0.0
    %7552 = vmatpush1.msra.mxu0 0.0
    %7553 = vmatprep.subr.mxu0 0.0
    %7554 = vmatpush1.msra.mxu0 0.0
    %7555 = vmatprep.subr.mxu0 0.0
    %7556 = vmatpush1.msra.mxu0 0.0
    %7557 = vmatprep.subr.mxu0 0.0
    %7558 = vmatpush1.msra.mxu0 0.0
    %7559 = vmatprep.subr.mxu0 0.0
    %7560 = vmatpush1.msra.mxu0 0.0
    %7561 = vmatprep.subr.mxu0 0.0
    %7562 = vmatpush1.msra.mxu0 0.0
    %7563 = vmatprep.subr.mxu0 0.0
    %7564 = vmatpush1.msra.mxu0 0.0
    %7565 = vmatprep.subr.mxu0 0.0
    %7566 = vmatpush1.msra.mxu0 0.0
    %7567 = vmatprep.subr.mxu0 0.0
    %7568 = vmatpush1.msra.mxu0 0.0
    %7569 = vmatprep.subr.mxu0 0.0
    %7570 = vmatpush1.msra.mxu0 0.0
    %7571 = vmatprep.subr.mxu0 0.0
    %7572 = vmatpush1.msra.mxu0 0.0
    %7573 = vmatprep.subr.mxu0 0.0
    %7574 = vmatpush1.msra.mxu0 0.0
    %7575 = vmatprep.subr.mxu0 0.0
    %7576 = vmatpush1.msra.mxu0 0.0
    %7577 = vmatprep.subr.mxu0 0.0
    %7578 = vmatpush1.msra.mxu0 0.0
    %7579 = vmatprep.subr.mxu0 0.0
    %7580 = vmatpush1.msra.mxu0 0.0
    %7581 = vmatprep.subr.mxu0 0.0
    %7582 = vmatpush1.msra.mxu0 0.0
    %7583 = vmatprep.subr.mxu0 0.0
    %7584 = vmatpush1.msra.mxu0 0.0
    %7585 = vmatprep.subr.mxu0 0.0
    %7586 = vmatpush1.msra.mxu0 0.0
    %7587 = vmatprep.subr.mxu0 0.0
    %7588 = vmatpush1.msra.mxu0 0.0
    %7589 = vmatprep.subr.mxu0 0.0
    %7590 = vmatpush1.msra.mxu0 0.0
    %7591 = vmatprep.subr.mxu0 0.0
    %7592 = vmatpush1.msra.mxu0 0.0
    %7593 = vmatprep.subr.mxu0 0.0
    %7594 = vmatpush1.msra.mxu0 0.0
    %7595 = vmatprep.subr.mxu0 0.0
    %7596 = vmatpush1.msra.mxu0 0.0
    %7597 = vmatprep.mubr.f32.mxu0 0.0
    %7598 = vmatmul.mubr.f32.gmra.mrb[0].mxu0 %v7528
    %v7599 = vpop.f32.mrb[0].mxu0
    %v7600 = vadd.f32 0.0, %v7599
    %v7601 = vpop.f32.mrb[0].mxu0
    %7602 = vmatprep.mubr.f32.mxu0 0.0
    %7603 = vmatmul.mubr.f32.gmra.mrb[0].mxu0 %v7531
    %v7604 = vpop.f32.mrb[0].mxu0
    %v7605 = vadd.f32 0.0, %v7604
    %v7606 = vpop.f32.mrb[0].mxu0
    %7607 = vdwg.mxu0
    %v7608 = vadd.f32 %v7053, %v7600
    %v7609 = vadd.f32 %v7054, %v7605
    %s7610 = scalar_lea.vmem %s93, 128
    %v7611 = vld [vmem:[%s7610] sm:$0xff]
    %v7612 = vld [vmem:[%s7610 + $0x8] sm:$0xff]
    %v7613 = vld [vmem:[%s7610 + $0x10] sm:$0xff]
    %v7614 = vld [vmem:[%s7610 + $0x18] sm:$0xff]
    %v7615 = vld [vmem:[%s7610 + $0x20] sm:$0xff]
    %v7616 = vld [vmem:[%s7610 + $0x28] sm:$0xff]
    %v7617 = vld [vmem:[%s7610 + $0x30] sm:$0xff]
    %v7618 = vld [vmem:[%s7610 + $0x38] sm:$0xff]
    %s7619 = scalar_lea.vmem %s99, 2
    %v7620 = vld [vmem:[%s7619] sm:$0x1]
    %v7622 = vlaneseq
    %v7623 = vshrl.u32 %v7622, 7
    %v7624 = vsub.s32 0, %v7623
    %v7625 = vrot.slane %v7620, %v7624
    %7627 = vmatprep.subr.mxu0 0.0
    %7628 = vmatpush1.msra.mxu0 %v7611
    %7629 = vmatprep.subr.mxu0 0.0
    %7630 = vmatpush1.msra.mxu0 %v7612
    %7631 = vmatprep.subr.mxu0 0.0
    %7632 = vmatpush1.msra.mxu0 %v7613
    %7633 = vmatprep.subr.mxu0 0.0
    %7634 = vmatpush1.msra.mxu0 %v7614
    %7635 = vmatprep.subr.mxu0 0.0
    %7636 = vmatpush1.msra.mxu0 %v7615
    %7637 = vmatprep.subr.mxu0 0.0
    %7638 = vmatpush1.msra.mxu0 %v7616
    %7639 = vmatprep.subr.mxu0 0.0
    %7640 = vmatpush1.msra.mxu0 %v7617
    %7641 = vmatprep.subr.mxu0 0.0
    %7642 = vmatpush1.msra.mxu0 %v7618
    %7643 = vmatprep.subr.mxu0 0.0
    %7644 = vmatpush1.msra.mxu0 0.0
    %7645 = vmatprep.subr.mxu0 0.0
    %7646 = vmatpush1.msra.mxu0 0.0
    %7647 = vmatprep.subr.mxu0 0.0
    %7648 = vmatpush1.msra.mxu0 0.0
    %7649 = vmatprep.subr.mxu0 0.0
    %7650 = vmatpush1.msra.mxu0 0.0
    %7651 = vmatprep.subr.mxu0 0.0
    %7652 = vmatpush1.msra.mxu0 0.0
    %7653 = vmatprep.subr.mxu0 0.0
    %7654 = vmatpush1.msra.mxu0 0.0
    %7655 = vmatprep.subr.mxu0 0.0
    %7656 = vmatpush1.msra.mxu0 0.0
    %7657 = vmatprep.subr.mxu0 0.0
    %7658 = vmatpush1.msra.mxu0 0.0
    %7659 = vmatprep.subr.mxu0 0.0
    %7660 = vmatpush1.msra.mxu0 0.0
    %7661 = vmatprep.subr.mxu0 0.0
    %7662 = vmatpush1.msra.mxu0 0.0
    %7663 = vmatprep.subr.mxu0 0.0
    %7664 = vmatpush1.msra.mxu0 0.0
    %7665 = vmatprep.subr.mxu0 0.0
    %7666 = vmatpush1.msra.mxu0 0.0
    %7667 = vmatprep.subr.mxu0 0.0
    %7668 = vmatpush1.msra.mxu0 0.0
    %7669 = vmatprep.subr.mxu0 0.0
    %7670 = vmatpush1.msra.mxu0 0.0
    %7671 = vmatprep.subr.mxu0 0.0
    %7672 = vmatpush1.msra.mxu0 0.0
    %7673 = vmatprep.subr.mxu0 0.0
    %7674 = vmatpush1.msra.mxu0 0.0
    %7675 = vmatprep.subr.mxu0 0.0
    %7676 = vmatpush1.msra.mxu0 0.0
    %7677 = vmatprep.subr.mxu0 0.0
    %7678 = vmatpush1.msra.mxu0 0.0
    %7679 = vmatprep.subr.mxu0 0.0
    %7680 = vmatpush1.msra.mxu0 0.0
    %7681 = vmatprep.subr.mxu0 0.0
    %7682 = vmatpush1.msra.mxu0 0.0
    %7683 = vmatprep.subr.mxu0 0.0
    %7684 = vmatpush1.msra.mxu0 0.0
    %7685 = vmatprep.subr.mxu0 0.0
    %7686 = vmatpush1.msra.mxu0 0.0
    %7687 = vmatprep.subr.mxu0 0.0
    %7688 = vmatpush1.msra.mxu0 0.0
    %7689 = vmatprep.subr.mxu0 0.0
    %7690 = vmatpush1.msra.mxu0 0.0
    %7691 = vmatprep.mubr.f32.mxu0 0.0
    %7692 = vmatmul.mubr.f32.gmra.mrb[0].mxu0 %v6512
    %v7693 = vpop.f32.mrb[0].mxu0
    %v7694 = vadd.f32 %v7625, %v7693
    %v7695 = vpop.f32.mrb[0].mxu0
    %7696 = vmatprep.mubr.f32.mxu0 0.0
    %7697 = vmatmul.mubr.f32.gmra.mrb[0].mxu0 %v6515
    %v7698 = vpop.f32.mrb[0].mxu0
    %v7699 = vadd.f32 %v7625, %v7698
    %v7700 = vpop.f32.mrb[0].mxu0
    %7701 = vdwg.mxu0
    %s7702 = scalar_lea.vmem %s95, 128
    %v7703 = vld [vmem:[%s7702] sm:$0xff]
    %v7704 = vld [vmem:[%s7702 + $0x8] sm:$0xff]
    %v7705 = vld [vmem:[%s7702 + $0x10] sm:$0xff]
    %v7706 = vld [vmem:[%s7702 + $0x18] sm:$0xff]
    %v7707 = vld [vmem:[%s7702 + $0x20] sm:$0xff]
    %v7708 = vld [vmem:[%s7702 + $0x28] sm:$0xff]
    %v7709 = vld [vmem:[%s7702 + $0x30] sm:$0xff]
    %v7710 = vld [vmem:[%s7702 + $0x38] sm:$0xff]
    %s7711 = scalar_lea.vmem %s101, 2
    %v7712 = vld [vmem:[%s7711] sm:$0x1]
    %v7714 = vlaneseq
    %v7715 = vshrl.u32 %v7714, 7
    %v7716 = vsub.s32 0, %v7715
    %v7717 = vrot.slane %v7712, %v7716
    %7719 = vmatprep.subr.mxu0 0.0
    %7720 = vmatpush1.msra.mxu0 %v7703
    %7721 = vmatprep.subr.mxu0 0.0
    %7722 = vmatpush1.msra.mxu0 %v7704
    %7723 = vmatprep.subr.mxu0 0.0
    %7724 = vmatpush1.msra.mxu0 %v7705
    %7725 = vmatprep.subr.mxu0 0.0
    %7726 = vmatpush1.msra.mxu0 %v7706
    %7727 = vmatprep.subr.mxu0 0.0
    %7728 = vmatpush1.msra.mxu0 %v7707
    %7729 = vmatprep.subr.mxu0 0.0
    %7730 = vmatpush1.msra.mxu0 %v7708
    %7731 = vmatprep.subr.mxu0 0.0
    %7732 = vmatpush1.msra.mxu0 %v7709
    %7733 = vmatprep.subr.mxu0 0.0
    %7734 = vmatpush1.msra.mxu0 %v7710
    %7735 = vmatprep.subr.mxu0 0.0
    %7736 = vmatpush1.msra.mxu0 0.0
    %7737 = vmatprep.subr.mxu0 0.0
    %7738 = vmatpush1.msra.mxu0 0.0
    %7739 = vmatprep.subr.mxu0 0.0
    %7740 = vmatpush1.msra.mxu0 0.0
    %7741 = vmatprep.subr.mxu0 0.0
    %7742 = vmatpush1.msra.mxu0 0.0
    %7743 = vmatprep.subr.mxu0 0.0
    %7744 = vmatpush1.msra.mxu0 0.0
    %7745 = vmatprep.subr.mxu0 0.0
    %7746 = vmatpush1.msra.mxu0 0.0
    %7747 = vmatprep.subr.mxu0 0.0
    %7748 = vmatpush1.msra.mxu0 0.0
    %7749 = vmatprep.subr.mxu0 0.0
    %7750 = vmatpush1.msra.mxu0 0.0
    %7751 = vmatprep.subr.mxu0 0.0
    %7752 = vmatpush1.msra.mxu0 0.0
    %7753 = vmatprep.subr.mxu0 0.0
    %7754 = vmatpush1.msra.mxu0 0.0
    %7755 = vmatprep.subr.mxu0 0.0
    %7756 = vmatpush1.msra.mxu0 0.0
    %7757 = vmatprep.subr.mxu0 0.0
    %7758 = vmatpush1.msra.mxu0 0.0
    %7759 = vmatprep.subr.mxu0 0.0
    %7760 = vmatpush1.msra.mxu0 0.0
    %7761 = vmatprep.subr.mxu0 0.0
    %7762 = vmatpush1.msra.mxu0 0.0
    %7763 = vmatprep.subr.mxu0 0.0
    %7764 = vmatpush1.msra.mxu0 0.0
    %7765 = vmatprep.subr.mxu0 0.0
    %7766 = vmatpush1.msra.mxu0 0.0
    %7767 = vmatprep.subr.mxu0 0.0
    %7768 = vmatpush1.msra.mxu0 0.0
    %7769 = vmatprep.subr.mxu0 0.0
    %7770 = vmatpush1.msra.mxu0 0.0
    %7771 = vmatprep.subr.mxu0 0.0
    %7772 = vmatpush1.msra.mxu0 0.0
    %7773 = vmatprep.subr.mxu0 0.0
    %7774 = vmatpush1.msra.mxu0 0.0
    %7775 = vmatprep.subr.mxu0 0.0
    %7776 = vmatpush1.msra.mxu0 0.0
    %7777 = vmatprep.subr.mxu0 0.0
    %7778 = vmatpush1.msra.mxu0 0.0
    %7779 = vmatprep.subr.mxu0 0.0
    %7780 = vmatpush1.msra.mxu0 0.0
    %7781 = vmatprep.subr.mxu0 0.0
    %7782 = vmatpush1.msra.mxu0 0.0
    %7783 = vmatprep.mubr.f32.mxu0 0.0
    %7784 = vmatmul.mubr.f32.gmra.mrb[0].mxu0 %v6512
    %v7785 = vpop.f32.mrb[0].mxu0
    %v7786 = vadd.f32 %v7717, %v7785
    %v7787 = vpop.f32.mrb[0].mxu0
    %7788 = vmatprep.mubr.f32.mxu0 0.0
    %7789 = vmatmul.mubr.f32.gmra.mrb[0].mxu0 %v6515
    %v7790 = vpop.f32.mrb[0].mxu0
    %v7791 = vadd.f32 %v7717, %v7790
    %v7792 = vpop.f32.mrb[0].mxu0
    %7793 = vdwg.mxu0
    %s7794 = scalar_lea.vmem %s97, 128
    %v7795 = vld [vmem:[%s7794] sm:$0xff]
    %v7796 = vld [vmem:[%s7794 + $0x8] sm:$0xff]
    %v7797 = vld [vmem:[%s7794 + $0x10] sm:$0xff]
    %v7798 = vld [vmem:[%s7794 + $0x18] sm:$0xff]
    %v7799 = vld [vmem:[%s7794 + $0x20] sm:$0xff]
    %v7800 = vld [vmem:[%s7794 + $0x28] sm:$0xff]
    %v7801 = vld [vmem:[%s7794 + $0x30] sm:$0xff]
    %v7802 = vld [vmem:[%s7794 + $0x38] sm:$0xff]
    %s7803 = scalar_lea.vmem %s103, 2
    %v7804 = vld [vmem:[%s7803] sm:$0x1]
    %v7806 = vlaneseq
    %v7807 = vshrl.u32 %v7806, 7
    %v7808 = vsub.s32 0, %v7807
    %v7809 = vrot.slane %v7804, %v7808
    %7811 = vmatprep.subr.mxu0 0.0
    %7812 = vmatpush1.msra.mxu0 %v7795
    %7813 = vmatprep.subr.mxu0 0.0
    %7814 = vmatpush1.msra.mxu0 %v7796
    %7815 = vmatprep.subr.mxu0 0.0
    %7816 = vmatpush1.msra.mxu0 %v7797
    %7817 = vmatprep.subr.mxu0 0.0
    %7818 = vmatpush1.msra.mxu0 %v7798
    %7819 = vmatprep.subr.mxu0 0.0
    %7820 = vmatpush1.msra.mxu0 %v7799
    %7821 = vmatprep.subr.mxu0 0.0
    %7822 = vmatpush1.msra.mxu0 %v7800
    %7823 = vmatprep.subr.mxu0 0.0
    %7824 = vmatpush1.msra.mxu0 %v7801
    %7825 = vmatprep.subr.mxu0 0.0
    %7826 = vmatpush1.msra.mxu0 %v7802
    %7827 = vmatprep.subr.mxu0 0.0
    %7828 = vmatpush1.msra.mxu0 0.0
    %7829 = vmatprep.subr.mxu0 0.0
    %7830 = vmatpush1.msra.mxu0 0.0
    %7831 = vmatprep.subr.mxu0 0.0
    %7832 = vmatpush1.msra.mxu0 0.0
    %7833 = vmatprep.subr.mxu0 0.0
    %7834 = vmatpush1.msra.mxu0 0.0
    %7835 = vmatprep.subr.mxu0 0.0
    %7836 = vmatpush1.msra.mxu0 0.0
    %7837 = vmatprep.subr.mxu0 0.0
    %7838 = vmatpush1.msra.mxu0 0.0
    %7839 = vmatprep.subr.mxu0 0.0
    %7840 = vmatpush1.msra.mxu0 0.0
    %7841 = vmatprep.subr.mxu0 0.0
    %7842 = vmatpush1.msra.mxu0 0.0
    %7843 = vmatprep.subr.mxu0 0.0
    %7844 = vmatpush1.msra.mxu0 0.0
    %7845 = vmatprep.subr.mxu0 0.0
    %7846 = vmatpush1.msra.mxu0 0.0
    %7847 = vmatprep.subr.mxu0 0.0
    %7848 = vmatpush1.msra.mxu0 0.0
    %7849 = vmatprep.subr.mxu0 0.0
    %7850 = vmatpush1.msra.mxu0 0.0
    %7851 = vmatprep.subr.mxu0 0.0
    %7852 = vmatpush1.msra.mxu0 0.0
    %7853 = vmatprep.subr.mxu0 0.0
    %7854 = vmatpush1.msra.mxu0 0.0
    %7855 = vmatprep.subr.mxu0 0.0
    %7856 = vmatpush1.msra.mxu0 0.0
    %7857 = vmatprep.subr.mxu0 0.0
    %7858 = vmatpush1.msra.mxu0 0.0
    %7859 = vmatprep.subr.mxu0 0.0
    %7860 = vmatpush1.msra.mxu0 0.0
    %7861 = vmatprep.subr.mxu0 0.0
    %7862 = vmatpush1.msra.mxu0 0.0
    %7863 = vmatprep.subr.mxu0 0.0
    %7864 = vmatpush1.msra.mxu0 0.0
    %7865 = vmatprep.subr.mxu0 0.0
    %7866 = vmatpush1.msra.mxu0 0.0
    %7867 = vmatprep.subr.mxu0 0.0
    %7868 = vmatpush1.msra.mxu0 0.0
    %7869 = vmatprep.subr.mxu0 0.0
    %7870 = vmatpush1.msra.mxu0 0.0
    %7871 = vmatprep.subr.mxu0 0.0
    %7872 = vmatpush1.msra.mxu0 0.0
    %7873 = vmatprep.subr.mxu0 0.0
    %7874 = vmatpush1.msra.mxu0 0.0
    %7875 = vmatprep.mubr.f32.mxu0 0.0
    %7876 = vmatmul.mubr.f32.gmra.mrb[0].mxu0 %v6512
    %v7877 = vpop.f32.mrb[0].mxu0
    %v7878 = vadd.f32 %v7809, %v7877
    %v7879 = vpop.f32.mrb[0].mxu0
    %7880 = vmatprep.mubr.f32.mxu0 0.0
    %7881 = vmatmul.mubr.f32.gmra.mrb[0].mxu0 %v6515
    %v7882 = vpop.f32.mrb[0].mxu0
    %v7883 = vadd.f32 %v7809, %v7882
    %v7884 = vpop.f32.mrb[0].mxu0
    %7885 = vdwg.mxu0
    %s7886 = scalar_lea.vmem %s105, 32
    %v7887 = vld [vmem:[%s7886] sm:$0xff]
    %v7888 = vld [vmem:[%s7886 + $0x8] sm:$0xff]
    %v7890 = vsel %vm1281, %v7694, 0
    %v7893 = vsel %vm1281, %v7699, 0
    %v7896 = vsel %vm1281, %v7786, 0
    %v7899 = vsel %vm1281, %v7791, 0
    %7901 = vmatprep.subr.mxu0 0.0
    %7902 = vmatpush1.xpose.msra.mxu0 %v7896
    %7903 = vmatprep.subr.mxu0 0.0
    %7904 = vmatpush1.xpose.msra.mxu0 %v7899
    %7905 = vmatprep.subr.mxu0 0.0
    %7906 = vmatpush1.xpose.msra.mxu0 0.0
    %7907 = vmatprep.subr.mxu0 0.0
    %7908 = vmatpush1.xpose.msra.mxu0 0.0
    %7909 = vmatprep.subr.mxu0 0.0
    %7910 = vmatpush1.xpose.msra.mxu0 0.0
    %7911 = vmatprep.subr.mxu0 0.0
    %7912 = vmatpush1.xpose.msra.mxu0 0.0
    %7913 = vmatprep.subr.mxu0 0.0
    %7914 = vmatpush1.xpose.msra.mxu0 0.0
    %7915 = vmatprep.subr.mxu0 0.0
    %7916 = vmatpush1.xpose.msra.mxu0 0.0
    %7917 = vmatprep.subr.mxu0 0.0
    %7918 = vmatpush1.xpose.msra.mxu0 0.0
    %7919 = vmatprep.subr.mxu0 0.0
    %7920 = vmatpush1.xpose.msra.mxu0 0.0
    %7921 = vmatprep.subr.mxu0 0.0
    %7922 = vmatpush1.xpose.msra.mxu0 0.0
    %7923 = vmatprep.subr.mxu0 0.0
    %7924 = vmatpush1.xpose.msra.mxu0 0.0
    %7925 = vmatprep.subr.mxu0 0.0
    %7926 = vmatpush1.xpose.msra.mxu0 0.0
    %7927 = vmatprep.subr.mxu0 0.0
    %7928 = vmatpush1.xpose.msra.mxu0 0.0
    %7929 = vmatprep.subr.mxu0 0.0
    %7930 = vmatpush1.xpose.msra.mxu0 0.0
    %7931 = vmatprep.subr.mxu0 0.0
    %7932 = vmatpush1.xpose.msra.mxu0 0.0
    %7933 = vmatprep.subr.mxu0 0.0
    %7934 = vmatpush1.xpose.msra.mxu0 0.0
    %7935 = vmatprep.subr.mxu0 0.0
    %7936 = vmatpush1.xpose.msra.mxu0 0.0
    %7937 = vmatprep.subr.mxu0 0.0
    %7938 = vmatpush1.xpose.msra.mxu0 0.0
    %7939 = vmatprep.subr.mxu0 0.0
    %7940 = vmatpush1.xpose.msra.mxu0 0.0
    %7941 = vmatprep.subr.mxu0 0.0
    %7942 = vmatpush1.xpose.msra.mxu0 0.0
    %7943 = vmatprep.subr.mxu0 0.0
    %7944 = vmatpush1.xpose.msra.mxu0 0.0
    %7945 = vmatprep.subr.mxu0 0.0
    %7946 = vmatpush1.xpose.msra.mxu0 0.0
    %7947 = vmatprep.subr.mxu0 0.0
    %7948 = vmatpush1.xpose.msra.mxu0 0.0
    %7949 = vmatprep.subr.mxu0 0.0
    %7950 = vmatpush1.xpose.msra.mxu0 0.0
    %7951 = vmatprep.subr.mxu0 0.0
    %7952 = vmatpush1.xpose.msra.mxu0 0.0
    %7953 = vmatprep.subr.mxu0 0.0
    %7954 = vmatpush1.xpose.msra.mxu0 0.0
    %7955 = vmatprep.subr.mxu0 0.0
    %7956 = vmatpush1.xpose.msra.mxu0 0.0
    %7957 = vmatprep.subr.mxu0 0.0
    %7958 = vmatpush1.xpose.msra.mxu0 0.0
    %7959 = vmatprep.subr.mxu0 0.0
    %7960 = vmatpush1.xpose.msra.mxu0 0.0
    %7961 = vmatprep.subr.mxu0 0.0
    %7962 = vmatpush1.xpose.msra.mxu0 0.0
    %7963 = vmatprep.subr.mxu0 0.0
    %7964 = vmatpush1.xpose.msra.mxu0 0.0
    %7965 = vmatprep.mubr.f32.mxu0 0.0
    %7966 = vmatmul.mubr.f32.gmra.mrb[0].mxu0 %v7890
    %v7967 = vpop.f32.mrb[0].mxu0
    %v7968 = vadd.f32 %v7887, %v7967
    %v7969 = vpop.f32.mrb[0].mxu0
    %7970 = vmatprep.mubr.f32.mxu0 0.0
    %7971 = vmatmul.mubr.f32.gmra.mrb[0].mxu0 %v7893
    %v7972 = vpop.f32.mrb[0].mxu0
    %v7973 = vadd.f32 %v7888, %v7972
    %v7974 = vpop.f32.mrb[0].mxu0
    %7975 = vdwg.mxu0
    %v7976 = vsel %vm1281, %v7968, -inf
    %7977 = vmax.xlane.f32.xlu0 %v7976
    %v7978 = vpop.xlane.xlu0 %7977
    %v7979 = vsel %vm1281, %v7973, -inf
    %7980 = vmax.xlane.f32.xlu0 %v7979
    %v7981 = vpop.xlane.xlu0 %7980
    %v7982 = vsub.f32 %v7968, %v7978
    %v7983 = vsub.f32 %v7973, %v7981
    %v7984 = vmul.f32 %v7982, 1.442695
    %v7985 = vpow.pop %v7984
    %v7986 = vmul.f32 %v7983, 1.442695
    %v7987 = vpow.pop %v7986
    %v7988 = vsel %vm1281, %v7985, 0.0
    %7989 = vadd.xlane.f32.xlu0 %v7988
    %v7990 = vpop.xlane.xlu0 %7989
    %v7991 = vsel %vm1281, %v7987, 0.0
    %7992 = vadd.xlane.f32.xlu0 %v7991
    %v7993 = vpop.xlane.xlu0 %7992
    %v7994 = vrcp.pop %v7990
    %v7995 = vrcp.pop %v7993
    %v7996 = vmul.f32 %v7985, %v7994
    %v7997 = vmul.f32 %v7987, %v7995
    %v7999 = vsel %vm1281, %v7996, 0
    %v8002 = vsel %vm1281, %v7997, 0
    %8004 = vmatprep.subr.mxu0 0.0
    %8005 = vmatpush1.msra.mxu0 %v7878
    %8006 = vmatprep.subr.mxu0 0.0
    %8007 = vmatpush1.msra.mxu0 %v7883
    %8008 = vmatprep.subr.mxu0 0.0
    %8009 = vmatpush1.msra.mxu0 0.0
    %8010 = vmatprep.subr.mxu0 0.0
    %8011 = vmatpush1.msra.mxu0 0.0
    %8012 = vmatprep.subr.mxu0 0.0
    %8013 = vmatpush1.msra.mxu0 0.0
    %8014 = vmatprep.subr.mxu0 0.0
    %8015 = vmatpush1.msra.mxu0 0.0
    %8016 = vmatprep.subr.mxu0 0.0
    %8017 = vmatpush1.msra.mxu0 0.0
    %8018 = vmatprep.subr.mxu0 0.0
    %8019 = vmatpush1.msra.mxu0 0.0
    %8020 = vmatprep.subr.mxu0 0.0
    %8021 = vmatpush1.msra.mxu0 0.0
    %8022 = vmatprep.subr.mxu0 0.0
    %8023 = vmatpush1.msra.mxu0 0.0
    %8024 = vmatprep.subr.mxu0 0.0
    %8025 = vmatpush1.msra.mxu0 0.0
    %8026 = vmatprep.subr.mxu0 0.0
    %8027 = vmatpush1.msra.mxu0 0.0
    %8028 = vmatprep.subr.mxu0 0.0
    %8029 = vmatpush1.msra.mxu0 0.0
    %8030 = vmatprep.subr.mxu0 0.0
    %8031 = vmatpush1.msra.mxu0 0.0
    %8032 = vmatprep.subr.mxu0 0.0
    %8033 = vmatpush1.msra.mxu0 0.0
    %8034 = vmatprep.subr.mxu0 0.0
    %8035 = vmatpush1.msra.mxu0 0.0
    %8036 = vmatprep.subr.mxu0 0.0
    %8037 = vmatpush1.msra.mxu0 0.0
    %8038 = vmatprep.subr.mxu0 0.0
    %8039 = vmatpush1.msra.mxu0 0.0
    %8040 = vmatprep.subr.mxu0 0.0
    %8041 = vmatpush1.msra.mxu0 0.0
    %8042 = vmatprep.subr.mxu0 0.0
    %8043 = vmatpush1.msra.mxu0 0.0
    %8044 = vmatprep.subr.mxu0 0.0
    %8045 = vmatpush1.msra.mxu0 0.0
    %8046 = vmatprep.subr.mxu0 0.0
    %8047 = vmatpush1.msra.mxu0 0.0
    %8048 = vmatprep.subr.mxu0 0.0
    %8049 = vmatpush1.msra.mxu0 0.0
    %8050 = vmatprep.subr.mxu0 0.0
    %8051 = vmatpush1.msra.mxu0 0.0
    %8052 = vmatprep.subr.mxu0 0.0
    %8053 = vmatpush1.msra.mxu0 0.0
    %8054 = vmatprep.subr.mxu0 0.0
    %8055 = vmatpush1.msra.mxu0 0.0
    %8056 = vmatprep.subr.mxu0 0.0
    %8057 = vmatpush1.msra.mxu0 0.0
    %8058 = vmatprep.subr.mxu0 0.0
    %8059 = vmatpush1.msra.mxu0 0.0
    %8060 = vmatprep.subr.mxu0 0.0
    %8061 = vmatpush1.msra.mxu0 0.0
    %8062 = vmatprep.subr.mxu0 0.0
    %8063 = vmatpush1.msra.mxu0 0.0
    %8064 = vmatprep.subr.mxu0 0.0
    %8065 = vmatpush1.msra.mxu0 0.0
    %8066 = vmatprep.subr.mxu0 0.0
    %8067 = vmatpush1.msra.mxu0 0.0
    %8068 = vmatprep.mubr.f32.mxu0 0.0
    %8069 = vmatmul.mubr.f32.gmra.mrb[0].mxu0 %v7999
    %v8070 = vpop.f32.mrb[0].mxu0
    %v8071 = vadd.f32 0.0, %v8070
    %v8072 = vpop.f32.mrb[0].mxu0
    %8073 = vmatprep.mubr.f32.mxu0 0.0
    %8074 = vmatmul.mubr.f32.gmra.mrb[0].mxu0 %v8002
    %v8075 = vpop.f32.mrb[0].mxu0
    %v8076 = vadd.f32 0.0, %v8075
    %v8077 = vpop.f32.mrb[0].mxu0
    %8078 = vdwg.mxu0
    %s8079 = scalar_lea.vmem %s107, 32
    %v8080 = vld [vmem:[%s8079] sm:$0xff]
    %v8081 = vld [vmem:[%s8079 + $0x8] sm:$0xff]
    %v8083 = vsel %vm1281, %v8071, 0
    %v8086 = vsel %vm1281, %v8076, 0
    %8088 = vmatprep.subr.mxu0 0.0
    %8089 = vmatpush1.msra.mxu0 %v8080
    %8090 = vmatprep.subr.mxu0 0.0
    %8091 = vmatpush1.msra.mxu0 %v8081
    %8092 = vmatprep.subr.mxu0 0.0
    %8093 = vmatpush1.msra.mxu0 0.0
    %8094 = vmatprep.subr.mxu0 0.0
    %8095 = vmatpush1.msra.mxu0 0.0
    %8096 = vmatprep.subr.mxu0 0.0
    %8097 = vmatpush1.msra.mxu0 0.0
    %8098 = vmatprep.subr.mxu0 0.0
    %8099 = vmatpush1.msra.mxu0 0.0
    %8100 = vmatprep.subr.mxu0 0.0
    %8101 = vmatpush1.msra.mxu0 0.0
    %8102 = vmatprep.subr.mxu0 0.0
    %8103 = vmatpush1.msra.mxu0 0.0
    %8104 = vmatprep.subr.mxu0 0.0
    %8105 = vmatpush1.msra.mxu0 0.0
    %8106 = vmatprep.subr.mxu0 0.0
    %8107 = vmatpush1.msra.mxu0 0.0
    %8108 = vmatprep.subr.mxu0 0.0
    %8109 = vmatpush1.msra.mxu0 0.0
    %8110 = vmatprep.subr.mxu0 0.0
    %8111 = vmatpush1.msra.mxu0 0.0
    %8112 = vmatprep.subr.mxu0 0.0
    %8113 = vmatpush1.msra.mxu0 0.0
    %8114 = vmatprep.subr.mxu0 0.0
    %8115 = vmatpush1.msra.mxu0 0.0
    %8116 = vmatprep.subr.mxu0 0.0
    %8117 = vmatpush1.msra.mxu0 0.0
    %8118 = vmatprep.subr.mxu0 0.0
    %8119 = vmatpush1.msra.mxu0 0.0
    %8120 = vmatprep.subr.mxu0 0.0
    %8121 = vmatpush1.msra.mxu0 0.0
    %8122 = vmatprep.subr.mxu0 0.0
    %8123 = vmatpush1.msra.mxu0 0.0
    %8124 = vmatprep.subr.mxu0 0.0
    %8125 = vmatpush1.msra.mxu0 0.0
    %8126 = vmatprep.subr.mxu0 0.0
    %8127 = vmatpush1.msra.mxu0 0.0
    %8128 = vmatprep.subr.mxu0 0.0
    %8129 = vmatpush1.msra.mxu0 0.0
    %8130 = vmatprep.subr.mxu0 0.0
    %8131 = vmatpush1.msra.mxu0 0.0
    %8132 = vmatprep.subr.mxu0 0.0
    %8133 = vmatpush1.msra.mxu0 0.0
    %8134 = vmatprep.subr.mxu0 0.0
    %8135 = vmatpush1.msra.mxu0 0.0
    %8136 = vmatprep.subr.mxu0 0.0
    %8137 = vmatpush1.msra.mxu0 0.0
    %8138 = vmatprep.subr.mxu0 0.0
    %8139 = vmatpush1.msra.mxu0 0.0
    %8140 = vmatprep.subr.mxu0 0.0
    %8141 = vmatpush1.msra.mxu0 0.0
    %8142 = vmatprep.subr.mxu0 0.0
    %8143 = vmatpush1.msra.mxu0 0.0
    %8144 = vmatprep.subr.mxu0 0.0
    %8145 = vmatpush1.msra.mxu0 0.0
    %8146 = vmatprep.subr.mxu0 0.0
    %8147 = vmatpush1.msra.mxu0 0.0
    %8148 = vmatprep.subr.mxu0 0.0
    %8149 = vmatpush1.msra.mxu0 0.0
    %8150 = vmatprep.subr.mxu0 0.0
    %8151 = vmatpush1.msra.mxu0 0.0
    %8152 = vmatprep.mubr.f32.mxu0 0.0
    %8153 = vmatmul.mubr.f32.gmra.mrb[0].mxu0 %v8083
    %v8154 = vpop.f32.mrb[0].mxu0
    %v8155 = vadd.f32 0.0, %v8154
    %v8156 = vpop.f32.mrb[0].mxu0
    %8157 = vmatprep.mubr.f32.mxu0 0.0
    %8158 = vmatmul.mubr.f32.gmra.mrb[0].mxu0 %v8086
    %v8159 = vpop.f32.mrb[0].mxu0
    %v8160 = vadd.f32 0.0, %v8159
    %v8161 = vpop.f32.mrb[0].mxu0
    %8162 = vdwg.mxu0
    %v8163 = vadd.f32 %v7608, %v8155
    %v8164 = vadd.f32 %v7609, %v8160
    %s8165 = scalar_lea.vmem %s93, 192
    %v8166 = vld [vmem:[%s8165] sm:$0xff]
    %v8167 = vld [vmem:[%s8165 + $0x8] sm:$0xff]
    %v8168 = vld [vmem:[%s8165 + $0x10] sm:$0xff]
    %v8169 = vld [vmem:[%s8165 + $0x18] sm:$0xff]
    %v8170 = vld [vmem:[%s8165 + $0x20] sm:$0xff]
    %v8171 = vld [vmem:[%s8165 + $0x28] sm:$0xff]
    %v8172 = vld [vmem:[%s8165 + $0x30] sm:$0xff]
    %v8173 = vld [vmem:[%s8165 + $0x38] sm:$0xff]
    %s8174 = scalar_lea.vmem %s99, 3
    %v8175 = vld [vmem:[%s8174] sm:$0x1]
    %v8177 = vlaneseq
    %v8178 = vshrl.u32 %v8177, 7
    %v8179 = vsub.s32 0, %v8178
    %v8180 = vrot.slane %v8175, %v8179
    %8182 = vmatprep.subr.mxu0 0.0
    %8183 = vmatpush1.msra.mxu0 %v8166
    %8184 = vmatprep.subr.mxu0 0.0
    %8185 = vmatpush1.msra.mxu0 %v8167
    %8186 = vmatprep.subr.mxu0 0.0
    %8187 = vmatpush1.msra.mxu0 %v8168
    %8188 = vmatprep.subr.mxu0 0.0
    %8189 = vmatpush1.msra.mxu0 %v8169
    %8190 = vmatprep.subr.mxu0 0.0
    %8191 = vmatpush1.msra.mxu0 %v8170
    %8192 = vmatprep.subr.mxu0 0.0
    %8193 = vmatpush1.msra.mxu0 %v8171
    %8194 = vmatprep.subr.mxu0 0.0
    %8195 = vmatpush1.msra.mxu0 %v8172
    %8196 = vmatprep.subr.mxu0 0.0
    %8197 = vmatpush1.msra.mxu0 %v8173
    %8198 = vmatprep.subr.mxu0 0.0
    %8199 = vmatpush1.msra.mxu0 0.0
    %8200 = vmatprep.subr.mxu0 0.0
    %8201 = vmatpush1.msra.mxu0 0.0
    %8202 = vmatprep.subr.mxu0 0.0
    %8203 = vmatpush1.msra.mxu0 0.0
    %8204 = vmatprep.subr.mxu0 0.0
    %8205 = vmatpush1.msra.mxu0 0.0
    %8206 = vmatprep.subr.mxu0 0.0
    %8207 = vmatpush1.msra.mxu0 0.0
    %8208 = vmatprep.subr.mxu0 0.0
    %8209 = vmatpush1.msra.mxu0 0.0
    %8210 = vmatprep.subr.mxu0 0.0
    %8211 = vmatpush1.msra.mxu0 0.0
    %8212 = vmatprep.subr.mxu0 0.0
    %8213 = vmatpush1.msra.mxu0 0.0
    %8214 = vmatprep.subr.mxu0 0.0
    %8215 = vmatpush1.msra.mxu0 0.0
    %8216 = vmatprep.subr.mxu0 0.0
    %8217 = vmatpush1.msra.mxu0 0.0
    %8218 = vmatprep.subr.mxu0 0.0
    %8219 = vmatpush1.msra.mxu0 0.0
    %8220 = vmatprep.subr.mxu0 0.0
    %8221 = vmatpush1.msra.mxu0 0.0
    %8222 = vmatprep.subr.mxu0 0.0
    %8223 = vmatpush1.msra.mxu0 0.0
    %8224 = vmatprep.subr.mxu0 0.0
    %8225 = vmatpush1.msra.mxu0 0.0
    %8226 = vmatprep.subr.mxu0 0.0
    %8227 = vmatpush1.msra.mxu0 0.0
    %8228 = vmatprep.subr.mxu0 0.0
    %8229 = vmatpush1.msra.mxu0 0.0
    %8230 = vmatprep.subr.mxu0 0.0
    %8231 = vmatpush1.msra.mxu0 0.0
    %8232 = vmatprep.subr.mxu0 0.0
    %8233 = vmatpush1.msra.mxu0 0.0
    %8234 = vmatprep.subr.mxu0 0.0
    %8235 = vmatpush1.msra.mxu0 0.0
    %8236 = vmatprep.subr.mxu0 0.0
    %8237 = vmatpush1.msra.mxu0 0.0
    %8238 = vmatprep.subr.mxu0 0.0
    %8239 = vmatpush1.msra.mxu0 0.0
    %8240 = vmatprep.subr.mxu0 0.0
    %8241 = vmatpush1.msra.mxu0 0.0
    %8242 = vmatprep.subr.mxu0 0.0
    %8243 = vmatpush1.msra.mxu0 0.0
    %8244 = vmatprep.subr.mxu0 0.0
    %8245 = vmatpush1.msra.mxu0 0.0
    %8246 = vmatprep.mubr.f32.mxu0 0.0
    %8247 = vmatmul.mubr.f32.gmra.mrb[0].mxu0 %v6512
    %v8248 = vpop.f32.mrb[0].mxu0
    %v8249 = vadd.f32 %v8180, %v8248
    %v8250 = vpop.f32.mrb[0].mxu0
    %8251 = vmatprep.mubr.f32.mxu0 0.0
    %8252 = vmatmul.mubr.f32.gmra.mrb[0].mxu0 %v6515
    %v8253 = vpop.f32.mrb[0].mxu0
    %v8254 = vadd.f32 %v8180, %v8253
    %v8255 = vpop.f32.mrb[0].mxu0
    %8256 = vdwg.mxu0
    %s8257 = scalar_lea.vmem %s95, 192
    %v8258 = vld [vmem:[%s8257] sm:$0xff]
    %v8259 = vld [vmem:[%s8257 + $0x8] sm:$0xff]
    %v8260 = vld [vmem:[%s8257 + $0x10] sm:$0xff]
    %v8261 = vld [vmem:[%s8257 + $0x18] sm:$0xff]
    %v8262 = vld [vmem:[%s8257 + $0x20] sm:$0xff]
    %v8263 = vld [vmem:[%s8257 + $0x28] sm:$0xff]
    %v8264 = vld [vmem:[%s8257 + $0x30] sm:$0xff]
    %v8265 = vld [vmem:[%s8257 + $0x38] sm:$0xff]
    %s8266 = scalar_lea.vmem %s101, 3
    %v8267 = vld [vmem:[%s8266] sm:$0x1]
    %v8269 = vlaneseq
    %v8270 = vshrl.u32 %v8269, 7
    %v8271 = vsub.s32 0, %v8270
    %v8272 = vrot.slane %v8267, %v8271
    %8274 = vmatprep.subr.mxu0 0.0
    %8275 = vmatpush1.msra.mxu0 %v8258
    %8276 = vmatprep.subr.mxu0 0.0
    %8277 = vmatpush1.msra.mxu0 %v8259
    %8278 = vmatprep.subr.mxu0 0.0
    %8279 = vmatpush1.msra.mxu0 %v8260
    %8280 = vmatprep.subr.mxu0 0.0
    %8281 = vmatpush1.msra.mxu0 %v8261
    %8282 = vmatprep.subr.mxu0 0.0
    %8283 = vmatpush1.msra.mxu0 %v8262
    %8284 = vmatprep.subr.mxu0 0.0
    %8285 = vmatpush1.msra.mxu0 %v8263
    %8286 = vmatprep.subr.mxu0 0.0
    %8287 = vmatpush1.msra.mxu0 %v8264
    %8288 = vmatprep.subr.mxu0 0.0
    %8289 = vmatpush1.msra.mxu0 %v8265
    %8290 = vmatprep.subr.mxu0 0.0
    %8291 = vmatpush1.msra.mxu0 0.0
    %8292 = vmatprep.subr.mxu0 0.0
    %8293 = vmatpush1.msra.mxu0 0.0
    %8294 = vmatprep.subr.mxu0 0.0
    %8295 = vmatpush1.msra.mxu0 0.0
    %8296 = vmatprep.subr.mxu0 0.0
    %8297 = vmatpush1.msra.mxu0 0.0
    %8298 = vmatprep.subr.mxu0 0.0
    %8299 = vmatpush1.msra.mxu0 0.0
    %8300 = vmatprep.subr.mxu0 0.0
    %8301 = vmatpush1.msra.mxu0 0.0
    %8302 = vmatprep.subr.mxu0 0.0
    %8303 = vmatpush1.msra.mxu0 0.0
    %8304 = vmatprep.subr.mxu0 0.0
    %8305 = vmatpush1.msra.mxu0 0.0
    %8306 = vmatprep.subr.mxu0 0.0
    %8307 = vmatpush1.msra.mxu0 0.0
    %8308 = vmatprep.subr.mxu0 0.0
    %8309 = vmatpush1.msra.mxu0 0.0
    %8310 = vmatprep.subr.mxu0 0.0
    %8311 = vmatpush1.msra.mxu0 0.0
    %8312 = vmatprep.subr.mxu0 0.0
    %8313 = vmatpush1.msra.mxu0 0.0
    %8314 = vmatprep.subr.mxu0 0.0
    %8315 = vmatpush1.msra.mxu0 0.0
    %8316 = vmatprep.subr.mxu0 0.0
    %8317 = vmatpush1.msra.mxu0 0.0
    %8318 = vmatprep.subr.mxu0 0.0
    %8319 = vmatpush1.msra.mxu0 0.0
    %8320 = vmatprep.subr.mxu0 0.0
    %8321 = vmatpush1.msra.mxu0 0.0
    %8322 = vmatprep.subr.mxu0 0.0
    %8323 = vmatpush1.msra.mxu0 0.0
    %8324 = vmatprep.subr.mxu0 0.0
    %8325 = vmatpush1.msra.mxu0 0.0
    %8326 = vmatprep.subr.mxu0 0.0
    %8327 = vmatpush1.msra.mxu0 0.0
    %8328 = vmatprep.subr.mxu0 0.0
    %8329 = vmatpush1.msra.mxu0 0.0
    %8330 = vmatprep.subr.mxu0 0.0
    %8331 = vmatpush1.msra.mxu0 0.0
    %8332 = vmatprep.subr.mxu0 0.0
    %8333 = vmatpush1.msra.mxu0 0.0
    %8334 = vmatprep.subr.mxu0 0.0
    %8335 = vmatpush1.msra.mxu0 0.0
    %8336 = vmatprep.subr.mxu0 0.0
    %8337 = vmatpush1.msra.mxu0 0.0
    %8338 = vmatprep.mubr.f32.mxu0 0.0
    %8339 = vmatmul.mubr.f32.gmra.mrb[0].mxu0 %v6512
    %v8340 = vpop.f32.mrb[0].mxu0
    %v8341 = vadd.f32 %v8272, %v8340
    %v8342 = vpop.f32.mrb[0].mxu0
    %8343 = vmatprep.mubr.f32.mxu0 0.0
    %8344 = vmatmul.mubr.f32.gmra.mrb[0].mxu0 %v6515
    %v8345 = vpop.f32.mrb[0].mxu0
    %v8346 = vadd.f32 %v8272, %v8345
    %v8347 = vpop.f32.mrb[0].mxu0
    %8348 = vdwg.mxu0
    %s8349 = scalar_lea.vmem %s97, 192
    %v8350 = vld [vmem:[%s8349] sm:$0xff]
    %v8351 = vld [vmem:[%s8349 + $0x8] sm:$0xff]
    %v8352 = vld [vmem:[%s8349 + $0x10] sm:$0xff]
    %v8353 = vld [vmem:[%s8349 + $0x18] sm:$0xff]
    %v8354 = vld [vmem:[%s8349 + $0x20] sm:$0xff]
    %v8355 = vld [vmem:[%s8349 + $0x28] sm:$0xff]
    %v8356 = vld [vmem:[%s8349 + $0x30] sm:$0xff]
    %v8357 = vld [vmem:[%s8349 + $0x38] sm:$0xff]
    %s8358 = scalar_lea.vmem %s103, 3
    %v8359 = vld [vmem:[%s8358] sm:$0x1]
    %v8361 = vlaneseq
    %v8362 = vshrl.u32 %v8361, 7
    %v8363 = vsub.s32 0, %v8362
    %v8364 = vrot.slane %v8359, %v8363
    %8366 = vmatprep.subr.mxu0 0.0
    %8367 = vmatpush1.msra.mxu0 %v8350
    %8368 = vmatprep.subr.mxu0 0.0
    %8369 = vmatpush1.msra.mxu0 %v8351
    %8370 = vmatprep.subr.mxu0 0.0
    %8371 = vmatpush1.msra.mxu0 %v8352
    %8372 = vmatprep.subr.mxu0 0.0
    %8373 = vmatpush1.msra.mxu0 %v8353
    %8374 = vmatprep.subr.mxu0 0.0
    %8375 = vmatpush1.msra.mxu0 %v8354
    %8376 = vmatprep.subr.mxu0 0.0
    %8377 = vmatpush1.msra.mxu0 %v8355
    %8378 = vmatprep.subr.mxu0 0.0
    %8379 = vmatpush1.msra.mxu0 %v8356
    %8380 = vmatprep.subr.mxu0 0.0
    %8381 = vmatpush1.msra.mxu0 %v8357
    %8382 = vmatprep.subr.mxu0 0.0
    %8383 = vmatpush1.msra.mxu0 0.0
    %8384 = vmatprep.subr.mxu0 0.0
    %8385 = vmatpush1.msra.mxu0 0.0
    %8386 = vmatprep.subr.mxu0 0.0
    %8387 = vmatpush1.msra.mxu0 0.0
    %8388 = vmatprep.subr.mxu0 0.0
    %8389 = vmatpush1.msra.mxu0 0.0
    %8390 = vmatprep.subr.mxu0 0.0
    %8391 = vmatpush1.msra.mxu0 0.0
    %8392 = vmatprep.subr.mxu0 0.0
    %8393 = vmatpush1.msra.mxu0 0.0
    %8394 = vmatprep.subr.mxu0 0.0
    %8395 = vmatpush1.msra.mxu0 0.0
    %8396 = vmatprep.subr.mxu0 0.0
    %8397 = vmatpush1.msra.mxu0 0.0
    %8398 = vmatprep.subr.mxu0 0.0
    %8399 = vmatpush1.msra.mxu0 0.0
    %8400 = vmatprep.subr.mxu0 0.0
    %8401 = vmatpush1.msra.mxu0 0.0
    %8402 = vmatprep.subr.mxu0 0.0
    %8403 = vmatpush1.msra.mxu0 0.0
    %8404 = vmatprep.subr.mxu0 0.0
    %8405 = vmatpush1.msra.mxu0 0.0
    %8406 = vmatprep.subr.mxu0 0.0
    %8407 = vmatpush1.msra.mxu0 0.0
    %8408 = vmatprep.subr.mxu0 0.0
    %8409 = vmatpush1.msra.mxu0 0.0
    %8410 = vmatprep.subr.mxu0 0.0
    %8411 = vmatpush1.msra.mxu0 0.0
    %8412 = vmatprep.subr.mxu0 0.0
    %8413 = vmatpush1.msra.mxu0 0.0
    %8414 = vmatprep.subr.mxu0 0.0
    %8415 = vmatpush1.msra.mxu0 0.0
    %8416 = vmatprep.subr.mxu0 0.0
    %8417 = vmatpush1.msra.mxu0 0.0
    %8418 = vmatprep.subr.mxu0 0.0
    %8419 = vmatpush1.msra.mxu0 0.0
    %8420 = vmatprep.subr.mxu0 0.0
    %8421 = vmatpush1.msra.mxu0 0.0
    %8422 = vmatprep.subr.mxu0 0.0
    %8423 = vmatpush1.msra.mxu0 0.0
    %8424 = vmatprep.subr.mxu0 0.0
    %8425 = vmatpush1.msra.mxu0 0.0
    %8426 = vmatprep.subr.mxu0 0.0
    %8427 = vmatpush1.msra.mxu0 0.0
    %8428 = vmatprep.subr.mxu0 0.0
    %8429 = vmatpush1.msra.mxu0 0.0
    %8430 = vmatprep.mubr.f32.mxu0 0.0
    %8431 = vmatmul.mubr.f32.gmra.mrb[0].mxu0 %v6512
    %v8432 = vpop.f32.mrb[0].mxu0
    %v8433 = vadd.f32 %v8364, %v8432
    %v8434 = vpop.f32.mrb[0].mxu0
    %8435 = vmatprep.mubr.f32.mxu0 0.0
    %8436 = vmatmul.mubr.f32.gmra.mrb[0].mxu0 %v6515
    %v8437 = vpop.f32.mrb[0].mxu0
    %v8438 = vadd.f32 %v8364, %v8437
    %v8439 = vpop.f32.mrb[0].mxu0
    %8440 = vdwg.mxu0
    %s8441 = scalar_lea.vmem %s105, 48
    %v8442 = vld [vmem:[%s8441] sm:$0xff]
    %v8443 = vld [vmem:[%s8441 + $0x8] sm:$0xff]
    %v8445 = vsel %vm1281, %v8249, 0
    %v8448 = vsel %vm1281, %v8254, 0
    %v8451 = vsel %vm1281, %v8341, 0
    %v8454 = vsel %vm1281, %v8346, 0
    %8456 = vmatprep.subr.mxu0 0.0
    %8457 = vmatpush1.xpose.msra.mxu0 %v8451
    %8458 = vmatprep.subr.mxu0 0.0
    %8459 = vmatpush1.xpose.msra.mxu0 %v8454
    %8460 = vmatprep.subr.mxu0 0.0
    %8461 = vmatpush1.xpose.msra.mxu0 0.0
    %8462 = vmatprep.subr.mxu0 0.0
    %8463 = vmatpush1.xpose.msra.mxu0 0.0
    %8464 = vmatprep.subr.mxu0 0.0
    %8465 = vmatpush1.xpose.msra.mxu0 0.0
    %8466 = vmatprep.subr.mxu0 0.0
    %8467 = vmatpush1.xpose.msra.mxu0 0.0
    %8468 = vmatprep.subr.mxu0 0.0
    %8469 = vmatpush1.xpose.msra.mxu0 0.0
    %8470 = vmatprep.subr.mxu0 0.0
    %8471 = vmatpush1.xpose.msra.mxu0 0.0
    %8472 = vmatprep.subr.mxu0 0.0
    %8473 = vmatpush1.xpose.msra.mxu0 0.0
    %8474 = vmatprep.subr.mxu0 0.0
    %8475 = vmatpush1.xpose.msra.mxu0 0.0
    %8476 = vmatprep.subr.mxu0 0.0
    %8477 = vmatpush1.xpose.msra.mxu0 0.0
    %8478 = vmatprep.subr.mxu0 0.0
    %8479 = vmatpush1.xpose.msra.mxu0 0.0
    %8480 = vmatprep.subr.mxu0 0.0
    %8481 = vmatpush1.xpose.msra.mxu0 0.0
    %8482 = vmatprep.subr.mxu0 0.0
    %8483 = vmatpush1.xpose.msra.mxu0 0.0
    %8484 = vmatprep.subr.mxu0 0.0
    %8485 = vmatpush1.xpose.msra.mxu0 0.0
    %8486 = vmatprep.subr.mxu0 0.0
    %8487 = vmatpush1.xpose.msra.mxu0 0.0
    %8488 = vmatprep.subr.mxu0 0.0
    %8489 = vmatpush1.xpose.msra.mxu0 0.0
    %8490 = vmatprep.subr.mxu0 0.0
    %8491 = vmatpush1.xpose.msra.mxu0 0.0
    %8492 = vmatprep.subr.mxu0 0.0
    %8493 = vmatpush1.xpose.msra.mxu0 0.0
    %8494 = vmatprep.subr.mxu0 0.0
    %8495 = vmatpush1.xpose.msra.mxu0 0.0
    %8496 = vmatprep.subr.mxu0 0.0
    %8497 = vmatpush1.xpose.msra.mxu0 0.0
    %8498 = vmatprep.subr.mxu0 0.0
    %8499 = vmatpush1.xpose.msra.mxu0 0.0
    %8500 = vmatprep.subr.mxu0 0.0
    %8501 = vmatpush1.xpose.msra.mxu0 0.0
    %8502 = vmatprep.subr.mxu0 0.0
    %8503 = vmatpush1.xpose.msra.mxu0 0.0
    %8504 = vmatprep.subr.mxu0 0.0
    %8505 = vmatpush1.xpose.msra.mxu0 0.0
    %8506 = vmatprep.subr.mxu0 0.0
    %8507 = vmatpush1.xpose.msra.mxu0 0.0
    %8508 = vmatprep.subr.mxu0 0.0
    %8509 = vmatpush1.xpose.msra.mxu0 0.0
    %8510 = vmatprep.subr.mxu0 0.0
    %8511 = vmatpush1.xpose.msra.mxu0 0.0
    %8512 = vmatprep.subr.mxu0 0.0
    %8513 = vmatpush1.xpose.msra.mxu0 0.0
    %8514 = vmatprep.subr.mxu0 0.0
    %8515 = vmatpush1.xpose.msra.mxu0 0.0
    %8516 = vmatprep.subr.mxu0 0.0
    %8517 = vmatpush1.xpose.msra.mxu0 0.0
    %8518 = vmatprep.subr.mxu0 0.0
    %8519 = vmatpush1.xpose.msra.mxu0 0.0
    %8520 = vmatprep.mubr.f32.mxu0 0.0
    %8521 = vmatmul.mubr.f32.gmra.mrb[0].mxu0 %v8445
    %v8522 = vpop.f32.mrb[0].mxu0
    %v8523 = vadd.f32 %v8442, %v8522
    %v8524 = vpop.f32.mrb[0].mxu0
    %8525 = vmatprep.mubr.f32.mxu0 0.0
    %8526 = vmatmul.mubr.f32.gmra.mrb[0].mxu0 %v8448
    %v8527 = vpop.f32.mrb[0].mxu0
    %v8528 = vadd.f32 %v8443, %v8527
    %v8529 = vpop.f32.mrb[0].mxu0
    %8530 = vdwg.mxu0
    %v8531 = vsel %vm1281, %v8523, -inf
    %8532 = vmax.xlane.f32.xlu0 %v8531
    %v8533 = vpop.xlane.xlu0 %8532
    %v8534 = vsel %vm1281, %v8528, -inf
    %8535 = vmax.xlane.f32.xlu0 %v8534
    %v8536 = vpop.xlane.xlu0 %8535
    %v8537 = vsub.f32 %v8523, %v8533
    %v8538 = vsub.f32 %v8528, %v8536
    %v8539 = vmul.f32 %v8537, 1.442695
    %v8540 = vpow.pop %v8539
    %v8541 = vmul.f32 %v8538, 1.442695
    %v8542 = vpow.pop %v8541
    %v8543 = vsel %vm1281, %v8540, 0.0
    %8544 = vadd.xlane.f32.xlu0 %v8543
    %v8545 = vpop.xlane.xlu0 %8544
    %v8546 = vsel %vm1281, %v8542, 0.0
    %8547 = vadd.xlane.f32.xlu0 %v8546
    %v8548 = vpop.xlane.xlu0 %8547
    %v8549 = vrcp.pop %v8545
    %v8550 = vrcp.pop %v8548
    %v8551 = vmul.f32 %v8540, %v8549
    %v8552 = vmul.f32 %v8542, %v8550
    %v8554 = vsel %vm1281, %v8551, 0
    %v8557 = vsel %vm1281, %v8552, 0
    %8559 = vmatprep.subr.mxu0 0.0
    %8560 = vmatpush1.msra.mxu0 %v8433
    %8561 = vmatprep.subr.mxu0 0.0
    %8562 = vmatpush1.msra.mxu0 %v8438
    %8563 = vmatprep.subr.mxu0 0.0
    %8564 = vmatpush1.msra.mxu0 0.0
    %8565 = vmatprep.subr.mxu0 0.0
    %8566 = vmatpush1.msra.mxu0 0.0
    %8567 = vmatprep.subr.mxu0 0.0
    %8568 = vmatpush1.msra.mxu0 0.0
    %8569 = vmatprep.subr.mxu0 0.0
    %8570 = vmatpush1.msra.mxu0 0.0
    %8571 = vmatprep.subr.mxu0 0.0
    %8572 = vmatpush1.msra.mxu0 0.0
    %8573 = vmatprep.subr.mxu0 0.0
    %8574 = vmatpush1.msra.mxu0 0.0
    %8575 = vmatprep.subr.mxu0 0.0
    %8576 = vmatpush1.msra.mxu0 0.0
    %8577 = vmatprep.subr.mxu0 0.0
    %8578 = vmatpush1.msra.mxu0 0.0
    %8579 = vmatprep.subr.mxu0 0.0
    %8580 = vmatpush1.msra.mxu0 0.0
    %8581 = vmatprep.subr.mxu0 0.0
    %8582 = vmatpush1.msra.mxu0 0.0
    %8583 = vmatprep.subr.mxu0 0.0
    %8584 = vmatpush1.msra.mxu0 0.0
    %8585 = vmatprep.subr.mxu0 0.0
    %8586 = vmatpush1.msra.mxu0 0.0
    %8587 = vmatprep.subr.mxu0 0.0
    %8588 = vmatpush1.msra.mxu0 0.0
    %8589 = vmatprep.subr.mxu0 0.0
    %8590 = vmatpush1.msra.mxu0 0.0
    %8591 = vmatprep.subr.mxu0 0.0
    %8592 = vmatpush1.msra.mxu0 0.0
    %8593 = vmatprep.subr.mxu0 0.0
    %8594 = vmatpush1.msra.mxu0 0.0
    %8595 = vmatprep.subr.mxu0 0.0
    %8596 = vmatpush1.msra.mxu0 0.0
    %8597 = vmatprep.subr.mxu0 0.0
    %8598 = vmatpush1.msra.mxu0 0.0
    %8599 = vmatprep.subr.mxu0 0.0
    %8600 = vmatpush1.msra.mxu0 0.0
    %8601 = vmatprep.subr.mxu0 0.0
    %8602 = vmatpush1.msra.mxu0 0.0
    %8603 = vmatprep.subr.mxu0 0.0
    %8604 = vmatpush1.msra.mxu0 0.0
    %8605 = vmatprep.subr.mxu0 0.0
    %8606 = vmatpush1.msra.mxu0 0.0
    %8607 = vmatprep.subr.mxu0 0.0
    %8608 = vmatpush1.msra.mxu0 0.0
    %8609 = vmatprep.subr.mxu0 0.0
    %8610 = vmatpush1.msra.mxu0 0.0
    %8611 = vmatprep.subr.mxu0 0.0
    %8612 = vmatpush1.msra.mxu0 0.0
    %8613 = vmatprep.subr.mxu0 0.0
    %8614 = vmatpush1.msra.mxu0 0.0
    %8615 = vmatprep.subr.mxu0 0.0
    %8616 = vmatpush1.msra.mxu0 0.0
    %8617 = vmatprep.subr.mxu0 0.0
    %8618 = vmatpush1.msra.mxu0 0.0
    %8619 = vmatprep.subr.mxu0 0.0
    %8620 = vmatpush1.msra.mxu0 0.0
    %8621 = vmatprep.subr.mxu0 0.0
    %8622 = vmatpush1.msra.mxu0 0.0
    %8623 = vmatprep.mubr.f32.mxu0 0.0
    %8624 = vmatmul.mubr.f32.gmra.mrb[0].mxu0 %v8554
    %v8625 = vpop.f32.mrb[0].mxu0
    %v8626 = vadd.f32 0.0, %v8625
    %v8627 = vpop.f32.mrb[0].mxu0
    %8628 = vmatprep.mubr.f32.mxu0 0.0
    %8629 = vmatmul.mubr.f32.gmra.mrb[0].mxu0 %v8557
    %v8630 = vpop.f32.mrb[0].mxu0
    %v8631 = vadd.f32 0.0, %v8630
    %v8632 = vpop.f32.mrb[0].mxu0
    %8633 = vdwg.mxu0
    %s8634 = scalar_lea.vmem %s107, 48
    %v8635 = vld [vmem:[%s8634] sm:$0xff]
    %v8636 = vld [vmem:[%s8634 + $0x8] sm:$0xff]
    %v8638 = vsel %vm1281, %v8626, 0
    %v8641 = vsel %vm1281, %v8631, 0
    %8643 = vmatprep.subr.mxu0 0.0
    %8644 = vmatpush1.msra.mxu0 %v8635
    %8645 = vmatprep.subr.mxu0 0.0
    %8646 = vmatpush1.msra.mxu0 %v8636
    %8647 = vmatprep.subr.mxu0 0.0
    %8648 = vmatpush1.msra.mxu0 0.0
    %8649 = vmatprep.subr.mxu0 0.0
    %8650 = vmatpush1.msra.mxu0 0.0
    %8651 = vmatprep.subr.mxu0 0.0
    %8652 = vmatpush1.msra.mxu0 0.0
    %8653 = vmatprep.subr.mxu0 0.0
    %8654 = vmatpush1.msra.mxu0 0.0
    %8655 = vmatprep.subr.mxu0 0.0
    %8656 = vmatpush1.msra.mxu0 0.0
    %8657 = vmatprep.subr.mxu0 0.0
    %8658 = vmatpush1.msra.mxu0 0.0
    %8659 = vmatprep.subr.mxu0 0.0
    %8660 = vmatpush1.msra.mxu0 0.0
    %8661 = vmatprep.subr.mxu0 0.0
    %8662 = vmatpush1.msra.mxu0 0.0
    %8663 = vmatprep.subr.mxu0 0.0
    %8664 = vmatpush1.msra.mxu0 0.0
    %8665 = vmatprep.subr.mxu0 0.0
    %8666 = vmatpush1.msra.mxu0 0.0
    %8667 = vmatprep.subr.mxu0 0.0
    %8668 = vmatpush1.msra.mxu0 0.0
    %8669 = vmatprep.subr.mxu0 0.0
    %8670 = vmatpush1.msra.mxu0 0.0
    %8671 = vmatprep.subr.mxu0 0.0
    %8672 = vmatpush1.msra.mxu0 0.0
    %8673 = vmatprep.subr.mxu0 0.0
    %8674 = vmatpush1.msra.mxu0 0.0
    %8675 = vmatprep.subr.mxu0 0.0
    %8676 = vmatpush1.msra.mxu0 0.0
    %8677 = vmatprep.subr.mxu0 0.0
    %8678 = vmatpush1.msra.mxu0 0.0
    %8679 = vmatprep.subr.mxu0 0.0
    %8680 = vmatpush1.msra.mxu0 0.0
    %8681 = vmatprep.subr.mxu0 0.0
    %8682 = vmatpush1.msra.mxu0 0.0
    %8683 = vmatprep.subr.mxu0 0.0
    %8684 = vmatpush1.msra.mxu0 0.0
    %8685 = vmatprep.subr.mxu0 0.0
    %8686 = vmatpush1.msra.mxu0 0.0
    %8687 = vmatprep.subr.mxu0 0.0
    %8688 = vmatpush1.msra.mxu0 0.0
    %8689 = vmatprep.subr.mxu0 0.0
    %8690 = vmatpush1.msra.mxu0 0.0
    %8691 = vmatprep.subr.mxu0 0.0
    %8692 = vmatpush1.msra.mxu0 0.0
    %8693 = vmatprep.subr.mxu0 0.0
    %8694 = vmatpush1.msra.mxu0 0.0
    %8695 = vmatprep.subr.mxu0 0.0
    %8696 = vmatpush1.msra.mxu0 0.0
    %8697 = vmatprep.subr.mxu0 0.0
    %8698 = vmatpush1.msra.mxu0 0.0
    %8699 = vmatprep.subr.mxu0 0.0
    %8700 = vmatpush1.msra.mxu0 0.0
    %8701 = vmatprep.subr.mxu0 0.0
    %8702 = vmatpush1.msra.mxu0 0.0
    %8703 = vmatprep.subr.mxu0 0.0
    %8704 = vmatpush1.msra.mxu0 0.0
    %8705 = vmatprep.subr.mxu0 0.0
    %8706 = vmatpush1.msra.mxu0 0.0
    %8707 = vmatprep.mubr.f32.mxu0 0.0
    %8708 = vmatmul.mubr.f32.gmra.mrb[0].mxu0 %v8638
    %v8709 = vpop.f32.mrb[0].mxu0
    %v8710 = vadd.f32 0.0, %v8709
    %v8711 = vpop.f32.mrb[0].mxu0
    %8712 = vmatprep.mubr.f32.mxu0 0.0
    %8713 = vmatmul.mubr.f32.gmra.mrb[0].mxu0 %v8641
    %v8714 = vpop.f32.mrb[0].mxu0
    %v8715 = vadd.f32 0.0, %v8714
    %v8716 = vpop.f32.mrb[0].mxu0
    %8717 = vdwg.mxu0
    %v8718 = vadd.f32 %v8163, %v8710
    %v8719 = vadd.f32 %v8164, %v8715
    %v8720 = vadd.f32 %v6396, %v8718
    %v8721 = vadd.f32 %v6397, %v8719
    %v8722 = vsel %vm1435, %v8720, 0.0
    %8723 = vadd.xlane.f32.xlu0 %v8722
    %v8724 = vpop.xlane.xlu0 %8723
    %v8725 = vsel %vm1435, %v8721, 0.0
    %8726 = vadd.xlane.f32.xlu0 %v8725
    %v8727 = vpop.xlane.xlu0 %8726
    %v8728 = vmul.f32 %v8724, %v6459
    %v8729 = vmul.f32 %v8727, %v6459
    %v8730 = vsub.f32 %v8720, %v8728
    %v8731 = vsub.f32 %v8721, %v8729
    %v8732 = vmul.f32 %v8730, %v8730
    %v8733 = vmul.f32 %v8731, %v8731
    %v8734 = vsel %vm1435, %v8732, 0.0
    %8735 = vadd.xlane.f32.xlu0 %v8734
    %v8736 = vpop.xlane.xlu0 %8735
    %v8737 = vsel %vm1435, %v8733, 0.0
    %8738 = vadd.xlane.f32.xlu0 %v8737
    %v8739 = vpop.xlane.xlu0 %8738
    %v8740 = vmul.f32 %v8736, %v6459
    %v8741 = vmul.f32 %v8739, %v6459
    %v8742 = vadd.f32 %v8740, 1e-05
    %v8743 = vadd.f32 %v8741, 1e-05
    %v8744 = vrsqrt.pop %v8742
    %v8745 = vrsqrt.pop %v8743
    %v8746 = vmul.f32 %v8730, %v8744
    %v8747 = vmul.f32 %v8731, %v8745
    %v8749 = vlaneseq
    %v8750 = vshrl.u32 %v8749, 7
    %v8751 = vsub.s32 0, %v8750
    %v8752 = vrot.slane %v6401, %v8751
    %v8754 = vmul.f32 %v8746, %v8752
    %v8755 = vmul.f32 %v8747, %v8752
    %v8757 = vlaneseq
    %v8758 = vshrl.u32 %v8757, 7
    %v8759 = vsub.s32 0, %v8758
    %v8760 = vrot.slane %v6402, %v8759
    %v8762 = vadd.f32 %v8754, %v8760
    %v8763 = vadd.f32 %v8755, %v8760
    %v8765 = vlaneseq
    %v8766 = vshrl.u32 %v8765, 7
    %v8767 = vsub.s32 0, %v8766
    %v8768 = vrot.slane %v6419, %v8767
    %v8769 = vlaneseq
    %v8770 = vshrl.u32 %v8769, 7
    %v8771 = vsub.s32 1, %v8770
    %v8772 = vrot.slane %v6419, %v8771
    %v8776 = vsel %vm1435, %v8762, 0
    %v8779 = vsel %vm1435, %v8763, 0
    %8781 = vmatprep.subr.mxu0 %v6404
    %8782 = vmatpush1.msra.mxu0 %v6403
    %8783 = vmatprep.subr.mxu0 %v6406
    %8784 = vmatpush1.msra.mxu0 %v6405
    %8785 = vmatprep.subr.mxu0 %v6408
    %8786 = vmatpush1.msra.mxu0 %v6407
    %8787 = vmatprep.subr.mxu0 %v6410
    %8788 = vmatpush1.msra.mxu0 %v6409
    %8789 = vmatprep.subr.mxu0 %v6412
    %8790 = vmatpush1.msra.mxu0 %v6411
    %8791 = vmatprep.subr.mxu0 %v6414
    %8792 = vmatpush1.msra.mxu0 %v6413
    %8793 = vmatprep.subr.mxu0 %v6416
    %8794 = vmatpush1.msra.mxu0 %v6415
    %8795 = vmatprep.subr.mxu0 %v6418
    %8796 = vmatpush1.msra.mxu0 %v6417
    %8797 = vmatprep.subr.mxu0 0.0
    %8798 = vmatpush1.msra.mxu0 0.0
    %8799 = vmatprep.subr.mxu0 0.0
    %8800 = vmatpush1.msra.mxu0 0.0
    %8801 = vmatprep.subr.mxu0 0.0
    %8802 = vmatpush1.msra.mxu0 0.0
    %8803 = vmatprep.subr.mxu0 0.0
    %8804 = vmatpush1.msra.mxu0 0.0
    %8805 = vmatprep.subr.mxu0 0.0
    %8806 = vmatpush1.msra.mxu0 0.0
    %8807 = vmatprep.subr.mxu0 0.0
    %8808 = vmatpush1.msra.mxu0 0.0
    %8809 = vmatprep.subr.mxu0 0.0
    %8810 = vmatpush1.msra.mxu0 0.0
    %8811 = vmatprep.subr.mxu0 0.0
    %8812 = vmatpush1.msra.mxu0 0.0
    %8813 = vmatprep.subr.mxu0 0.0
    %8814 = vmatpush1.msra.mxu0 0.0
    %8815 = vmatprep.subr.mxu0 0.0
    %8816 = vmatpush1.msra.mxu0 0.0
    %8817 = vmatprep.subr.mxu0 0.0
    %8818 = vmatpush1.msra.mxu0 0.0
    %8819 = vmatprep.subr.mxu0 0.0
    %8820 = vmatpush1.msra.mxu0 0.0
    %8821 = vmatprep.subr.mxu0 0.0
    %8822 = vmatpush1.msra.mxu0 0.0
    %8823 = vmatprep.subr.mxu0 0.0
    %8824 = vmatpush1.msra.mxu0 0.0
    %8825 = vmatprep.subr.mxu0 0.0
    %8826 = vmatpush1.msra.mxu0 0.0
    %8827 = vmatprep.subr.mxu0 0.0
    %8828 = vmatpush1.msra.mxu0 0.0
    %8829 = vmatprep.subr.mxu0 0.0
    %8830 = vmatpush1.msra.mxu0 0.0
    %8831 = vmatprep.subr.mxu0 0.0
    %8832 = vmatpush1.msra.mxu0 0.0
    %8833 = vmatprep.subr.mxu0 0.0
    %8834 = vmatpush1.msra.mxu0 0.0
    %8835 = vmatprep.subr.mxu0 0.0
    %8836 = vmatpush1.msra.mxu0 0.0
    %8837 = vmatprep.subr.mxu0 0.0
    %8838 = vmatpush1.msra.mxu0 0.0
    %8839 = vmatprep.subr.mxu0 0.0
    %8840 = vmatpush1.msra.mxu0 0.0
    %8841 = vmatprep.subr.mxu0 0.0
    %8842 = vmatpush1.msra.mxu0 0.0
    %8843 = vmatprep.subr.mxu0 0.0
    %8844 = vmatpush1.msra.mxu0 0.0
    %8845 = vmatprep.mubr.f32.mxu0 0.0
    %8846 = vmatmul.mubr.f32.gmra.mrb[0].mxu0 %v8776
    %v8847 = vpop.f32.mrb[0].mxu0
    %v8848 = vadd.f32 %v8768, %v8847
    %v8849 = vpop.f32.mrb[0].mxu0
    %v8850 = vadd.f32 %v8772, %v8849
    %8851 = vmatprep.mubr.f32.mxu0 0.0
    %8852 = vmatmul.mubr.f32.gmra.mrb[0].mxu0 %v8779
    %v8853 = vpop.f32.mrb[0].mxu0
    %v8854 = vadd.f32 %v8768, %v8853
    %v8855 = vpop.f32.mrb[0].mxu0
    %v8856 = vadd.f32 %v8772, %v8855
    %8857 = vdwg.mxu0
    %v8858 = vmul.f32 %v8848, 0.5
    %v8859 = vmul.f32 %v8850, 0.5
    %v8860 = vmul.f32 %v8854, 0.5
    %v8861 = vmul.f32 %v8856, 0.5
    %v8862 = vmul.f32 %v8848, 0.044715
    %v8863 = vmul.f32 %v8850, 0.044715
    %v8864 = vmul.f32 %v8854, 0.044715
    %v8865 = vmul.f32 %v8856, 0.044715
    %v8866 = vmul.f32 %v8862, %v8848
    %v8867 = vmul.f32 %v8863, %v8850
    %v8868 = vmul.f32 %v8864, %v8854
    %v8869 = vmul.f32 %v8865, %v8856
    %v8870 = vmul.f32 %v8866, %v8848
    %v8871 = vmul.f32 %v8867, %v8850
    %v8872 = vmul.f32 %v8868, %v8854
    %v8873 = vmul.f32 %v8869, %v8856
    %v8874 = vadd.f32 %v8848, %v8870
    %v8875 = vadd.f32 %v8850, %v8871
    %v8876 = vadd.f32 %v8854, %v8872
    %v8877 = vadd.f32 %v8856, %v8873
    %v8878 = vmul.f32 %v8874, 0.7978846
    %v8879 = vmul.f32 %v8875, 0.7978846
    %v8880 = vmul.f32 %v8876, 0.7978846
    %v8881 = vmul.f32 %v8877, 0.7978846
    %v8882 = vtanh.pop %v8878
    %v8883 = vtanh.pop %v8879
    %v8884 = vtanh.pop %v8880
    %v8885 = vtanh.pop %v8881
    %v8886 = vadd.f32 %v8882, 1.0
    %v8887 = vadd.f32 %v8883, 1.0
    %v8888 = vadd.f32 %v8884, 1.0
    %v8889 = vadd.f32 %v8885, 1.0
    %v8890 = vmul.f32 %v8858, %v8886
    %v8891 = vmul.f32 %v8859, %v8887
    %v8892 = vmul.f32 %v8860, %v8888
    %v8893 = vmul.f32 %v8861, %v8889
    %v8895 = vlaneseq
    %v8896 = vshrl.u32 %v8895, 7
    %v8897 = vsub.s32 0, %v8896
    %v8898 = vrot.slane %v6452, %v8897
    %8900 = vmatprep.subr.mxu0 0.0
    %8901 = vmatpush1.msra.mxu0 %v6420
    %8902 = vmatprep.subr.mxu0 0.0
    %8903 = vmatpush1.msra.mxu0 %v6421
    %8904 = vmatprep.subr.mxu0 0.0
    %8905 = vmatpush1.msra.mxu0 %v6422
    %8906 = vmatprep.subr.mxu0 0.0
    %8907 = vmatpush1.msra.mxu0 %v6423
    %8908 = vmatprep.subr.mxu0 0.0
    %8909 = vmatpush1.msra.mxu0 %v6424
    %8910 = vmatprep.subr.mxu0 0.0
    %8911 = vmatpush1.msra.mxu0 %v6425
    %8912 = vmatprep.subr.mxu0 0.0
    %8913 = vmatpush1.msra.mxu0 %v6426
    %8914 = vmatprep.subr.mxu0 0.0
    %8915 = vmatpush1.msra.mxu0 %v6427
    %8916 = vmatprep.subr.mxu0 0.0
    %8917 = vmatpush1.msra.mxu0 %v6428
    %8918 = vmatprep.subr.mxu0 0.0
    %8919 = vmatpush1.msra.mxu0 %v6429
    %8920 = vmatprep.subr.mxu0 0.0
    %8921 = vmatpush1.msra.mxu0 %v6430
    %8922 = vmatprep.subr.mxu0 0.0
    %8923 = vmatpush1.msra.mxu0 %v6431
    %8924 = vmatprep.subr.mxu0 0.0
    %8925 = vmatpush1.msra.mxu0 %v6432
    %8926 = vmatprep.subr.mxu0 0.0
    %8927 = vmatpush1.msra.mxu0 %v6433
    %8928 = vmatprep.subr.mxu0 0.0
    %8929 = vmatpush1.msra.mxu0 %v6434
    %8930 = vmatprep.subr.mxu0 0.0
    %8931 = vmatpush1.msra.mxu0 %v6435
    %8932 = vmatprep.subr.mxu0 0.0
    %8933 = vmatpush1.msra.mxu0 %v6436
    %8934 = vmatprep.subr.mxu0 0.0
    %8935 = vmatpush1.msra.mxu0 %v6437
    %8936 = vmatprep.subr.mxu0 0.0
    %8937 = vmatpush1.msra.mxu0 %v6438
    %8938 = vmatprep.subr.mxu0 0.0
    %8939 = vmatpush1.msra.mxu0 %v6439
    %8940 = vmatprep.subr.mxu0 0.0
    %8941 = vmatpush1.msra.mxu0 %v6440
    %8942 = vmatprep.subr.mxu0 0.0
    %8943 = vmatpush1.msra.mxu0 %v6441
    %8944 = vmatprep.subr.mxu0 0.0
    %8945 = vmatpush1.msra.mxu0 %v6442
    %8946 = vmatprep.subr.mxu0 0.0
    %8947 = vmatpush1.msra.mxu0 %v6443
    %8948 = vmatprep.subr.mxu0 0.0
    %8949 = vmatpush1.msra.mxu0 %v6444
    %8950 = vmatprep.subr.mxu0 0.0
    %8951 = vmatpush1.msra.mxu0 %v6445
    %8952 = vmatprep.subr.mxu0 0.0
    %8953 = vmatpush1.msra.mxu0 %v6446
    %8954 = vmatprep.subr.mxu0 0.0
    %8955 = vmatpush1.msra.mxu0 %v6447
    %8956 = vmatprep.subr.mxu0 0.0
    %8957 = vmatpush1.msra.mxu0 %v6448
    %8958 = vmatprep.subr.mxu0 0.0
    %8959 = vmatpush1.msra.mxu0 %v6449
    %8960 = vmatprep.subr.mxu0 0.0
    %8961 = vmatpush1.msra.mxu0 %v6450
    %8962 = vmatprep.subr.mxu0 0.0
    %8963 = vmatpush1.msra.mxu0 %v6451
    %8964 = vmatprep.mubr.f32.mxu0 %v8891
    %8965 = vmatmul.mubr.f32.gmra.mrb[0].mxu0 %v8890
    %v8966 = vpop.f32.mrb[0].mxu0
    %v8967 = vadd.f32 %v8898, %v8966
    %v8968 = vpop.f32.mrb[0].mxu0
    %8969 = vmatprep.mubr.f32.mxu0 %v8893
    %8970 = vmatmul.mubr.f32.gmra.mrb[0].mxu0 %v8892
    %v8971 = vpop.f32.mrb[0].mxu0
    %v8972 = vadd.f32 %v8898, %v8971
    %v8973 = vpop.f32.mrb[0].mxu0
    %8974 = vdwg.mxu0
    %v8975 = vadd.f32 %v8720, %v8967
    %v8976 = vadd.f32 %v8721, %v8972
    %v8977 = vld [vmem:[#allocation22] sm:$0x1]
    %v8978 = vld [vmem:[#allocation24] sm:$0x1]
    %v8979 = vld [vmem:[%s127] sm:$0xf]
    %v8980 = vld [vmem:[%s129] sm:$0xff]
    %v8981 = vld [vmem:[%s129 + $0x8] sm:$0xff]
    %v8982 = vld [vmem:[%s129 + $0x10] sm:$0xff]
    %v8983 = vld [vmem:[%s129 + $0x18] sm:$0xff]
    %v8984 = vld [vmem:[%s129 + $0x20] sm:$0xff]
    %v8985 = vld [vmem:[%s129 + $0x28] sm:$0xff]
    %v8986 = vld [vmem:[%s129 + $0x30] sm:$0xff]
    %v8987 = vld [vmem:[%s129 + $0x38] sm:$0xff]
    %v8988 = vld [vmem:[#allocation25] sm:$0x1]
    %v8989 = vsel %vm1435, %v8975, 0.0
    %8990 = vadd.xlane.f32.xlu0 %v8989
    %v8991 = vpop.xlane.xlu0 %8990
    %v8992 = vsel %vm1435, %v8976, 0.0
    %8993 = vadd.xlane.f32.xlu0 %v8992
    %v8994 = vpop.xlane.xlu0 %8993
    %v8995 = vmul.f32 %v8991, %v6459
    %v8996 = vmul.f32 %v8994, %v6459
    %v8997 = vsub.f32 %v8975, %v8995
    %v8998 = vsub.f32 %v8976, %v8996
    %v8999 = vmul.f32 %v8997, %v8997
    %v9000 = vmul.f32 %v8998, %v8998
    %v9001 = vsel %vm1435, %v8999, 0.0
    %9002 = vadd.xlane.f32.xlu0 %v9001
    %v9003 = vpop.xlane.xlu0 %9002
    %v9004 = vsel %vm1435, %v9000, 0.0
    %9005 = vadd.xlane.f32.xlu0 %v9004
    %v9006 = vpop.xlane.xlu0 %9005
    %v9007 = vmul.f32 %v9003, %v6459
    %v9008 = vmul.f32 %v9006, %v6459
    %v9009 = vadd.f32 %v9007, 1e-05
    %v9010 = vadd.f32 %v9008, 1e-05
    %v9011 = vrsqrt.pop %v9009
    %v9012 = vrsqrt.pop %v9010
    %v9013 = vmul.f32 %v8997, %v9011
    %v9014 = vmul.f32 %v8998, %v9012
    %v9016 = vlaneseq
    %v9017 = vshrl.u32 %v9016, 7
    %v9018 = vsub.s32 0, %v9017
    %v9019 = vrot.slane %v8977, %v9018
    %v9021 = vmul.f32 %v9013, %v9019
    %v9022 = vmul.f32 %v9014, %v9019
    %v9024 = vlaneseq
    %v9025 = vshrl.u32 %v9024, 7
    %v9026 = vsub.s32 0, %v9025
    %v9027 = vrot.slane %v8978, %v9026
    %v9029 = vadd.f32 %v9021, %v9027
    %v9030 = vadd.f32 %v9022, %v9027
    %v9032 = vsel %vm1281, %v8979, 0
    %9034 = vmatprep.subr.mxu0 0.0
    %9035 = vmatpush1.msra.mxu0 %v9029
    %9036 = vmatprep.subr.mxu0 0.0
    %9037 = vmatpush1.msra.mxu0 %v9030
    %9038 = vmatprep.subr.mxu0 0.0
    %9039 = vmatpush1.msra.mxu0 0.0
    %9040 = vmatprep.subr.mxu0 0.0
    %9041 = vmatpush1.msra.mxu0 0.0
    %9042 = vmatprep.subr.mxu0 0.0
    %9043 = vmatpush1.msra.mxu0 0.0
    %9044 = vmatprep.subr.mxu0 0.0
    %9045 = vmatpush1.msra.mxu0 0.0
    %9046 = vmatprep.subr.mxu0 0.0
    %9047 = vmatpush1.msra.mxu0 0.0
    %9048 = vmatprep.subr.mxu0 0.0
    %9049 = vmatpush1.msra.mxu0 0.0
    %9050 = vmatprep.subr.mxu0 0.0
    %9051 = vmatpush1.msra.mxu0 0.0
    %9052 = vmatprep.subr.mxu0 0.0
    %9053 = vmatpush1.msra.mxu0 0.0
    %9054 = vmatprep.subr.mxu0 0.0
    %9055 = vmatpush1.msra.mxu0 0.0
    %9056 = vmatprep.subr.mxu0 0.0
    %9057 = vmatpush1.msra.mxu0 0.0
    %9058 = vmatprep.subr.mxu0 0.0
    %9059 = vmatpush1.msra.mxu0 0.0
    %9060 = vmatprep.subr.mxu0 0.0
    %9061 = vmatpush1.msra.mxu0 0.0
    %9062 = vmatprep.subr.mxu0 0.0
    %9063 = vmatpush1.msra.mxu0 0.0
    %9064 = vmatprep.subr.mxu0 0.0
    %9065 = vmatpush1.msra.mxu0 0.0
    %9066 = vmatprep.subr.mxu0 0.0
    %9067 = vmatpush1.msra.mxu0 0.0
    %9068 = vmatprep.subr.mxu0 0.0
    %9069 = vmatpush1.msra.mxu0 0.0
    %9070 = vmatprep.subr.mxu0 0.0
    %9071 = vmatpush1.msra.mxu0 0.0
    %9072 = vmatprep.subr.mxu0 0.0
    %9073 = vmatpush1.msra.mxu0 0.0
    %9074 = vmatprep.subr.mxu0 0.0
    %9075 = vmatpush1.msra.mxu0 0.0
    %9076 = vmatprep.subr.mxu0 0.0
    %9077 = vmatpush1.msra.mxu0 0.0
    %9078 = vmatprep.subr.mxu0 0.0
    %9079 = vmatpush1.msra.mxu0 0.0
    %9080 = vmatprep.subr.mxu0 0.0
    %9081 = vmatpush1.msra.mxu0 0.0
    %9082 = vmatprep.subr.mxu0 0.0
    %9083 = vmatpush1.msra.mxu0 0.0
    %9084 = vmatprep.subr.mxu0 0.0
    %9085 = vmatpush1.msra.mxu0 0.0
    %9086 = vmatprep.subr.mxu0 0.0
    %9087 = vmatpush1.msra.mxu0 0.0
    %9088 = vmatprep.subr.mxu0 0.0
    %9089 = vmatpush1.msra.mxu0 0.0
    %9090 = vmatprep.subr.mxu0 0.0
    %9091 = vmatpush1.msra.mxu0 0.0
    %9092 = vmatprep.subr.mxu0 0.0
    %9093 = vmatpush1.msra.mxu0 0.0
    %9094 = vmatprep.subr.mxu0 0.0
    %9095 = vmatpush1.msra.mxu0 0.0
    %9096 = vmatprep.subr.mxu0 0.0
    %9097 = vmatpush1.msra.mxu0 0.0
    %9098 = vmatprep.mubr.f32.mxu0 0.0
    %9099 = vmatmul.mubr.f32.gmra.mrb[0].mxu0 %v9032
    %v9100 = vpop.f32.mrb[0].mxu0
    %v9101 = vadd.f32 0.0, %v9100
    %v9102 = vpop.f32.mrb[0].mxu0
    %9103 = vdwg.mxu0
    %v9105 = vlaneseq
    %v9106 = vshrl.u32 %v9105, 7
    %v9107 = vsub.s32 0, %v9106
    %v9108 = vrot.slane %v8988, %v9107
    %v9111 = vsel %vm1435, %v9101, 0
    %9113 = vmatprep.subr.mxu0 0.0
    %9114 = vmatpush1.msra.mxu0 %v8980
    %9115 = vmatprep.subr.mxu0 0.0
    %9116 = vmatpush1.msra.mxu0 %v8981
    %9117 = vmatprep.subr.mxu0 0.0
    %9118 = vmatpush1.msra.mxu0 %v8982
    %9119 = vmatprep.subr.mxu0 0.0
    %9120 = vmatpush1.msra.mxu0 %v8983
    %9121 = vmatprep.subr.mxu0 0.0
    %9122 = vmatpush1.msra.mxu0 %v8984
    %9123 = vmatprep.subr.mxu0 0.0
    %9124 = vmatpush1.msra.mxu0 %v8985
    %9125 = vmatprep.subr.mxu0 0.0
    %9126 = vmatpush1.msra.mxu0 %v8986
    %9127 = vmatprep.subr.mxu0 0.0
    %9128 = vmatpush1.msra.mxu0 %v8987
    %9129 = vmatprep.subr.mxu0 0.0
    %9130 = vmatpush1.msra.mxu0 0.0
    %9131 = vmatprep.subr.mxu0 0.0
    %9132 = vmatpush1.msra.mxu0 0.0
    %9133 = vmatprep.subr.mxu0 0.0
    %9134 = vmatpush1.msra.mxu0 0.0
    %9135 = vmatprep.subr.mxu0 0.0
    %9136 = vmatpush1.msra.mxu0 0.0
    %9137 = vmatprep.subr.mxu0 0.0
    %9138 = vmatpush1.msra.mxu0 0.0
    %9139 = vmatprep.subr.mxu0 0.0
    %9140 = vmatpush1.msra.mxu0 0.0
    %9141 = vmatprep.subr.mxu0 0.0
    %9142 = vmatpush1.msra.mxu0 0.0
    %9143 = vmatprep.subr.mxu0 0.0
    %9144 = vmatpush1.msra.mxu0 0.0
    %9145 = vmatprep.subr.mxu0 0.0
    %9146 = vmatpush1.msra.mxu0 0.0
    %9147 = vmatprep.subr.mxu0 0.0
    %9148 = vmatpush1.msra.mxu0 0.0
    %9149 = vmatprep.subr.mxu0 0.0
    %9150 = vmatpush1.msra.mxu0 0.0
    %9151 = vmatprep.subr.mxu0 0.0
    %9152 = vmatpush1.msra.mxu0 0.0
    %9153 = vmatprep.subr.mxu0 0.0
    %9154 = vmatpush1.msra.mxu0 0.0
    %9155 = vmatprep.subr.mxu0 0.0
    %9156 = vmatpush1.msra.mxu0 0.0
    %9157 = vmatprep.subr.mxu0 0.0
    %9158 = vmatpush1.msra.mxu0 0.0
    %9159 = vmatprep.subr.mxu0 0.0
    %9160 = vmatpush1.msra.mxu0 0.0
    %9161 = vmatprep.subr.mxu0 0.0
    %9162 = vmatpush1.msra.mxu0 0.0
    %9163 = vmatprep.subr.mxu0 0.0
    %9164 = vmatpush1.msra.mxu0 0.0
    %9165 = vmatprep.subr.mxu0 0.0
    %9166 = vmatpush1.msra.mxu0 0.0
    %9167 = vmatprep.subr.mxu0 0.0
    %9168 = vmatpush1.msra.mxu0 0.0
    %9169 = vmatprep.subr.mxu0 0.0
    %9170 = vmatpush1.msra.mxu0 0.0
    %9171 = vmatprep.subr.mxu0 0.0
    %9172 = vmatpush1.msra.mxu0 0.0
    %9173 = vmatprep.subr.mxu0 0.0
    %9174 = vmatpush1.msra.mxu0 0.0
    %9175 = vmatprep.subr.mxu0 0.0
    %9176 = vmatpush1.msra.mxu0 0.0
    %9177 = vmatprep.mubr.f32.mxu0 0.0
    %9178 = vmatmul.mubr.f32.gmra.mrb[0].mxu0 %v9111
    %v9179 = vpop.f32.mrb[0].mxu0
    %v9180 = vadd.f32 %v9108, %v9179
    %v9181 = vpop.f32.mrb[0].mxu0
    %9182 = vdwg.mxu0
    %vm9183 = vcmask 11264
    %9184 = vst.msk [vmem:[%s133] sm:$0xf] %vm9183, %v9180
    // Predicated region
    $region330: #{tpu_custom_call.1} parent=1 // pred_check
      _
    $region331: #{tpu_custom_call.1} parent=1 // pred_check_branch
      %9186 = sbr.rel (0) target = $region333
    $region332: #{tpu_custom_call.1} parent=1 // pred_region
      _
    $region333: #{tpu_custom_call.1} parent=1 // pred_fallthru
      _
    // Predicated region
    $region334: #{tpu_custom_call.1} parent=1 // pred_check
      _
    $region335: #{tpu_custom_call.1} parent=1 // pred_check_branch
      %9188 = sbr.rel (0) target = $region337
    $region336: #{tpu_custom_call.1} parent=1 // pred_region
      _
    $region337: #{tpu_custom_call.1} parent=1 // pred_fallthru
      _
    %9189 = vsyncpa [#allocation3], 1
    %9190 = vsyncpa [#allocation5], 1
    %9191 = vsyncpa [#allocation8], 1
    %9192 = vsyncpa [#allocation11], 1
    %9193 = vsyncpa [#allocation14], 1
    %9194 = vsyncpa [#allocation17], 1
    %9195 = vsyncpa [#allocation20], 1
    %9196 = vsyncpa [#allocation23], 1
    %9197 = vsyncpa [#allocation26], 1

</llo_original>
